<compile_context>
chip_gen: v7x
topology: tpu7x:2x2x1
jax: 0.10.0
libtpu: 0.0.40
codegen_flags: <defaults>
</compile_context>

<pallas_src>
import jax
import jax.numpy as jnp
from jax.experimental import pallas as pl
from jax.experimental.pallas import tpu as pltpu

BN_EPS = 1e-5
LEAKY_SLOPE = 0.01  # PyTorch F.leaky_relu default negative_slope


def _leaky_relu(x):
    return jnp.where(x >= 0.0, x, LEAKY_SLOPE * x)


def _celu(x, alpha):
    # F.celu(x, alpha) = max(0, x) + min(0, alpha * (exp(x / alpha) - 1))
    return jnp.maximum(x, 0.0) + jnp.minimum(0.0, alpha * (jnp.exp(x / alpha) - 1.0))


def _make_kernel(bias_offsets, bias_sizes):
    """Build the fused forward kernel with static bias-slice offsets."""
    (o1, o2, o3, o4, o5, o6, o7) = bias_offsets
    (n1, n2, n3, n4, n5, n6, n7) = bias_sizes

    def kernel(z_ref, w1, w2, w3, w4, w5, w6, w7, b_ref, out_ref):
        def lin(x, w_ref, off, n):
            # bf16 x bf16 on the MXU, f32 accumulation; bias added in f32.
            y = jnp.dot(x.astype(jnp.bfloat16), w_ref[...],
                        preferred_element_type=jnp.float32)
            return y + b_ref[:, off:off + n]

        z = z_ref[...].astype(jnp.float32)
        h = _leaky_relu(lin(z, w1, o1, n1))      # fc1 + bn1 (folded)
        # dropout1 (p=0.2): identity in eval mode
        h = _leaky_relu(lin(h, w2, o2, n2))      # fc2
        h = _leaky_relu(lin(h, w3, o3, n3))      # fc3 + bn3 (folded)
        # dropout3 (p=0.3): identity in eval mode
        h = _celu(lin(h, w4, o4, n4), 0.9)       # fc4
        h = _celu(lin(h, w5, o5, n5), 1.0)       # fc5
        h = lin(h, w6, o6, n6)                   # fc6
        out_ref[...] = jnp.tanh(lin(h, w7, o7, n7)).astype(out_ref.dtype)

    return kernel


def init_params(key, latent_dim, output_dim):
    """Raw f32 parameters matching the PyTorch module.

    Linear weights (stored as (in, out) == W.T): kaiming_normal_, bias = 0.
    BatchNorm: gamma = 1, beta = 0, running_mean = 0, running_var = 1.
    """
    dims = [latent_dim, 128, 256, 512, 4096,
            int(output_dim / 6), int(output_dim / 2), output_dim]
    keys = jax.random.split(key, 7)
    params = {}
    for i in range(7):
        fan_in, fan_out = dims[i], dims[i + 1]
        std = (2.0 / fan_in) ** 0.5  # kaiming_normal_ (fan_in, a=0)
        params[f"w{i+1}"] = std * jax.random.normal(keys[i], (fan_in, fan_out), jnp.float32)
        params[f"b{i+1}"] = jnp.zeros((fan_out,), jnp.float32)
    for name, c in (("bn1", 128), ("bn3", 512)):
        params[f"{name}_gamma"] = jnp.ones((c,), jnp.float32)
        params[f"{name}_beta"] = jnp.zeros((c,), jnp.float32)
        params[f"{name}_mean"] = jnp.zeros((c,), jnp.float32)
        params[f"{name}_var"] = jnp.ones((c,), jnp.float32)
    return params


def prepare_params(raw):
    """Fold BN into fc1/fc3, cast weights to bf16, concatenate biases."""
    s1 = raw["bn1_gamma"] * jax.lax.rsqrt(raw["bn1_var"] + BN_EPS)
    w1 = raw["w1"] * s1[None, :]
    b1 = (raw["b1"] - raw["bn1_mean"]) * s1 + raw["bn1_beta"]

    s3 = raw["bn3_gamma"] * jax.lax.rsqrt(raw["bn3_var"] + BN_EPS)
    w3 = raw["w3"] * s3[None, :]
    b3 = (raw["b3"] - raw["bn3_mean"]) * s3 + raw["bn3_beta"]

    ws = [w1, raw["w2"], w3, raw["w4"], raw["w5"], raw["w6"], raw["w7"]]
    bs = [b1, raw["b2"], b3, raw["b4"], raw["b5"], raw["b6"], raw["b7"]]

    weights = [w.astype(jnp.bfloat16) for w in ws]
    bias_sizes = tuple(int(b.shape[0]) for b in bs)
    bias_cat = jnp.concatenate(bs).astype(jnp.float32)[None, :]  # (1, sum_out)
    return weights, bias_cat, bias_sizes


def _vmem_budget_bytes(weights, bias_cat, tb, latent_dim, output_dim):
    w_bytes = sum(int(w.size) * w.dtype.itemsize for w in weights)
    b_bytes = int(bias_cat.size) * bias_cat.dtype.itemsize
    io_bytes = tb * latent_dim * 4 + tb * output_dim * 4
    # 2x for double-buffered tiles + headroom for activations / MXU scratch.
    budget = 2 * (w_bytes + b_bytes + io_bytes) + (8 << 20)
    return min(budget, 48 << 20)  # stays within v7x's 64 MiB physical VMEM


def decoder_forward(z, weights, bias_cat, bias_sizes):
    batch, latent_dim = z.shape
    output_dim = int(weights[-1].shape[1])

    # Batch tiling: pad to a sublane-aligned tile and grid over batch tiles.
    tb = 128 if batch >= 128 else max(8, ((batch + 7) // 8) * 8)
    padded = ((batch + tb - 1) // tb) * tb
    if padded != batch:
        z = jnp.pad(z, ((0, padded - batch), (0, 0)))
    grid = (padded // tb,)

    offsets, acc = [], 0
    for n in bias_sizes:
        offsets.append(acc)
        acc += n
    kernel = _make_kernel(tuple(offsets), tuple(bias_sizes))

    z_spec = pl.BlockSpec((tb, latent_dim), lambda i: (i, 0))
    out_spec = pl.BlockSpec((tb, output_dim), lambda i: (i, 0))
    # Constant index_map -> weights/bias stay VMEM-resident across grid steps.
    w_specs = [pl.BlockSpec(tuple(w.shape), lambda i: (0, 0)) for w in weights]
    b_spec = pl.BlockSpec(tuple(bias_cat.shape), lambda i: (0, 0))

    vmem_limit = _vmem_budget_bytes(weights, bias_cat, tb, latent_dim, output_dim)

    out = pl.pallas_call(
        kernel,
        out_shape=jax.ShapeDtypeStruct((padded, output_dim), jnp.float32),
        grid=grid,
        in_specs=[z_spec] + w_specs + [b_spec],
        out_specs=out_spec,
        compiler_params=pltpu.CompilerParams(
            dimension_semantics=("parallel",),
            vmem_limit_bytes=vmem_limit,
        ),
    )(z, *weights, bias_cat)
    return out[:batch]


def decoder_reference(z, weights, bias_cat, bias_sizes):
    """Pure-JAX reference with the same bf16 weight / f32-accum arithmetic."""
    offsets, acc = [], 0
    for n in bias_sizes:
        offsets.append(acc)
        acc += n

    def lin(x, i):
        y = jnp.dot(x.astype(jnp.bfloat16), weights[i],
                    preferred_element_type=jnp.float32)
        return y + bias_cat[:, offsets[i]:offsets[i] + bias_sizes[i]]

    h = _leaky_relu(lin(z.astype(jnp.float32), 0))
    h = _leaky_relu(lin(h, 1))
    h = _leaky_relu(lin(h, 2))
    h = _celu(lin(h, 3), 0.9)
    h = _celu(lin(h, 4), 1.0)
    h = lin(h, 5)
    return jnp.tanh(lin(h, 6))


if __name__ == "__main__":
    latent_dim = 32
    output_dim = 768          # int(768/6)=128, int(768/2)=384 -> lane-aligned
    key = jax.random.PRNGKey(0)
    k_params, k_z1, k_z2 = jax.random.split(key, 3)

    raw = init_params(k_params, latent_dim, output_dim)
    weights, bias_cat, bias_sizes = prepare_params(raw)

    # Small-batch case (single grid step).
    z_small = jax.random.normal(k_z1, (8, latent_dim), jnp.float32)
    out_small = jax.block_until_ready(decoder_forward(z_small, weights, bias_cat, bias_sizes))
    assert out_small.shape == (8, output_dim), out_small.shape
    assert out_small.dtype == jnp.float32
    assert bool(jnp.all(jnp.isfinite(out_small)))
    assert bool(jnp.all(jnp.abs(out_small) <= 1.0))  # tanh range
    ref_small = decoder_reference(z_small, weights, bias_cat, bias_sizes)
    assert bool(jnp.max(jnp.abs(out_small - ref_small)) < 2e-2)

    # Batched case exercising the batch grid (tb=128, grid=(2,)).
    z_big = jax.random.normal(k_z2, (256, latent_dim), jnp.float32)
    out_big = jax.block_until_ready(decoder_forward(z_big, weights, bias_cat, bias_sizes))
    assert out_big.shape == (256, output_dim), out_big.shape
    assert bool(jnp.all(jnp.isfinite(out_big)))
    ref_big = decoder_reference(z_big, weights, bias_cat, bias_sizes)
    assert bool(jnp.max(jnp.abs(out_big - ref_big)) < 2e-2)

    print("KERNEL_OK")
</pallas_src>

<mosaic_0001>
module attributes {stable_mosaic.version = 11 : i64} {
  func.func @kernel(%arg0: i32, %arg1: memref<8x32xf32, #tpu.memory_space<vmem>>, %arg2: memref<32x128xbf16, #tpu.memory_space<vmem>>, %arg3: memref<128x256xbf16, #tpu.memory_space<vmem>>, %arg4: memref<256x512xbf16, #tpu.memory_space<vmem>>, %arg5: memref<512x4096xbf16, #tpu.memory_space<vmem>>, %arg6: memref<4096x128xbf16, #tpu.memory_space<vmem>>, %arg7: memref<128x384xbf16, #tpu.memory_space<vmem>>, %arg8: memref<384x768xbf16, #tpu.memory_space<vmem>>, %arg9: memref<1x6272xf32, #tpu.memory_space<vmem>>, %arg10: memref<8x768xf32, #tpu.memory_space<vmem>>) attributes {dimension_semantics = [#tpu.dimension_semantics<parallel>], iteration_bounds = array<i64: 1>, scalar_prefetch = 0 : i64, scratch_operands = 0 : i64, tpu.core_type = #tpu.core_type<tc>, window_params = [{transform_indices = @transform_0, window_bounds = array<i64: 8, 32>}, {pipeline_mode = #tpu.pipeline_mode<synchronous>, transform_indices = @transform_1, window_bounds = array<i64: 32, 128>}, {pipeline_mode = #tpu.pipeline_mode<synchronous>, transform_indices = @transform_2, window_bounds = array<i64: 128, 256>}, {pipeline_mode = #tpu.pipeline_mode<synchronous>, transform_indices = @transform_3, window_bounds = array<i64: 256, 512>}, {pipeline_mode = #tpu.pipeline_mode<synchronous>, transform_indices = @transform_4, window_bounds = array<i64: 512, 4096>}, {pipeline_mode = #tpu.pipeline_mode<synchronous>, transform_indices = @transform_5, window_bounds = array<i64: 4096, 128>}, {pipeline_mode = #tpu.pipeline_mode<synchronous>, transform_indices = @transform_6, window_bounds = array<i64: 128, 384>}, {pipeline_mode = #tpu.pipeline_mode<synchronous>, transform_indices = @transform_7, window_bounds = array<i64: 384, 768>}, {pipeline_mode = #tpu.pipeline_mode<synchronous>, transform_indices = @transform_8, window_bounds = array<i64: 1, 6272>}, {transform_indices = @transform_9, window_bounds = array<i64: 8, 768>}]} {
    %c0 = arith.constant 0 : index
    %c0_0 = arith.constant 0 : index
    %0 = vector.load %arg1[%c0, %c0_0] : memref<8x32xf32, #tpu.memory_space<vmem>>, vector<8x32xf32>
    %1 = arith.truncf %0 : vector<8x32xf32> to vector<8x32xbf16>
    %c0_1 = arith.constant 0 : index
    %c0_2 = arith.constant 0 : index
    %2 = vector.load %arg2[%c0_1, %c0_2] : memref<32x128xbf16, #tpu.memory_space<vmem>>, vector<32x128xbf16>
    %cst = arith.constant dense<0.000000e+00> : vector<8x128xf32>
    %3 = tpu.matmul %1, %2, %cst {dimension_numbers = #tpu.dot_dimension_numbers<[1], [0], [0], [1], [0, 0, 1, 1], [], []>} : vector<8x32xbf16>, vector<32x128xbf16>, vector<8x128xf32> -> vector<8x128xf32>
    %c0_3 = arith.constant 0 : index
    %c0_4 = arith.constant 0 : index
    %4 = vector.load %arg9[%c0_3, %c0_4] : memref<1x6272xf32, #tpu.memory_space<vmem>>, vector<1x128xf32>
    %5 = vector.broadcast %4 : vector<1x128xf32> to vector<8x128xf32>
    %6 = arith.addf %3, %5 : vector<8x128xf32>
    %cst_5 = arith.constant 0.000000e+00 : f32
    %7 = vector.broadcast %cst_5 : f32 to vector<8x128xf32>
    %8 = arith.cmpf oge, %6, %7 : vector<8x128xf32>
    %cst_6 = arith.constant 0.00999999977 : f32
    %9 = vector.broadcast %cst_6 : f32 to vector<8x128xf32>
    %10 = arith.mulf %9, %6 : vector<8x128xf32>
    %11 = arith.select %8, %6, %10 : vector<8x128xi1>, vector<8x128xf32>
    %12 = arith.truncf %11 : vector<8x128xf32> to vector<8x128xbf16>
    %c0_7 = arith.constant 0 : index
    %c0_8 = arith.constant 0 : index
    %13 = vector.load %arg3[%c0_7, %c0_8] : memref<128x256xbf16, #tpu.memory_space<vmem>>, vector<128x256xbf16>
    %cst_9 = arith.constant dense<0.000000e+00> : vector<8x256xf32>
    %14 = tpu.matmul %12, %13, %cst_9 {dimension_numbers = #tpu.dot_dimension_numbers<[1], [0], [0], [1], [0, 0, 1, 1], [], []>} : vector<8x128xbf16>, vector<128x256xbf16>, vector<8x256xf32> -> vector<8x256xf32>
    %c0_10 = arith.constant 0 : index
    %c128 = arith.constant 128 : index
    %15 = vector.load %arg9[%c0_10, %c128] : memref<1x6272xf32, #tpu.memory_space<vmem>>, vector<1x256xf32>
    %16 = vector.broadcast %15 : vector<1x256xf32> to vector<8x256xf32>
    %17 = arith.addf %14, %16 : vector<8x256xf32>
    %cst_11 = arith.constant 0.000000e+00 : f32
    %18 = vector.broadcast %cst_11 : f32 to vector<8x256xf32>
    %19 = arith.cmpf oge, %17, %18 : vector<8x256xf32>
    %cst_12 = arith.constant 0.00999999977 : f32
    %20 = vector.broadcast %cst_12 : f32 to vector<8x256xf32>
    %21 = arith.mulf %20, %17 : vector<8x256xf32>
    %22 = arith.select %19, %17, %21 : vector<8x256xi1>, vector<8x256xf32>
    %23 = arith.truncf %22 : vector<8x256xf32> to vector<8x256xbf16>
    %c0_13 = arith.constant 0 : index
    %c0_14 = arith.constant 0 : index
    %24 = vector.load %arg4[%c0_13, %c0_14] : memref<256x512xbf16, #tpu.memory_space<vmem>>, vector<256x512xbf16>
    %cst_15 = arith.constant dense<0.000000e+00> : vector<8x512xf32>
    %25 = tpu.matmul %23, %24, %cst_15 {dimension_numbers = #tpu.dot_dimension_numbers<[1], [0], [0], [1], [0, 0, 1, 1], [], []>} : vector<8x256xbf16>, vector<256x512xbf16>, vector<8x512xf32> -> vector<8x512xf32>
    %c0_16 = arith.constant 0 : index
    %c384 = arith.constant 384 : index
    %26 = vector.load %arg9[%c0_16, %c384] : memref<1x6272xf32, #tpu.memory_space<vmem>>, vector<1x512xf32>
    %27 = vector.broadcast %26 : vector<1x512xf32> to vector<8x512xf32>
    %28 = arith.addf %25, %27 : vector<8x512xf32>
    %cst_17 = arith.constant 0.000000e+00 : f32
    %29 = vector.broadcast %cst_17 : f32 to vector<8x512xf32>
    %30 = arith.cmpf oge, %28, %29 : vector<8x512xf32>
    %cst_18 = arith.constant 0.00999999977 : f32
    %31 = vector.broadcast %cst_18 : f32 to vector<8x512xf32>
    %32 = arith.mulf %31, %28 : vector<8x512xf32>
    %33 = arith.select %30, %28, %32 : vector<8x512xi1>, vector<8x512xf32>
    %34 = arith.truncf %33 : vector<8x512xf32> to vector<8x512xbf16>
    %c0_19 = arith.constant 0 : index
    %c0_20 = arith.constant 0 : index
    %35 = vector.load %arg5[%c0_19, %c0_20] : memref<512x4096xbf16, #tpu.memory_space<vmem>>, vector<512x4096xbf16>
    %cst_21 = arith.constant dense<0.000000e+00> : vector<8x4096xf32>
    %36 = tpu.matmul %34, %35, %cst_21 {dimension_numbers = #tpu.dot_dimension_numbers<[1], [0], [0], [1], [0, 0, 1, 1], [], []>} : vector<8x512xbf16>, vector<512x4096xbf16>, vector<8x4096xf32> -> vector<8x4096xf32>
    %c0_22 = arith.constant 0 : index
    %c896 = arith.constant 896 : index
    %37 = vector.load %arg9[%c0_22, %c896] : memref<1x6272xf32, #tpu.memory_space<vmem>>, vector<1x4096xf32>
    %38 = vector.broadcast %37 : vector<1x4096xf32> to vector<8x4096xf32>
    %39 = arith.addf %36, %38 : vector<8x4096xf32>
    %cst_23 = arith.constant 0.000000e+00 : f32
    %40 = vector.broadcast %cst_23 : f32 to vector<8x4096xf32>
    %41 = arith.maximumf %39, %40 : vector<8x4096xf32>
    %cst_24 = arith.constant 0.899999976 : f32
    %42 = vector.broadcast %cst_24 : f32 to vector<8x4096xf32>
    %43 = arith.divf %39, %42 : vector<8x4096xf32>
    %44 = math.exp %43 : vector<8x4096xf32>
    %cst_25 = arith.constant 1.000000e+00 : f32
    %45 = vector.broadcast %cst_25 : f32 to vector<8x4096xf32>
    %46 = arith.subf %44, %45 : vector<8x4096xf32>
    %cst_26 = arith.constant 0.899999976 : f32
    %47 = vector.broadcast %cst_26 : f32 to vector<8x4096xf32>
    %48 = arith.mulf %47, %46 : vector<8x4096xf32>
    %cst_27 = arith.constant 0.000000e+00 : f32
    %49 = vector.broadcast %cst_27 : f32 to vector<8x4096xf32>
    %50 = arith.minimumf %49, %48 : vector<8x4096xf32>
    %51 = arith.addf %41, %50 : vector<8x4096xf32>
    %52 = arith.truncf %51 : vector<8x4096xf32> to vector<8x4096xbf16>
    %c0_28 = arith.constant 0 : index
    %c0_29 = arith.constant 0 : index
    %53 = vector.load %arg6[%c0_28, %c0_29] : memref<4096x128xbf16, #tpu.memory_space<vmem>>, vector<4096x128xbf16>
    %cst_30 = arith.constant dense<0.000000e+00> : vector<8x128xf32>
    %54 = tpu.matmul %52, %53, %cst_30 {dimension_numbers = #tpu.dot_dimension_numbers<[1], [0], [0], [1], [0, 0, 1, 1], [], []>} : vector<8x4096xbf16>, vector<4096x128xbf16>, vector<8x128xf32> -> vector<8x128xf32>
    %c0_31 = arith.constant 0 : index
    %c4992 = arith.constant 4992 : index
    %55 = vector.load %arg9[%c0_31, %c4992] : memref<1x6272xf32, #tpu.memory_space<vmem>>, vector<1x128xf32>
    %56 = vector.broadcast %55 : vector<1x128xf32> to vector<8x128xf32>
    %57 = arith.addf %54, %56 : vector<8x128xf32>
    %cst_32 = arith.constant 0.000000e+00 : f32
    %58 = vector.broadcast %cst_32 : f32 to vector<8x128xf32>
    %59 = arith.maximumf %57, %58 : vector<8x128xf32>
    %cst_33 = arith.constant 1.000000e+00 : f32
    %60 = vector.broadcast %cst_33 : f32 to vector<8x128xf32>
    %61 = arith.divf %57, %60 : vector<8x128xf32>
    %62 = math.exp %61 : vector<8x128xf32>
    %cst_34 = arith.constant 1.000000e+00 : f32
    %63 = vector.broadcast %cst_34 : f32 to vector<8x128xf32>
    %64 = arith.subf %62, %63 : vector<8x128xf32>
    %cst_35 = arith.constant 1.000000e+00 : f32
    %65 = vector.broadcast %cst_35 : f32 to vector<8x128xf32>
    %66 = arith.mulf %65, %64 : vector<8x128xf32>
    %cst_36 = arith.constant 0.000000e+00 : f32
    %67 = vector.broadcast %cst_36 : f32 to vector<8x128xf32>
    %68 = arith.minimumf %67, %66 : vector<8x128xf32>
    %69 = arith.addf %59, %68 : vector<8x128xf32>
    %70 = arith.truncf %69 : vector<8x128xf32> to vector<8x128xbf16>
    %c0_37 = arith.constant 0 : index
    %c0_38 = arith.constant 0 : index
    %71 = vector.load %arg7[%c0_37, %c0_38] : memref<128x384xbf16, #tpu.memory_space<vmem>>, vector<128x384xbf16>
    %cst_39 = arith.constant dense<0.000000e+00> : vector<8x384xf32>
    %72 = tpu.matmul %70, %71, %cst_39 {dimension_numbers = #tpu.dot_dimension_numbers<[1], [0], [0], [1], [0, 0, 1, 1], [], []>} : vector<8x128xbf16>, vector<128x384xbf16>, vector<8x384xf32> -> vector<8x384xf32>
    %c0_40 = arith.constant 0 : index
    %c5120 = arith.constant 5120 : index
    %73 = vector.load %arg9[%c0_40, %c5120] : memref<1x6272xf32, #tpu.memory_space<vmem>>, vector<1x384xf32>
    %74 = vector.broadcast %73 : vector<1x384xf32> to vector<8x384xf32>
    %75 = arith.addf %72, %74 : vector<8x384xf32>
    %76 = arith.truncf %75 : vector<8x384xf32> to vector<8x384xbf16>
    %c0_41 = arith.constant 0 : index
    %c0_42 = arith.constant 0 : index
    %77 = vector.load %arg8[%c0_41, %c0_42] : memref<384x768xbf16, #tpu.memory_space<vmem>>, vector<384x768xbf16>
    %cst_43 = arith.constant dense<0.000000e+00> : vector<8x768xf32>
    %78 = tpu.matmul %76, %77, %cst_43 {dimension_numbers = #tpu.dot_dimension_numbers<[1], [0], [0], [1], [0, 0, 1, 1], [], []>} : vector<8x384xbf16>, vector<384x768xbf16>, vector<8x768xf32> -> vector<8x768xf32>
    %c0_44 = arith.constant 0 : index
    %c5504 = arith.constant 5504 : index
    %79 = vector.load %arg9[%c0_44, %c5504] : memref<1x6272xf32, #tpu.memory_space<vmem>>, vector<1x768xf32>
    %80 = vector.broadcast %79 : vector<1x768xf32> to vector<8x768xf32>
    %81 = arith.addf %78, %80 : vector<8x768xf32>
    %82 = math.tanh %81 : vector<8x768xf32>
    %c0_45 = arith.constant 0 : index
    %c0_46 = arith.constant 0 : index
    %83 = vector.load %arg10[%c0_45, %c0_46] : memref<8x768xf32, #tpu.memory_space<vmem>>, vector<8x768xf32>
    tpu.vector_store %arg10[%c0_45, %c0_46], %82 {strides = array<i32>} : memref<8x768xf32, #tpu.memory_space<vmem>>, vector<8x768xf32>,
    return
  }
  func.func @transform_0(%arg0: i32) -> (i32, i32) {
    %c0_i32 = arith.constant 0 : i32
    %c0_i32_0 = arith.constant 0 : i32
    return %arg0, %c0_i32 : i32, i32
  }
  func.func @transform_1(%arg0: i32) -> (i32, i32) {
    %c0_i32 = arith.constant 0 : i32
    %c0_i32_0 = arith.constant 0 : i32
    %c0_i32_1 = arith.constant 0 : i32
    return %c0_i32, %c0_i32_0 : i32, i32
  }
  func.func @transform_2(%arg0: i32) -> (i32, i32) {
    %c0_i32 = arith.constant 0 : i32
    %c0_i32_0 = arith.constant 0 : i32
    %c0_i32_1 = arith.constant 0 : i32
    return %c0_i32, %c0_i32_0 : i32, i32
  }
  func.func @transform_3(%arg0: i32) -> (i32, i32) {
    %c0_i32 = arith.constant 0 : i32
    %c0_i32_0 = arith.constant 0 : i32
    %c0_i32_1 = arith.constant 0 : i32
    return %c0_i32, %c0_i32_0 : i32, i32
  }
  func.func @transform_4(%arg0: i32) -> (i32, i32) {
    %c0_i32 = arith.constant 0 : i32
    %c0_i32_0 = arith.constant 0 : i32
    %c0_i32_1 = arith.constant 0 : i32
    return %c0_i32, %c0_i32_0 : i32, i32
  }
  func.func @transform_5(%arg0: i32) -> (i32, i32) {
    %c0_i32 = arith.constant 0 : i32
    %c0_i32_0 = arith.constant 0 : i32
    %c0_i32_1 = arith.constant 0 : i32
    return %c0_i32, %c0_i32_0 : i32, i32
  }
  func.func @transform_6(%arg0: i32) -> (i32, i32) {
    %c0_i32 = arith.constant 0 : i32
    %c0_i32_0 = arith.constant 0 : i32
    %c0_i32_1 = arith.constant 0 : i32
    return %c0_i32, %c0_i32_0 : i32, i32
  }
  func.func @transform_7(%arg0: i32) -> (i32, i32) {
    %c0_i32 = arith.constant 0 : i32
    %c0_i32_0 = arith.constant 0 : i32
    %c0_i32_1 = arith.constant 0 : i32
    return %c0_i32, %c0_i32_0 : i32, i32
  }
  func.func @transform_8(%arg0: i32) -> (i32, i32) {
    %c0_i32 = arith.constant 0 : i32
    %c0_i32_0 = arith.constant 0 : i32
    %c0_i32_1 = arith.constant 0 : i32
    return %c0_i32, %c0_i32_0 : i32, i32
  }
  func.func @transform_9(%arg0: i32) -> (i32, i32) {
    %c0_i32 = arith.constant 0 : i32
    %c0_i32_0 = arith.constant 0 : i32
    return %arg0, %c0_i32 : i32, i32
  }
}

</mosaic_0001>

<llo_original>
// kernel: tpu_custom_call.1
$region0: #{tpu_custom_call.1}
  #allocation0 [shape = 'u32[]', space=smem, size = 0x4, offset = 0x4, fixed_abs, tag = 'smem constant byte address 0x4 - core index']
  #allocation1 [shape = 'u32[144,128]{1,0:T(1,128)}', space=vmem, size = 0x12000, scoped, tag = 'internal scratch']
  %s0 = inlined_call_operand.hbm [shape: f32[8,32], index: 0, kind: input, shape index: {}]
  %s1 = inlined_call_operand.hbm [shape: bf16[32,128], index: 1, kind: input, shape index: {}]
  %s2 = inlined_call_operand.hbm [shape: bf16[128,256], index: 2, kind: input, shape index: {}]
  %s3 = inlined_call_operand.hbm [shape: bf16[256,512], index: 3, kind: input, shape index: {}]
  %s4 = inlined_call_operand.hbm [shape: bf16[512,4096], index: 4, kind: input, shape index: {}]
  %s5 = inlined_call_operand.hbm [shape: bf16[4096,128], index: 5, kind: input, shape index: {}]
  %s6 = inlined_call_operand.hbm [shape: bf16[128,384], index: 6, kind: input, shape index: {}]
  %s7 = inlined_call_operand.hbm [shape: bf16[384,768], index: 7, kind: input, shape index: {}]
  %s8 = inlined_call_operand.hbm [shape: f32[1,6272], index: 8, kind: input, shape index: {}]
  %s9 = inlined_call_operand.hbm [shape: f32[8,768], index: 9, kind: output, shape index: {}]
  %s10 = sld [smem:[#allocation0]]
  $region82: #{tpu_custom_call.1} parent=0
    _
  %s12 = ssub.s32 1, %s10
  %s13 = scalar_select 0, %s12, %s10
  $region1: #{tpu_custom_call.1} parent=0
    #allocation2 [shape = 'u8[4096]{0}', space=vmem, size = 0x1000, scoped, tag = 'input window, operand 0, single buffered']
    #allocation3 [shape = 's32[1]{0}', space=sflag, size = 0x4, scoped, tag = 'scoped memory for tpu_custom_call.1']
    #allocation4 [shape = 's32[1]{0}', space=sflag, size = 0x4, scoped, tag = 'scoped memory for tpu_custom_call.1']
    #allocation5 [shape = 'u8[8192]{0}', space=vmem, size = 0x2000, scoped, tag = 'input window, operand 1, single buffered']
    #allocation6 [shape = 's32[1]{0}', space=sflag, size = 0x4, scoped, tag = 'scoped memory for tpu_custom_call.1']
    #allocation7 [shape = 'u8[65536]{0}', space=vmem, size = 0x10000, scoped, tag = 'input window, operand 2, single buffered']
    #allocation8 [shape = 'u8[262144]{0}', space=vmem, size = 0x40000, scoped, tag = 'input window, operand 3, single buffered']
    #allocation9 [shape = 's32[1]{0}', space=sflag, size = 0x4, scoped, tag = 'scoped memory for tpu_custom_call.1']
    #allocation10 [shape = 'u8[4194304]{0}', space=vmem, size = 0x400000, scoped, tag = 'input window, operand 4, single buffered']
    #allocation11 [shape = 'u8[1048576]{0}', space=vmem, size = 0x100000, scoped, tag = 'input window, operand 5, single buffered']
    #allocation12 [shape = 's32[1]{0}', space=sflag, size = 0x4, scoped, tag = 'scoped memory for tpu_custom_call.1']
    #allocation13 [shape = 'u8[98304]{0}', space=vmem, size = 0x18000, scoped, tag = 'input window, operand 6, single buffered']
    #allocation14 [shape = 'u8[589824]{0}', space=vmem, size = 0x90000, scoped, tag = 'input window, operand 7, single buffered']
    #allocation15 [shape = 's32[1]{0}', space=sflag, size = 0x4, scoped, tag = 'scoped memory for tpu_custom_call.1']
    #allocation16 [shape = 'u8[25088]{0}', space=vmem, size = 0x6400, scoped, tag = 'input window, operand 8, single buffered']
    #allocation17 [shape = 'u8[24576]{0}', space=vmem, size = 0x6000, scoped, tag = 'output window, operand 0, single buffered']
    %14 = vsyncpa [#allocation3], 0
    %15 = vsyncpa [#allocation6], 0
    %16 = vsyncpa [#allocation9], 0
    %17 = vsyncpa [#allocation12], 0
    %18 = vsyncpa [#allocation15], 0
    %19 = vsyncpa [#allocation4], 0
    // Predicated region
    $region2: #{tpu_custom_call.1} parent=1 // pred_check
      _
    $region3: #{tpu_custom_call.1} parent=1 // pred_check_branch
      %21 = sbr.rel (0) target = $region5
    $region4: #{tpu_custom_call.1} parent=1 // pred_region
      %s23 = ssub.s32 128, 128
      %24 = vsyncadd [#allocation3], %s23
      %s26 = sshll.u32 [#allocation2], 4
      %s27 = int_to_ptr.vmem [resolvable:$true] %s26
      %29 = dma.hbm_to_vmem [thread:$0]  %s0, 128, %s27, [#allocation3]
    $region5: #{tpu_custom_call.1} parent=1 // pred_fallthru
      _
    // Predicated region
    $region6: #{tpu_custom_call.1} parent=1 // pred_check
      _
    $region7: #{tpu_custom_call.1} parent=1 // pred_check_branch
      %31 = sbr.rel (0) target = $region9
    $region8: #{tpu_custom_call.1} parent=1 // pred_region
      %s33 = ssub.s32 256, 256
      %34 = vsyncadd [#allocation6], %s33
      %s35 = sshll.u32 [#allocation5], 4
      %s36 = int_to_ptr.vmem [resolvable:$true] %s35
      %41 = dma.hbm_to_vmem [thread:$0]  %s1, 256, %s36, [#allocation6], 64, 64, 4
    $region9: #{tpu_custom_call.1} parent=1 // pred_fallthru
      _
    // Predicated region
    $region10: #{tpu_custom_call.1} parent=1 // pred_check
      _
    $region11: #{tpu_custom_call.1} parent=1 // pred_check_branch
      %43 = sbr.rel (0) target = $region13
    $region12: #{tpu_custom_call.1} parent=1 // pred_region
      %s45 = ssub.s32 2048, 2048
      %46 = vsyncadd [#allocation6], %s45
      %s47 = sshll.u32 [#allocation7], 4
      %s48 = int_to_ptr.vmem [resolvable:$true] %s47
      %53 = dma.hbm_to_vmem [thread:$0]  %s2, 2048, %s48, [#allocation6], 128, 128, 8
    $region13: #{tpu_custom_call.1} parent=1 // pred_fallthru
      _
    // Predicated region
    $region14: #{tpu_custom_call.1} parent=1 // pred_check
      _
    $region15: #{tpu_custom_call.1} parent=1 // pred_check_branch
      %55 = sbr.rel (0) target = $region17
    $region16: #{tpu_custom_call.1} parent=1 // pred_region
      %s57 = ssub.s32 8192, 8192
      %58 = vsyncadd [#allocation9], %s57
      %s59 = sshll.u32 [#allocation8], 4
      %s60 = int_to_ptr.vmem [resolvable:$true] %s59
      %65 = dma.hbm_to_vmem [thread:$0]  %s3, 8192, %s60, [#allocation9], 256, 256, 16
    $region17: #{tpu_custom_call.1} parent=1 // pred_fallthru
      _
    // Predicated region
    $region18: #{tpu_custom_call.1} parent=1 // pred_check
      _
    $region19: #{tpu_custom_call.1} parent=1 // pred_check_branch
      %67 = sbr.rel (0) target = $region21
    $region20: #{tpu_custom_call.1} parent=1 // pred_region
      %s69 = ssub.s32 131072, 131072
      %70 = vsyncadd [#allocation9], %s69
      %s71 = sshll.u32 [#allocation10], 4
      %s72 = int_to_ptr.vmem [resolvable:$true] %s71
      %77 = dma.hbm_to_vmem [thread:$0]  %s4, 131072, %s72, [#allocation9], 2048, 2048, 128
    $region21: #{tpu_custom_call.1} parent=1 // pred_fallthru
      _
    // Predicated region
    $region22: #{tpu_custom_call.1} parent=1 // pred_check
      _
    $region23: #{tpu_custom_call.1} parent=1 // pred_check_branch
      %79 = sbr.rel (0) target = $region25
    $region24: #{tpu_custom_call.1} parent=1 // pred_region
      %s81 = ssub.s32 32768, 32768
      %82 = vsyncadd [#allocation12], %s81
      %s83 = sshll.u32 [#allocation11], 4
      %s84 = int_to_ptr.vmem [resolvable:$true] %s83
      %89 = dma.hbm_to_vmem [thread:$0]  %s5, 32768, %s84, [#allocation12], 64, 64, 4
    $region25: #{tpu_custom_call.1} parent=1 // pred_fallthru
      _
    // Predicated region
    $region26: #{tpu_custom_call.1} parent=1 // pred_check
      _
    $region27: #{tpu_custom_call.1} parent=1 // pred_check_branch
      %91 = sbr.rel (0) target = $region29
    $region28: #{tpu_custom_call.1} parent=1 // pred_region
      %s93 = ssub.s32 3072, 3072
      %94 = vsyncadd [#allocation12], %s93
      %s95 = sshll.u32 [#allocation13], 4
      %s96 = int_to_ptr.vmem [resolvable:$true] %s95
      %101 = dma.hbm_to_vmem [thread:$0]  %s6, 3072, %s96, [#allocation12], 192, 192, 12
    $region29: #{tpu_custom_call.1} parent=1 // pred_fallthru
      _
    // Predicated region
    $region30: #{tpu_custom_call.1} parent=1 // pred_check
      _
    $region31: #{tpu_custom_call.1} parent=1 // pred_check_branch
      %103 = sbr.rel (0) target = $region33
    $region32: #{tpu_custom_call.1} parent=1 // pred_region
      %s105 = ssub.s32 18432, 18432
      %106 = vsyncadd [#allocation15], %s105
      %s107 = sshll.u32 [#allocation14], 4
      %s108 = int_to_ptr.vmem [resolvable:$true] %s107
      %113 = dma.hbm_to_vmem [thread:$0]  %s7, 18432, %s108, [#allocation15], 384, 384, 24
    $region33: #{tpu_custom_call.1} parent=1 // pred_fallthru
      _
    // Predicated region
    $region34: #{tpu_custom_call.1} parent=1 // pred_check
      _
    $region35: #{tpu_custom_call.1} parent=1 // pred_check_branch
      %115 = sbr.rel (0) target = $region37
    $region36: #{tpu_custom_call.1} parent=1 // pred_region
      %s117 = ssub.s32 784, 784
      %118 = vsyncadd [#allocation15], %s117
      %s120 = sshll.u32 [#allocation16], 4
      %s121 = int_to_ptr.vmem [resolvable:$true] %s120
      %123 = dma.hbm_to_vmem [thread:$0]  %s8, 784, %s121, [#allocation15]
    $region37: #{tpu_custom_call.1} parent=1 // pred_fallthru
      _
    // Predicated region
    $region38: #{tpu_custom_call.1} parent=1 // pred_check
      _
    $region39: #{tpu_custom_call.1} parent=1 // pred_check_branch
      %125 = sbr.rel (0) target = $region41
    $region40: #{tpu_custom_call.1} parent=1 // pred_region
      %126 = dma.done [#allocation3], 128
    $region41: #{tpu_custom_call.1} parent=1 // pred_fallthru
      _
    // Predicated region
    $region42: #{tpu_custom_call.1} parent=1 // pred_check
      _
    $region43: #{tpu_custom_call.1} parent=1 // pred_check_branch
      %128 = sbr.rel (0) target = $region45
    $region44: #{tpu_custom_call.1} parent=1 // pred_region
      %129 = dma.done [#allocation6], 256
    $region45: #{tpu_custom_call.1} parent=1 // pred_fallthru
      _
    // Predicated region
    $region46: #{tpu_custom_call.1} parent=1 // pred_check
      _
    $region47: #{tpu_custom_call.1} parent=1 // pred_check_branch
      %131 = sbr.rel (0) target = $region49
    $region48: #{tpu_custom_call.1} parent=1 // pred_region
      %132 = dma.done [#allocation6], 2048
    $region49: #{tpu_custom_call.1} parent=1 // pred_fallthru
      _
    // Predicated region
    $region50: #{tpu_custom_call.1} parent=1 // pred_check
      _
    $region51: #{tpu_custom_call.1} parent=1 // pred_check_branch
      %134 = sbr.rel (0) target = $region53
    $region52: #{tpu_custom_call.1} parent=1 // pred_region
      %135 = dma.done [#allocation9], 8192
    $region53: #{tpu_custom_call.1} parent=1 // pred_fallthru
      _
    // Predicated region
    $region54: #{tpu_custom_call.1} parent=1 // pred_check
      _
    $region55: #{tpu_custom_call.1} parent=1 // pred_check_branch
      %137 = sbr.rel (0) target = $region57
    $region56: #{tpu_custom_call.1} parent=1 // pred_region
      %138 = dma.done [#allocation9], 131072
    $region57: #{tpu_custom_call.1} parent=1 // pred_fallthru
      _
    // Predicated region
    $region58: #{tpu_custom_call.1} parent=1 // pred_check
      _
    $region59: #{tpu_custom_call.1} parent=1 // pred_check_branch
      %140 = sbr.rel (0) target = $region61
    $region60: #{tpu_custom_call.1} parent=1 // pred_region
      %141 = dma.done [#allocation12], 32768
    $region61: #{tpu_custom_call.1} parent=1 // pred_fallthru
      _
    // Predicated region
    $region62: #{tpu_custom_call.1} parent=1 // pred_check
      _
    $region63: #{tpu_custom_call.1} parent=1 // pred_check_branch
      %143 = sbr.rel (0) target = $region65
    $region64: #{tpu_custom_call.1} parent=1 // pred_region
      %144 = dma.done [#allocation12], 3072
    $region65: #{tpu_custom_call.1} parent=1 // pred_fallthru
      _
    // Predicated region
    $region66: #{tpu_custom_call.1} parent=1 // pred_check
      _
    $region67: #{tpu_custom_call.1} parent=1 // pred_check_branch
      %146 = sbr.rel (0) target = $region69
    $region68: #{tpu_custom_call.1} parent=1 // pred_region
      %147 = dma.done [#allocation15], 18432
    $region69: #{tpu_custom_call.1} parent=1 // pred_fallthru
      _
    // Predicated region
    $region70: #{tpu_custom_call.1} parent=1 // pred_check
      _
    $region71: #{tpu_custom_call.1} parent=1 // pred_check_branch
      %149 = sbr.rel (0) target = $region73
    $region72: #{tpu_custom_call.1} parent=1 // pred_region
      %150 = dma.done [#allocation15], 784
    $region73: #{tpu_custom_call.1} parent=1 // pred_fallthru
      _
    %v152 = vld [vmem:[#allocation2] sm:$0xff]
    %v153 = vpack.c.bf16 %v152, %v152
    %v154 = vld [vmem:[#allocation5] sm:$0xf]
    %v155 = vld [vmem:[#allocation5 + $0x4] sm:$0xf]
    %v156 = vld [vmem:[#allocation5 + $0x8] sm:$0xf]
    %v157 = vld [vmem:[#allocation5 + $0xc] sm:$0xf]
    %v158 = vld [vmem:[#allocation16] sm:$0x1]
    %v160 = vlaneseq
    %v161 = vshrl.u32 %v160, 7
    %v162 = vsub.s32 0, %v161
    %v163 = vrot.slane %v158, %v162
    %v169 = vunpack.c.l.b16 %v154
    %v170 = vunpack.c.l.b16 %v155
    %v171 = vunpack.c.l.b16 %v156
    %v172 = vunpack.c.l.b16 %v157
    %v173 = vpack.c.b16 %v170, %v169
    %v174 = vpack.c.b16 %v172, %v171
    %vm177 = vcmask 261120
    %v179 = vsel %vm177, %v153, 0
    %181 = vmatprep.subr.bf16.mxu0 0
    %182 = vmatpush1.bf16.msra.mxu0 %v173
    %183 = vmatprep.subr.bf16.mxu0 0
    %184 = vmatpush1.bf16.msra.mxu0 %v174
    %185 = vmatprep.subr.bf16.mxu0 0
    %186 = vmatpush1.bf16.msra.mxu0 0
    %187 = vmatprep.subr.bf16.mxu0 0
    %188 = vmatpush1.bf16.msra.mxu0 0
    %189 = vmatprep.subr.bf16.mxu0 0
    %190 = vmatpush1.bf16.msra.mxu0 0
    %191 = vmatprep.subr.bf16.mxu0 0
    %192 = vmatpush1.bf16.msra.mxu0 0
    %193 = vmatprep.subr.bf16.mxu0 0
    %194 = vmatpush1.bf16.msra.mxu0 0
    %195 = vmatprep.subr.bf16.mxu0 0
    %196 = vmatpush1.bf16.msra.mxu0 0
    %197 = vmatprep.subr.bf16.mxu0 0
    %198 = vmatpush1.bf16.msra.mxu0 0
    %199 = vmatprep.subr.bf16.mxu0 0
    %200 = vmatpush1.bf16.msra.mxu0 0
    %201 = vmatprep.subr.bf16.mxu0 0
    %202 = vmatpush1.bf16.msra.mxu0 0
    %203 = vmatprep.subr.bf16.mxu0 0
    %204 = vmatpush1.bf16.msra.mxu0 0
    %205 = vmatprep.subr.bf16.mxu0 0
    %206 = vmatpush1.bf16.msra.mxu0 0
    %207 = vmatprep.subr.bf16.mxu0 0
    %208 = vmatpush1.bf16.msra.mxu0 0
    %209 = vmatprep.subr.bf16.mxu0 0
    %210 = vmatpush1.bf16.msra.mxu0 0
    %211 = vmatprep.subr.bf16.mxu0 0
    %212 = vmatpush1.bf16.msra.mxu0 0
    %213 = vmatprep.mubr.bf16.mxu0 0
    %214 = vmatmul.mubr.bf16.gmra.mrb[0].mxu0 %v179
    %v215 = vpop.f32.mrb[0].mxu0
    %v216 = vadd.f32 %v163, %v215
    %v217 = vpop.f32.mrb[0].mxu0
    %v218 = vpop.f32.mrb[0].mxu0
    %v219 = vpop.f32.mrb[0].mxu0
    %220 = vdwg.mxu0
    %vm221 = vcmp.ge.f32.partialorder %v216, 0.0
    %v222 = vmul.f32 %v216, 0.01
    %v223 = vsel %vm221, %v216, %v222
    %v224 = vpack.c.bf16 %v223, %v223
    %v225 = vld [vmem:[#allocation7] sm:$0xff]
    %v226 = vld [vmem:[#allocation7 + $0x8] sm:$0xff]
    %v227 = vld [vmem:[#allocation7 + $0x10] sm:$0xff]
    %v228 = vld [vmem:[#allocation7 + $0x18] sm:$0xff]
    %v229 = vld [vmem:[#allocation7 + $0x20] sm:$0xff]
    %v230 = vld [vmem:[#allocation7 + $0x28] sm:$0xff]
    %v231 = vld [vmem:[#allocation7 + $0x30] sm:$0xff]
    %v232 = vld [vmem:[#allocation7 + $0x38] sm:$0xff]
    %v233 = vld [vmem:[#allocation7 + $0x40] sm:$0xff]
    %v234 = vld [vmem:[#allocation7 + $0x48] sm:$0xff]
    %v235 = vld [vmem:[#allocation7 + $0x50] sm:$0xff]
    %v236 = vld [vmem:[#allocation7 + $0x58] sm:$0xff]
    %v237 = vld [vmem:[#allocation7 + $0x60] sm:$0xff]
    %v238 = vld [vmem:[#allocation7 + $0x68] sm:$0xff]
    %v239 = vld [vmem:[#allocation7 + $0x70] sm:$0xff]
    %v240 = vld [vmem:[#allocation7 + $0x78] sm:$0xff]
    %v241 = vld [vmem:[#allocation16 + $0x1] sm:$0x3]
    %v243 = vlaneseq
    %v244 = vshrl.u32 %v243, 7
    %v245 = vsub.s32 0, %v244
    %v246 = vrot.slane %v241, %v245
    %v247 = vlaneseq
    %v248 = vshrl.u32 %v247, 7
    %v249 = vsub.s32 1, %v248
    %v250 = vrot.slane %v241, %v249
    %v269 = vunpack.c.l.b16 %v225
    %v270 = vunpack.c.h.b16 %v225
    %v271 = vunpack.c.l.b16 %v226
    %v272 = vunpack.c.h.b16 %v226
    %v273 = vunpack.c.l.b16 %v227
    %v274 = vunpack.c.h.b16 %v227
    %v275 = vunpack.c.l.b16 %v228
    %v276 = vunpack.c.h.b16 %v228
    %v277 = vunpack.c.l.b16 %v229
    %v278 = vunpack.c.h.b16 %v229
    %v279 = vunpack.c.l.b16 %v230
    %v280 = vunpack.c.h.b16 %v230
    %v281 = vunpack.c.l.b16 %v231
    %v282 = vunpack.c.h.b16 %v231
    %v283 = vunpack.c.l.b16 %v232
    %v284 = vunpack.c.h.b16 %v232
    %v285 = vunpack.c.l.b16 %v233
    %v286 = vunpack.c.h.b16 %v233
    %v287 = vunpack.c.l.b16 %v234
    %v288 = vunpack.c.h.b16 %v234
    %v289 = vunpack.c.l.b16 %v235
    %v290 = vunpack.c.h.b16 %v235
    %v291 = vunpack.c.l.b16 %v236
    %v292 = vunpack.c.h.b16 %v236
    %v293 = vunpack.c.l.b16 %v237
    %v294 = vunpack.c.h.b16 %v237
    %v295 = vunpack.c.l.b16 %v238
    %v296 = vunpack.c.h.b16 %v238
    %v297 = vunpack.c.l.b16 %v239
    %v298 = vunpack.c.h.b16 %v239
    %v299 = vunpack.c.l.b16 %v240
    %v300 = vunpack.c.h.b16 %v240
    %v301 = vpack.c.b16 %v271, %v269
    %v302 = vpack.c.b16 %v272, %v270
    %v303 = vpack.c.b16 %v275, %v273
    %v304 = vpack.c.b16 %v276, %v274
    %v305 = vpack.c.b16 %v279, %v277
    %v306 = vpack.c.b16 %v280, %v278
    %v307 = vpack.c.b16 %v283, %v281
    %v308 = vpack.c.b16 %v284, %v282
    %v309 = vpack.c.b16 %v287, %v285
    %v310 = vpack.c.b16 %v288, %v286
    %v311 = vpack.c.b16 %v291, %v289
    %v312 = vpack.c.b16 %v292, %v290
    %v313 = vpack.c.b16 %v295, %v293
    %v314 = vpack.c.b16 %v296, %v294
    %v315 = vpack.c.b16 %v299, %v297
    %v316 = vpack.c.b16 %v300, %v298
    %333 = vmatprep.subr.bf16.mxu0 %v302
    %334 = vmatpush1.bf16.msra.mxu0 %v301
    %335 = vmatprep.subr.bf16.mxu0 %v304
    %336 = vmatpush1.bf16.msra.mxu0 %v303
    %337 = vmatprep.subr.bf16.mxu0 %v306
    %338 = vmatpush1.bf16.msra.mxu0 %v305
    %339 = vmatprep.subr.bf16.mxu0 %v308
    %340 = vmatpush1.bf16.msra.mxu0 %v307
    %341 = vmatprep.subr.bf16.mxu0 %v310
    %342 = vmatpush1.bf16.msra.mxu0 %v309
    %343 = vmatprep.subr.bf16.mxu0 %v312
    %344 = vmatpush1.bf16.msra.mxu0 %v311
    %345 = vmatprep.subr.bf16.mxu0 %v314
    %346 = vmatpush1.bf16.msra.mxu0 %v313
    %347 = vmatprep.subr.bf16.mxu0 %v316
    %348 = vmatpush1.bf16.msra.mxu0 %v315
    %349 = vmatprep.subr.bf16.mxu0 0
    %350 = vmatpush1.bf16.msra.mxu0 0
    %351 = vmatprep.subr.bf16.mxu0 0
    %352 = vmatpush1.bf16.msra.mxu0 0
    %353 = vmatprep.subr.bf16.mxu0 0
    %354 = vmatpush1.bf16.msra.mxu0 0
    %355 = vmatprep.subr.bf16.mxu0 0
    %356 = vmatpush1.bf16.msra.mxu0 0
    %357 = vmatprep.subr.bf16.mxu0 0
    %358 = vmatpush1.bf16.msra.mxu0 0
    %359 = vmatprep.subr.bf16.mxu0 0
    %360 = vmatpush1.bf16.msra.mxu0 0
    %361 = vmatprep.subr.bf16.mxu0 0
    %362 = vmatpush1.bf16.msra.mxu0 0
    %363 = vmatprep.subr.bf16.mxu0 0
    %364 = vmatpush1.bf16.msra.mxu0 0
    %365 = vmatprep.mubr.bf16.mxu0 0
    %366 = vmatmul.mubr.bf16.gmra.mrb[0].mxu0 %v224
    %v367 = vpop.f32.mrb[0].mxu0
    %v368 = vadd.f32 %v246, %v367
    %v369 = vpop.f32.mrb[0].mxu0
    %v370 = vadd.f32 %v250, %v369
    %v371 = vpop.f32.mrb[0].mxu0
    %v372 = vpop.f32.mrb[0].mxu0
    %373 = vdwg.mxu0
    %vm374 = vcmp.ge.f32.partialorder %v368, 0.0
    %vm375 = vcmp.ge.f32.partialorder %v370, 0.0
    %v376 = vmul.f32 %v368, 0.01
    %v377 = vmul.f32 %v370, 0.01
    %v378 = vsel %vm374, %v368, %v376
    %v379 = vsel %vm375, %v370, %v377
    %v380 = vpack.c.bf16 %v378, %v378
    %v381 = vpack.c.bf16 %v379, %v379
    %v382 = vld [vmem:[#allocation8] sm:$0xff]
    %v383 = vld [vmem:[#allocation8 + $0x8] sm:$0xff]
    %v384 = vld [vmem:[#allocation8 + $0x10] sm:$0xff]
    %v385 = vld [vmem:[#allocation8 + $0x18] sm:$0xff]
    %v386 = vld [vmem:[#allocation8 + $0x20] sm:$0xff]
    %v387 = vld [vmem:[#allocation8 + $0x28] sm:$0xff]
    %v388 = vld [vmem:[#allocation8 + $0x30] sm:$0xff]
    %v389 = vld [vmem:[#allocation8 + $0x38] sm:$0xff]
    %v390 = vld [vmem:[#allocation8 + $0x40] sm:$0xff]
    %v391 = vld [vmem:[#allocation8 + $0x48] sm:$0xff]
    %v392 = vld [vmem:[#allocation8 + $0x50] sm:$0xff]
    %v393 = vld [vmem:[#allocation8 + $0x58] sm:$0xff]
    %v394 = vld [vmem:[#allocation8 + $0x60] sm:$0xff]
    %v395 = vld [vmem:[#allocation8 + $0x68] sm:$0xff]
    %v396 = vld [vmem:[#allocation8 + $0x70] sm:$0xff]
    %v397 = vld [vmem:[#allocation8 + $0x78] sm:$0xff]
    %v398 = vld [vmem:[#allocation8 + $0x80] sm:$0xff]
    %v399 = vld [vmem:[#allocation8 + $0x88] sm:$0xff]
    %v400 = vld [vmem:[#allocation8 + $0x90] sm:$0xff]
    %v401 = vld [vmem:[#allocation8 + $0x98] sm:$0xff]
    %v402 = vld [vmem:[#allocation8 + $0xa0] sm:$0xff]
    %v403 = vld [vmem:[#allocation8 + $0xa8] sm:$0xff]
    %v404 = vld [vmem:[#allocation8 + $0xb0] sm:$0xff]
    %v405 = vld [vmem:[#allocation8 + $0xb8] sm:$0xff]
    %v406 = vld [vmem:[#allocation8 + $0xc0] sm:$0xff]
    %v407 = vld [vmem:[#allocation8 + $0xc8] sm:$0xff]
    %v408 = vld [vmem:[#allocation8 + $0xd0] sm:$0xff]
    %v409 = vld [vmem:[#allocation8 + $0xd8] sm:$0xff]
    %v410 = vld [vmem:[#allocation8 + $0xe0] sm:$0xff]
    %v411 = vld [vmem:[#allocation8 + $0xe8] sm:$0xff]
    %v412 = vld [vmem:[#allocation8 + $0xf0] sm:$0xff]
    %v413 = vld [vmem:[#allocation8 + $0xf8] sm:$0xff]
    %v414 = vld [vmem:[#allocation8 + $0x100] sm:$0xff]
    %v415 = vld [vmem:[#allocation8 + $0x108] sm:$0xff]
    %v416 = vld [vmem:[#allocation8 + $0x110] sm:$0xff]
    %v417 = vld [vmem:[#allocation8 + $0x118] sm:$0xff]
    %v418 = vld [vmem:[#allocation8 + $0x120] sm:$0xff]
    %v419 = vld [vmem:[#allocation8 + $0x128] sm:$0xff]
    %v420 = vld [vmem:[#allocation8 + $0x130] sm:$0xff]
    %v421 = vld [vmem:[#allocation8 + $0x138] sm:$0xff]
    %v422 = vld [vmem:[#allocation8 + $0x140] sm:$0xff]
    %v423 = vld [vmem:[#allocation8 + $0x148] sm:$0xff]
    %v424 = vld [vmem:[#allocation8 + $0x150] sm:$0xff]
    %v425 = vld [vmem:[#allocation8 + $0x158] sm:$0xff]
    %v426 = vld [vmem:[#allocation8 + $0x160] sm:$0xff]
    %v427 = vld [vmem:[#allocation8 + $0x168] sm:$0xff]
    %v428 = vld [vmem:[#allocation8 + $0x170] sm:$0xff]
    %v429 = vld [vmem:[#allocation8 + $0x178] sm:$0xff]
    %v430 = vld [vmem:[#allocation8 + $0x180] sm:$0xff]
    %v431 = vld [vmem:[#allocation8 + $0x188] sm:$0xff]
    %v432 = vld [vmem:[#allocation8 + $0x190] sm:$0xff]
    %v433 = vld [vmem:[#allocation8 + $0x198] sm:$0xff]
    %v434 = vld [vmem:[#allocation8 + $0x1a0] sm:$0xff]
    %v435 = vld [vmem:[#allocation8 + $0x1a8] sm:$0xff]
    %v436 = vld [vmem:[#allocation8 + $0x1b0] sm:$0xff]
    %v437 = vld [vmem:[#allocation8 + $0x1b8] sm:$0xff]
    %v438 = vld [vmem:[#allocation8 + $0x1c0] sm:$0xff]
    %v439 = vld [vmem:[#allocation8 + $0x1c8] sm:$0xff]
    %v440 = vld [vmem:[#allocation8 + $0x1d0] sm:$0xff]
    %v441 = vld [vmem:[#allocation8 + $0x1d8] sm:$0xff]
    %v442 = vld [vmem:[#allocation8 + $0x1e0] sm:$0xff]
    %v443 = vld [vmem:[#allocation8 + $0x1e8] sm:$0xff]
    %v444 = vld [vmem:[#allocation8 + $0x1f0] sm:$0xff]
    %v445 = vld [vmem:[#allocation8 + $0x1f8] sm:$0xff]
    %v446 = vld [vmem:[#allocation16 + $0x3] sm:$0xf]
    %v448 = vlaneseq
    %v449 = vshrl.u32 %v448, 7
    %v450 = vsub.s32 0, %v449
    %v451 = vrot.slane %v446, %v450
    %v452 = vlaneseq
    %v453 = vshrl.u32 %v452, 7
    %v454 = vsub.s32 1, %v453
    %v455 = vrot.slane %v446, %v454
    %v456 = vlaneseq
    %v457 = vshrl.u32 %v456, 7
    %v458 = vsub.s32 2, %v457
    %v459 = vrot.slane %v446, %v458
    %v460 = vlaneseq
    %v461 = vshrl.u32 %v460, 7
    %v462 = vsub.s32 3, %v461
    %v463 = vrot.slane %v446, %v462
    %v532 = vunpack.c.l.b16 %v382
    %v533 = vunpack.c.h.b16 %v382
    %v534 = vunpack.c.l.b16 %v383
    %v535 = vunpack.c.h.b16 %v383
    %v536 = vunpack.c.l.b16 %v384
    %v537 = vunpack.c.h.b16 %v384
    %v538 = vunpack.c.l.b16 %v385
    %v539 = vunpack.c.h.b16 %v385
    %v540 = vunpack.c.l.b16 %v386
    %v541 = vunpack.c.h.b16 %v386
    %v542 = vunpack.c.l.b16 %v387
    %v543 = vunpack.c.h.b16 %v387
    %v544 = vunpack.c.l.b16 %v388
    %v545 = vunpack.c.h.b16 %v388
    %v546 = vunpack.c.l.b16 %v389
    %v547 = vunpack.c.h.b16 %v389
    %v548 = vunpack.c.l.b16 %v390
    %v549 = vunpack.c.h.b16 %v390
    %v550 = vunpack.c.l.b16 %v391
    %v551 = vunpack.c.h.b16 %v391
    %v552 = vunpack.c.l.b16 %v392
    %v553 = vunpack.c.h.b16 %v392
    %v554 = vunpack.c.l.b16 %v393
    %v555 = vunpack.c.h.b16 %v393
    %v556 = vunpack.c.l.b16 %v394
    %v557 = vunpack.c.h.b16 %v394
    %v558 = vunpack.c.l.b16 %v395
    %v559 = vunpack.c.h.b16 %v395
    %v560 = vunpack.c.l.b16 %v396
    %v561 = vunpack.c.h.b16 %v396
    %v562 = vunpack.c.l.b16 %v397
    %v563 = vunpack.c.h.b16 %v397
    %v564 = vunpack.c.l.b16 %v398
    %v565 = vunpack.c.h.b16 %v398
    %v566 = vunpack.c.l.b16 %v399
    %v567 = vunpack.c.h.b16 %v399
    %v568 = vunpack.c.l.b16 %v400
    %v569 = vunpack.c.h.b16 %v400
    %v570 = vunpack.c.l.b16 %v401
    %v571 = vunpack.c.h.b16 %v401
    %v572 = vunpack.c.l.b16 %v402
    %v573 = vunpack.c.h.b16 %v402
    %v574 = vunpack.c.l.b16 %v403
    %v575 = vunpack.c.h.b16 %v403
    %v576 = vunpack.c.l.b16 %v404
    %v577 = vunpack.c.h.b16 %v404
    %v578 = vunpack.c.l.b16 %v405
    %v579 = vunpack.c.h.b16 %v405
    %v580 = vunpack.c.l.b16 %v406
    %v581 = vunpack.c.h.b16 %v406
    %v582 = vunpack.c.l.b16 %v407
    %v583 = vunpack.c.h.b16 %v407
    %v584 = vunpack.c.l.b16 %v408
    %v585 = vunpack.c.h.b16 %v408
    %v586 = vunpack.c.l.b16 %v409
    %v587 = vunpack.c.h.b16 %v409
    %v588 = vunpack.c.l.b16 %v410
    %v589 = vunpack.c.h.b16 %v410
    %v590 = vunpack.c.l.b16 %v411
    %v591 = vunpack.c.h.b16 %v411
    %v592 = vunpack.c.l.b16 %v412
    %v593 = vunpack.c.h.b16 %v412
    %v594 = vunpack.c.l.b16 %v413
    %v595 = vunpack.c.h.b16 %v413
    %v596 = vunpack.c.l.b16 %v414
    %v597 = vunpack.c.h.b16 %v414
    %v598 = vunpack.c.l.b16 %v415
    %v599 = vunpack.c.h.b16 %v415
    %v600 = vunpack.c.l.b16 %v416
    %v601 = vunpack.c.h.b16 %v416
    %v602 = vunpack.c.l.b16 %v417
    %v603 = vunpack.c.h.b16 %v417
    %v604 = vunpack.c.l.b16 %v418
    %v605 = vunpack.c.h.b16 %v418
    %v606 = vunpack.c.l.b16 %v419
    %v607 = vunpack.c.h.b16 %v419
    %v608 = vunpack.c.l.b16 %v420
    %v609 = vunpack.c.h.b16 %v420
    %v610 = vunpack.c.l.b16 %v421
    %v611 = vunpack.c.h.b16 %v421
    %v612 = vunpack.c.l.b16 %v422
    %v613 = vunpack.c.h.b16 %v422
    %v614 = vunpack.c.l.b16 %v423
    %v615 = vunpack.c.h.b16 %v423
    %v616 = vunpack.c.l.b16 %v424
    %v617 = vunpack.c.h.b16 %v424
    %v618 = vunpack.c.l.b16 %v425
    %v619 = vunpack.c.h.b16 %v425
    %v620 = vunpack.c.l.b16 %v426
    %v621 = vunpack.c.h.b16 %v426
    %v622 = vunpack.c.l.b16 %v427
    %v623 = vunpack.c.h.b16 %v427
    %v624 = vunpack.c.l.b16 %v428
    %v625 = vunpack.c.h.b16 %v428
    %v626 = vunpack.c.l.b16 %v429
    %v627 = vunpack.c.h.b16 %v429
    %v628 = vunpack.c.l.b16 %v430
    %v629 = vunpack.c.h.b16 %v430
    %v630 = vunpack.c.l.b16 %v431
    %v631 = vunpack.c.h.b16 %v431
    %v632 = vunpack.c.l.b16 %v432
    %v633 = vunpack.c.h.b16 %v432
    %v634 = vunpack.c.l.b16 %v433
    %v635 = vunpack.c.h.b16 %v433
    %v636 = vunpack.c.l.b16 %v434
    %v637 = vunpack.c.h.b16 %v434
    %v638 = vunpack.c.l.b16 %v435
    %v639 = vunpack.c.h.b16 %v435
    %v640 = vunpack.c.l.b16 %v436
    %v641 = vunpack.c.h.b16 %v436
    %v642 = vunpack.c.l.b16 %v437
    %v643 = vunpack.c.h.b16 %v437
    %v644 = vunpack.c.l.b16 %v438
    %v645 = vunpack.c.h.b16 %v438
    %v646 = vunpack.c.l.b16 %v439
    %v647 = vunpack.c.h.b16 %v439
    %v648 = vunpack.c.l.b16 %v440
    %v649 = vunpack.c.h.b16 %v440
    %v650 = vunpack.c.l.b16 %v441
    %v651 = vunpack.c.h.b16 %v441
    %v652 = vunpack.c.l.b16 %v442
    %v653 = vunpack.c.h.b16 %v442
    %v654 = vunpack.c.l.b16 %v443
    %v655 = vunpack.c.h.b16 %v443
    %v656 = vunpack.c.l.b16 %v444
    %v657 = vunpack.c.h.b16 %v444
    %v658 = vunpack.c.l.b16 %v445
    %v659 = vunpack.c.h.b16 %v445
    %v660 = vpack.c.b16 %v536, %v532
    %v661 = vpack.c.b16 %v537, %v533
    %v662 = vpack.c.b16 %v538, %v534
    %v663 = vpack.c.b16 %v539, %v535
    %v664 = vpack.c.b16 %v544, %v540
    %v665 = vpack.c.b16 %v545, %v541
    %v666 = vpack.c.b16 %v546, %v542
    %v667 = vpack.c.b16 %v547, %v543
    %v668 = vpack.c.b16 %v552, %v548
    %v669 = vpack.c.b16 %v553, %v549
    %v670 = vpack.c.b16 %v554, %v550
    %v671 = vpack.c.b16 %v555, %v551
    %v672 = vpack.c.b16 %v560, %v556
    %v673 = vpack.c.b16 %v561, %v557
    %v674 = vpack.c.b16 %v562, %v558
    %v675 = vpack.c.b16 %v563, %v559
    %v676 = vpack.c.b16 %v568, %v564
    %v677 = vpack.c.b16 %v569, %v565
    %v678 = vpack.c.b16 %v570, %v566
    %v679 = vpack.c.b16 %v571, %v567
    %v680 = vpack.c.b16 %v576, %v572
    %v681 = vpack.c.b16 %v577, %v573
    %v682 = vpack.c.b16 %v578, %v574
    %v683 = vpack.c.b16 %v579, %v575
    %v684 = vpack.c.b16 %v584, %v580
    %v685 = vpack.c.b16 %v585, %v581
    %v686 = vpack.c.b16 %v586, %v582
    %v687 = vpack.c.b16 %v587, %v583
    %v688 = vpack.c.b16 %v592, %v588
    %v689 = vpack.c.b16 %v593, %v589
    %v690 = vpack.c.b16 %v594, %v590
    %v691 = vpack.c.b16 %v595, %v591
    %v692 = vpack.c.b16 %v600, %v596
    %v693 = vpack.c.b16 %v601, %v597
    %v694 = vpack.c.b16 %v602, %v598
    %v695 = vpack.c.b16 %v603, %v599
    %v696 = vpack.c.b16 %v608, %v604
    %v697 = vpack.c.b16 %v609, %v605
    %v698 = vpack.c.b16 %v610, %v606
    %v699 = vpack.c.b16 %v611, %v607
    %v700 = vpack.c.b16 %v616, %v612
    %v701 = vpack.c.b16 %v617, %v613
    %v702 = vpack.c.b16 %v618, %v614
    %v703 = vpack.c.b16 %v619, %v615
    %v704 = vpack.c.b16 %v624, %v620
    %v705 = vpack.c.b16 %v625, %v621
    %v706 = vpack.c.b16 %v626, %v622
    %v707 = vpack.c.b16 %v627, %v623
    %v708 = vpack.c.b16 %v632, %v628
    %v709 = vpack.c.b16 %v633, %v629
    %v710 = vpack.c.b16 %v634, %v630
    %v711 = vpack.c.b16 %v635, %v631
    %v712 = vpack.c.b16 %v640, %v636
    %v713 = vpack.c.b16 %v641, %v637
    %v714 = vpack.c.b16 %v642, %v638
    %v715 = vpack.c.b16 %v643, %v639
    %v716 = vpack.c.b16 %v648, %v644
    %v717 = vpack.c.b16 %v649, %v645
    %v718 = vpack.c.b16 %v650, %v646
    %v719 = vpack.c.b16 %v651, %v647
    %v720 = vpack.c.b16 %v656, %v652
    %v721 = vpack.c.b16 %v657, %v653
    %v722 = vpack.c.b16 %v658, %v654
    %v723 = vpack.c.b16 %v659, %v655
    %788 = vmatprep.subr.bf16.mxu0 %v661
    %789 = vmatpush1.bf16.msra.mxu0 %v660
    %790 = vmatprep.subr.bf16.mxu0 %v665
    %791 = vmatpush1.bf16.msra.mxu0 %v664
    %792 = vmatprep.subr.bf16.mxu0 %v669
    %793 = vmatpush1.bf16.msra.mxu0 %v668
    %794 = vmatprep.subr.bf16.mxu0 %v673
    %795 = vmatpush1.bf16.msra.mxu0 %v672
    %796 = vmatprep.subr.bf16.mxu0 %v677
    %797 = vmatpush1.bf16.msra.mxu0 %v676
    %798 = vmatprep.subr.bf16.mxu0 %v681
    %799 = vmatpush1.bf16.msra.mxu0 %v680
    %800 = vmatprep.subr.bf16.mxu0 %v685
    %801 = vmatpush1.bf16.msra.mxu0 %v684
    %802 = vmatprep.subr.bf16.mxu0 %v689
    %803 = vmatpush1.bf16.msra.mxu0 %v688
    %804 = vmatprep.subr.bf16.mxu0 %v693
    %805 = vmatpush1.bf16.msra.mxu0 %v692
    %806 = vmatprep.subr.bf16.mxu0 %v697
    %807 = vmatpush1.bf16.msra.mxu0 %v696
    %808 = vmatprep.subr.bf16.mxu0 %v701
    %809 = vmatpush1.bf16.msra.mxu0 %v700
    %810 = vmatprep.subr.bf16.mxu0 %v705
    %811 = vmatpush1.bf16.msra.mxu0 %v704
    %812 = vmatprep.subr.bf16.mxu0 %v709
    %813 = vmatpush1.bf16.msra.mxu0 %v708
    %814 = vmatprep.subr.bf16.mxu0 %v713
    %815 = vmatpush1.bf16.msra.mxu0 %v712
    %816 = vmatprep.subr.bf16.mxu0 %v717
    %817 = vmatpush1.bf16.msra.mxu0 %v716
    %818 = vmatprep.subr.bf16.mxu0 %v721
    %819 = vmatpush1.bf16.msra.mxu0 %v720
    %820 = vmatprep.mubr.bf16.mxu0 %v381
    %821 = vmatmul.mubr.bf16.gmra.mrb[0].mxu0 %v380
    %v822 = vpop.f32.mrb[0].mxu0
    %v823 = vadd.f32 %v451, %v822
    %v824 = vpop.f32.mrb[0].mxu0
    %v825 = vadd.f32 %v455, %v824
    %v826 = vpop.f32.mrb[0].mxu0
    %v827 = vpop.f32.mrb[0].mxu0
    %828 = vdwg.mxu0
    %829 = vmatprep.subr.bf16.mxu0 %v663
    %830 = vmatpush1.bf16.msra.mxu0 %v662
    %831 = vmatprep.subr.bf16.mxu0 %v667
    %832 = vmatpush1.bf16.msra.mxu0 %v666
    %833 = vmatprep.subr.bf16.mxu0 %v671
    %834 = vmatpush1.bf16.msra.mxu0 %v670
    %835 = vmatprep.subr.bf16.mxu0 %v675
    %836 = vmatpush1.bf16.msra.mxu0 %v674
    %837 = vmatprep.subr.bf16.mxu0 %v679
    %838 = vmatpush1.bf16.msra.mxu0 %v678
    %839 = vmatprep.subr.bf16.mxu0 %v683
    %840 = vmatpush1.bf16.msra.mxu0 %v682
    %841 = vmatprep.subr.bf16.mxu0 %v687
    %842 = vmatpush1.bf16.msra.mxu0 %v686
    %843 = vmatprep.subr.bf16.mxu0 %v691
    %844 = vmatpush1.bf16.msra.mxu0 %v690
    %845 = vmatprep.subr.bf16.mxu0 %v695
    %846 = vmatpush1.bf16.msra.mxu0 %v694
    %847 = vmatprep.subr.bf16.mxu0 %v699
    %848 = vmatpush1.bf16.msra.mxu0 %v698
    %849 = vmatprep.subr.bf16.mxu0 %v703
    %850 = vmatpush1.bf16.msra.mxu0 %v702
    %851 = vmatprep.subr.bf16.mxu0 %v707
    %852 = vmatpush1.bf16.msra.mxu0 %v706
    %853 = vmatprep.subr.bf16.mxu0 %v711
    %854 = vmatpush1.bf16.msra.mxu0 %v710
    %855 = vmatprep.subr.bf16.mxu0 %v715
    %856 = vmatpush1.bf16.msra.mxu0 %v714
    %857 = vmatprep.subr.bf16.mxu0 %v719
    %858 = vmatpush1.bf16.msra.mxu0 %v718
    %859 = vmatprep.subr.bf16.mxu0 %v723
    %860 = vmatpush1.bf16.msra.mxu0 %v722
    %861 = vmatprep.mubr.bf16.mxu0 %v381
    %862 = vmatmul.mubr.bf16.gmra.mrb[0].mxu0 %v380
    %v863 = vpop.f32.mrb[0].mxu0
    %v864 = vadd.f32 %v459, %v863
    %v865 = vpop.f32.mrb[0].mxu0
    %v866 = vadd.f32 %v463, %v865
    %v867 = vpop.f32.mrb[0].mxu0
    %v868 = vpop.f32.mrb[0].mxu0
    %869 = vdwg.mxu0
    %vm870 = vcmp.ge.f32.partialorder %v823, 0.0
    %vm871 = vcmp.ge.f32.partialorder %v825, 0.0
    %vm872 = vcmp.ge.f32.partialorder %v864, 0.0
    %vm873 = vcmp.ge.f32.partialorder %v866, 0.0
    %v874 = vmul.f32 %v823, 0.01
    %v875 = vmul.f32 %v825, 0.01
    %v876 = vmul.f32 %v864, 0.01
    %v877 = vmul.f32 %v866, 0.01
    %v878 = vsel %vm870, %v823, %v874
    %v879 = vsel %vm871, %v825, %v875
    %v880 = vsel %vm872, %v864, %v876
    %v881 = vsel %vm873, %v866, %v877
    %v882 = vpack.c.bf16 %v878, %v878
    %v883 = vpack.c.bf16 %v879, %v879
    %v884 = vpack.c.bf16 %v880, %v880
    %v885 = vpack.c.bf16 %v881, %v881
    %v886 = vld [vmem:[#allocation10] sm:$0xff]
    %v887 = vld [vmem:[#allocation10 + $0x8] sm:$0xff]
    %v888 = vld [vmem:[#allocation10 + $0x10] sm:$0xff]
    %v889 = vld [vmem:[#allocation10 + $0x18] sm:$0xff]
    %v890 = vld [vmem:[#allocation10 + $0x20] sm:$0xff]
    %v891 = vld [vmem:[#allocation10 + $0x28] sm:$0xff]
    %v892 = vld [vmem:[#allocation10 + $0x30] sm:$0xff]
    %v893 = vld [vmem:[#allocation10 + $0x38] sm:$0xff]
    %v894 = vld [vmem:[#allocation10 + $0x40] sm:$0xff]
    %v895 = vld [vmem:[#allocation10 + $0x48] sm:$0xff]
    %v896 = vld [vmem:[#allocation10 + $0x50] sm:$0xff]
    %v897 = vld [vmem:[#allocation10 + $0x58] sm:$0xff]
    %v898 = vld [vmem:[#allocation10 + $0x60] sm:$0xff]
    %v899 = vld [vmem:[#allocation10 + $0x68] sm:$0xff]
    %v900 = vld [vmem:[#allocation10 + $0x70] sm:$0xff]
    %v901 = vld [vmem:[#allocation10 + $0x78] sm:$0xff]
    %v902 = vld [vmem:[#allocation10 + $0x80] sm:$0xff]
    %v903 = vld [vmem:[#allocation10 + $0x88] sm:$0xff]
    %v904 = vld [vmem:[#allocation10 + $0x90] sm:$0xff]
    %v905 = vld [vmem:[#allocation10 + $0x98] sm:$0xff]
    %v906 = vld [vmem:[#allocation10 + $0xa0] sm:$0xff]
    %v907 = vld [vmem:[#allocation10 + $0xa8] sm:$0xff]
    %v908 = vld [vmem:[#allocation10 + $0xb0] sm:$0xff]
    %v909 = vld [vmem:[#allocation10 + $0xb8] sm:$0xff]
    %v910 = vld [vmem:[#allocation10 + $0xc0] sm:$0xff]
    %v911 = vld [vmem:[#allocation10 + $0xc8] sm:$0xff]
    %v912 = vld [vmem:[#allocation10 + $0xd0] sm:$0xff]
    %v913 = vld [vmem:[#allocation10 + $0xd8] sm:$0xff]
    %v914 = vld [vmem:[#allocation10 + $0xe0] sm:$0xff]
    %v915 = vld [vmem:[#allocation10 + $0xe8] sm:$0xff]
    %v916 = vld [vmem:[#allocation10 + $0xf0] sm:$0xff]
    %v917 = vld [vmem:[#allocation10 + $0xf8] sm:$0xff]
    %v918 = vld [vmem:[#allocation10 + $0x100] sm:$0xff]
    %v919 = vld [vmem:[#allocation10 + $0x108] sm:$0xff]
    %v920 = vld [vmem:[#allocation10 + $0x110] sm:$0xff]
    %v921 = vld [vmem:[#allocation10 + $0x118] sm:$0xff]
    %v922 = vld [vmem:[#allocation10 + $0x120] sm:$0xff]
    %v923 = vld [vmem:[#allocation10 + $0x128] sm:$0xff]
    %v924 = vld [vmem:[#allocation10 + $0x130] sm:$0xff]
    %v925 = vld [vmem:[#allocation10 + $0x138] sm:$0xff]
    %v926 = vld [vmem:[#allocation10 + $0x140] sm:$0xff]
    %v927 = vld [vmem:[#allocation10 + $0x148] sm:$0xff]
    %v928 = vld [vmem:[#allocation10 + $0x150] sm:$0xff]
    %v929 = vld [vmem:[#allocation10 + $0x158] sm:$0xff]
    %v930 = vld [vmem:[#allocation10 + $0x160] sm:$0xff]
    %v931 = vld [vmem:[#allocation10 + $0x168] sm:$0xff]
    %v932 = vld [vmem:[#allocation10 + $0x170] sm:$0xff]
    %v933 = vld [vmem:[#allocation10 + $0x178] sm:$0xff]
    %v934 = vld [vmem:[#allocation10 + $0x180] sm:$0xff]
    %v935 = vld [vmem:[#allocation10 + $0x188] sm:$0xff]
    %v936 = vld [vmem:[#allocation10 + $0x190] sm:$0xff]
    %v937 = vld [vmem:[#allocation10 + $0x198] sm:$0xff]
    %v938 = vld [vmem:[#allocation10 + $0x1a0] sm:$0xff]
    %v939 = vld [vmem:[#allocation10 + $0x1a8] sm:$0xff]
    %v940 = vld [vmem:[#allocation10 + $0x1b0] sm:$0xff]
    %v941 = vld [vmem:[#allocation10 + $0x1b8] sm:$0xff]
    %v942 = vld [vmem:[#allocation10 + $0x1c0] sm:$0xff]
    %v943 = vld [vmem:[#allocation10 + $0x1c8] sm:$0xff]
    %v944 = vld [vmem:[#allocation10 + $0x1d0] sm:$0xff]
    %v945 = vld [vmem:[#allocation10 + $0x1d8] sm:$0xff]
    %v946 = vld [vmem:[#allocation10 + $0x1e0] sm:$0xff]
    %v947 = vld [vmem:[#allocation10 + $0x1e8] sm:$0xff]
    %v948 = vld [vmem:[#allocation10 + $0x1f0] sm:$0xff]
    %v949 = vld [vmem:[#allocation10 + $0x1f8] sm:$0xff]
    %v950 = vld [vmem:[#allocation10 + $0x200] sm:$0xff]
    %v951 = vld [vmem:[#allocation10 + $0x208] sm:$0xff]
    %v952 = vld [vmem:[#allocation10 + $0x210] sm:$0xff]
    %v953 = vld [vmem:[#allocation10 + $0x218] sm:$0xff]
    %v954 = vld [vmem:[#allocation10 + $0x220] sm:$0xff]
    %v955 = vld [vmem:[#allocation10 + $0x228] sm:$0xff]
    %v956 = vld [vmem:[#allocation10 + $0x230] sm:$0xff]
    %v957 = vld [vmem:[#allocation10 + $0x238] sm:$0xff]
    %v958 = vld [vmem:[#allocation10 + $0x240] sm:$0xff]
    %v959 = vld [vmem:[#allocation10 + $0x248] sm:$0xff]
    %v960 = vld [vmem:[#allocation10 + $0x250] sm:$0xff]
    %v961 = vld [vmem:[#allocation10 + $0x258] sm:$0xff]
    %v962 = vld [vmem:[#allocation10 + $0x260] sm:$0xff]
    %v963 = vld [vmem:[#allocation10 + $0x268] sm:$0xff]
    %v964 = vld [vmem:[#allocation10 + $0x270] sm:$0xff]
    %v965 = vld [vmem:[#allocation10 + $0x278] sm:$0xff]
    %v966 = vld [vmem:[#allocation10 + $0x280] sm:$0xff]
    %v967 = vld [vmem:[#allocation10 + $0x288] sm:$0xff]
    %v968 = vld [vmem:[#allocation10 + $0x290] sm:$0xff]
    %v969 = vld [vmem:[#allocation10 + $0x298] sm:$0xff]
    %v970 = vld [vmem:[#allocation10 + $0x2a0] sm:$0xff]
    %v971 = vld [vmem:[#allocation10 + $0x2a8] sm:$0xff]
    %v972 = vld [vmem:[#allocation10 + $0x2b0] sm:$0xff]
    %v973 = vld [vmem:[#allocation10 + $0x2b8] sm:$0xff]
    %v974 = vld [vmem:[#allocation10 + $0x2c0] sm:$0xff]
    %v975 = vld [vmem:[#allocation10 + $0x2c8] sm:$0xff]
    %v976 = vld [vmem:[#allocation10 + $0x2d0] sm:$0xff]
    %v977 = vld [vmem:[#allocation10 + $0x2d8] sm:$0xff]
    %v978 = vld [vmem:[#allocation10 + $0x2e0] sm:$0xff]
    %v979 = vld [vmem:[#allocation10 + $0x2e8] sm:$0xff]
    %v980 = vld [vmem:[#allocation10 + $0x2f0] sm:$0xff]
    %v981 = vld [vmem:[#allocation10 + $0x2f8] sm:$0xff]
    %v982 = vld [vmem:[#allocation10 + $0x300] sm:$0xff]
    %v983 = vld [vmem:[#allocation10 + $0x308] sm:$0xff]
    %v984 = vld [vmem:[#allocation10 + $0x310] sm:$0xff]
    %v985 = vld [vmem:[#allocation10 + $0x318] sm:$0xff]
    %v986 = vld [vmem:[#allocation10 + $0x320] sm:$0xff]
    %v987 = vld [vmem:[#allocation10 + $0x328] sm:$0xff]
    %v988 = vld [vmem:[#allocation10 + $0x330] sm:$0xff]
    %v989 = vld [vmem:[#allocation10 + $0x338] sm:$0xff]
    %v990 = vld [vmem:[#allocation10 + $0x340] sm:$0xff]
    %v991 = vld [vmem:[#allocation10 + $0x348] sm:$0xff]
    %v992 = vld [vmem:[#allocation10 + $0x350] sm:$0xff]
    %v993 = vld [vmem:[#allocation10 + $0x358] sm:$0xff]
    %v994 = vld [vmem:[#allocation10 + $0x360] sm:$0xff]
    %v995 = vld [vmem:[#allocation10 + $0x368] sm:$0xff]
    %v996 = vld [vmem:[#allocation10 + $0x370] sm:$0xff]
    %v997 = vld [vmem:[#allocation10 + $0x378] sm:$0xff]
    %v998 = vld [vmem:[#allocation10 + $0x380] sm:$0xff]
    %v999 = vld [vmem:[#allocation10 + $0x388] sm:$0xff]
    %v1000 = vld [vmem:[#allocation10 + $0x390] sm:$0xff]
    %v1001 = vld [vmem:[#allocation10 + $0x398] sm:$0xff]
    %v1002 = vld [vmem:[#allocation10 + $0x3a0] sm:$0xff]
    %v1003 = vld [vmem:[#allocation10 + $0x3a8] sm:$0xff]
    %v1004 = vld [vmem:[#allocation10 + $0x3b0] sm:$0xff]
    %v1005 = vld [vmem:[#allocation10 + $0x3b8] sm:$0xff]
    %v1006 = vld [vmem:[#allocation10 + $0x3c0] sm:$0xff]
    %v1007 = vld [vmem:[#allocation10 + $0x3c8] sm:$0xff]
    %v1008 = vld [vmem:[#allocation10 + $0x3d0] sm:$0xff]
    %v1009 = vld [vmem:[#allocation10 + $0x3d8] sm:$0xff]
    %v1010 = vld [vmem:[#allocation10 + $0x3e0] sm:$0xff]
    %v1011 = vld [vmem:[#allocation10 + $0x3e8] sm:$0xff]
    %v1012 = vld [vmem:[#allocation10 + $0x3f0] sm:$0xff]
    %v1013 = vld [vmem:[#allocation10 + $0x3f8] sm:$0xff]
    %v1014 = vld [vmem:[#allocation10 + $0x400] sm:$0xff]
    %v1015 = vld [vmem:[#allocation10 + $0x408] sm:$0xff]
    %v1016 = vld [vmem:[#allocation10 + $0x410] sm:$0xff]
    %v1017 = vld [vmem:[#allocation10 + $0x418] sm:$0xff]
    %v1018 = vld [vmem:[#allocation10 + $0x420] sm:$0xff]
    %v1019 = vld [vmem:[#allocation10 + $0x428] sm:$0xff]
    %v1020 = vld [vmem:[#allocation10 + $0x430] sm:$0xff]
    %v1021 = vld [vmem:[#allocation10 + $0x438] sm:$0xff]
    %v1022 = vld [vmem:[#allocation10 + $0x440] sm:$0xff]
    %v1023 = vld [vmem:[#allocation10 + $0x448] sm:$0xff]
    %v1024 = vld [vmem:[#allocation10 + $0x450] sm:$0xff]
    %v1025 = vld [vmem:[#allocation10 + $0x458] sm:$0xff]
    %v1026 = vld [vmem:[#allocation10 + $0x460] sm:$0xff]
    %v1027 = vld [vmem:[#allocation10 + $0x468] sm:$0xff]
    %v1028 = vld [vmem:[#allocation10 + $0x470] sm:$0xff]
    %v1029 = vld [vmem:[#allocation10 + $0x478] sm:$0xff]
    %v1030 = vld [vmem:[#allocation10 + $0x480] sm:$0xff]
    %v1031 = vld [vmem:[#allocation10 + $0x488] sm:$0xff]
    %v1032 = vld [vmem:[#allocation10 + $0x490] sm:$0xff]
    %v1033 = vld [vmem:[#allocation10 + $0x498] sm:$0xff]
    %v1034 = vld [vmem:[#allocation10 + $0x4a0] sm:$0xff]
    %v1035 = vld [vmem:[#allocation10 + $0x4a8] sm:$0xff]
    %v1036 = vld [vmem:[#allocation10 + $0x4b0] sm:$0xff]
    %v1037 = vld [vmem:[#allocation10 + $0x4b8] sm:$0xff]
    %v1038 = vld [vmem:[#allocation10 + $0x4c0] sm:$0xff]
    %v1039 = vld [vmem:[#allocation10 + $0x4c8] sm:$0xff]
    %v1040 = vld [vmem:[#allocation10 + $0x4d0] sm:$0xff]
    %v1041 = vld [vmem:[#allocation10 + $0x4d8] sm:$0xff]
    %v1042 = vld [vmem:[#allocation10 + $0x4e0] sm:$0xff]
    %v1043 = vld [vmem:[#allocation10 + $0x4e8] sm:$0xff]
    %v1044 = vld [vmem:[#allocation10 + $0x4f0] sm:$0xff]
    %v1045 = vld [vmem:[#allocation10 + $0x4f8] sm:$0xff]
    %v1046 = vld [vmem:[#allocation10 + $0x500] sm:$0xff]
    %v1047 = vld [vmem:[#allocation10 + $0x508] sm:$0xff]
    %v1048 = vld [vmem:[#allocation10 + $0x510] sm:$0xff]
    %v1049 = vld [vmem:[#allocation10 + $0x518] sm:$0xff]
    %v1050 = vld [vmem:[#allocation10 + $0x520] sm:$0xff]
    %v1051 = vld [vmem:[#allocation10 + $0x528] sm:$0xff]
    %v1052 = vld [vmem:[#allocation10 + $0x530] sm:$0xff]
    %v1053 = vld [vmem:[#allocation10 + $0x538] sm:$0xff]
    %v1054 = vld [vmem:[#allocation10 + $0x540] sm:$0xff]
    %v1055 = vld [vmem:[#allocation10 + $0x548] sm:$0xff]
    %v1056 = vld [vmem:[#allocation10 + $0x550] sm:$0xff]
    %v1057 = vld [vmem:[#allocation10 + $0x558] sm:$0xff]
    %v1058 = vld [vmem:[#allocation10 + $0x560] sm:$0xff]
    %v1059 = vld [vmem:[#allocation10 + $0x568] sm:$0xff]
    %v1060 = vld [vmem:[#allocation10 + $0x570] sm:$0xff]
    %v1061 = vld [vmem:[#allocation10 + $0x578] sm:$0xff]
    %v1062 = vld [vmem:[#allocation10 + $0x580] sm:$0xff]
    %v1063 = vld [vmem:[#allocation10 + $0x588] sm:$0xff]
    %v1064 = vld [vmem:[#allocation10 + $0x590] sm:$0xff]
    %v1065 = vld [vmem:[#allocation10 + $0x598] sm:$0xff]
    %v1066 = vld [vmem:[#allocation10 + $0x5a0] sm:$0xff]
    %v1067 = vld [vmem:[#allocation10 + $0x5a8] sm:$0xff]
    %v1068 = vld [vmem:[#allocation10 + $0x5b0] sm:$0xff]
    %v1069 = vld [vmem:[#allocation10 + $0x5b8] sm:$0xff]
    %v1070 = vld [vmem:[#allocation10 + $0x5c0] sm:$0xff]
    %v1071 = vld [vmem:[#allocation10 + $0x5c8] sm:$0xff]
    %v1072 = vld [vmem:[#allocation10 + $0x5d0] sm:$0xff]
    %v1073 = vld [vmem:[#allocation10 + $0x5d8] sm:$0xff]
    %v1074 = vld [vmem:[#allocation10 + $0x5e0] sm:$0xff]
    %v1075 = vld [vmem:[#allocation10 + $0x5e8] sm:$0xff]
    %v1076 = vld [vmem:[#allocation10 + $0x5f0] sm:$0xff]
    %v1077 = vld [vmem:[#allocation10 + $0x5f8] sm:$0xff]
    %v1078 = vld [vmem:[#allocation10 + $0x600] sm:$0xff]
    %v1079 = vld [vmem:[#allocation10 + $0x608] sm:$0xff]
    %v1080 = vld [vmem:[#allocation10 + $0x610] sm:$0xff]
    %v1081 = vld [vmem:[#allocation10 + $0x618] sm:$0xff]
    %v1082 = vld [vmem:[#allocation10 + $0x620] sm:$0xff]
    %v1083 = vld [vmem:[#allocation10 + $0x628] sm:$0xff]
    %v1084 = vld [vmem:[#allocation10 + $0x630] sm:$0xff]
    %v1085 = vld [vmem:[#allocation10 + $0x638] sm:$0xff]
    %v1086 = vld [vmem:[#allocation10 + $0x640] sm:$0xff]
    %v1087 = vld [vmem:[#allocation10 + $0x648] sm:$0xff]
    %v1088 = vld [vmem:[#allocation10 + $0x650] sm:$0xff]
    %v1089 = vld [vmem:[#allocation10 + $0x658] sm:$0xff]
    %v1090 = vld [vmem:[#allocation10 + $0x660] sm:$0xff]
    %v1091 = vld [vmem:[#allocation10 + $0x668] sm:$0xff]
    %v1092 = vld [vmem:[#allocation10 + $0x670] sm:$0xff]
    %v1093 = vld [vmem:[#allocation10 + $0x678] sm:$0xff]
    %v1094 = vld [vmem:[#allocation10 + $0x680] sm:$0xff]
    %v1095 = vld [vmem:[#allocation10 + $0x688] sm:$0xff]
    %v1096 = vld [vmem:[#allocation10 + $0x690] sm:$0xff]
    %v1097 = vld [vmem:[#allocation10 + $0x698] sm:$0xff]
    %v1098 = vld [vmem:[#allocation10 + $0x6a0] sm:$0xff]
    %v1099 = vld [vmem:[#allocation10 + $0x6a8] sm:$0xff]
    %v1100 = vld [vmem:[#allocation10 + $0x6b0] sm:$0xff]
    %v1101 = vld [vmem:[#allocation10 + $0x6b8] sm:$0xff]
    %v1102 = vld [vmem:[#allocation10 + $0x6c0] sm:$0xff]
    %v1103 = vld [vmem:[#allocation10 + $0x6c8] sm:$0xff]
    %v1104 = vld [vmem:[#allocation10 + $0x6d0] sm:$0xff]
    %v1105 = vld [vmem:[#allocation10 + $0x6d8] sm:$0xff]
    %v1106 = vld [vmem:[#allocation10 + $0x6e0] sm:$0xff]
    %v1107 = vld [vmem:[#allocation10 + $0x6e8] sm:$0xff]
    %v1108 = vld [vmem:[#allocation10 + $0x6f0] sm:$0xff]
    %v1109 = vld [vmem:[#allocation10 + $0x6f8] sm:$0xff]
    %v1110 = vld [vmem:[#allocation10 + $0x700] sm:$0xff]
    %v1111 = vld [vmem:[#allocation10 + $0x708] sm:$0xff]
    %v1112 = vld [vmem:[#allocation10 + $0x710] sm:$0xff]
    %v1113 = vld [vmem:[#allocation10 + $0x718] sm:$0xff]
    %v1114 = vld [vmem:[#allocation10 + $0x720] sm:$0xff]
    %v1115 = vld [vmem:[#allocation10 + $0x728] sm:$0xff]
    %v1116 = vld [vmem:[#allocation10 + $0x730] sm:$0xff]
    %v1117 = vld [vmem:[#allocation10 + $0x738] sm:$0xff]
    %v1118 = vld [vmem:[#allocation10 + $0x740] sm:$0xff]
    %v1119 = vld [vmem:[#allocation10 + $0x748] sm:$0xff]
    %v1120 = vld [vmem:[#allocation10 + $0x750] sm:$0xff]
    %v1121 = vld [vmem:[#allocation10 + $0x758] sm:$0xff]
    %v1122 = vld [vmem:[#allocation10 + $0x760] sm:$0xff]
    %v1123 = vld [vmem:[#allocation10 + $0x768] sm:$0xff]
    %v1124 = vld [vmem:[#allocation10 + $0x770] sm:$0xff]
    %v1125 = vld [vmem:[#allocation10 + $0x778] sm:$0xff]
    %v1126 = vld [vmem:[#allocation10 + $0x780] sm:$0xff]
    %v1127 = vld [vmem:[#allocation10 + $0x788] sm:$0xff]
    %v1128 = vld [vmem:[#allocation10 + $0x790] sm:$0xff]
    %v1129 = vld [vmem:[#allocation10 + $0x798] sm:$0xff]
    %v1130 = vld [vmem:[#allocation10 + $0x7a0] sm:$0xff]
    %v1131 = vld [vmem:[#allocation10 + $0x7a8] sm:$0xff]
    %v1132 = vld [vmem:[#allocation10 + $0x7b0] sm:$0xff]
    %v1133 = vld [vmem:[#allocation10 + $0x7b8] sm:$0xff]
    %v1134 = vld [vmem:[#allocation10 + $0x7c0] sm:$0xff]
    %v1135 = vld [vmem:[#allocation10 + $0x7c8] sm:$0xff]
    %v1136 = vld [vmem:[#allocation10 + $0x7d0] sm:$0xff]
    %v1137 = vld [vmem:[#allocation10 + $0x7d8] sm:$0xff]
    %v1138 = vld [vmem:[#allocation10 + $0x7e0] sm:$0xff]
    %v1139 = vld [vmem:[#allocation10 + $0x7e8] sm:$0xff]
    %v1140 = vld [vmem:[#allocation10 + $0x7f0] sm:$0xff]
    %v1141 = vld [vmem:[#allocation10 + $0x7f8] sm:$0xff]
    %v1142 = vld [vmem:[#allocation10 + $0x800] sm:$0xff]
    %v1143 = vld [vmem:[#allocation10 + $0x808] sm:$0xff]
    %v1144 = vld [vmem:[#allocation10 + $0x810] sm:$0xff]
    %v1145 = vld [vmem:[#allocation10 + $0x818] sm:$0xff]
    %v1146 = vld [vmem:[#allocation10 + $0x820] sm:$0xff]
    %v1147 = vld [vmem:[#allocation10 + $0x828] sm:$0xff]
    %v1148 = vld [vmem:[#allocation10 + $0x830] sm:$0xff]
    %v1149 = vld [vmem:[#allocation10 + $0x838] sm:$0xff]
    %v1150 = vld [vmem:[#allocation10 + $0x840] sm:$0xff]
    %v1151 = vld [vmem:[#allocation10 + $0x848] sm:$0xff]
    %v1152 = vld [vmem:[#allocation10 + $0x850] sm:$0xff]
    %v1153 = vld [vmem:[#allocation10 + $0x858] sm:$0xff]
    %v1154 = vld [vmem:[#allocation10 + $0x860] sm:$0xff]
    %v1155 = vld [vmem:[#allocation10 + $0x868] sm:$0xff]
    %v1156 = vld [vmem:[#allocation10 + $0x870] sm:$0xff]
    %v1157 = vld [vmem:[#allocation10 + $0x878] sm:$0xff]
    %v1158 = vld [vmem:[#allocation10 + $0x880] sm:$0xff]
    %v1159 = vld [vmem:[#allocation10 + $0x888] sm:$0xff]
    %v1160 = vld [vmem:[#allocation10 + $0x890] sm:$0xff]
    %v1161 = vld [vmem:[#allocation10 + $0x898] sm:$0xff]
    %v1162 = vld [vmem:[#allocation10 + $0x8a0] sm:$0xff]
    %v1163 = vld [vmem:[#allocation10 + $0x8a8] sm:$0xff]
    %v1164 = vld [vmem:[#allocation10 + $0x8b0] sm:$0xff]
    %v1165 = vld [vmem:[#allocation10 + $0x8b8] sm:$0xff]
    %v1166 = vld [vmem:[#allocation10 + $0x8c0] sm:$0xff]
    %v1167 = vld [vmem:[#allocation10 + $0x8c8] sm:$0xff]
    %v1168 = vld [vmem:[#allocation10 + $0x8d0] sm:$0xff]
    %v1169 = vld [vmem:[#allocation10 + $0x8d8] sm:$0xff]
    %v1170 = vld [vmem:[#allocation10 + $0x8e0] sm:$0xff]
    %v1171 = vld [vmem:[#allocation10 + $0x8e8] sm:$0xff]
    %v1172 = vld [vmem:[#allocation10 + $0x8f0] sm:$0xff]
    %v1173 = vld [vmem:[#allocation10 + $0x8f8] sm:$0xff]
    %v1174 = vld [vmem:[#allocation10 + $0x900] sm:$0xff]
    %v1175 = vld [vmem:[#allocation10 + $0x908] sm:$0xff]
    %v1176 = vld [vmem:[#allocation10 + $0x910] sm:$0xff]
    %v1177 = vld [vmem:[#allocation10 + $0x918] sm:$0xff]
    %v1178 = vld [vmem:[#allocation10 + $0x920] sm:$0xff]
    %v1179 = vld [vmem:[#allocation10 + $0x928] sm:$0xff]
    %v1180 = vld [vmem:[#allocation10 + $0x930] sm:$0xff]
    %v1181 = vld [vmem:[#allocation10 + $0x938] sm:$0xff]
    %v1182 = vld [vmem:[#allocation10 + $0x940] sm:$0xff]
    %v1183 = vld [vmem:[#allocation10 + $0x948] sm:$0xff]
    %v1184 = vld [vmem:[#allocation10 + $0x950] sm:$0xff]
    %v1185 = vld [vmem:[#allocation10 + $0x958] sm:$0xff]
    %v1186 = vld [vmem:[#allocation10 + $0x960] sm:$0xff]
    %v1187 = vld [vmem:[#allocation10 + $0x968] sm:$0xff]
    %v1188 = vld [vmem:[#allocation10 + $0x970] sm:$0xff]
    %v1189 = vld [vmem:[#allocation10 + $0x978] sm:$0xff]
    %v1190 = vld [vmem:[#allocation10 + $0x980] sm:$0xff]
    %v1191 = vld [vmem:[#allocation10 + $0x988] sm:$0xff]
    %v1192 = vld [vmem:[#allocation10 + $0x990] sm:$0xff]
    %v1193 = vld [vmem:[#allocation10 + $0x998] sm:$0xff]
    %v1194 = vld [vmem:[#allocation10 + $0x9a0] sm:$0xff]
    %v1195 = vld [vmem:[#allocation10 + $0x9a8] sm:$0xff]
    %v1196 = vld [vmem:[#allocation10 + $0x9b0] sm:$0xff]
    %v1197 = vld [vmem:[#allocation10 + $0x9b8] sm:$0xff]
    %v1198 = vld [vmem:[#allocation10 + $0x9c0] sm:$0xff]
    %v1199 = vld [vmem:[#allocation10 + $0x9c8] sm:$0xff]
    %v1200 = vld [vmem:[#allocation10 + $0x9d0] sm:$0xff]
    %v1201 = vld [vmem:[#allocation10 + $0x9d8] sm:$0xff]
    %v1202 = vld [vmem:[#allocation10 + $0x9e0] sm:$0xff]
    %v1203 = vld [vmem:[#allocation10 + $0x9e8] sm:$0xff]
    %v1204 = vld [vmem:[#allocation10 + $0x9f0] sm:$0xff]
    %v1205 = vld [vmem:[#allocation10 + $0x9f8] sm:$0xff]
    %v1206 = vld [vmem:[#allocation10 + $0xa00] sm:$0xff]
    %v1207 = vld [vmem:[#allocation10 + $0xa08] sm:$0xff]
    %v1208 = vld [vmem:[#allocation10 + $0xa10] sm:$0xff]
    %v1209 = vld [vmem:[#allocation10 + $0xa18] sm:$0xff]
    %v1210 = vld [vmem:[#allocation10 + $0xa20] sm:$0xff]
    %v1211 = vld [vmem:[#allocation10 + $0xa28] sm:$0xff]
    %v1212 = vld [vmem:[#allocation10 + $0xa30] sm:$0xff]
    %v1213 = vld [vmem:[#allocation10 + $0xa38] sm:$0xff]
    %v1214 = vld [vmem:[#allocation10 + $0xa40] sm:$0xff]
    %v1215 = vld [vmem:[#allocation10 + $0xa48] sm:$0xff]
    %v1216 = vld [vmem:[#allocation10 + $0xa50] sm:$0xff]
    %v1217 = vld [vmem:[#allocation10 + $0xa58] sm:$0xff]
    %v1218 = vld [vmem:[#allocation10 + $0xa60] sm:$0xff]
    %v1219 = vld [vmem:[#allocation10 + $0xa68] sm:$0xff]
    %v1220 = vld [vmem:[#allocation10 + $0xa70] sm:$0xff]
    %v1221 = vld [vmem:[#allocation10 + $0xa78] sm:$0xff]
    %v1222 = vld [vmem:[#allocation10 + $0xa80] sm:$0xff]
    %v1223 = vld [vmem:[#allocation10 + $0xa88] sm:$0xff]
    %v1224 = vld [vmem:[#allocation10 + $0xa90] sm:$0xff]
    %v1225 = vld [vmem:[#allocation10 + $0xa98] sm:$0xff]
    %v1226 = vld [vmem:[#allocation10 + $0xaa0] sm:$0xff]
    %v1227 = vld [vmem:[#allocation10 + $0xaa8] sm:$0xff]
    %v1228 = vld [vmem:[#allocation10 + $0xab0] sm:$0xff]
    %v1229 = vld [vmem:[#allocation10 + $0xab8] sm:$0xff]
    %v1230 = vld [vmem:[#allocation10 + $0xac0] sm:$0xff]
    %v1231 = vld [vmem:[#allocation10 + $0xac8] sm:$0xff]
    %v1232 = vld [vmem:[#allocation10 + $0xad0] sm:$0xff]
    %v1233 = vld [vmem:[#allocation10 + $0xad8] sm:$0xff]
    %v1234 = vld [vmem:[#allocation10 + $0xae0] sm:$0xff]
    %v1235 = vld [vmem:[#allocation10 + $0xae8] sm:$0xff]
    %v1236 = vld [vmem:[#allocation10 + $0xaf0] sm:$0xff]
    %v1237 = vld [vmem:[#allocation10 + $0xaf8] sm:$0xff]
    %v1238 = vld [vmem:[#allocation10 + $0xb00] sm:$0xff]
    %v1239 = vld [vmem:[#allocation10 + $0xb08] sm:$0xff]
    %v1240 = vld [vmem:[#allocation10 + $0xb10] sm:$0xff]
    %v1241 = vld [vmem:[#allocation10 + $0xb18] sm:$0xff]
    %v1242 = vld [vmem:[#allocation10 + $0xb20] sm:$0xff]
    %v1243 = vld [vmem:[#allocation10 + $0xb28] sm:$0xff]
    %v1244 = vld [vmem:[#allocation10 + $0xb30] sm:$0xff]
    %v1245 = vld [vmem:[#allocation10 + $0xb38] sm:$0xff]
    %v1246 = vld [vmem:[#allocation10 + $0xb40] sm:$0xff]
    %v1247 = vld [vmem:[#allocation10 + $0xb48] sm:$0xff]
    %v1248 = vld [vmem:[#allocation10 + $0xb50] sm:$0xff]
    %v1249 = vld [vmem:[#allocation10 + $0xb58] sm:$0xff]
    %v1250 = vld [vmem:[#allocation10 + $0xb60] sm:$0xff]
    %v1251 = vld [vmem:[#allocation10 + $0xb68] sm:$0xff]
    %v1252 = vld [vmem:[#allocation10 + $0xb70] sm:$0xff]
    %v1253 = vld [vmem:[#allocation10 + $0xb78] sm:$0xff]
    %v1254 = vld [vmem:[#allocation10 + $0xb80] sm:$0xff]
    %v1255 = vld [vmem:[#allocation10 + $0xb88] sm:$0xff]
    %v1256 = vld [vmem:[#allocation10 + $0xb90] sm:$0xff]
    %v1257 = vld [vmem:[#allocation10 + $0xb98] sm:$0xff]
    %v1258 = vld [vmem:[#allocation10 + $0xba0] sm:$0xff]
    %v1259 = vld [vmem:[#allocation10 + $0xba8] sm:$0xff]
    %v1260 = vld [vmem:[#allocation10 + $0xbb0] sm:$0xff]
    %v1261 = vld [vmem:[#allocation10 + $0xbb8] sm:$0xff]
    %v1262 = vld [vmem:[#allocation10 + $0xbc0] sm:$0xff]
    %v1263 = vld [vmem:[#allocation10 + $0xbc8] sm:$0xff]
    %v1264 = vld [vmem:[#allocation10 + $0xbd0] sm:$0xff]
    %v1265 = vld [vmem:[#allocation10 + $0xbd8] sm:$0xff]
    %v1266 = vld [vmem:[#allocation10 + $0xbe0] sm:$0xff]
    %v1267 = vld [vmem:[#allocation10 + $0xbe8] sm:$0xff]
    %v1268 = vld [vmem:[#allocation10 + $0xbf0] sm:$0xff]
    %v1269 = vld [vmem:[#allocation10 + $0xbf8] sm:$0xff]
    %v1270 = vld [vmem:[#allocation10 + $0xc00] sm:$0xff]
    %v1271 = vld [vmem:[#allocation10 + $0xc08] sm:$0xff]
    %v1272 = vld [vmem:[#allocation10 + $0xc10] sm:$0xff]
    %v1273 = vld [vmem:[#allocation10 + $0xc18] sm:$0xff]
    %v1274 = vld [vmem:[#allocation10 + $0xc20] sm:$0xff]
    %v1275 = vld [vmem:[#allocation10 + $0xc28] sm:$0xff]
    %v1276 = vld [vmem:[#allocation10 + $0xc30] sm:$0xff]
    %v1277 = vld [vmem:[#allocation10 + $0xc38] sm:$0xff]
    %v1278 = vld [vmem:[#allocation10 + $0xc40] sm:$0xff]
    %v1279 = vld [vmem:[#allocation10 + $0xc48] sm:$0xff]
    %v1280 = vld [vmem:[#allocation10 + $0xc50] sm:$0xff]
    %v1281 = vld [vmem:[#allocation10 + $0xc58] sm:$0xff]
    %v1282 = vld [vmem:[#allocation10 + $0xc60] sm:$0xff]
    %v1283 = vld [vmem:[#allocation10 + $0xc68] sm:$0xff]
    %v1284 = vld [vmem:[#allocation10 + $0xc70] sm:$0xff]
    %v1285 = vld [vmem:[#allocation10 + $0xc78] sm:$0xff]
    %v1286 = vld [vmem:[#allocation10 + $0xc80] sm:$0xff]
    %v1287 = vld [vmem:[#allocation10 + $0xc88] sm:$0xff]
    %v1288 = vld [vmem:[#allocation10 + $0xc90] sm:$0xff]
    %v1289 = vld [vmem:[#allocation10 + $0xc98] sm:$0xff]
    %v1290 = vld [vmem:[#allocation10 + $0xca0] sm:$0xff]
    %v1291 = vld [vmem:[#allocation10 + $0xca8] sm:$0xff]
    %v1292 = vld [vmem:[#allocation10 + $0xcb0] sm:$0xff]
    %v1293 = vld [vmem:[#allocation10 + $0xcb8] sm:$0xff]
    %v1294 = vld [vmem:[#allocation10 + $0xcc0] sm:$0xff]
    %v1295 = vld [vmem:[#allocation10 + $0xcc8] sm:$0xff]
    %v1296 = vld [vmem:[#allocation10 + $0xcd0] sm:$0xff]
    %v1297 = vld [vmem:[#allocation10 + $0xcd8] sm:$0xff]
    %v1298 = vld [vmem:[#allocation10 + $0xce0] sm:$0xff]
    %v1299 = vld [vmem:[#allocation10 + $0xce8] sm:$0xff]
    %v1300 = vld [vmem:[#allocation10 + $0xcf0] sm:$0xff]
    %v1301 = vld [vmem:[#allocation10 + $0xcf8] sm:$0xff]
    %v1302 = vld [vmem:[#allocation10 + $0xd00] sm:$0xff]
    %v1303 = vld [vmem:[#allocation10 + $0xd08] sm:$0xff]
    %v1304 = vld [vmem:[#allocation10 + $0xd10] sm:$0xff]
    %v1305 = vld [vmem:[#allocation10 + $0xd18] sm:$0xff]
    %v1306 = vld [vmem:[#allocation10 + $0xd20] sm:$0xff]
    %v1307 = vld [vmem:[#allocation10 + $0xd28] sm:$0xff]
    %v1308 = vld [vmem:[#allocation10 + $0xd30] sm:$0xff]
    %v1309 = vld [vmem:[#allocation10 + $0xd38] sm:$0xff]
    %v1310 = vld [vmem:[#allocation10 + $0xd40] sm:$0xff]
    %v1311 = vld [vmem:[#allocation10 + $0xd48] sm:$0xff]
    %v1312 = vld [vmem:[#allocation10 + $0xd50] sm:$0xff]
    %v1313 = vld [vmem:[#allocation10 + $0xd58] sm:$0xff]
    %v1314 = vld [vmem:[#allocation10 + $0xd60] sm:$0xff]
    %v1315 = vld [vmem:[#allocation10 + $0xd68] sm:$0xff]
    %v1316 = vld [vmem:[#allocation10 + $0xd70] sm:$0xff]
    %v1317 = vld [vmem:[#allocation10 + $0xd78] sm:$0xff]
    %v1318 = vld [vmem:[#allocation10 + $0xd80] sm:$0xff]
    %v1319 = vld [vmem:[#allocation10 + $0xd88] sm:$0xff]
    %v1320 = vld [vmem:[#allocation10 + $0xd90] sm:$0xff]
    %v1321 = vld [vmem:[#allocation10 + $0xd98] sm:$0xff]
    %v1322 = vld [vmem:[#allocation10 + $0xda0] sm:$0xff]
    %v1323 = vld [vmem:[#allocation10 + $0xda8] sm:$0xff]
    %v1324 = vld [vmem:[#allocation10 + $0xdb0] sm:$0xff]
    %v1325 = vld [vmem:[#allocation10 + $0xdb8] sm:$0xff]
    %v1326 = vld [vmem:[#allocation10 + $0xdc0] sm:$0xff]
    %v1327 = vld [vmem:[#allocation10 + $0xdc8] sm:$0xff]
    %v1328 = vld [vmem:[#allocation10 + $0xdd0] sm:$0xff]
    %v1329 = vld [vmem:[#allocation10 + $0xdd8] sm:$0xff]
    %v1330 = vld [vmem:[#allocation10 + $0xde0] sm:$0xff]
    %v1331 = vld [vmem:[#allocation10 + $0xde8] sm:$0xff]
    %v1332 = vld [vmem:[#allocation10 + $0xdf0] sm:$0xff]
    %v1333 = vld [vmem:[#allocation10 + $0xdf8] sm:$0xff]
    %v1334 = vld [vmem:[#allocation10 + $0xe00] sm:$0xff]
    %v1335 = vld [vmem:[#allocation10 + $0xe08] sm:$0xff]
    %v1336 = vld [vmem:[#allocation10 + $0xe10] sm:$0xff]
    %v1337 = vld [vmem:[#allocation10 + $0xe18] sm:$0xff]
    %v1338 = vld [vmem:[#allocation10 + $0xe20] sm:$0xff]
    %v1339 = vld [vmem:[#allocation10 + $0xe28] sm:$0xff]
    %v1340 = vld [vmem:[#allocation10 + $0xe30] sm:$0xff]
    %v1341 = vld [vmem:[#allocation10 + $0xe38] sm:$0xff]
    %v1342 = vld [vmem:[#allocation10 + $0xe40] sm:$0xff]
    %v1343 = vld [vmem:[#allocation10 + $0xe48] sm:$0xff]
    %v1344 = vld [vmem:[#allocation10 + $0xe50] sm:$0xff]
    %v1345 = vld [vmem:[#allocation10 + $0xe58] sm:$0xff]
    %v1346 = vld [vmem:[#allocation10 + $0xe60] sm:$0xff]
    %v1347 = vld [vmem:[#allocation10 + $0xe68] sm:$0xff]
    %v1348 = vld [vmem:[#allocation10 + $0xe70] sm:$0xff]
    %v1349 = vld [vmem:[#allocation10 + $0xe78] sm:$0xff]
    %v1350 = vld [vmem:[#allocation10 + $0xe80] sm:$0xff]
    %v1351 = vld [vmem:[#allocation10 + $0xe88] sm:$0xff]
    %v1352 = vld [vmem:[#allocation10 + $0xe90] sm:$0xff]
    %v1353 = vld [vmem:[#allocation10 + $0xe98] sm:$0xff]
    %v1354 = vld [vmem:[#allocation10 + $0xea0] sm:$0xff]
    %v1355 = vld [vmem:[#allocation10 + $0xea8] sm:$0xff]
    %v1356 = vld [vmem:[#allocation10 + $0xeb0] sm:$0xff]
    %v1357 = vld [vmem:[#allocation10 + $0xeb8] sm:$0xff]
    %v1358 = vld [vmem:[#allocation10 + $0xec0] sm:$0xff]
    %v1359 = vld [vmem:[#allocation10 + $0xec8] sm:$0xff]
    %v1360 = vld [vmem:[#allocation10 + $0xed0] sm:$0xff]
    %v1361 = vld [vmem:[#allocation10 + $0xed8] sm:$0xff]
    %v1362 = vld [vmem:[#allocation10 + $0xee0] sm:$0xff]
    %v1363 = vld [vmem:[#allocation10 + $0xee8] sm:$0xff]
    %v1364 = vld [vmem:[#allocation10 + $0xef0] sm:$0xff]
    %v1365 = vld [vmem:[#allocation10 + $0xef8] sm:$0xff]
    %v1366 = vld [vmem:[#allocation10 + $0xf00] sm:$0xff]
    %v1367 = vld [vmem:[#allocation10 + $0xf08] sm:$0xff]
    %v1368 = vld [vmem:[#allocation10 + $0xf10] sm:$0xff]
    %v1369 = vld [vmem:[#allocation10 + $0xf18] sm:$0xff]
    %v1370 = vld [vmem:[#allocation10 + $0xf20] sm:$0xff]
    %v1371 = vld [vmem:[#allocation10 + $0xf28] sm:$0xff]
    %v1372 = vld [vmem:[#allocation10 + $0xf30] sm:$0xff]
    %v1373 = vld [vmem:[#allocation10 + $0xf38] sm:$0xff]
    %v1374 = vld [vmem:[#allocation10 + $0xf40] sm:$0xff]
    %v1375 = vld [vmem:[#allocation10 + $0xf48] sm:$0xff]
    %v1376 = vld [vmem:[#allocation10 + $0xf50] sm:$0xff]
    %v1377 = vld [vmem:[#allocation10 + $0xf58] sm:$0xff]
    %v1378 = vld [vmem:[#allocation10 + $0xf60] sm:$0xff]
    %v1379 = vld [vmem:[#allocation10 + $0xf68] sm:$0xff]
    %v1380 = vld [vmem:[#allocation10 + $0xf70] sm:$0xff]
    %v1381 = vld [vmem:[#allocation10 + $0xf78] sm:$0xff]
    %v1382 = vld [vmem:[#allocation10 + $0xf80] sm:$0xff]
    %v1383 = vld [vmem:[#allocation10 + $0xf88] sm:$0xff]
    %v1384 = vld [vmem:[#allocation10 + $0xf90] sm:$0xff]
    %v1385 = vld [vmem:[#allocation10 + $0xf98] sm:$0xff]
    %v1386 = vld [vmem:[#allocation10 + $0xfa0] sm:$0xff]
    %v1387 = vld [vmem:[#allocation10 + $0xfa8] sm:$0xff]
    %v1388 = vld [vmem:[#allocation10 + $0xfb0] sm:$0xff]
    %v1389 = vld [vmem:[#allocation10 + $0xfb8] sm:$0xff]
    %v1390 = vld [vmem:[#allocation10 + $0xfc0] sm:$0xff]
    %v1391 = vld [vmem:[#allocation10 + $0xfc8] sm:$0xff]
    %v1392 = vld [vmem:[#allocation10 + $0xfd0] sm:$0xff]
    %v1393 = vld [vmem:[#allocation10 + $0xfd8] sm:$0xff]
    %v1394 = vld [vmem:[#allocation10 + $0xfe0] sm:$0xff]
    %v1395 = vld [vmem:[#allocation10 + $0xfe8] sm:$0xff]
    %v1396 = vld [vmem:[#allocation10 + $0xff0] sm:$0xff]
    %v1397 = vld [vmem:[#allocation10 + $0xff8] sm:$0xff]
    %v1398 = vld [vmem:[#allocation10 + $0x1000] sm:$0xff]
    %v1399 = vld [vmem:[#allocation10 + $0x1008] sm:$0xff]
    %v1400 = vld [vmem:[#allocation10 + $0x1010] sm:$0xff]
    %v1401 = vld [vmem:[#allocation10 + $0x1018] sm:$0xff]
    %v1402 = vld [vmem:[#allocation10 + $0x1020] sm:$0xff]
    %v1403 = vld [vmem:[#allocation10 + $0x1028] sm:$0xff]
    %v1404 = vld [vmem:[#allocation10 + $0x1030] sm:$0xff]
    %v1405 = vld [vmem:[#allocation10 + $0x1038] sm:$0xff]
    %v1406 = vld [vmem:[#allocation10 + $0x1040] sm:$0xff]
    %v1407 = vld [vmem:[#allocation10 + $0x1048] sm:$0xff]
    %v1408 = vld [vmem:[#allocation10 + $0x1050] sm:$0xff]
    %v1409 = vld [vmem:[#allocation10 + $0x1058] sm:$0xff]
    %v1410 = vld [vmem:[#allocation10 + $0x1060] sm:$0xff]
    %v1411 = vld [vmem:[#allocation10 + $0x1068] sm:$0xff]
    %v1412 = vld [vmem:[#allocation10 + $0x1070] sm:$0xff]
    %v1413 = vld [vmem:[#allocation10 + $0x1078] sm:$0xff]
    %v1414 = vld [vmem:[#allocation10 + $0x1080] sm:$0xff]
    %v1415 = vld [vmem:[#allocation10 + $0x1088] sm:$0xff]
    %v1416 = vld [vmem:[#allocation10 + $0x1090] sm:$0xff]
    %v1417 = vld [vmem:[#allocation10 + $0x1098] sm:$0xff]
    %v1418 = vld [vmem:[#allocation10 + $0x10a0] sm:$0xff]
    %v1419 = vld [vmem:[#allocation10 + $0x10a8] sm:$0xff]
    %v1420 = vld [vmem:[#allocation10 + $0x10b0] sm:$0xff]
    %v1421 = vld [vmem:[#allocation10 + $0x10b8] sm:$0xff]
    %v1422 = vld [vmem:[#allocation10 + $0x10c0] sm:$0xff]
    %v1423 = vld [vmem:[#allocation10 + $0x10c8] sm:$0xff]
    %v1424 = vld [vmem:[#allocation10 + $0x10d0] sm:$0xff]
    %v1425 = vld [vmem:[#allocation10 + $0x10d8] sm:$0xff]
    %v1426 = vld [vmem:[#allocation10 + $0x10e0] sm:$0xff]
    %v1427 = vld [vmem:[#allocation10 + $0x10e8] sm:$0xff]
    %v1428 = vld [vmem:[#allocation10 + $0x10f0] sm:$0xff]
    %v1429 = vld [vmem:[#allocation10 + $0x10f8] sm:$0xff]
    %v1430 = vld [vmem:[#allocation10 + $0x1100] sm:$0xff]
    %v1431 = vld [vmem:[#allocation10 + $0x1108] sm:$0xff]
    %v1432 = vld [vmem:[#allocation10 + $0x1110] sm:$0xff]
    %v1433 = vld [vmem:[#allocation10 + $0x1118] sm:$0xff]
    %v1434 = vld [vmem:[#allocation10 + $0x1120] sm:$0xff]
    %v1435 = vld [vmem:[#allocation10 + $0x1128] sm:$0xff]
    %v1436 = vld [vmem:[#allocation10 + $0x1130] sm:$0xff]
    %v1437 = vld [vmem:[#allocation10 + $0x1138] sm:$0xff]
    %v1438 = vld [vmem:[#allocation10 + $0x1140] sm:$0xff]
    %v1439 = vld [vmem:[#allocation10 + $0x1148] sm:$0xff]
    %v1440 = vld [vmem:[#allocation10 + $0x1150] sm:$0xff]
    %v1441 = vld [vmem:[#allocation10 + $0x1158] sm:$0xff]
    %v1442 = vld [vmem:[#allocation10 + $0x1160] sm:$0xff]
    %v1443 = vld [vmem:[#allocation10 + $0x1168] sm:$0xff]
    %v1444 = vld [vmem:[#allocation10 + $0x1170] sm:$0xff]
    %v1445 = vld [vmem:[#allocation10 + $0x1178] sm:$0xff]
    %v1446 = vld [vmem:[#allocation10 + $0x1180] sm:$0xff]
    %v1447 = vld [vmem:[#allocation10 + $0x1188] sm:$0xff]
    %v1448 = vld [vmem:[#allocation10 + $0x1190] sm:$0xff]
    %v1449 = vld [vmem:[#allocation10 + $0x1198] sm:$0xff]
    %v1450 = vld [vmem:[#allocation10 + $0x11a0] sm:$0xff]
    %v1451 = vld [vmem:[#allocation10 + $0x11a8] sm:$0xff]
    %v1452 = vld [vmem:[#allocation10 + $0x11b0] sm:$0xff]
    %v1453 = vld [vmem:[#allocation10 + $0x11b8] sm:$0xff]
    %v1454 = vld [vmem:[#allocation10 + $0x11c0] sm:$0xff]
    %v1455 = vld [vmem:[#allocation10 + $0x11c8] sm:$0xff]
    %v1456 = vld [vmem:[#allocation10 + $0x11d0] sm:$0xff]
    %v1457 = vld [vmem:[#allocation10 + $0x11d8] sm:$0xff]
    %v1458 = vld [vmem:[#allocation10 + $0x11e0] sm:$0xff]
    %v1459 = vld [vmem:[#allocation10 + $0x11e8] sm:$0xff]
    %v1460 = vld [vmem:[#allocation10 + $0x11f0] sm:$0xff]
    %v1461 = vld [vmem:[#allocation10 + $0x11f8] sm:$0xff]
    %v1462 = vld [vmem:[#allocation10 + $0x1200] sm:$0xff]
    %v1463 = vld [vmem:[#allocation10 + $0x1208] sm:$0xff]
    %v1464 = vld [vmem:[#allocation10 + $0x1210] sm:$0xff]
    %v1465 = vld [vmem:[#allocation10 + $0x1218] sm:$0xff]
    %v1466 = vld [vmem:[#allocation10 + $0x1220] sm:$0xff]
    %v1467 = vld [vmem:[#allocation10 + $0x1228] sm:$0xff]
    %v1468 = vld [vmem:[#allocation10 + $0x1230] sm:$0xff]
    %v1469 = vld [vmem:[#allocation10 + $0x1238] sm:$0xff]
    %v1470 = vld [vmem:[#allocation10 + $0x1240] sm:$0xff]
    %v1471 = vld [vmem:[#allocation10 + $0x1248] sm:$0xff]
    %v1472 = vld [vmem:[#allocation10 + $0x1250] sm:$0xff]
    %v1473 = vld [vmem:[#allocation10 + $0x1258] sm:$0xff]
    %v1474 = vld [vmem:[#allocation10 + $0x1260] sm:$0xff]
    %v1475 = vld [vmem:[#allocation10 + $0x1268] sm:$0xff]
    %v1476 = vld [vmem:[#allocation10 + $0x1270] sm:$0xff]
    %v1477 = vld [vmem:[#allocation10 + $0x1278] sm:$0xff]
    %v1478 = vld [vmem:[#allocation10 + $0x1280] sm:$0xff]
    %v1479 = vld [vmem:[#allocation10 + $0x1288] sm:$0xff]
    %v1480 = vld [vmem:[#allocation10 + $0x1290] sm:$0xff]
    %v1481 = vld [vmem:[#allocation10 + $0x1298] sm:$0xff]
    %v1482 = vld [vmem:[#allocation10 + $0x12a0] sm:$0xff]
    %v1483 = vld [vmem:[#allocation10 + $0x12a8] sm:$0xff]
    %v1484 = vld [vmem:[#allocation10 + $0x12b0] sm:$0xff]
    %v1485 = vld [vmem:[#allocation10 + $0x12b8] sm:$0xff]
    %v1486 = vld [vmem:[#allocation10 + $0x12c0] sm:$0xff]
    %v1487 = vld [vmem:[#allocation10 + $0x12c8] sm:$0xff]
    %v1488 = vld [vmem:[#allocation10 + $0x12d0] sm:$0xff]
    %v1489 = vld [vmem:[#allocation10 + $0x12d8] sm:$0xff]
    %v1490 = vld [vmem:[#allocation10 + $0x12e0] sm:$0xff]
    %v1491 = vld [vmem:[#allocation10 + $0x12e8] sm:$0xff]
    %v1492 = vld [vmem:[#allocation10 + $0x12f0] sm:$0xff]
    %v1493 = vld [vmem:[#allocation10 + $0x12f8] sm:$0xff]
    %v1494 = vld [vmem:[#allocation10 + $0x1300] sm:$0xff]
    %v1495 = vld [vmem:[#allocation10 + $0x1308] sm:$0xff]
    %v1496 = vld [vmem:[#allocation10 + $0x1310] sm:$0xff]
    %v1497 = vld [vmem:[#allocation10 + $0x1318] sm:$0xff]
    %v1498 = vld [vmem:[#allocation10 + $0x1320] sm:$0xff]
    %v1499 = vld [vmem:[#allocation10 + $0x1328] sm:$0xff]
    %v1500 = vld [vmem:[#allocation10 + $0x1330] sm:$0xff]
    %v1501 = vld [vmem:[#allocation10 + $0x1338] sm:$0xff]
    %v1502 = vld [vmem:[#allocation10 + $0x1340] sm:$0xff]
    %v1503 = vld [vmem:[#allocation10 + $0x1348] sm:$0xff]
    %v1504 = vld [vmem:[#allocation10 + $0x1350] sm:$0xff]
    %v1505 = vld [vmem:[#allocation10 + $0x1358] sm:$0xff]
    %v1506 = vld [vmem:[#allocation10 + $0x1360] sm:$0xff]
    %v1507 = vld [vmem:[#allocation10 + $0x1368] sm:$0xff]
    %v1508 = vld [vmem:[#allocation10 + $0x1370] sm:$0xff]
    %v1509 = vld [vmem:[#allocation10 + $0x1378] sm:$0xff]
    %v1510 = vld [vmem:[#allocation10 + $0x1380] sm:$0xff]
    %v1511 = vld [vmem:[#allocation10 + $0x1388] sm:$0xff]
    %v1512 = vld [vmem:[#allocation10 + $0x1390] sm:$0xff]
    %v1513 = vld [vmem:[#allocation10 + $0x1398] sm:$0xff]
    %v1514 = vld [vmem:[#allocation10 + $0x13a0] sm:$0xff]
    %v1515 = vld [vmem:[#allocation10 + $0x13a8] sm:$0xff]
    %v1516 = vld [vmem:[#allocation10 + $0x13b0] sm:$0xff]
    %v1517 = vld [vmem:[#allocation10 + $0x13b8] sm:$0xff]
    %v1518 = vld [vmem:[#allocation10 + $0x13c0] sm:$0xff]
    %v1519 = vld [vmem:[#allocation10 + $0x13c8] sm:$0xff]
    %v1520 = vld [vmem:[#allocation10 + $0x13d0] sm:$0xff]
    %v1521 = vld [vmem:[#allocation10 + $0x13d8] sm:$0xff]
    %v1522 = vld [vmem:[#allocation10 + $0x13e0] sm:$0xff]
    %v1523 = vld [vmem:[#allocation10 + $0x13e8] sm:$0xff]
    %v1524 = vld [vmem:[#allocation10 + $0x13f0] sm:$0xff]
    %v1525 = vld [vmem:[#allocation10 + $0x13f8] sm:$0xff]
    %v1526 = vld [vmem:[#allocation10 + $0x1400] sm:$0xff]
    %v1527 = vld [vmem:[#allocation10 + $0x1408] sm:$0xff]
    %v1528 = vld [vmem:[#allocation10 + $0x1410] sm:$0xff]
    %v1529 = vld [vmem:[#allocation10 + $0x1418] sm:$0xff]
    %v1530 = vld [vmem:[#allocation10 + $0x1420] sm:$0xff]
    %v1531 = vld [vmem:[#allocation10 + $0x1428] sm:$0xff]
    %v1532 = vld [vmem:[#allocation10 + $0x1430] sm:$0xff]
    %v1533 = vld [vmem:[#allocation10 + $0x1438] sm:$0xff]
    %v1534 = vld [vmem:[#allocation10 + $0x1440] sm:$0xff]
    %v1535 = vld [vmem:[#allocation10 + $0x1448] sm:$0xff]
    %v1536 = vld [vmem:[#allocation10 + $0x1450] sm:$0xff]
    %v1537 = vld [vmem:[#allocation10 + $0x1458] sm:$0xff]
    %v1538 = vld [vmem:[#allocation10 + $0x1460] sm:$0xff]
    %v1539 = vld [vmem:[#allocation10 + $0x1468] sm:$0xff]
    %v1540 = vld [vmem:[#allocation10 + $0x1470] sm:$0xff]
    %v1541 = vld [vmem:[#allocation10 + $0x1478] sm:$0xff]
    %v1542 = vld [vmem:[#allocation10 + $0x1480] sm:$0xff]
    %v1543 = vld [vmem:[#allocation10 + $0x1488] sm:$0xff]
    %v1544 = vld [vmem:[#allocation10 + $0x1490] sm:$0xff]
    %v1545 = vld [vmem:[#allocation10 + $0x1498] sm:$0xff]
    %v1546 = vld [vmem:[#allocation10 + $0x14a0] sm:$0xff]
    %v1547 = vld [vmem:[#allocation10 + $0x14a8] sm:$0xff]
    %v1548 = vld [vmem:[#allocation10 + $0x14b0] sm:$0xff]
    %v1549 = vld [vmem:[#allocation10 + $0x14b8] sm:$0xff]
    %v1550 = vld [vmem:[#allocation10 + $0x14c0] sm:$0xff]
    %v1551 = vld [vmem:[#allocation10 + $0x14c8] sm:$0xff]
    %v1552 = vld [vmem:[#allocation10 + $0x14d0] sm:$0xff]
    %v1553 = vld [vmem:[#allocation10 + $0x14d8] sm:$0xff]
    %v1554 = vld [vmem:[#allocation10 + $0x14e0] sm:$0xff]
    %v1555 = vld [vmem:[#allocation10 + $0x14e8] sm:$0xff]
    %v1556 = vld [vmem:[#allocation10 + $0x14f0] sm:$0xff]
    %v1557 = vld [vmem:[#allocation10 + $0x14f8] sm:$0xff]
    %v1558 = vld [vmem:[#allocation10 + $0x1500] sm:$0xff]
    %v1559 = vld [vmem:[#allocation10 + $0x1508] sm:$0xff]
    %v1560 = vld [vmem:[#allocation10 + $0x1510] sm:$0xff]
    %v1561 = vld [vmem:[#allocation10 + $0x1518] sm:$0xff]
    %v1562 = vld [vmem:[#allocation10 + $0x1520] sm:$0xff]
    %v1563 = vld [vmem:[#allocation10 + $0x1528] sm:$0xff]
    %v1564 = vld [vmem:[#allocation10 + $0x1530] sm:$0xff]
    %v1565 = vld [vmem:[#allocation10 + $0x1538] sm:$0xff]
    %v1566 = vld [vmem:[#allocation10 + $0x1540] sm:$0xff]
    %v1567 = vld [vmem:[#allocation10 + $0x1548] sm:$0xff]
    %v1568 = vld [vmem:[#allocation10 + $0x1550] sm:$0xff]
    %v1569 = vld [vmem:[#allocation10 + $0x1558] sm:$0xff]
    %v1570 = vld [vmem:[#allocation10 + $0x1560] sm:$0xff]
    %v1571 = vld [vmem:[#allocation10 + $0x1568] sm:$0xff]
    %v1572 = vld [vmem:[#allocation10 + $0x1570] sm:$0xff]
    %v1573 = vld [vmem:[#allocation10 + $0x1578] sm:$0xff]
    %v1574 = vld [vmem:[#allocation10 + $0x1580] sm:$0xff]
    %v1575 = vld [vmem:[#allocation10 + $0x1588] sm:$0xff]
    %v1576 = vld [vmem:[#allocation10 + $0x1590] sm:$0xff]
    %v1577 = vld [vmem:[#allocation10 + $0x1598] sm:$0xff]
    %v1578 = vld [vmem:[#allocation10 + $0x15a0] sm:$0xff]
    %v1579 = vld [vmem:[#allocation10 + $0x15a8] sm:$0xff]
    %v1580 = vld [vmem:[#allocation10 + $0x15b0] sm:$0xff]
    %v1581 = vld [vmem:[#allocation10 + $0x15b8] sm:$0xff]
    %v1582 = vld [vmem:[#allocation10 + $0x15c0] sm:$0xff]
    %v1583 = vld [vmem:[#allocation10 + $0x15c8] sm:$0xff]
    %v1584 = vld [vmem:[#allocation10 + $0x15d0] sm:$0xff]
    %v1585 = vld [vmem:[#allocation10 + $0x15d8] sm:$0xff]
    %v1586 = vld [vmem:[#allocation10 + $0x15e0] sm:$0xff]
    %v1587 = vld [vmem:[#allocation10 + $0x15e8] sm:$0xff]
    %v1588 = vld [vmem:[#allocation10 + $0x15f0] sm:$0xff]
    %v1589 = vld [vmem:[#allocation10 + $0x15f8] sm:$0xff]
    %v1590 = vld [vmem:[#allocation10 + $0x1600] sm:$0xff]
    %v1591 = vld [vmem:[#allocation10 + $0x1608] sm:$0xff]
    %v1592 = vld [vmem:[#allocation10 + $0x1610] sm:$0xff]
    %v1593 = vld [vmem:[#allocation10 + $0x1618] sm:$0xff]
    %v1594 = vld [vmem:[#allocation10 + $0x1620] sm:$0xff]
    %v1595 = vld [vmem:[#allocation10 + $0x1628] sm:$0xff]
    %v1596 = vld [vmem:[#allocation10 + $0x1630] sm:$0xff]
    %v1597 = vld [vmem:[#allocation10 + $0x1638] sm:$0xff]
    %v1598 = vld [vmem:[#allocation10 + $0x1640] sm:$0xff]
    %v1599 = vld [vmem:[#allocation10 + $0x1648] sm:$0xff]
    %v1600 = vld [vmem:[#allocation10 + $0x1650] sm:$0xff]
    %v1601 = vld [vmem:[#allocation10 + $0x1658] sm:$0xff]
    %v1602 = vld [vmem:[#allocation10 + $0x1660] sm:$0xff]
    %v1603 = vld [vmem:[#allocation10 + $0x1668] sm:$0xff]
    %v1604 = vld [vmem:[#allocation10 + $0x1670] sm:$0xff]
    %v1605 = vld [vmem:[#allocation10 + $0x1678] sm:$0xff]
    %v1606 = vld [vmem:[#allocation10 + $0x1680] sm:$0xff]
    %v1607 = vld [vmem:[#allocation10 + $0x1688] sm:$0xff]
    %v1608 = vld [vmem:[#allocation10 + $0x1690] sm:$0xff]
    %v1609 = vld [vmem:[#allocation10 + $0x1698] sm:$0xff]
    %v1610 = vld [vmem:[#allocation10 + $0x16a0] sm:$0xff]
    %v1611 = vld [vmem:[#allocation10 + $0x16a8] sm:$0xff]
    %v1612 = vld [vmem:[#allocation10 + $0x16b0] sm:$0xff]
    %v1613 = vld [vmem:[#allocation10 + $0x16b8] sm:$0xff]
    %v1614 = vld [vmem:[#allocation10 + $0x16c0] sm:$0xff]
    %v1615 = vld [vmem:[#allocation10 + $0x16c8] sm:$0xff]
    %v1616 = vld [vmem:[#allocation10 + $0x16d0] sm:$0xff]
    %v1617 = vld [vmem:[#allocation10 + $0x16d8] sm:$0xff]
    %v1618 = vld [vmem:[#allocation10 + $0x16e0] sm:$0xff]
    %v1619 = vld [vmem:[#allocation10 + $0x16e8] sm:$0xff]
    %v1620 = vld [vmem:[#allocation10 + $0x16f0] sm:$0xff]
    %v1621 = vld [vmem:[#allocation10 + $0x16f8] sm:$0xff]
    %v1622 = vld [vmem:[#allocation10 + $0x1700] sm:$0xff]
    %v1623 = vld [vmem:[#allocation10 + $0x1708] sm:$0xff]
    %v1624 = vld [vmem:[#allocation10 + $0x1710] sm:$0xff]
    %v1625 = vld [vmem:[#allocation10 + $0x1718] sm:$0xff]
    %v1626 = vld [vmem:[#allocation10 + $0x1720] sm:$0xff]
    %v1627 = vld [vmem:[#allocation10 + $0x1728] sm:$0xff]
    %v1628 = vld [vmem:[#allocation10 + $0x1730] sm:$0xff]
    %v1629 = vld [vmem:[#allocation10 + $0x1738] sm:$0xff]
    %v1630 = vld [vmem:[#allocation10 + $0x1740] sm:$0xff]
    %v1631 = vld [vmem:[#allocation10 + $0x1748] sm:$0xff]
    %v1632 = vld [vmem:[#allocation10 + $0x1750] sm:$0xff]
    %v1633 = vld [vmem:[#allocation10 + $0x1758] sm:$0xff]
    %v1634 = vld [vmem:[#allocation10 + $0x1760] sm:$0xff]
    %v1635 = vld [vmem:[#allocation10 + $0x1768] sm:$0xff]
    %v1636 = vld [vmem:[#allocation10 + $0x1770] sm:$0xff]
    %v1637 = vld [vmem:[#allocation10 + $0x1778] sm:$0xff]
    %v1638 = vld [vmem:[#allocation10 + $0x1780] sm:$0xff]
    %v1639 = vld [vmem:[#allocation10 + $0x1788] sm:$0xff]
    %v1640 = vld [vmem:[#allocation10 + $0x1790] sm:$0xff]
    %v1641 = vld [vmem:[#allocation10 + $0x1798] sm:$0xff]
    %v1642 = vld [vmem:[#allocation10 + $0x17a0] sm:$0xff]
    %v1643 = vld [vmem:[#allocation10 + $0x17a8] sm:$0xff]
    %v1644 = vld [vmem:[#allocation10 + $0x17b0] sm:$0xff]
    %v1645 = vld [vmem:[#allocation10 + $0x17b8] sm:$0xff]
    %v1646 = vld [vmem:[#allocation10 + $0x17c0] sm:$0xff]
    %v1647 = vld [vmem:[#allocation10 + $0x17c8] sm:$0xff]
    %v1648 = vld [vmem:[#allocation10 + $0x17d0] sm:$0xff]
    %v1649 = vld [vmem:[#allocation10 + $0x17d8] sm:$0xff]
    %v1650 = vld [vmem:[#allocation10 + $0x17e0] sm:$0xff]
    %v1651 = vld [vmem:[#allocation10 + $0x17e8] sm:$0xff]
    %v1652 = vld [vmem:[#allocation10 + $0x17f0] sm:$0xff]
    %v1653 = vld [vmem:[#allocation10 + $0x17f8] sm:$0xff]
    %v1654 = vld [vmem:[#allocation10 + $0x1800] sm:$0xff]
    %v1655 = vld [vmem:[#allocation10 + $0x1808] sm:$0xff]
    %v1656 = vld [vmem:[#allocation10 + $0x1810] sm:$0xff]
    %v1657 = vld [vmem:[#allocation10 + $0x1818] sm:$0xff]
    %v1658 = vld [vmem:[#allocation10 + $0x1820] sm:$0xff]
    %v1659 = vld [vmem:[#allocation10 + $0x1828] sm:$0xff]
    %v1660 = vld [vmem:[#allocation10 + $0x1830] sm:$0xff]
    %v1661 = vld [vmem:[#allocation10 + $0x1838] sm:$0xff]
    %v1662 = vld [vmem:[#allocation10 + $0x1840] sm:$0xff]
    %v1663 = vld [vmem:[#allocation10 + $0x1848] sm:$0xff]
    %v1664 = vld [vmem:[#allocation10 + $0x1850] sm:$0xff]
    %v1665 = vld [vmem:[#allocation10 + $0x1858] sm:$0xff]
    %v1666 = vld [vmem:[#allocation10 + $0x1860] sm:$0xff]
    %v1667 = vld [vmem:[#allocation10 + $0x1868] sm:$0xff]
    %v1668 = vld [vmem:[#allocation10 + $0x1870] sm:$0xff]
    %v1669 = vld [vmem:[#allocation10 + $0x1878] sm:$0xff]
    %v1670 = vld [vmem:[#allocation10 + $0x1880] sm:$0xff]
    %v1671 = vld [vmem:[#allocation10 + $0x1888] sm:$0xff]
    %v1672 = vld [vmem:[#allocation10 + $0x1890] sm:$0xff]
    %v1673 = vld [vmem:[#allocation10 + $0x1898] sm:$0xff]
    %v1674 = vld [vmem:[#allocation10 + $0x18a0] sm:$0xff]
    %v1675 = vld [vmem:[#allocation10 + $0x18a8] sm:$0xff]
    %v1676 = vld [vmem:[#allocation10 + $0x18b0] sm:$0xff]
    %v1677 = vld [vmem:[#allocation10 + $0x18b8] sm:$0xff]
    %v1678 = vld [vmem:[#allocation10 + $0x18c0] sm:$0xff]
    %v1679 = vld [vmem:[#allocation10 + $0x18c8] sm:$0xff]
    %v1680 = vld [vmem:[#allocation10 + $0x18d0] sm:$0xff]
    %v1681 = vld [vmem:[#allocation10 + $0x18d8] sm:$0xff]
    %v1682 = vld [vmem:[#allocation10 + $0x18e0] sm:$0xff]
    %v1683 = vld [vmem:[#allocation10 + $0x18e8] sm:$0xff]
    %v1684 = vld [vmem:[#allocation10 + $0x18f0] sm:$0xff]
    %v1685 = vld [vmem:[#allocation10 + $0x18f8] sm:$0xff]
    %v1686 = vld [vmem:[#allocation10 + $0x1900] sm:$0xff]
    %v1687 = vld [vmem:[#allocation10 + $0x1908] sm:$0xff]
    %v1688 = vld [vmem:[#allocation10 + $0x1910] sm:$0xff]
    %v1689 = vld [vmem:[#allocation10 + $0x1918] sm:$0xff]
    %v1690 = vld [vmem:[#allocation10 + $0x1920] sm:$0xff]
    %v1691 = vld [vmem:[#allocation10 + $0x1928] sm:$0xff]
    %v1692 = vld [vmem:[#allocation10 + $0x1930] sm:$0xff]
    %v1693 = vld [vmem:[#allocation10 + $0x1938] sm:$0xff]
    %v1694 = vld [vmem:[#allocation10 + $0x1940] sm:$0xff]
    %v1695 = vld [vmem:[#allocation10 + $0x1948] sm:$0xff]
    %v1696 = vld [vmem:[#allocation10 + $0x1950] sm:$0xff]
    %v1697 = vld [vmem:[#allocation10 + $0x1958] sm:$0xff]
    %v1698 = vld [vmem:[#allocation10 + $0x1960] sm:$0xff]
    %v1699 = vld [vmem:[#allocation10 + $0x1968] sm:$0xff]
    %v1700 = vld [vmem:[#allocation10 + $0x1970] sm:$0xff]
    %v1701 = vld [vmem:[#allocation10 + $0x1978] sm:$0xff]
    %v1702 = vld [vmem:[#allocation10 + $0x1980] sm:$0xff]
    %v1703 = vld [vmem:[#allocation10 + $0x1988] sm:$0xff]
    %v1704 = vld [vmem:[#allocation10 + $0x1990] sm:$0xff]
    %v1705 = vld [vmem:[#allocation10 + $0x1998] sm:$0xff]
    %v1706 = vld [vmem:[#allocation10 + $0x19a0] sm:$0xff]
    %v1707 = vld [vmem:[#allocation10 + $0x19a8] sm:$0xff]
    %v1708 = vld [vmem:[#allocation10 + $0x19b0] sm:$0xff]
    %v1709 = vld [vmem:[#allocation10 + $0x19b8] sm:$0xff]
    %v1710 = vld [vmem:[#allocation10 + $0x19c0] sm:$0xff]
    %v1711 = vld [vmem:[#allocation10 + $0x19c8] sm:$0xff]
    %v1712 = vld [vmem:[#allocation10 + $0x19d0] sm:$0xff]
    %v1713 = vld [vmem:[#allocation10 + $0x19d8] sm:$0xff]
    %v1714 = vld [vmem:[#allocation10 + $0x19e0] sm:$0xff]
    %v1715 = vld [vmem:[#allocation10 + $0x19e8] sm:$0xff]
    %v1716 = vld [vmem:[#allocation10 + $0x19f0] sm:$0xff]
    %v1717 = vld [vmem:[#allocation10 + $0x19f8] sm:$0xff]
    %v1718 = vld [vmem:[#allocation10 + $0x1a00] sm:$0xff]
    %v1719 = vld [vmem:[#allocation10 + $0x1a08] sm:$0xff]
    %v1720 = vld [vmem:[#allocation10 + $0x1a10] sm:$0xff]
    %v1721 = vld [vmem:[#allocation10 + $0x1a18] sm:$0xff]
    %v1722 = vld [vmem:[#allocation10 + $0x1a20] sm:$0xff]
    %v1723 = vld [vmem:[#allocation10 + $0x1a28] sm:$0xff]
    %v1724 = vld [vmem:[#allocation10 + $0x1a30] sm:$0xff]
    %v1725 = vld [vmem:[#allocation10 + $0x1a38] sm:$0xff]
    %v1726 = vld [vmem:[#allocation10 + $0x1a40] sm:$0xff]
    %v1727 = vld [vmem:[#allocation10 + $0x1a48] sm:$0xff]
    %v1728 = vld [vmem:[#allocation10 + $0x1a50] sm:$0xff]
    %v1729 = vld [vmem:[#allocation10 + $0x1a58] sm:$0xff]
    %v1730 = vld [vmem:[#allocation10 + $0x1a60] sm:$0xff]
    %v1731 = vld [vmem:[#allocation10 + $0x1a68] sm:$0xff]
    %v1732 = vld [vmem:[#allocation10 + $0x1a70] sm:$0xff]
    %v1733 = vld [vmem:[#allocation10 + $0x1a78] sm:$0xff]
    %v1734 = vld [vmem:[#allocation10 + $0x1a80] sm:$0xff]
    %v1735 = vld [vmem:[#allocation10 + $0x1a88] sm:$0xff]
    %v1736 = vld [vmem:[#allocation10 + $0x1a90] sm:$0xff]
    %v1737 = vld [vmem:[#allocation10 + $0x1a98] sm:$0xff]
    %v1738 = vld [vmem:[#allocation10 + $0x1aa0] sm:$0xff]
    %v1739 = vld [vmem:[#allocation10 + $0x1aa8] sm:$0xff]
    %v1740 = vld [vmem:[#allocation10 + $0x1ab0] sm:$0xff]
    %v1741 = vld [vmem:[#allocation10 + $0x1ab8] sm:$0xff]
    %v1742 = vld [vmem:[#allocation10 + $0x1ac0] sm:$0xff]
    %v1743 = vld [vmem:[#allocation10 + $0x1ac8] sm:$0xff]
    %v1744 = vld [vmem:[#allocation10 + $0x1ad0] sm:$0xff]
    %v1745 = vld [vmem:[#allocation10 + $0x1ad8] sm:$0xff]
    %v1746 = vld [vmem:[#allocation10 + $0x1ae0] sm:$0xff]
    %v1747 = vld [vmem:[#allocation10 + $0x1ae8] sm:$0xff]
    %v1748 = vld [vmem:[#allocation10 + $0x1af0] sm:$0xff]
    %v1749 = vld [vmem:[#allocation10 + $0x1af8] sm:$0xff]
    %v1750 = vld [vmem:[#allocation10 + $0x1b00] sm:$0xff]
    %v1751 = vld [vmem:[#allocation10 + $0x1b08] sm:$0xff]
    %v1752 = vld [vmem:[#allocation10 + $0x1b10] sm:$0xff]
    %v1753 = vld [vmem:[#allocation10 + $0x1b18] sm:$0xff]
    %v1754 = vld [vmem:[#allocation10 + $0x1b20] sm:$0xff]
    %v1755 = vld [vmem:[#allocation10 + $0x1b28] sm:$0xff]
    %v1756 = vld [vmem:[#allocation10 + $0x1b30] sm:$0xff]
    %v1757 = vld [vmem:[#allocation10 + $0x1b38] sm:$0xff]
    %v1758 = vld [vmem:[#allocation10 + $0x1b40] sm:$0xff]
    %v1759 = vld [vmem:[#allocation10 + $0x1b48] sm:$0xff]
    %v1760 = vld [vmem:[#allocation10 + $0x1b50] sm:$0xff]
    %v1761 = vld [vmem:[#allocation10 + $0x1b58] sm:$0xff]
    %v1762 = vld [vmem:[#allocation10 + $0x1b60] sm:$0xff]
    %v1763 = vld [vmem:[#allocation10 + $0x1b68] sm:$0xff]
    %v1764 = vld [vmem:[#allocation10 + $0x1b70] sm:$0xff]
    %v1765 = vld [vmem:[#allocation10 + $0x1b78] sm:$0xff]
    %v1766 = vld [vmem:[#allocation10 + $0x1b80] sm:$0xff]
    %v1767 = vld [vmem:[#allocation10 + $0x1b88] sm:$0xff]
    %v1768 = vld [vmem:[#allocation10 + $0x1b90] sm:$0xff]
    %v1769 = vld [vmem:[#allocation10 + $0x1b98] sm:$0xff]
    %v1770 = vld [vmem:[#allocation10 + $0x1ba0] sm:$0xff]
    %v1771 = vld [vmem:[#allocation10 + $0x1ba8] sm:$0xff]
    %v1772 = vld [vmem:[#allocation10 + $0x1bb0] sm:$0xff]
    %v1773 = vld [vmem:[#allocation10 + $0x1bb8] sm:$0xff]
    %v1774 = vld [vmem:[#allocation10 + $0x1bc0] sm:$0xff]
    %v1775 = vld [vmem:[#allocation10 + $0x1bc8] sm:$0xff]
    %v1776 = vld [vmem:[#allocation10 + $0x1bd0] sm:$0xff]
    %v1777 = vld [vmem:[#allocation10 + $0x1bd8] sm:$0xff]
    %v1778 = vld [vmem:[#allocation10 + $0x1be0] sm:$0xff]
    %v1779 = vld [vmem:[#allocation10 + $0x1be8] sm:$0xff]
    %v1780 = vld [vmem:[#allocation10 + $0x1bf0] sm:$0xff]
    %v1781 = vld [vmem:[#allocation10 + $0x1bf8] sm:$0xff]
    %v1782 = vld [vmem:[#allocation10 + $0x1c00] sm:$0xff]
    %v1783 = vld [vmem:[#allocation10 + $0x1c08] sm:$0xff]
    %v1784 = vld [vmem:[#allocation10 + $0x1c10] sm:$0xff]
    %v1785 = vld [vmem:[#allocation10 + $0x1c18] sm:$0xff]
    %v1786 = vld [vmem:[#allocation10 + $0x1c20] sm:$0xff]
    %v1787 = vld [vmem:[#allocation10 + $0x1c28] sm:$0xff]
    %v1788 = vld [vmem:[#allocation10 + $0x1c30] sm:$0xff]
    %v1789 = vld [vmem:[#allocation10 + $0x1c38] sm:$0xff]
    %v1790 = vld [vmem:[#allocation10 + $0x1c40] sm:$0xff]
    %v1791 = vld [vmem:[#allocation10 + $0x1c48] sm:$0xff]
    %v1792 = vld [vmem:[#allocation10 + $0x1c50] sm:$0xff]
    %v1793 = vld [vmem:[#allocation10 + $0x1c58] sm:$0xff]
    %v1794 = vld [vmem:[#allocation10 + $0x1c60] sm:$0xff]
    %v1795 = vld [vmem:[#allocation10 + $0x1c68] sm:$0xff]
    %v1796 = vld [vmem:[#allocation10 + $0x1c70] sm:$0xff]
    %v1797 = vld [vmem:[#allocation10 + $0x1c78] sm:$0xff]
    %v1798 = vld [vmem:[#allocation10 + $0x1c80] sm:$0xff]
    %v1799 = vld [vmem:[#allocation10 + $0x1c88] sm:$0xff]
    %v1800 = vld [vmem:[#allocation10 + $0x1c90] sm:$0xff]
    %v1801 = vld [vmem:[#allocation10 + $0x1c98] sm:$0xff]
    %v1802 = vld [vmem:[#allocation10 + $0x1ca0] sm:$0xff]
    %v1803 = vld [vmem:[#allocation10 + $0x1ca8] sm:$0xff]
    %v1804 = vld [vmem:[#allocation10 + $0x1cb0] sm:$0xff]
    %v1805 = vld [vmem:[#allocation10 + $0x1cb8] sm:$0xff]
    %v1806 = vld [vmem:[#allocation10 + $0x1cc0] sm:$0xff]
    %v1807 = vld [vmem:[#allocation10 + $0x1cc8] sm:$0xff]
    %v1808 = vld [vmem:[#allocation10 + $0x1cd0] sm:$0xff]
    %v1809 = vld [vmem:[#allocation10 + $0x1cd8] sm:$0xff]
    %v1810 = vld [vmem:[#allocation10 + $0x1ce0] sm:$0xff]
    %v1811 = vld [vmem:[#allocation10 + $0x1ce8] sm:$0xff]
    %v1812 = vld [vmem:[#allocation10 + $0x1cf0] sm:$0xff]
    %v1813 = vld [vmem:[#allocation10 + $0x1cf8] sm:$0xff]
    %v1814 = vld [vmem:[#allocation10 + $0x1d00] sm:$0xff]
    %v1815 = vld [vmem:[#allocation10 + $0x1d08] sm:$0xff]
    %v1816 = vld [vmem:[#allocation10 + $0x1d10] sm:$0xff]
    %v1817 = vld [vmem:[#allocation10 + $0x1d18] sm:$0xff]
    %v1818 = vld [vmem:[#allocation10 + $0x1d20] sm:$0xff]
    %v1819 = vld [vmem:[#allocation10 + $0x1d28] sm:$0xff]
    %v1820 = vld [vmem:[#allocation10 + $0x1d30] sm:$0xff]
    %v1821 = vld [vmem:[#allocation10 + $0x1d38] sm:$0xff]
    %v1822 = vld [vmem:[#allocation10 + $0x1d40] sm:$0xff]
    %v1823 = vld [vmem:[#allocation10 + $0x1d48] sm:$0xff]
    %v1824 = vld [vmem:[#allocation10 + $0x1d50] sm:$0xff]
    %v1825 = vld [vmem:[#allocation10 + $0x1d58] sm:$0xff]
    %v1826 = vld [vmem:[#allocation10 + $0x1d60] sm:$0xff]
    %v1827 = vld [vmem:[#allocation10 + $0x1d68] sm:$0xff]
    %v1828 = vld [vmem:[#allocation10 + $0x1d70] sm:$0xff]
    %v1829 = vld [vmem:[#allocation10 + $0x1d78] sm:$0xff]
    %v1830 = vld [vmem:[#allocation10 + $0x1d80] sm:$0xff]
    %v1831 = vld [vmem:[#allocation10 + $0x1d88] sm:$0xff]
    %v1832 = vld [vmem:[#allocation10 + $0x1d90] sm:$0xff]
    %v1833 = vld [vmem:[#allocation10 + $0x1d98] sm:$0xff]
    %v1834 = vld [vmem:[#allocation10 + $0x1da0] sm:$0xff]
    %v1835 = vld [vmem:[#allocation10 + $0x1da8] sm:$0xff]
    %v1836 = vld [vmem:[#allocation10 + $0x1db0] sm:$0xff]
    %v1837 = vld [vmem:[#allocation10 + $0x1db8] sm:$0xff]
    %v1838 = vld [vmem:[#allocation10 + $0x1dc0] sm:$0xff]
    %v1839 = vld [vmem:[#allocation10 + $0x1dc8] sm:$0xff]
    %v1840 = vld [vmem:[#allocation10 + $0x1dd0] sm:$0xff]
    %v1841 = vld [vmem:[#allocation10 + $0x1dd8] sm:$0xff]
    %v1842 = vld [vmem:[#allocation10 + $0x1de0] sm:$0xff]
    %v1843 = vld [vmem:[#allocation10 + $0x1de8] sm:$0xff]
    %v1844 = vld [vmem:[#allocation10 + $0x1df0] sm:$0xff]
    %v1845 = vld [vmem:[#allocation10 + $0x1df8] sm:$0xff]
    %v1846 = vld [vmem:[#allocation10 + $0x1e00] sm:$0xff]
    %v1847 = vld [vmem:[#allocation10 + $0x1e08] sm:$0xff]
    %v1848 = vld [vmem:[#allocation10 + $0x1e10] sm:$0xff]
    %v1849 = vld [vmem:[#allocation10 + $0x1e18] sm:$0xff]
    %v1850 = vld [vmem:[#allocation10 + $0x1e20] sm:$0xff]
    %v1851 = vld [vmem:[#allocation10 + $0x1e28] sm:$0xff]
    %v1852 = vld [vmem:[#allocation10 + $0x1e30] sm:$0xff]
    %v1853 = vld [vmem:[#allocation10 + $0x1e38] sm:$0xff]
    %v1854 = vld [vmem:[#allocation10 + $0x1e40] sm:$0xff]
    %v1855 = vld [vmem:[#allocation10 + $0x1e48] sm:$0xff]
    %v1856 = vld [vmem:[#allocation10 + $0x1e50] sm:$0xff]
    %v1857 = vld [vmem:[#allocation10 + $0x1e58] sm:$0xff]
    %v1858 = vld [vmem:[#allocation10 + $0x1e60] sm:$0xff]
    %v1859 = vld [vmem:[#allocation10 + $0x1e68] sm:$0xff]
    %v1860 = vld [vmem:[#allocation10 + $0x1e70] sm:$0xff]
    %v1861 = vld [vmem:[#allocation10 + $0x1e78] sm:$0xff]
    %v1862 = vld [vmem:[#allocation10 + $0x1e80] sm:$0xff]
    %v1863 = vld [vmem:[#allocation10 + $0x1e88] sm:$0xff]
    %v1864 = vld [vmem:[#allocation10 + $0x1e90] sm:$0xff]
    %v1865 = vld [vmem:[#allocation10 + $0x1e98] sm:$0xff]
    %v1866 = vld [vmem:[#allocation10 + $0x1ea0] sm:$0xff]
    %v1867 = vld [vmem:[#allocation10 + $0x1ea8] sm:$0xff]
    %v1868 = vld [vmem:[#allocation10 + $0x1eb0] sm:$0xff]
    %v1869 = vld [vmem:[#allocation10 + $0x1eb8] sm:$0xff]
    %v1870 = vld [vmem:[#allocation10 + $0x1ec0] sm:$0xff]
    %v1871 = vld [vmem:[#allocation10 + $0x1ec8] sm:$0xff]
    %v1872 = vld [vmem:[#allocation10 + $0x1ed0] sm:$0xff]
    %v1873 = vld [vmem:[#allocation10 + $0x1ed8] sm:$0xff]
    %v1874 = vld [vmem:[#allocation10 + $0x1ee0] sm:$0xff]
    %v1875 = vld [vmem:[#allocation10 + $0x1ee8] sm:$0xff]
    %v1876 = vld [vmem:[#allocation10 + $0x1ef0] sm:$0xff]
    %v1877 = vld [vmem:[#allocation10 + $0x1ef8] sm:$0xff]
    %v1878 = vld [vmem:[#allocation10 + $0x1f00] sm:$0xff]
    %v1879 = vld [vmem:[#allocation10 + $0x1f08] sm:$0xff]
    %v1880 = vld [vmem:[#allocation10 + $0x1f10] sm:$0xff]
    %v1881 = vld [vmem:[#allocation10 + $0x1f18] sm:$0xff]
    %v1882 = vld [vmem:[#allocation10 + $0x1f20] sm:$0xff]
    %v1883 = vld [vmem:[#allocation10 + $0x1f28] sm:$0xff]
    %v1884 = vld [vmem:[#allocation10 + $0x1f30] sm:$0xff]
    %v1885 = vld [vmem:[#allocation10 + $0x1f38] sm:$0xff]
    %v1886 = vld [vmem:[#allocation10 + $0x1f40] sm:$0xff]
    %v1887 = vld [vmem:[#allocation10 + $0x1f48] sm:$0xff]
    %v1888 = vld [vmem:[#allocation10 + $0x1f50] sm:$0xff]
    %v1889 = vld [vmem:[#allocation10 + $0x1f58] sm:$0xff]
    %v1890 = vld [vmem:[#allocation10 + $0x1f60] sm:$0xff]
    %v1891 = vld [vmem:[#allocation10 + $0x1f68] sm:$0xff]
    %v1892 = vld [vmem:[#allocation10 + $0x1f70] sm:$0xff]
    %v1893 = vld [vmem:[#allocation10 + $0x1f78] sm:$0xff]
    %v1894 = vld [vmem:[#allocation10 + $0x1f80] sm:$0xff]
    %v1895 = vld [vmem:[#allocation10 + $0x1f88] sm:$0xff]
    %v1896 = vld [vmem:[#allocation10 + $0x1f90] sm:$0xff]
    %v1897 = vld [vmem:[#allocation10 + $0x1f98] sm:$0xff]
    %v1898 = vld [vmem:[#allocation10 + $0x1fa0] sm:$0xff]
    %v1899 = vld [vmem:[#allocation10 + $0x1fa8] sm:$0xff]
    %v1900 = vld [vmem:[#allocation10 + $0x1fb0] sm:$0xff]
    %v1901 = vld [vmem:[#allocation10 + $0x1fb8] sm:$0xff]
    %v1902 = vld [vmem:[#allocation10 + $0x1fc0] sm:$0xff]
    %v1903 = vld [vmem:[#allocation10 + $0x1fc8] sm:$0xff]
    %v1904 = vld [vmem:[#allocation10 + $0x1fd0] sm:$0xff]
    %v1905 = vld [vmem:[#allocation10 + $0x1fd8] sm:$0xff]
    %v1906 = vld [vmem:[#allocation10 + $0x1fe0] sm:$0xff]
    %v1907 = vld [vmem:[#allocation10 + $0x1fe8] sm:$0xff]
    %v1908 = vld [vmem:[#allocation10 + $0x1ff0] sm:$0xff]
    %v1909 = vld [vmem:[#allocation10 + $0x1ff8] sm:$0xff]
    %v1910 = vld [vmem:[#allocation16 + $0x7] sm:$0xff]
    %v1911 = vld [vmem:[#allocation16 + $0xf] sm:$0xff]
    %v1912 = vld [vmem:[#allocation16 + $0x17] sm:$0xff]
    %v1913 = vld [vmem:[#allocation16 + $0x1f] sm:$0xff]
    %v1918 = vlaneseq
    %v1919 = vshrl.u32 %v1918, 7
    %v1920 = vsub.s32 0, %v1919
    %v1921 = vrot.slane %v1910, %v1920
    %v1922 = vlaneseq
    %v1923 = vshrl.u32 %v1922, 7
    %v1924 = vsub.s32 1, %v1923
    %v1925 = vrot.slane %v1910, %v1924
    %v1926 = vlaneseq
    %v1927 = vshrl.u32 %v1926, 7
    %v1928 = vsub.s32 2, %v1927
    %v1929 = vrot.slane %v1910, %v1928
    %v1930 = vlaneseq
    %v1931 = vshrl.u32 %v1930, 7
    %v1932 = vsub.s32 3, %v1931
    %v1933 = vrot.slane %v1910, %v1932
    %v1934 = vlaneseq
    %v1935 = vshrl.u32 %v1934, 7
    %v1936 = vsub.s32 4, %v1935
    %v1937 = vrot.slane %v1910, %v1936
    %v1938 = vlaneseq
    %v1939 = vshrl.u32 %v1938, 7
    %v1940 = vsub.s32 5, %v1939
    %v1941 = vrot.slane %v1910, %v1940
    %v1942 = vlaneseq
    %v1943 = vshrl.u32 %v1942, 7
    %v1944 = vsub.s32 6, %v1943
    %v1945 = vrot.slane %v1910, %v1944
    %v1946 = vlaneseq
    %v1947 = vshrl.u32 %v1946, 7
    %v1948 = vsub.s32 7, %v1947
    %v1949 = vrot.slane %v1910, %v1948
    %v1950 = vlaneseq
    %v1951 = vshrl.u32 %v1950, 7
    %v1952 = vsub.s32 0, %v1951
    %v1953 = vrot.slane %v1911, %v1952
    %v1954 = vlaneseq
    %v1955 = vshrl.u32 %v1954, 7
    %v1956 = vsub.s32 1, %v1955
    %v1957 = vrot.slane %v1911, %v1956
    %v1958 = vlaneseq
    %v1959 = vshrl.u32 %v1958, 7
    %v1960 = vsub.s32 2, %v1959
    %v1961 = vrot.slane %v1911, %v1960
    %v1962 = vlaneseq
    %v1963 = vshrl.u32 %v1962, 7
    %v1964 = vsub.s32 3, %v1963
    %v1965 = vrot.slane %v1911, %v1964
    %v1966 = vlaneseq
    %v1967 = vshrl.u32 %v1966, 7
    %v1968 = vsub.s32 4, %v1967
    %v1969 = vrot.slane %v1911, %v1968
    %v1970 = vlaneseq
    %v1971 = vshrl.u32 %v1970, 7
    %v1972 = vsub.s32 5, %v1971
    %v1973 = vrot.slane %v1911, %v1972
    %v1974 = vlaneseq
    %v1975 = vshrl.u32 %v1974, 7
    %v1976 = vsub.s32 6, %v1975
    %v1977 = vrot.slane %v1911, %v1976
    %v1978 = vlaneseq
    %v1979 = vshrl.u32 %v1978, 7
    %v1980 = vsub.s32 7, %v1979
    %v1981 = vrot.slane %v1911, %v1980
    %v1982 = vlaneseq
    %v1983 = vshrl.u32 %v1982, 7
    %v1984 = vsub.s32 0, %v1983
    %v1985 = vrot.slane %v1912, %v1984
    %v1986 = vlaneseq
    %v1987 = vshrl.u32 %v1986, 7
    %v1988 = vsub.s32 1, %v1987
    %v1989 = vrot.slane %v1912, %v1988
    %v1990 = vlaneseq
    %v1991 = vshrl.u32 %v1990, 7
    %v1992 = vsub.s32 2, %v1991
    %v1993 = vrot.slane %v1912, %v1992
    %v1994 = vlaneseq
    %v1995 = vshrl.u32 %v1994, 7
    %v1996 = vsub.s32 3, %v1995
    %v1997 = vrot.slane %v1912, %v1996
    %v1998 = vlaneseq
    %v1999 = vshrl.u32 %v1998, 7
    %v2000 = vsub.s32 4, %v1999
    %v2001 = vrot.slane %v1912, %v2000
    %v2002 = vlaneseq
    %v2003 = vshrl.u32 %v2002, 7
    %v2004 = vsub.s32 5, %v2003
    %v2005 = vrot.slane %v1912, %v2004
    %v2006 = vlaneseq
    %v2007 = vshrl.u32 %v2006, 7
    %v2008 = vsub.s32 6, %v2007
    %v2009 = vrot.slane %v1912, %v2008
    %v2010 = vlaneseq
    %v2011 = vshrl.u32 %v2010, 7
    %v2012 = vsub.s32 7, %v2011
    %v2013 = vrot.slane %v1912, %v2012
    %v2014 = vlaneseq
    %v2015 = vshrl.u32 %v2014, 7
    %v2016 = vsub.s32 0, %v2015
    %v2017 = vrot.slane %v1913, %v2016
    %v2018 = vlaneseq
    %v2019 = vshrl.u32 %v2018, 7
    %v2020 = vsub.s32 1, %v2019
    %v2021 = vrot.slane %v1913, %v2020
    %v2022 = vlaneseq
    %v2023 = vshrl.u32 %v2022, 7
    %v2024 = vsub.s32 2, %v2023
    %v2025 = vrot.slane %v1913, %v2024
    %v2026 = vlaneseq
    %v2027 = vshrl.u32 %v2026, 7
    %v2028 = vsub.s32 3, %v2027
    %v2029 = vrot.slane %v1913, %v2028
    %v2030 = vlaneseq
    %v2031 = vshrl.u32 %v2030, 7
    %v2032 = vsub.s32 4, %v2031
    %v2033 = vrot.slane %v1913, %v2032
    %v2034 = vlaneseq
    %v2035 = vshrl.u32 %v2034, 7
    %v2036 = vsub.s32 5, %v2035
    %v2037 = vrot.slane %v1913, %v2036
    %v2038 = vlaneseq
    %v2039 = vshrl.u32 %v2038, 7
    %v2040 = vsub.s32 6, %v2039
    %v2041 = vrot.slane %v1913, %v2040
    %v2042 = vlaneseq
    %v2043 = vshrl.u32 %v2042, 7
    %v2044 = vsub.s32 7, %v2043
    %v2045 = vrot.slane %v1913, %v2044
    %v3102 = vunpack.c.l.b16 %v886
    %v3103 = vunpack.c.h.b16 %v886
    %v3104 = vunpack.c.l.b16 %v887
    %v3105 = vunpack.c.h.b16 %v887
    %v3106 = vunpack.c.l.b16 %v888
    %v3107 = vunpack.c.h.b16 %v888
    %v3108 = vunpack.c.l.b16 %v889
    %v3109 = vunpack.c.h.b16 %v889
    %v3110 = vunpack.c.l.b16 %v890
    %v3111 = vunpack.c.h.b16 %v890
    %v3112 = vunpack.c.l.b16 %v891
    %v3113 = vunpack.c.h.b16 %v891
    %v3114 = vunpack.c.l.b16 %v892
    %v3115 = vunpack.c.h.b16 %v892
    %v3116 = vunpack.c.l.b16 %v893
    %v3117 = vunpack.c.h.b16 %v893
    %v3118 = vunpack.c.l.b16 %v894
    %v3119 = vunpack.c.h.b16 %v894
    %v3120 = vunpack.c.l.b16 %v895
    %v3121 = vunpack.c.h.b16 %v895
    %v3122 = vunpack.c.l.b16 %v896
    %v3123 = vunpack.c.h.b16 %v896
    %v3124 = vunpack.c.l.b16 %v897
    %v3125 = vunpack.c.h.b16 %v897
    %v3126 = vunpack.c.l.b16 %v898
    %v3127 = vunpack.c.h.b16 %v898
    %v3128 = vunpack.c.l.b16 %v899
    %v3129 = vunpack.c.h.b16 %v899
    %v3130 = vunpack.c.l.b16 %v900
    %v3131 = vunpack.c.h.b16 %v900
    %v3132 = vunpack.c.l.b16 %v901
    %v3133 = vunpack.c.h.b16 %v901
    %v3134 = vunpack.c.l.b16 %v902
    %v3135 = vunpack.c.h.b16 %v902
    %v3136 = vunpack.c.l.b16 %v903
    %v3137 = vunpack.c.h.b16 %v903
    %v3138 = vunpack.c.l.b16 %v904
    %v3139 = vunpack.c.h.b16 %v904
    %v3140 = vunpack.c.l.b16 %v905
    %v3141 = vunpack.c.h.b16 %v905
    %v3142 = vunpack.c.l.b16 %v906
    %v3143 = vunpack.c.h.b16 %v906
    %v3144 = vunpack.c.l.b16 %v907
    %v3145 = vunpack.c.h.b16 %v907
    %v3146 = vunpack.c.l.b16 %v908
    %v3147 = vunpack.c.h.b16 %v908
    %v3148 = vunpack.c.l.b16 %v909
    %v3149 = vunpack.c.h.b16 %v909
    %v3150 = vunpack.c.l.b16 %v910
    %v3151 = vunpack.c.h.b16 %v910
    %v3152 = vunpack.c.l.b16 %v911
    %v3153 = vunpack.c.h.b16 %v911
    %v3154 = vunpack.c.l.b16 %v912
    %v3155 = vunpack.c.h.b16 %v912
    %v3156 = vunpack.c.l.b16 %v913
    %v3157 = vunpack.c.h.b16 %v913
    %v3158 = vunpack.c.l.b16 %v914
    %v3159 = vunpack.c.h.b16 %v914
    %v3160 = vunpack.c.l.b16 %v915
    %v3161 = vunpack.c.h.b16 %v915
    %v3162 = vunpack.c.l.b16 %v916
    %v3163 = vunpack.c.h.b16 %v916
    %v3164 = vunpack.c.l.b16 %v917
    %v3165 = vunpack.c.h.b16 %v917
    %v3166 = vunpack.c.l.b16 %v918
    %v3167 = vunpack.c.h.b16 %v918
    %v3168 = vunpack.c.l.b16 %v919
    %v3169 = vunpack.c.h.b16 %v919
    %v3170 = vunpack.c.l.b16 %v920
    %v3171 = vunpack.c.h.b16 %v920
    %v3172 = vunpack.c.l.b16 %v921
    %v3173 = vunpack.c.h.b16 %v921
    %v3174 = vunpack.c.l.b16 %v922
    %v3175 = vunpack.c.h.b16 %v922
    %v3176 = vunpack.c.l.b16 %v923
    %v3177 = vunpack.c.h.b16 %v923
    %v3178 = vunpack.c.l.b16 %v924
    %v3179 = vunpack.c.h.b16 %v924
    %v3180 = vunpack.c.l.b16 %v925
    %v3181 = vunpack.c.h.b16 %v925
    %v3182 = vunpack.c.l.b16 %v926
    %v3183 = vunpack.c.h.b16 %v926
    %v3184 = vunpack.c.l.b16 %v927
    %v3185 = vunpack.c.h.b16 %v927
    %v3186 = vunpack.c.l.b16 %v928
    %v3187 = vunpack.c.h.b16 %v928
    %v3188 = vunpack.c.l.b16 %v929
    %v3189 = vunpack.c.h.b16 %v929
    %v3190 = vunpack.c.l.b16 %v930
    %v3191 = vunpack.c.h.b16 %v930
    %v3192 = vunpack.c.l.b16 %v931
    %v3193 = vunpack.c.h.b16 %v931
    %v3194 = vunpack.c.l.b16 %v932
    %v3195 = vunpack.c.h.b16 %v932
    %v3196 = vunpack.c.l.b16 %v933
    %v3197 = vunpack.c.h.b16 %v933
    %v3198 = vunpack.c.l.b16 %v934
    %v3199 = vunpack.c.h.b16 %v934
    %v3200 = vunpack.c.l.b16 %v935
    %v3201 = vunpack.c.h.b16 %v935
    %v3202 = vunpack.c.l.b16 %v936
    %v3203 = vunpack.c.h.b16 %v936
    %v3204 = vunpack.c.l.b16 %v937
    %v3205 = vunpack.c.h.b16 %v937
    %v3206 = vunpack.c.l.b16 %v938
    %v3207 = vunpack.c.h.b16 %v938
    %v3208 = vunpack.c.l.b16 %v939
    %v3209 = vunpack.c.h.b16 %v939
    %v3210 = vunpack.c.l.b16 %v940
    %v3211 = vunpack.c.h.b16 %v940
    %v3212 = vunpack.c.l.b16 %v941
    %v3213 = vunpack.c.h.b16 %v941
    %v3214 = vunpack.c.l.b16 %v942
    %v3215 = vunpack.c.h.b16 %v942
    %v3216 = vunpack.c.l.b16 %v943
    %v3217 = vunpack.c.h.b16 %v943
    %v3218 = vunpack.c.l.b16 %v944
    %v3219 = vunpack.c.h.b16 %v944
    %v3220 = vunpack.c.l.b16 %v945
    %v3221 = vunpack.c.h.b16 %v945
    %v3222 = vunpack.c.l.b16 %v946
    %v3223 = vunpack.c.h.b16 %v946
    %v3224 = vunpack.c.l.b16 %v947
    %v3225 = vunpack.c.h.b16 %v947
    %v3226 = vunpack.c.l.b16 %v948
    %v3227 = vunpack.c.h.b16 %v948
    %v3228 = vunpack.c.l.b16 %v949
    %v3229 = vunpack.c.h.b16 %v949
    %v3230 = vunpack.c.l.b16 %v950
    %v3231 = vunpack.c.h.b16 %v950
    %v3232 = vunpack.c.l.b16 %v951
    %v3233 = vunpack.c.h.b16 %v951
    %v3234 = vunpack.c.l.b16 %v952
    %v3235 = vunpack.c.h.b16 %v952
    %v3236 = vunpack.c.l.b16 %v953
    %v3237 = vunpack.c.h.b16 %v953
    %v3238 = vunpack.c.l.b16 %v954
    %v3239 = vunpack.c.h.b16 %v954
    %v3240 = vunpack.c.l.b16 %v955
    %v3241 = vunpack.c.h.b16 %v955
    %v3242 = vunpack.c.l.b16 %v956
    %v3243 = vunpack.c.h.b16 %v956
    %v3244 = vunpack.c.l.b16 %v957
    %v3245 = vunpack.c.h.b16 %v957
    %v3246 = vunpack.c.l.b16 %v958
    %v3247 = vunpack.c.h.b16 %v958
    %v3248 = vunpack.c.l.b16 %v959
    %v3249 = vunpack.c.h.b16 %v959
    %v3250 = vunpack.c.l.b16 %v960
    %v3251 = vunpack.c.h.b16 %v960
    %v3252 = vunpack.c.l.b16 %v961
    %v3253 = vunpack.c.h.b16 %v961
    %v3254 = vunpack.c.l.b16 %v962
    %v3255 = vunpack.c.h.b16 %v962
    %v3256 = vunpack.c.l.b16 %v963
    %v3257 = vunpack.c.h.b16 %v963
    %v3258 = vunpack.c.l.b16 %v964
    %v3259 = vunpack.c.h.b16 %v964
    %v3260 = vunpack.c.l.b16 %v965
    %v3261 = vunpack.c.h.b16 %v965
    %v3262 = vunpack.c.l.b16 %v966
    %v3263 = vunpack.c.h.b16 %v966
    %v3264 = vunpack.c.l.b16 %v967
    %v3265 = vunpack.c.h.b16 %v967
    %v3266 = vunpack.c.l.b16 %v968
    %v3267 = vunpack.c.h.b16 %v968
    %v3268 = vunpack.c.l.b16 %v969
    %v3269 = vunpack.c.h.b16 %v969
    %v3270 = vunpack.c.l.b16 %v970
    %v3271 = vunpack.c.h.b16 %v970
    %v3272 = vunpack.c.l.b16 %v971
    %v3273 = vunpack.c.h.b16 %v971
    %v3274 = vunpack.c.l.b16 %v972
    %v3275 = vunpack.c.h.b16 %v972
    %v3276 = vunpack.c.l.b16 %v973
    %v3277 = vunpack.c.h.b16 %v973
    %v3278 = vunpack.c.l.b16 %v974
    %v3279 = vunpack.c.h.b16 %v974
    %v3280 = vunpack.c.l.b16 %v975
    %v3281 = vunpack.c.h.b16 %v975
    %v3282 = vunpack.c.l.b16 %v976
    %v3283 = vunpack.c.h.b16 %v976
    %v3284 = vunpack.c.l.b16 %v977
    %v3285 = vunpack.c.h.b16 %v977
    %v3286 = vunpack.c.l.b16 %v978
    %v3287 = vunpack.c.h.b16 %v978
    %v3288 = vunpack.c.l.b16 %v979
    %v3289 = vunpack.c.h.b16 %v979
    %v3290 = vunpack.c.l.b16 %v980
    %v3291 = vunpack.c.h.b16 %v980
    %v3292 = vunpack.c.l.b16 %v981
    %v3293 = vunpack.c.h.b16 %v981
    %v3294 = vunpack.c.l.b16 %v982
    %v3295 = vunpack.c.h.b16 %v982
    %v3296 = vunpack.c.l.b16 %v983
    %v3297 = vunpack.c.h.b16 %v983
    %v3298 = vunpack.c.l.b16 %v984
    %v3299 = vunpack.c.h.b16 %v984
    %v3300 = vunpack.c.l.b16 %v985
    %v3301 = vunpack.c.h.b16 %v985
    %v3302 = vunpack.c.l.b16 %v986
    %v3303 = vunpack.c.h.b16 %v986
    %v3304 = vunpack.c.l.b16 %v987
    %v3305 = vunpack.c.h.b16 %v987
    %v3306 = vunpack.c.l.b16 %v988
    %v3307 = vunpack.c.h.b16 %v988
    %v3308 = vunpack.c.l.b16 %v989
    %v3309 = vunpack.c.h.b16 %v989
    %v3310 = vunpack.c.l.b16 %v990
    %v3311 = vunpack.c.h.b16 %v990
    %v3312 = vunpack.c.l.b16 %v991
    %v3313 = vunpack.c.h.b16 %v991
    %v3314 = vunpack.c.l.b16 %v992
    %v3315 = vunpack.c.h.b16 %v992
    %v3316 = vunpack.c.l.b16 %v993
    %v3317 = vunpack.c.h.b16 %v993
    %v3318 = vunpack.c.l.b16 %v994
    %v3319 = vunpack.c.h.b16 %v994
    %v3320 = vunpack.c.l.b16 %v995
    %v3321 = vunpack.c.h.b16 %v995
    %v3322 = vunpack.c.l.b16 %v996
    %v3323 = vunpack.c.h.b16 %v996
    %v3324 = vunpack.c.l.b16 %v997
    %v3325 = vunpack.c.h.b16 %v997
    %v3326 = vunpack.c.l.b16 %v998
    %v3327 = vunpack.c.h.b16 %v998
    %v3328 = vunpack.c.l.b16 %v999
    %v3329 = vunpack.c.h.b16 %v999
    %v3330 = vunpack.c.l.b16 %v1000
    %v3331 = vunpack.c.h.b16 %v1000
    %v3332 = vunpack.c.l.b16 %v1001
    %v3333 = vunpack.c.h.b16 %v1001
    %v3334 = vunpack.c.l.b16 %v1002
    %v3335 = vunpack.c.h.b16 %v1002
    %v3336 = vunpack.c.l.b16 %v1003
    %v3337 = vunpack.c.h.b16 %v1003
    %v3338 = vunpack.c.l.b16 %v1004
    %v3339 = vunpack.c.h.b16 %v1004
    %v3340 = vunpack.c.l.b16 %v1005
    %v3341 = vunpack.c.h.b16 %v1005
    %v3342 = vunpack.c.l.b16 %v1006
    %v3343 = vunpack.c.h.b16 %v1006
    %v3344 = vunpack.c.l.b16 %v1007
    %v3345 = vunpack.c.h.b16 %v1007
    %v3346 = vunpack.c.l.b16 %v1008
    %v3347 = vunpack.c.h.b16 %v1008
    %v3348 = vunpack.c.l.b16 %v1009
    %v3349 = vunpack.c.h.b16 %v1009
    %v3350 = vunpack.c.l.b16 %v1010
    %v3351 = vunpack.c.h.b16 %v1010
    %v3352 = vunpack.c.l.b16 %v1011
    %v3353 = vunpack.c.h.b16 %v1011
    %v3354 = vunpack.c.l.b16 %v1012
    %v3355 = vunpack.c.h.b16 %v1012
    %v3356 = vunpack.c.l.b16 %v1013
    %v3357 = vunpack.c.h.b16 %v1013
    %v3358 = vunpack.c.l.b16 %v1014
    %v3359 = vunpack.c.h.b16 %v1014
    %v3360 = vunpack.c.l.b16 %v1015
    %v3361 = vunpack.c.h.b16 %v1015
    %v3362 = vunpack.c.l.b16 %v1016
    %v3363 = vunpack.c.h.b16 %v1016
    %v3364 = vunpack.c.l.b16 %v1017
    %v3365 = vunpack.c.h.b16 %v1017
    %v3366 = vunpack.c.l.b16 %v1018
    %v3367 = vunpack.c.h.b16 %v1018
    %v3368 = vunpack.c.l.b16 %v1019
    %v3369 = vunpack.c.h.b16 %v1019
    %v3370 = vunpack.c.l.b16 %v1020
    %v3371 = vunpack.c.h.b16 %v1020
    %v3372 = vunpack.c.l.b16 %v1021
    %v3373 = vunpack.c.h.b16 %v1021
    %v3374 = vunpack.c.l.b16 %v1022
    %v3375 = vunpack.c.h.b16 %v1022
    %v3376 = vunpack.c.l.b16 %v1023
    %v3377 = vunpack.c.h.b16 %v1023
    %v3378 = vunpack.c.l.b16 %v1024
    %v3379 = vunpack.c.h.b16 %v1024
    %v3380 = vunpack.c.l.b16 %v1025
    %v3381 = vunpack.c.h.b16 %v1025
    %v3382 = vunpack.c.l.b16 %v1026
    %v3383 = vunpack.c.h.b16 %v1026
    %v3384 = vunpack.c.l.b16 %v1027
    %v3385 = vunpack.c.h.b16 %v1027
    %v3386 = vunpack.c.l.b16 %v1028
    %v3387 = vunpack.c.h.b16 %v1028
    %v3388 = vunpack.c.l.b16 %v1029
    %v3389 = vunpack.c.h.b16 %v1029
    %v3390 = vunpack.c.l.b16 %v1030
    %v3391 = vunpack.c.h.b16 %v1030
    %v3392 = vunpack.c.l.b16 %v1031
    %v3393 = vunpack.c.h.b16 %v1031
    %v3394 = vunpack.c.l.b16 %v1032
    %v3395 = vunpack.c.h.b16 %v1032
    %v3396 = vunpack.c.l.b16 %v1033
    %v3397 = vunpack.c.h.b16 %v1033
    %v3398 = vunpack.c.l.b16 %v1034
    %v3399 = vunpack.c.h.b16 %v1034
    %v3400 = vunpack.c.l.b16 %v1035
    %v3401 = vunpack.c.h.b16 %v1035
    %v3402 = vunpack.c.l.b16 %v1036
    %v3403 = vunpack.c.h.b16 %v1036
    %v3404 = vunpack.c.l.b16 %v1037
    %v3405 = vunpack.c.h.b16 %v1037
    %v3406 = vunpack.c.l.b16 %v1038
    %v3407 = vunpack.c.h.b16 %v1038
    %v3408 = vunpack.c.l.b16 %v1039
    %v3409 = vunpack.c.h.b16 %v1039
    %v3410 = vunpack.c.l.b16 %v1040
    %v3411 = vunpack.c.h.b16 %v1040
    %v3412 = vunpack.c.l.b16 %v1041
    %v3413 = vunpack.c.h.b16 %v1041
    %v3414 = vunpack.c.l.b16 %v1042
    %v3415 = vunpack.c.h.b16 %v1042
    %v3416 = vunpack.c.l.b16 %v1043
    %v3417 = vunpack.c.h.b16 %v1043
    %v3418 = vunpack.c.l.b16 %v1044
    %v3419 = vunpack.c.h.b16 %v1044
    %v3420 = vunpack.c.l.b16 %v1045
    %v3421 = vunpack.c.h.b16 %v1045
    %v3422 = vunpack.c.l.b16 %v1046
    %v3423 = vunpack.c.h.b16 %v1046
    %v3424 = vunpack.c.l.b16 %v1047
    %v3425 = vunpack.c.h.b16 %v1047
    %v3426 = vunpack.c.l.b16 %v1048
    %v3427 = vunpack.c.h.b16 %v1048
    %v3428 = vunpack.c.l.b16 %v1049
    %v3429 = vunpack.c.h.b16 %v1049
    %v3430 = vunpack.c.l.b16 %v1050
    %v3431 = vunpack.c.h.b16 %v1050
    %v3432 = vunpack.c.l.b16 %v1051
    %v3433 = vunpack.c.h.b16 %v1051
    %v3434 = vunpack.c.l.b16 %v1052
    %v3435 = vunpack.c.h.b16 %v1052
    %v3436 = vunpack.c.l.b16 %v1053
    %v3437 = vunpack.c.h.b16 %v1053
    %v3438 = vunpack.c.l.b16 %v1054
    %v3439 = vunpack.c.h.b16 %v1054
    %v3440 = vunpack.c.l.b16 %v1055
    %v3441 = vunpack.c.h.b16 %v1055
    %v3442 = vunpack.c.l.b16 %v1056
    %v3443 = vunpack.c.h.b16 %v1056
    %v3444 = vunpack.c.l.b16 %v1057
    %v3445 = vunpack.c.h.b16 %v1057
    %v3446 = vunpack.c.l.b16 %v1058
    %v3447 = vunpack.c.h.b16 %v1058
    %v3448 = vunpack.c.l.b16 %v1059
    %v3449 = vunpack.c.h.b16 %v1059
    %v3450 = vunpack.c.l.b16 %v1060
    %v3451 = vunpack.c.h.b16 %v1060
    %v3452 = vunpack.c.l.b16 %v1061
    %v3453 = vunpack.c.h.b16 %v1061
    %v3454 = vunpack.c.l.b16 %v1062
    %v3455 = vunpack.c.h.b16 %v1062
    %v3456 = vunpack.c.l.b16 %v1063
    %v3457 = vunpack.c.h.b16 %v1063
    %v3458 = vunpack.c.l.b16 %v1064
    %v3459 = vunpack.c.h.b16 %v1064
    %v3460 = vunpack.c.l.b16 %v1065
    %v3461 = vunpack.c.h.b16 %v1065
    %v3462 = vunpack.c.l.b16 %v1066
    %v3463 = vunpack.c.h.b16 %v1066
    %v3464 = vunpack.c.l.b16 %v1067
    %v3465 = vunpack.c.h.b16 %v1067
    %v3466 = vunpack.c.l.b16 %v1068
    %v3467 = vunpack.c.h.b16 %v1068
    %v3468 = vunpack.c.l.b16 %v1069
    %v3469 = vunpack.c.h.b16 %v1069
    %v3470 = vunpack.c.l.b16 %v1070
    %v3471 = vunpack.c.h.b16 %v1070
    %v3472 = vunpack.c.l.b16 %v1071
    %v3473 = vunpack.c.h.b16 %v1071
    %v3474 = vunpack.c.l.b16 %v1072
    %v3475 = vunpack.c.h.b16 %v1072
    %v3476 = vunpack.c.l.b16 %v1073
    %v3477 = vunpack.c.h.b16 %v1073
    %v3478 = vunpack.c.l.b16 %v1074
    %v3479 = vunpack.c.h.b16 %v1074
    %v3480 = vunpack.c.l.b16 %v1075
    %v3481 = vunpack.c.h.b16 %v1075
    %v3482 = vunpack.c.l.b16 %v1076
    %v3483 = vunpack.c.h.b16 %v1076
    %v3484 = vunpack.c.l.b16 %v1077
    %v3485 = vunpack.c.h.b16 %v1077
    %v3486 = vunpack.c.l.b16 %v1078
    %v3487 = vunpack.c.h.b16 %v1078
    %v3488 = vunpack.c.l.b16 %v1079
    %v3489 = vunpack.c.h.b16 %v1079
    %v3490 = vunpack.c.l.b16 %v1080
    %v3491 = vunpack.c.h.b16 %v1080
    %v3492 = vunpack.c.l.b16 %v1081
    %v3493 = vunpack.c.h.b16 %v1081
    %v3494 = vunpack.c.l.b16 %v1082
    %v3495 = vunpack.c.h.b16 %v1082
    %v3496 = vunpack.c.l.b16 %v1083
    %v3497 = vunpack.c.h.b16 %v1083
    %v3498 = vunpack.c.l.b16 %v1084
    %v3499 = vunpack.c.h.b16 %v1084
    %v3500 = vunpack.c.l.b16 %v1085
    %v3501 = vunpack.c.h.b16 %v1085
    %v3502 = vunpack.c.l.b16 %v1086
    %v3503 = vunpack.c.h.b16 %v1086
    %v3504 = vunpack.c.l.b16 %v1087
    %v3505 = vunpack.c.h.b16 %v1087
    %v3506 = vunpack.c.l.b16 %v1088
    %v3507 = vunpack.c.h.b16 %v1088
    %v3508 = vunpack.c.l.b16 %v1089
    %v3509 = vunpack.c.h.b16 %v1089
    %v3510 = vunpack.c.l.b16 %v1090
    %v3511 = vunpack.c.h.b16 %v1090
    %v3512 = vunpack.c.l.b16 %v1091
    %v3513 = vunpack.c.h.b16 %v1091
    %v3514 = vunpack.c.l.b16 %v1092
    %v3515 = vunpack.c.h.b16 %v1092
    %v3516 = vunpack.c.l.b16 %v1093
    %v3517 = vunpack.c.h.b16 %v1093
    %v3518 = vunpack.c.l.b16 %v1094
    %v3519 = vunpack.c.h.b16 %v1094
    %v3520 = vunpack.c.l.b16 %v1095
    %v3521 = vunpack.c.h.b16 %v1095
    %v3522 = vunpack.c.l.b16 %v1096
    %v3523 = vunpack.c.h.b16 %v1096
    %v3524 = vunpack.c.l.b16 %v1097
    %v3525 = vunpack.c.h.b16 %v1097
    %v3526 = vunpack.c.l.b16 %v1098
    %v3527 = vunpack.c.h.b16 %v1098
    %v3528 = vunpack.c.l.b16 %v1099
    %v3529 = vunpack.c.h.b16 %v1099
    %v3530 = vunpack.c.l.b16 %v1100
    %v3531 = vunpack.c.h.b16 %v1100
    %v3532 = vunpack.c.l.b16 %v1101
    %v3533 = vunpack.c.h.b16 %v1101
    %v3534 = vunpack.c.l.b16 %v1102
    %v3535 = vunpack.c.h.b16 %v1102
    %v3536 = vunpack.c.l.b16 %v1103
    %v3537 = vunpack.c.h.b16 %v1103
    %v3538 = vunpack.c.l.b16 %v1104
    %v3539 = vunpack.c.h.b16 %v1104
    %v3540 = vunpack.c.l.b16 %v1105
    %v3541 = vunpack.c.h.b16 %v1105
    %v3542 = vunpack.c.l.b16 %v1106
    %v3543 = vunpack.c.h.b16 %v1106
    %v3544 = vunpack.c.l.b16 %v1107
    %v3545 = vunpack.c.h.b16 %v1107
    %v3546 = vunpack.c.l.b16 %v1108
    %v3547 = vunpack.c.h.b16 %v1108
    %v3548 = vunpack.c.l.b16 %v1109
    %v3549 = vunpack.c.h.b16 %v1109
    %v3550 = vunpack.c.l.b16 %v1110
    %v3551 = vunpack.c.h.b16 %v1110
    %v3552 = vunpack.c.l.b16 %v1111
    %v3553 = vunpack.c.h.b16 %v1111
    %v3554 = vunpack.c.l.b16 %v1112
    %v3555 = vunpack.c.h.b16 %v1112
    %v3556 = vunpack.c.l.b16 %v1113
    %v3557 = vunpack.c.h.b16 %v1113
    %v3558 = vunpack.c.l.b16 %v1114
    %v3559 = vunpack.c.h.b16 %v1114
    %v3560 = vunpack.c.l.b16 %v1115
    %v3561 = vunpack.c.h.b16 %v1115
    %v3562 = vunpack.c.l.b16 %v1116
    %v3563 = vunpack.c.h.b16 %v1116
    %v3564 = vunpack.c.l.b16 %v1117
    %v3565 = vunpack.c.h.b16 %v1117
    %v3566 = vunpack.c.l.b16 %v1118
    %v3567 = vunpack.c.h.b16 %v1118
    %v3568 = vunpack.c.l.b16 %v1119
    %v3569 = vunpack.c.h.b16 %v1119
    %v3570 = vunpack.c.l.b16 %v1120
    %v3571 = vunpack.c.h.b16 %v1120
    %v3572 = vunpack.c.l.b16 %v1121
    %v3573 = vunpack.c.h.b16 %v1121
    %v3574 = vunpack.c.l.b16 %v1122
    %v3575 = vunpack.c.h.b16 %v1122
    %v3576 = vunpack.c.l.b16 %v1123
    %v3577 = vunpack.c.h.b16 %v1123
    %v3578 = vunpack.c.l.b16 %v1124
    %v3579 = vunpack.c.h.b16 %v1124
    %v3580 = vunpack.c.l.b16 %v1125
    %v3581 = vunpack.c.h.b16 %v1125
    %v3582 = vunpack.c.l.b16 %v1126
    %v3583 = vunpack.c.h.b16 %v1126
    %v3584 = vunpack.c.l.b16 %v1127
    %v3585 = vunpack.c.h.b16 %v1127
    %v3586 = vunpack.c.l.b16 %v1128
    %v3587 = vunpack.c.h.b16 %v1128
    %v3588 = vunpack.c.l.b16 %v1129
    %v3589 = vunpack.c.h.b16 %v1129
    %v3590 = vunpack.c.l.b16 %v1130
    %v3591 = vunpack.c.h.b16 %v1130
    %v3592 = vunpack.c.l.b16 %v1131
    %v3593 = vunpack.c.h.b16 %v1131
    %v3594 = vunpack.c.l.b16 %v1132
    %v3595 = vunpack.c.h.b16 %v1132
    %v3596 = vunpack.c.l.b16 %v1133
    %v3597 = vunpack.c.h.b16 %v1133
    %v3598 = vunpack.c.l.b16 %v1134
    %v3599 = vunpack.c.h.b16 %v1134
    %v3600 = vunpack.c.l.b16 %v1135
    %v3601 = vunpack.c.h.b16 %v1135
    %v3602 = vunpack.c.l.b16 %v1136
    %v3603 = vunpack.c.h.b16 %v1136
    %v3604 = vunpack.c.l.b16 %v1137
    %v3605 = vunpack.c.h.b16 %v1137
    %v3606 = vunpack.c.l.b16 %v1138
    %v3607 = vunpack.c.h.b16 %v1138
    %v3608 = vunpack.c.l.b16 %v1139
    %v3609 = vunpack.c.h.b16 %v1139
    %v3610 = vunpack.c.l.b16 %v1140
    %v3611 = vunpack.c.h.b16 %v1140
    %v3612 = vunpack.c.l.b16 %v1141
    %v3613 = vunpack.c.h.b16 %v1141
    %v3614 = vunpack.c.l.b16 %v1142
    %v3615 = vunpack.c.h.b16 %v1142
    %v3616 = vunpack.c.l.b16 %v1143
    %v3617 = vunpack.c.h.b16 %v1143
    %v3618 = vunpack.c.l.b16 %v1144
    %v3619 = vunpack.c.h.b16 %v1144
    %v3620 = vunpack.c.l.b16 %v1145
    %v3621 = vunpack.c.h.b16 %v1145
    %v3622 = vunpack.c.l.b16 %v1146
    %v3623 = vunpack.c.h.b16 %v1146
    %v3624 = vunpack.c.l.b16 %v1147
    %v3625 = vunpack.c.h.b16 %v1147
    %v3626 = vunpack.c.l.b16 %v1148
    %v3627 = vunpack.c.h.b16 %v1148
    %v3628 = vunpack.c.l.b16 %v1149
    %v3629 = vunpack.c.h.b16 %v1149
    %v3630 = vunpack.c.l.b16 %v1150
    %v3631 = vunpack.c.h.b16 %v1150
    %v3632 = vunpack.c.l.b16 %v1151
    %v3633 = vunpack.c.h.b16 %v1151
    %v3634 = vunpack.c.l.b16 %v1152
    %v3635 = vunpack.c.h.b16 %v1152
    %v3636 = vunpack.c.l.b16 %v1153
    %v3637 = vunpack.c.h.b16 %v1153
    %v3638 = vunpack.c.l.b16 %v1154
    %v3639 = vunpack.c.h.b16 %v1154
    %v3640 = vunpack.c.l.b16 %v1155
    %v3641 = vunpack.c.h.b16 %v1155
    %v3642 = vunpack.c.l.b16 %v1156
    %v3643 = vunpack.c.h.b16 %v1156
    %v3644 = vunpack.c.l.b16 %v1157
    %v3645 = vunpack.c.h.b16 %v1157
    %v3646 = vunpack.c.l.b16 %v1158
    %v3647 = vunpack.c.h.b16 %v1158
    %v3648 = vunpack.c.l.b16 %v1159
    %v3649 = vunpack.c.h.b16 %v1159
    %v3650 = vunpack.c.l.b16 %v1160
    %v3651 = vunpack.c.h.b16 %v1160
    %v3652 = vunpack.c.l.b16 %v1161
    %v3653 = vunpack.c.h.b16 %v1161
    %v3654 = vunpack.c.l.b16 %v1162
    %v3655 = vunpack.c.h.b16 %v1162
    %v3656 = vunpack.c.l.b16 %v1163
    %v3657 = vunpack.c.h.b16 %v1163
    %v3658 = vunpack.c.l.b16 %v1164
    %v3659 = vunpack.c.h.b16 %v1164
    %v3660 = vunpack.c.l.b16 %v1165
    %v3661 = vunpack.c.h.b16 %v1165
    %v3662 = vunpack.c.l.b16 %v1166
    %v3663 = vunpack.c.h.b16 %v1166
    %v3664 = vunpack.c.l.b16 %v1167
    %v3665 = vunpack.c.h.b16 %v1167
    %v3666 = vunpack.c.l.b16 %v1168
    %v3667 = vunpack.c.h.b16 %v1168
    %v3668 = vunpack.c.l.b16 %v1169
    %v3669 = vunpack.c.h.b16 %v1169
    %v3670 = vunpack.c.l.b16 %v1170
    %v3671 = vunpack.c.h.b16 %v1170
    %v3672 = vunpack.c.l.b16 %v1171
    %v3673 = vunpack.c.h.b16 %v1171
    %v3674 = vunpack.c.l.b16 %v1172
    %v3675 = vunpack.c.h.b16 %v1172
    %v3676 = vunpack.c.l.b16 %v1173
    %v3677 = vunpack.c.h.b16 %v1173
    %v3678 = vunpack.c.l.b16 %v1174
    %v3679 = vunpack.c.h.b16 %v1174
    %v3680 = vunpack.c.l.b16 %v1175
    %v3681 = vunpack.c.h.b16 %v1175
    %v3682 = vunpack.c.l.b16 %v1176
    %v3683 = vunpack.c.h.b16 %v1176
    %v3684 = vunpack.c.l.b16 %v1177
    %v3685 = vunpack.c.h.b16 %v1177
    %v3686 = vunpack.c.l.b16 %v1178
    %v3687 = vunpack.c.h.b16 %v1178
    %v3688 = vunpack.c.l.b16 %v1179
    %v3689 = vunpack.c.h.b16 %v1179
    %v3690 = vunpack.c.l.b16 %v1180
    %v3691 = vunpack.c.h.b16 %v1180
    %v3692 = vunpack.c.l.b16 %v1181
    %v3693 = vunpack.c.h.b16 %v1181
    %v3694 = vunpack.c.l.b16 %v1182
    %v3695 = vunpack.c.h.b16 %v1182
    %v3696 = vunpack.c.l.b16 %v1183
    %v3697 = vunpack.c.h.b16 %v1183
    %v3698 = vunpack.c.l.b16 %v1184
    %v3699 = vunpack.c.h.b16 %v1184
    %v3700 = vunpack.c.l.b16 %v1185
    %v3701 = vunpack.c.h.b16 %v1185
    %v3702 = vunpack.c.l.b16 %v1186
    %v3703 = vunpack.c.h.b16 %v1186
    %v3704 = vunpack.c.l.b16 %v1187
    %v3705 = vunpack.c.h.b16 %v1187
    %v3706 = vunpack.c.l.b16 %v1188
    %v3707 = vunpack.c.h.b16 %v1188
    %v3708 = vunpack.c.l.b16 %v1189
    %v3709 = vunpack.c.h.b16 %v1189
    %v3710 = vunpack.c.l.b16 %v1190
    %v3711 = vunpack.c.h.b16 %v1190
    %v3712 = vunpack.c.l.b16 %v1191
    %v3713 = vunpack.c.h.b16 %v1191
    %v3714 = vunpack.c.l.b16 %v1192
    %v3715 = vunpack.c.h.b16 %v1192
    %v3716 = vunpack.c.l.b16 %v1193
    %v3717 = vunpack.c.h.b16 %v1193
    %v3718 = vunpack.c.l.b16 %v1194
    %v3719 = vunpack.c.h.b16 %v1194
    %v3720 = vunpack.c.l.b16 %v1195
    %v3721 = vunpack.c.h.b16 %v1195
    %v3722 = vunpack.c.l.b16 %v1196
    %v3723 = vunpack.c.h.b16 %v1196
    %v3724 = vunpack.c.l.b16 %v1197
    %v3725 = vunpack.c.h.b16 %v1197
    %v3726 = vunpack.c.l.b16 %v1198
    %v3727 = vunpack.c.h.b16 %v1198
    %v3728 = vunpack.c.l.b16 %v1199
    %v3729 = vunpack.c.h.b16 %v1199
    %v3730 = vunpack.c.l.b16 %v1200
    %v3731 = vunpack.c.h.b16 %v1200
    %v3732 = vunpack.c.l.b16 %v1201
    %v3733 = vunpack.c.h.b16 %v1201
    %v3734 = vunpack.c.l.b16 %v1202
    %v3735 = vunpack.c.h.b16 %v1202
    %v3736 = vunpack.c.l.b16 %v1203
    %v3737 = vunpack.c.h.b16 %v1203
    %v3738 = vunpack.c.l.b16 %v1204
    %v3739 = vunpack.c.h.b16 %v1204
    %v3740 = vunpack.c.l.b16 %v1205
    %v3741 = vunpack.c.h.b16 %v1205
    %v3742 = vunpack.c.l.b16 %v1206
    %v3743 = vunpack.c.h.b16 %v1206
    %v3744 = vunpack.c.l.b16 %v1207
    %v3745 = vunpack.c.h.b16 %v1207
    %v3746 = vunpack.c.l.b16 %v1208
    %v3747 = vunpack.c.h.b16 %v1208
    %v3748 = vunpack.c.l.b16 %v1209
    %v3749 = vunpack.c.h.b16 %v1209
    %v3750 = vunpack.c.l.b16 %v1210
    %v3751 = vunpack.c.h.b16 %v1210
    %v3752 = vunpack.c.l.b16 %v1211
    %v3753 = vunpack.c.h.b16 %v1211
    %v3754 = vunpack.c.l.b16 %v1212
    %v3755 = vunpack.c.h.b16 %v1212
    %v3756 = vunpack.c.l.b16 %v1213
    %v3757 = vunpack.c.h.b16 %v1213
    %v3758 = vunpack.c.l.b16 %v1214
    %v3759 = vunpack.c.h.b16 %v1214
    %v3760 = vunpack.c.l.b16 %v1215
    %v3761 = vunpack.c.h.b16 %v1215
    %v3762 = vunpack.c.l.b16 %v1216
    %v3763 = vunpack.c.h.b16 %v1216
    %v3764 = vunpack.c.l.b16 %v1217
    %v3765 = vunpack.c.h.b16 %v1217
    %v3766 = vunpack.c.l.b16 %v1218
    %v3767 = vunpack.c.h.b16 %v1218
    %v3768 = vunpack.c.l.b16 %v1219
    %v3769 = vunpack.c.h.b16 %v1219
    %v3770 = vunpack.c.l.b16 %v1220
    %v3771 = vunpack.c.h.b16 %v1220
    %v3772 = vunpack.c.l.b16 %v1221
    %v3773 = vunpack.c.h.b16 %v1221
    %v3774 = vunpack.c.l.b16 %v1222
    %v3775 = vunpack.c.h.b16 %v1222
    %v3776 = vunpack.c.l.b16 %v1223
    %v3777 = vunpack.c.h.b16 %v1223
    %v3778 = vunpack.c.l.b16 %v1224
    %v3779 = vunpack.c.h.b16 %v1224
    %v3780 = vunpack.c.l.b16 %v1225
    %v3781 = vunpack.c.h.b16 %v1225
    %v3782 = vunpack.c.l.b16 %v1226
    %v3783 = vunpack.c.h.b16 %v1226
    %v3784 = vunpack.c.l.b16 %v1227
    %v3785 = vunpack.c.h.b16 %v1227
    %v3786 = vunpack.c.l.b16 %v1228
    %v3787 = vunpack.c.h.b16 %v1228
    %v3788 = vunpack.c.l.b16 %v1229
    %v3789 = vunpack.c.h.b16 %v1229
    %v3790 = vunpack.c.l.b16 %v1230
    %v3791 = vunpack.c.h.b16 %v1230
    %v3792 = vunpack.c.l.b16 %v1231
    %v3793 = vunpack.c.h.b16 %v1231
    %v3794 = vunpack.c.l.b16 %v1232
    %v3795 = vunpack.c.h.b16 %v1232
    %v3796 = vunpack.c.l.b16 %v1233
    %v3797 = vunpack.c.h.b16 %v1233
    %v3798 = vunpack.c.l.b16 %v1234
    %v3799 = vunpack.c.h.b16 %v1234
    %v3800 = vunpack.c.l.b16 %v1235
    %v3801 = vunpack.c.h.b16 %v1235
    %v3802 = vunpack.c.l.b16 %v1236
    %v3803 = vunpack.c.h.b16 %v1236
    %v3804 = vunpack.c.l.b16 %v1237
    %v3805 = vunpack.c.h.b16 %v1237
    %v3806 = vunpack.c.l.b16 %v1238
    %v3807 = vunpack.c.h.b16 %v1238
    %v3808 = vunpack.c.l.b16 %v1239
    %v3809 = vunpack.c.h.b16 %v1239
    %v3810 = vunpack.c.l.b16 %v1240
    %v3811 = vunpack.c.h.b16 %v1240
    %v3812 = vunpack.c.l.b16 %v1241
    %v3813 = vunpack.c.h.b16 %v1241
    %v3814 = vunpack.c.l.b16 %v1242
    %v3815 = vunpack.c.h.b16 %v1242
    %v3816 = vunpack.c.l.b16 %v1243
    %v3817 = vunpack.c.h.b16 %v1243
    %v3818 = vunpack.c.l.b16 %v1244
    %v3819 = vunpack.c.h.b16 %v1244
    %v3820 = vunpack.c.l.b16 %v1245
    %v3821 = vunpack.c.h.b16 %v1245
    %v3822 = vunpack.c.l.b16 %v1246
    %v3823 = vunpack.c.h.b16 %v1246
    %v3824 = vunpack.c.l.b16 %v1247
    %v3825 = vunpack.c.h.b16 %v1247
    %v3826 = vunpack.c.l.b16 %v1248
    %v3827 = vunpack.c.h.b16 %v1248
    %v3828 = vunpack.c.l.b16 %v1249
    %v3829 = vunpack.c.h.b16 %v1249
    %v3830 = vunpack.c.l.b16 %v1250
    %v3831 = vunpack.c.h.b16 %v1250
    %v3832 = vunpack.c.l.b16 %v1251
    %v3833 = vunpack.c.h.b16 %v1251
    %v3834 = vunpack.c.l.b16 %v1252
    %v3835 = vunpack.c.h.b16 %v1252
    %v3836 = vunpack.c.l.b16 %v1253
    %v3837 = vunpack.c.h.b16 %v1253
    %v3838 = vunpack.c.l.b16 %v1254
    %v3839 = vunpack.c.h.b16 %v1254
    %v3840 = vunpack.c.l.b16 %v1255
    %v3841 = vunpack.c.h.b16 %v1255
    %v3842 = vunpack.c.l.b16 %v1256
    %v3843 = vunpack.c.h.b16 %v1256
    %v3844 = vunpack.c.l.b16 %v1257
    %v3845 = vunpack.c.h.b16 %v1257
    %v3846 = vunpack.c.l.b16 %v1258
    %v3847 = vunpack.c.h.b16 %v1258
    %v3848 = vunpack.c.l.b16 %v1259
    %v3849 = vunpack.c.h.b16 %v1259
    %v3850 = vunpack.c.l.b16 %v1260
    %v3851 = vunpack.c.h.b16 %v1260
    %v3852 = vunpack.c.l.b16 %v1261
    %v3853 = vunpack.c.h.b16 %v1261
    %v3854 = vunpack.c.l.b16 %v1262
    %v3855 = vunpack.c.h.b16 %v1262
    %v3856 = vunpack.c.l.b16 %v1263
    %v3857 = vunpack.c.h.b16 %v1263
    %v3858 = vunpack.c.l.b16 %v1264
    %v3859 = vunpack.c.h.b16 %v1264
    %v3860 = vunpack.c.l.b16 %v1265
    %v3861 = vunpack.c.h.b16 %v1265
    %v3862 = vunpack.c.l.b16 %v1266
    %v3863 = vunpack.c.h.b16 %v1266
    %v3864 = vunpack.c.l.b16 %v1267
    %v3865 = vunpack.c.h.b16 %v1267
    %v3866 = vunpack.c.l.b16 %v1268
    %v3867 = vunpack.c.h.b16 %v1268
    %v3868 = vunpack.c.l.b16 %v1269
    %v3869 = vunpack.c.h.b16 %v1269
    %v3870 = vunpack.c.l.b16 %v1270
    %v3871 = vunpack.c.h.b16 %v1270
    %v3872 = vunpack.c.l.b16 %v1271
    %v3873 = vunpack.c.h.b16 %v1271
    %v3874 = vunpack.c.l.b16 %v1272
    %v3875 = vunpack.c.h.b16 %v1272
    %v3876 = vunpack.c.l.b16 %v1273
    %v3877 = vunpack.c.h.b16 %v1273
    %v3878 = vunpack.c.l.b16 %v1274
    %v3879 = vunpack.c.h.b16 %v1274
    %v3880 = vunpack.c.l.b16 %v1275
    %v3881 = vunpack.c.h.b16 %v1275
    %v3882 = vunpack.c.l.b16 %v1276
    %v3883 = vunpack.c.h.b16 %v1276
    %v3884 = vunpack.c.l.b16 %v1277
    %v3885 = vunpack.c.h.b16 %v1277
    %v3886 = vunpack.c.l.b16 %v1278
    %v3887 = vunpack.c.h.b16 %v1278
    %v3888 = vunpack.c.l.b16 %v1279
    %v3889 = vunpack.c.h.b16 %v1279
    %v3890 = vunpack.c.l.b16 %v1280
    %v3891 = vunpack.c.h.b16 %v1280
    %v3892 = vunpack.c.l.b16 %v1281
    %v3893 = vunpack.c.h.b16 %v1281
    %v3894 = vunpack.c.l.b16 %v1282
    %v3895 = vunpack.c.h.b16 %v1282
    %v3896 = vunpack.c.l.b16 %v1283
    %v3897 = vunpack.c.h.b16 %v1283
    %v3898 = vunpack.c.l.b16 %v1284
    %v3899 = vunpack.c.h.b16 %v1284
    %v3900 = vunpack.c.l.b16 %v1285
    %v3901 = vunpack.c.h.b16 %v1285
    %v3902 = vunpack.c.l.b16 %v1286
    %v3903 = vunpack.c.h.b16 %v1286
    %v3904 = vunpack.c.l.b16 %v1287
    %v3905 = vunpack.c.h.b16 %v1287
    %v3906 = vunpack.c.l.b16 %v1288
    %v3907 = vunpack.c.h.b16 %v1288
    %v3908 = vunpack.c.l.b16 %v1289
    %v3909 = vunpack.c.h.b16 %v1289
    %v3910 = vunpack.c.l.b16 %v1290
    %v3911 = vunpack.c.h.b16 %v1290
    %v3912 = vunpack.c.l.b16 %v1291
    %v3913 = vunpack.c.h.b16 %v1291
    %v3914 = vunpack.c.l.b16 %v1292
    %v3915 = vunpack.c.h.b16 %v1292
    %v3916 = vunpack.c.l.b16 %v1293
    %v3917 = vunpack.c.h.b16 %v1293
    %v3918 = vunpack.c.l.b16 %v1294
    %v3919 = vunpack.c.h.b16 %v1294
    %v3920 = vunpack.c.l.b16 %v1295
    %v3921 = vunpack.c.h.b16 %v1295
    %v3922 = vunpack.c.l.b16 %v1296
    %v3923 = vunpack.c.h.b16 %v1296
    %v3924 = vunpack.c.l.b16 %v1297
    %v3925 = vunpack.c.h.b16 %v1297
    %v3926 = vunpack.c.l.b16 %v1298
    %v3927 = vunpack.c.h.b16 %v1298
    %v3928 = vunpack.c.l.b16 %v1299
    %v3929 = vunpack.c.h.b16 %v1299
    %v3930 = vunpack.c.l.b16 %v1300
    %v3931 = vunpack.c.h.b16 %v1300
    %v3932 = vunpack.c.l.b16 %v1301
    %v3933 = vunpack.c.h.b16 %v1301
    %v3934 = vunpack.c.l.b16 %v1302
    %v3935 = vunpack.c.h.b16 %v1302
    %v3936 = vunpack.c.l.b16 %v1303
    %v3937 = vunpack.c.h.b16 %v1303
    %v3938 = vunpack.c.l.b16 %v1304
    %v3939 = vunpack.c.h.b16 %v1304
    %v3940 = vunpack.c.l.b16 %v1305
    %v3941 = vunpack.c.h.b16 %v1305
    %v3942 = vunpack.c.l.b16 %v1306
    %v3943 = vunpack.c.h.b16 %v1306
    %v3944 = vunpack.c.l.b16 %v1307
    %v3945 = vunpack.c.h.b16 %v1307
    %v3946 = vunpack.c.l.b16 %v1308
    %v3947 = vunpack.c.h.b16 %v1308
    %v3948 = vunpack.c.l.b16 %v1309
    %v3949 = vunpack.c.h.b16 %v1309
    %v3950 = vunpack.c.l.b16 %v1310
    %v3951 = vunpack.c.h.b16 %v1310
    %v3952 = vunpack.c.l.b16 %v1311
    %v3953 = vunpack.c.h.b16 %v1311
    %v3954 = vunpack.c.l.b16 %v1312
    %v3955 = vunpack.c.h.b16 %v1312
    %v3956 = vunpack.c.l.b16 %v1313
    %v3957 = vunpack.c.h.b16 %v1313
    %v3958 = vunpack.c.l.b16 %v1314
    %v3959 = vunpack.c.h.b16 %v1314
    %v3960 = vunpack.c.l.b16 %v1315
    %v3961 = vunpack.c.h.b16 %v1315
    %v3962 = vunpack.c.l.b16 %v1316
    %v3963 = vunpack.c.h.b16 %v1316
    %v3964 = vunpack.c.l.b16 %v1317
    %v3965 = vunpack.c.h.b16 %v1317
    %v3966 = vunpack.c.l.b16 %v1318
    %v3967 = vunpack.c.h.b16 %v1318
    %v3968 = vunpack.c.l.b16 %v1319
    %v3969 = vunpack.c.h.b16 %v1319
    %v3970 = vunpack.c.l.b16 %v1320
    %v3971 = vunpack.c.h.b16 %v1320
    %v3972 = vunpack.c.l.b16 %v1321
    %v3973 = vunpack.c.h.b16 %v1321
    %v3974 = vunpack.c.l.b16 %v1322
    %v3975 = vunpack.c.h.b16 %v1322
    %v3976 = vunpack.c.l.b16 %v1323
    %v3977 = vunpack.c.h.b16 %v1323
    %v3978 = vunpack.c.l.b16 %v1324
    %v3979 = vunpack.c.h.b16 %v1324
    %v3980 = vunpack.c.l.b16 %v1325
    %v3981 = vunpack.c.h.b16 %v1325
    %v3982 = vunpack.c.l.b16 %v1326
    %v3983 = vunpack.c.h.b16 %v1326
    %v3984 = vunpack.c.l.b16 %v1327
    %v3985 = vunpack.c.h.b16 %v1327
    %v3986 = vunpack.c.l.b16 %v1328
    %v3987 = vunpack.c.h.b16 %v1328
    %v3988 = vunpack.c.l.b16 %v1329
    %v3989 = vunpack.c.h.b16 %v1329
    %v3990 = vunpack.c.l.b16 %v1330
    %v3991 = vunpack.c.h.b16 %v1330
    %v3992 = vunpack.c.l.b16 %v1331
    %v3993 = vunpack.c.h.b16 %v1331
    %v3994 = vunpack.c.l.b16 %v1332
    %v3995 = vunpack.c.h.b16 %v1332
    %v3996 = vunpack.c.l.b16 %v1333
    %v3997 = vunpack.c.h.b16 %v1333
    %v3998 = vunpack.c.l.b16 %v1334
    %v3999 = vunpack.c.h.b16 %v1334
    %v4000 = vunpack.c.l.b16 %v1335
    %v4001 = vunpack.c.h.b16 %v1335
    %v4002 = vunpack.c.l.b16 %v1336
    %v4003 = vunpack.c.h.b16 %v1336
    %v4004 = vunpack.c.l.b16 %v1337
    %v4005 = vunpack.c.h.b16 %v1337
    %v4006 = vunpack.c.l.b16 %v1338
    %v4007 = vunpack.c.h.b16 %v1338
    %v4008 = vunpack.c.l.b16 %v1339
    %v4009 = vunpack.c.h.b16 %v1339
    %v4010 = vunpack.c.l.b16 %v1340
    %v4011 = vunpack.c.h.b16 %v1340
    %v4012 = vunpack.c.l.b16 %v1341
    %v4013 = vunpack.c.h.b16 %v1341
    %v4014 = vunpack.c.l.b16 %v1342
    %v4015 = vunpack.c.h.b16 %v1342
    %v4016 = vunpack.c.l.b16 %v1343
    %v4017 = vunpack.c.h.b16 %v1343
    %v4018 = vunpack.c.l.b16 %v1344
    %v4019 = vunpack.c.h.b16 %v1344
    %v4020 = vunpack.c.l.b16 %v1345
    %v4021 = vunpack.c.h.b16 %v1345
    %v4022 = vunpack.c.l.b16 %v1346
    %v4023 = vunpack.c.h.b16 %v1346
    %v4024 = vunpack.c.l.b16 %v1347
    %v4025 = vunpack.c.h.b16 %v1347
    %v4026 = vunpack.c.l.b16 %v1348
    %v4027 = vunpack.c.h.b16 %v1348
    %v4028 = vunpack.c.l.b16 %v1349
    %v4029 = vunpack.c.h.b16 %v1349
    %v4030 = vunpack.c.l.b16 %v1350
    %v4031 = vunpack.c.h.b16 %v1350
    %v4032 = vunpack.c.l.b16 %v1351
    %v4033 = vunpack.c.h.b16 %v1351
    %v4034 = vunpack.c.l.b16 %v1352
    %v4035 = vunpack.c.h.b16 %v1352
    %v4036 = vunpack.c.l.b16 %v1353
    %v4037 = vunpack.c.h.b16 %v1353
    %v4038 = vunpack.c.l.b16 %v1354
    %v4039 = vunpack.c.h.b16 %v1354
    %v4040 = vunpack.c.l.b16 %v1355
    %v4041 = vunpack.c.h.b16 %v1355
    %v4042 = vunpack.c.l.b16 %v1356
    %v4043 = vunpack.c.h.b16 %v1356
    %v4044 = vunpack.c.l.b16 %v1357
    %v4045 = vunpack.c.h.b16 %v1357
    %v4046 = vunpack.c.l.b16 %v1358
    %v4047 = vunpack.c.h.b16 %v1358
    %v4048 = vunpack.c.l.b16 %v1359
    %v4049 = vunpack.c.h.b16 %v1359
    %v4050 = vunpack.c.l.b16 %v1360
    %v4051 = vunpack.c.h.b16 %v1360
    %v4052 = vunpack.c.l.b16 %v1361
    %v4053 = vunpack.c.h.b16 %v1361
    %v4054 = vunpack.c.l.b16 %v1362
    %v4055 = vunpack.c.h.b16 %v1362
    %v4056 = vunpack.c.l.b16 %v1363
    %v4057 = vunpack.c.h.b16 %v1363
    %v4058 = vunpack.c.l.b16 %v1364
    %v4059 = vunpack.c.h.b16 %v1364
    %v4060 = vunpack.c.l.b16 %v1365
    %v4061 = vunpack.c.h.b16 %v1365
    %v4062 = vunpack.c.l.b16 %v1366
    %v4063 = vunpack.c.h.b16 %v1366
    %v4064 = vunpack.c.l.b16 %v1367
    %v4065 = vunpack.c.h.b16 %v1367
    %v4066 = vunpack.c.l.b16 %v1368
    %v4067 = vunpack.c.h.b16 %v1368
    %v4068 = vunpack.c.l.b16 %v1369
    %v4069 = vunpack.c.h.b16 %v1369
    %v4070 = vunpack.c.l.b16 %v1370
    %v4071 = vunpack.c.h.b16 %v1370
    %v4072 = vunpack.c.l.b16 %v1371
    %v4073 = vunpack.c.h.b16 %v1371
    %v4074 = vunpack.c.l.b16 %v1372
    %v4075 = vunpack.c.h.b16 %v1372
    %v4076 = vunpack.c.l.b16 %v1373
    %v4077 = vunpack.c.h.b16 %v1373
    %v4078 = vunpack.c.l.b16 %v1374
    %v4079 = vunpack.c.h.b16 %v1374
    %v4080 = vunpack.c.l.b16 %v1375
    %v4081 = vunpack.c.h.b16 %v1375
    %v4082 = vunpack.c.l.b16 %v1376
    %v4083 = vunpack.c.h.b16 %v1376
    %v4084 = vunpack.c.l.b16 %v1377
    %v4085 = vunpack.c.h.b16 %v1377
    %v4086 = vunpack.c.l.b16 %v1378
    %v4087 = vunpack.c.h.b16 %v1378
    %v4088 = vunpack.c.l.b16 %v1379
    %v4089 = vunpack.c.h.b16 %v1379
    %v4090 = vunpack.c.l.b16 %v1380
    %v4091 = vunpack.c.h.b16 %v1380
    %v4092 = vunpack.c.l.b16 %v1381
    %v4093 = vunpack.c.h.b16 %v1381
    %v4094 = vunpack.c.l.b16 %v1382
    %v4095 = vunpack.c.h.b16 %v1382
    %v4096 = vunpack.c.l.b16 %v1383
    %v4097 = vunpack.c.h.b16 %v1383
    %v4098 = vunpack.c.l.b16 %v1384
    %v4099 = vunpack.c.h.b16 %v1384
    %v4100 = vunpack.c.l.b16 %v1385
    %v4101 = vunpack.c.h.b16 %v1385
    %v4102 = vunpack.c.l.b16 %v1386
    %v4103 = vunpack.c.h.b16 %v1386
    %v4104 = vunpack.c.l.b16 %v1387
    %v4105 = vunpack.c.h.b16 %v1387
    %v4106 = vunpack.c.l.b16 %v1388
    %v4107 = vunpack.c.h.b16 %v1388
    %v4108 = vunpack.c.l.b16 %v1389
    %v4109 = vunpack.c.h.b16 %v1389
    %v4110 = vunpack.c.l.b16 %v1390
    %v4111 = vunpack.c.h.b16 %v1390
    %v4112 = vunpack.c.l.b16 %v1391
    %v4113 = vunpack.c.h.b16 %v1391
    %v4114 = vunpack.c.l.b16 %v1392
    %v4115 = vunpack.c.h.b16 %v1392
    %v4116 = vunpack.c.l.b16 %v1393
    %v4117 = vunpack.c.h.b16 %v1393
    %v4118 = vunpack.c.l.b16 %v1394
    %v4119 = vunpack.c.h.b16 %v1394
    %v4120 = vunpack.c.l.b16 %v1395
    %v4121 = vunpack.c.h.b16 %v1395
    %v4122 = vunpack.c.l.b16 %v1396
    %v4123 = vunpack.c.h.b16 %v1396
    %v4124 = vunpack.c.l.b16 %v1397
    %v4125 = vunpack.c.h.b16 %v1397
    %v4126 = vunpack.c.l.b16 %v1398
    %v4127 = vunpack.c.h.b16 %v1398
    %v4128 = vunpack.c.l.b16 %v1399
    %v4129 = vunpack.c.h.b16 %v1399
    %v4130 = vunpack.c.l.b16 %v1400
    %v4131 = vunpack.c.h.b16 %v1400
    %v4132 = vunpack.c.l.b16 %v1401
    %v4133 = vunpack.c.h.b16 %v1401
    %v4134 = vunpack.c.l.b16 %v1402
    %v4135 = vunpack.c.h.b16 %v1402
    %v4136 = vunpack.c.l.b16 %v1403
    %v4137 = vunpack.c.h.b16 %v1403
    %v4138 = vunpack.c.l.b16 %v1404
    %v4139 = vunpack.c.h.b16 %v1404
    %v4140 = vunpack.c.l.b16 %v1405
    %v4141 = vunpack.c.h.b16 %v1405
    %v4142 = vunpack.c.l.b16 %v1406
    %v4143 = vunpack.c.h.b16 %v1406
    %v4144 = vunpack.c.l.b16 %v1407
    %v4145 = vunpack.c.h.b16 %v1407
    %v4146 = vunpack.c.l.b16 %v1408
    %v4147 = vunpack.c.h.b16 %v1408
    %v4148 = vunpack.c.l.b16 %v1409
    %v4149 = vunpack.c.h.b16 %v1409
    %v4150 = vunpack.c.l.b16 %v1410
    %v4151 = vunpack.c.h.b16 %v1410
    %v4152 = vunpack.c.l.b16 %v1411
    %v4153 = vunpack.c.h.b16 %v1411
    %v4154 = vunpack.c.l.b16 %v1412
    %v4155 = vunpack.c.h.b16 %v1412
    %v4156 = vunpack.c.l.b16 %v1413
    %v4157 = vunpack.c.h.b16 %v1413
    %v4158 = vunpack.c.l.b16 %v1414
    %v4159 = vunpack.c.h.b16 %v1414
    %v4160 = vunpack.c.l.b16 %v1415
    %v4161 = vunpack.c.h.b16 %v1415
    %v4162 = vunpack.c.l.b16 %v1416
    %v4163 = vunpack.c.h.b16 %v1416
    %v4164 = vunpack.c.l.b16 %v1417
    %v4165 = vunpack.c.h.b16 %v1417
    %v4166 = vunpack.c.l.b16 %v1418
    %v4167 = vunpack.c.h.b16 %v1418
    %v4168 = vunpack.c.l.b16 %v1419
    %v4169 = vunpack.c.h.b16 %v1419
    %v4170 = vunpack.c.l.b16 %v1420
    %v4171 = vunpack.c.h.b16 %v1420
    %v4172 = vunpack.c.l.b16 %v1421
    %v4173 = vunpack.c.h.b16 %v1421
    %v4174 = vunpack.c.l.b16 %v1422
    %v4175 = vunpack.c.h.b16 %v1422
    %v4176 = vunpack.c.l.b16 %v1423
    %v4177 = vunpack.c.h.b16 %v1423
    %v4178 = vunpack.c.l.b16 %v1424
    %v4179 = vunpack.c.h.b16 %v1424
    %v4180 = vunpack.c.l.b16 %v1425
    %v4181 = vunpack.c.h.b16 %v1425
    %v4182 = vunpack.c.l.b16 %v1426
    %v4183 = vunpack.c.h.b16 %v1426
    %v4184 = vunpack.c.l.b16 %v1427
    %v4185 = vunpack.c.h.b16 %v1427
    %v4186 = vunpack.c.l.b16 %v1428
    %v4187 = vunpack.c.h.b16 %v1428
    %v4188 = vunpack.c.l.b16 %v1429
    %v4189 = vunpack.c.h.b16 %v1429
    %v4190 = vunpack.c.l.b16 %v1430
    %v4191 = vunpack.c.h.b16 %v1430
    %v4192 = vunpack.c.l.b16 %v1431
    %v4193 = vunpack.c.h.b16 %v1431
    %v4194 = vunpack.c.l.b16 %v1432
    %v4195 = vunpack.c.h.b16 %v1432
    %v4196 = vunpack.c.l.b16 %v1433
    %v4197 = vunpack.c.h.b16 %v1433
    %v4198 = vunpack.c.l.b16 %v1434
    %v4199 = vunpack.c.h.b16 %v1434
    %v4200 = vunpack.c.l.b16 %v1435
    %v4201 = vunpack.c.h.b16 %v1435
    %v4202 = vunpack.c.l.b16 %v1436
    %v4203 = vunpack.c.h.b16 %v1436
    %v4204 = vunpack.c.l.b16 %v1437
    %v4205 = vunpack.c.h.b16 %v1437
    %v4206 = vunpack.c.l.b16 %v1438
    %v4207 = vunpack.c.h.b16 %v1438
    %v4208 = vunpack.c.l.b16 %v1439
    %v4209 = vunpack.c.h.b16 %v1439
    %v4210 = vunpack.c.l.b16 %v1440
    %v4211 = vunpack.c.h.b16 %v1440
    %v4212 = vunpack.c.l.b16 %v1441
    %v4213 = vunpack.c.h.b16 %v1441
    %v4214 = vunpack.c.l.b16 %v1442
    %v4215 = vunpack.c.h.b16 %v1442
    %v4216 = vunpack.c.l.b16 %v1443
    %v4217 = vunpack.c.h.b16 %v1443
    %v4218 = vunpack.c.l.b16 %v1444
    %v4219 = vunpack.c.h.b16 %v1444
    %v4220 = vunpack.c.l.b16 %v1445
    %v4221 = vunpack.c.h.b16 %v1445
    %v4222 = vunpack.c.l.b16 %v1446
    %v4223 = vunpack.c.h.b16 %v1446
    %v4224 = vunpack.c.l.b16 %v1447
    %v4225 = vunpack.c.h.b16 %v1447
    %v4226 = vunpack.c.l.b16 %v1448
    %v4227 = vunpack.c.h.b16 %v1448
    %v4228 = vunpack.c.l.b16 %v1449
    %v4229 = vunpack.c.h.b16 %v1449
    %v4230 = vunpack.c.l.b16 %v1450
    %v4231 = vunpack.c.h.b16 %v1450
    %v4232 = vunpack.c.l.b16 %v1451
    %v4233 = vunpack.c.h.b16 %v1451
    %v4234 = vunpack.c.l.b16 %v1452
    %v4235 = vunpack.c.h.b16 %v1452
    %v4236 = vunpack.c.l.b16 %v1453
    %v4237 = vunpack.c.h.b16 %v1453
    %v4238 = vunpack.c.l.b16 %v1454
    %v4239 = vunpack.c.h.b16 %v1454
    %v4240 = vunpack.c.l.b16 %v1455
    %v4241 = vunpack.c.h.b16 %v1455
    %v4242 = vunpack.c.l.b16 %v1456
    %v4243 = vunpack.c.h.b16 %v1456
    %v4244 = vunpack.c.l.b16 %v1457
    %v4245 = vunpack.c.h.b16 %v1457
    %v4246 = vunpack.c.l.b16 %v1458
    %v4247 = vunpack.c.h.b16 %v1458
    %v4248 = vunpack.c.l.b16 %v1459
    %v4249 = vunpack.c.h.b16 %v1459
    %v4250 = vunpack.c.l.b16 %v1460
    %v4251 = vunpack.c.h.b16 %v1460
    %v4252 = vunpack.c.l.b16 %v1461
    %v4253 = vunpack.c.h.b16 %v1461
    %v4254 = vunpack.c.l.b16 %v1462
    %v4255 = vunpack.c.h.b16 %v1462
    %v4256 = vunpack.c.l.b16 %v1463
    %v4257 = vunpack.c.h.b16 %v1463
    %v4258 = vunpack.c.l.b16 %v1464
    %v4259 = vunpack.c.h.b16 %v1464
    %v4260 = vunpack.c.l.b16 %v1465
    %v4261 = vunpack.c.h.b16 %v1465
    %v4262 = vunpack.c.l.b16 %v1466
    %v4263 = vunpack.c.h.b16 %v1466
    %v4264 = vunpack.c.l.b16 %v1467
    %v4265 = vunpack.c.h.b16 %v1467
    %v4266 = vunpack.c.l.b16 %v1468
    %v4267 = vunpack.c.h.b16 %v1468
    %v4268 = vunpack.c.l.b16 %v1469
    %v4269 = vunpack.c.h.b16 %v1469
    %v4270 = vunpack.c.l.b16 %v1470
    %v4271 = vunpack.c.h.b16 %v1470
    %v4272 = vunpack.c.l.b16 %v1471
    %v4273 = vunpack.c.h.b16 %v1471
    %v4274 = vunpack.c.l.b16 %v1472
    %v4275 = vunpack.c.h.b16 %v1472
    %v4276 = vunpack.c.l.b16 %v1473
    %v4277 = vunpack.c.h.b16 %v1473
    %v4278 = vunpack.c.l.b16 %v1474
    %v4279 = vunpack.c.h.b16 %v1474
    %v4280 = vunpack.c.l.b16 %v1475
    %v4281 = vunpack.c.h.b16 %v1475
    %v4282 = vunpack.c.l.b16 %v1476
    %v4283 = vunpack.c.h.b16 %v1476
    %v4284 = vunpack.c.l.b16 %v1477
    %v4285 = vunpack.c.h.b16 %v1477
    %v4286 = vunpack.c.l.b16 %v1478
    %v4287 = vunpack.c.h.b16 %v1478
    %v4288 = vunpack.c.l.b16 %v1479
    %v4289 = vunpack.c.h.b16 %v1479
    %v4290 = vunpack.c.l.b16 %v1480
    %v4291 = vunpack.c.h.b16 %v1480
    %v4292 = vunpack.c.l.b16 %v1481
    %v4293 = vunpack.c.h.b16 %v1481
    %v4294 = vunpack.c.l.b16 %v1482
    %v4295 = vunpack.c.h.b16 %v1482
    %v4296 = vunpack.c.l.b16 %v1483
    %v4297 = vunpack.c.h.b16 %v1483
    %v4298 = vunpack.c.l.b16 %v1484
    %v4299 = vunpack.c.h.b16 %v1484
    %v4300 = vunpack.c.l.b16 %v1485
    %v4301 = vunpack.c.h.b16 %v1485
    %v4302 = vunpack.c.l.b16 %v1486
    %v4303 = vunpack.c.h.b16 %v1486
    %v4304 = vunpack.c.l.b16 %v1487
    %v4305 = vunpack.c.h.b16 %v1487
    %v4306 = vunpack.c.l.b16 %v1488
    %v4307 = vunpack.c.h.b16 %v1488
    %v4308 = vunpack.c.l.b16 %v1489
    %v4309 = vunpack.c.h.b16 %v1489
    %v4310 = vunpack.c.l.b16 %v1490
    %v4311 = vunpack.c.h.b16 %v1490
    %v4312 = vunpack.c.l.b16 %v1491
    %v4313 = vunpack.c.h.b16 %v1491
    %v4314 = vunpack.c.l.b16 %v1492
    %v4315 = vunpack.c.h.b16 %v1492
    %v4316 = vunpack.c.l.b16 %v1493
    %v4317 = vunpack.c.h.b16 %v1493
    %v4318 = vunpack.c.l.b16 %v1494
    %v4319 = vunpack.c.h.b16 %v1494
    %v4320 = vunpack.c.l.b16 %v1495
    %v4321 = vunpack.c.h.b16 %v1495
    %v4322 = vunpack.c.l.b16 %v1496
    %v4323 = vunpack.c.h.b16 %v1496
    %v4324 = vunpack.c.l.b16 %v1497
    %v4325 = vunpack.c.h.b16 %v1497
    %v4326 = vunpack.c.l.b16 %v1498
    %v4327 = vunpack.c.h.b16 %v1498
    %v4328 = vunpack.c.l.b16 %v1499
    %v4329 = vunpack.c.h.b16 %v1499
    %v4330 = vunpack.c.l.b16 %v1500
    %v4331 = vunpack.c.h.b16 %v1500
    %v4332 = vunpack.c.l.b16 %v1501
    %v4333 = vunpack.c.h.b16 %v1501
    %v4334 = vunpack.c.l.b16 %v1502
    %v4335 = vunpack.c.h.b16 %v1502
    %v4336 = vunpack.c.l.b16 %v1503
    %v4337 = vunpack.c.h.b16 %v1503
    %v4338 = vunpack.c.l.b16 %v1504
    %v4339 = vunpack.c.h.b16 %v1504
    %v4340 = vunpack.c.l.b16 %v1505
    %v4341 = vunpack.c.h.b16 %v1505
    %v4342 = vunpack.c.l.b16 %v1506
    %v4343 = vunpack.c.h.b16 %v1506
    %v4344 = vunpack.c.l.b16 %v1507
    %v4345 = vunpack.c.h.b16 %v1507
    %v4346 = vunpack.c.l.b16 %v1508
    %v4347 = vunpack.c.h.b16 %v1508
    %v4348 = vunpack.c.l.b16 %v1509
    %v4349 = vunpack.c.h.b16 %v1509
    %v4350 = vunpack.c.l.b16 %v1510
    %v4351 = vunpack.c.h.b16 %v1510
    %v4352 = vunpack.c.l.b16 %v1511
    %v4353 = vunpack.c.h.b16 %v1511
    %v4354 = vunpack.c.l.b16 %v1512
    %v4355 = vunpack.c.h.b16 %v1512
    %v4356 = vunpack.c.l.b16 %v1513
    %v4357 = vunpack.c.h.b16 %v1513
    %v4358 = vunpack.c.l.b16 %v1514
    %v4359 = vunpack.c.h.b16 %v1514
    %v4360 = vunpack.c.l.b16 %v1515
    %v4361 = vunpack.c.h.b16 %v1515
    %v4362 = vunpack.c.l.b16 %v1516
    %v4363 = vunpack.c.h.b16 %v1516
    %v4364 = vunpack.c.l.b16 %v1517
    %v4365 = vunpack.c.h.b16 %v1517
    %v4366 = vunpack.c.l.b16 %v1518
    %v4367 = vunpack.c.h.b16 %v1518
    %v4368 = vunpack.c.l.b16 %v1519
    %v4369 = vunpack.c.h.b16 %v1519
    %v4370 = vunpack.c.l.b16 %v1520
    %v4371 = vunpack.c.h.b16 %v1520
    %v4372 = vunpack.c.l.b16 %v1521
    %v4373 = vunpack.c.h.b16 %v1521
    %v4374 = vunpack.c.l.b16 %v1522
    %v4375 = vunpack.c.h.b16 %v1522
    %v4376 = vunpack.c.l.b16 %v1523
    %v4377 = vunpack.c.h.b16 %v1523
    %v4378 = vunpack.c.l.b16 %v1524
    %v4379 = vunpack.c.h.b16 %v1524
    %v4380 = vunpack.c.l.b16 %v1525
    %v4381 = vunpack.c.h.b16 %v1525
    %v4382 = vunpack.c.l.b16 %v1526
    %v4383 = vunpack.c.h.b16 %v1526
    %v4384 = vunpack.c.l.b16 %v1527
    %v4385 = vunpack.c.h.b16 %v1527
    %v4386 = vunpack.c.l.b16 %v1528
    %v4387 = vunpack.c.h.b16 %v1528
    %v4388 = vunpack.c.l.b16 %v1529
    %v4389 = vunpack.c.h.b16 %v1529
    %v4390 = vunpack.c.l.b16 %v1530
    %v4391 = vunpack.c.h.b16 %v1530
    %v4392 = vunpack.c.l.b16 %v1531
    %v4393 = vunpack.c.h.b16 %v1531
    %v4394 = vunpack.c.l.b16 %v1532
    %v4395 = vunpack.c.h.b16 %v1532
    %v4396 = vunpack.c.l.b16 %v1533
    %v4397 = vunpack.c.h.b16 %v1533
    %v4398 = vunpack.c.l.b16 %v1534
    %v4399 = vunpack.c.h.b16 %v1534
    %v4400 = vunpack.c.l.b16 %v1535
    %v4401 = vunpack.c.h.b16 %v1535
    %v4402 = vunpack.c.l.b16 %v1536
    %v4403 = vunpack.c.h.b16 %v1536
    %v4404 = vunpack.c.l.b16 %v1537
    %v4405 = vunpack.c.h.b16 %v1537
    %v4406 = vunpack.c.l.b16 %v1538
    %v4407 = vunpack.c.h.b16 %v1538
    %v4408 = vunpack.c.l.b16 %v1539
    %v4409 = vunpack.c.h.b16 %v1539
    %v4410 = vunpack.c.l.b16 %v1540
    %v4411 = vunpack.c.h.b16 %v1540
    %v4412 = vunpack.c.l.b16 %v1541
    %v4413 = vunpack.c.h.b16 %v1541
    %v4414 = vunpack.c.l.b16 %v1542
    %v4415 = vunpack.c.h.b16 %v1542
    %v4416 = vunpack.c.l.b16 %v1543
    %v4417 = vunpack.c.h.b16 %v1543
    %v4418 = vunpack.c.l.b16 %v1544
    %v4419 = vunpack.c.h.b16 %v1544
    %v4420 = vunpack.c.l.b16 %v1545
    %v4421 = vunpack.c.h.b16 %v1545
    %v4422 = vunpack.c.l.b16 %v1546
    %v4423 = vunpack.c.h.b16 %v1546
    %v4424 = vunpack.c.l.b16 %v1547
    %v4425 = vunpack.c.h.b16 %v1547
    %v4426 = vunpack.c.l.b16 %v1548
    %v4427 = vunpack.c.h.b16 %v1548
    %v4428 = vunpack.c.l.b16 %v1549
    %v4429 = vunpack.c.h.b16 %v1549
    %v4430 = vunpack.c.l.b16 %v1550
    %v4431 = vunpack.c.h.b16 %v1550
    %v4432 = vunpack.c.l.b16 %v1551
    %v4433 = vunpack.c.h.b16 %v1551
    %v4434 = vunpack.c.l.b16 %v1552
    %v4435 = vunpack.c.h.b16 %v1552
    %v4436 = vunpack.c.l.b16 %v1553
    %v4437 = vunpack.c.h.b16 %v1553
    %v4438 = vunpack.c.l.b16 %v1554
    %v4439 = vunpack.c.h.b16 %v1554
    %v4440 = vunpack.c.l.b16 %v1555
    %v4441 = vunpack.c.h.b16 %v1555
    %v4442 = vunpack.c.l.b16 %v1556
    %v4443 = vunpack.c.h.b16 %v1556
    %v4444 = vunpack.c.l.b16 %v1557
    %v4445 = vunpack.c.h.b16 %v1557
    %v4446 = vunpack.c.l.b16 %v1558
    %v4447 = vunpack.c.h.b16 %v1558
    %v4448 = vunpack.c.l.b16 %v1559
    %v4449 = vunpack.c.h.b16 %v1559
    %v4450 = vunpack.c.l.b16 %v1560
    %v4451 = vunpack.c.h.b16 %v1560
    %v4452 = vunpack.c.l.b16 %v1561
    %v4453 = vunpack.c.h.b16 %v1561
    %v4454 = vunpack.c.l.b16 %v1562
    %v4455 = vunpack.c.h.b16 %v1562
    %v4456 = vunpack.c.l.b16 %v1563
    %v4457 = vunpack.c.h.b16 %v1563
    %v4458 = vunpack.c.l.b16 %v1564
    %v4459 = vunpack.c.h.b16 %v1564
    %v4460 = vunpack.c.l.b16 %v1565
    %v4461 = vunpack.c.h.b16 %v1565
    %v4462 = vunpack.c.l.b16 %v1566
    %v4463 = vunpack.c.h.b16 %v1566
    %v4464 = vunpack.c.l.b16 %v1567
    %v4465 = vunpack.c.h.b16 %v1567
    %v4466 = vunpack.c.l.b16 %v1568
    %v4467 = vunpack.c.h.b16 %v1568
    %v4468 = vunpack.c.l.b16 %v1569
    %v4469 = vunpack.c.h.b16 %v1569
    %v4470 = vunpack.c.l.b16 %v1570
    %v4471 = vunpack.c.h.b16 %v1570
    %v4472 = vunpack.c.l.b16 %v1571
    %v4473 = vunpack.c.h.b16 %v1571
    %v4474 = vunpack.c.l.b16 %v1572
    %v4475 = vunpack.c.h.b16 %v1572
    %v4476 = vunpack.c.l.b16 %v1573
    %v4477 = vunpack.c.h.b16 %v1573
    %v4478 = vunpack.c.l.b16 %v1574
    %v4479 = vunpack.c.h.b16 %v1574
    %v4480 = vunpack.c.l.b16 %v1575
    %v4481 = vunpack.c.h.b16 %v1575
    %v4482 = vunpack.c.l.b16 %v1576
    %v4483 = vunpack.c.h.b16 %v1576
    %v4484 = vunpack.c.l.b16 %v1577
    %v4485 = vunpack.c.h.b16 %v1577
    %v4486 = vunpack.c.l.b16 %v1578
    %v4487 = vunpack.c.h.b16 %v1578
    %v4488 = vunpack.c.l.b16 %v1579
    %v4489 = vunpack.c.h.b16 %v1579
    %v4490 = vunpack.c.l.b16 %v1580
    %v4491 = vunpack.c.h.b16 %v1580
    %v4492 = vunpack.c.l.b16 %v1581
    %v4493 = vunpack.c.h.b16 %v1581
    %v4494 = vunpack.c.l.b16 %v1582
    %v4495 = vunpack.c.h.b16 %v1582
    %v4496 = vunpack.c.l.b16 %v1583
    %v4497 = vunpack.c.h.b16 %v1583
    %v4498 = vunpack.c.l.b16 %v1584
    %v4499 = vunpack.c.h.b16 %v1584
    %v4500 = vunpack.c.l.b16 %v1585
    %v4501 = vunpack.c.h.b16 %v1585
    %v4502 = vunpack.c.l.b16 %v1586
    %v4503 = vunpack.c.h.b16 %v1586
    %v4504 = vunpack.c.l.b16 %v1587
    %v4505 = vunpack.c.h.b16 %v1587
    %v4506 = vunpack.c.l.b16 %v1588
    %v4507 = vunpack.c.h.b16 %v1588
    %v4508 = vunpack.c.l.b16 %v1589
    %v4509 = vunpack.c.h.b16 %v1589
    %v4510 = vunpack.c.l.b16 %v1590
    %v4511 = vunpack.c.h.b16 %v1590
    %v4512 = vunpack.c.l.b16 %v1591
    %v4513 = vunpack.c.h.b16 %v1591
    %v4514 = vunpack.c.l.b16 %v1592
    %v4515 = vunpack.c.h.b16 %v1592
    %v4516 = vunpack.c.l.b16 %v1593
    %v4517 = vunpack.c.h.b16 %v1593
    %v4518 = vunpack.c.l.b16 %v1594
    %v4519 = vunpack.c.h.b16 %v1594
    %v4520 = vunpack.c.l.b16 %v1595
    %v4521 = vunpack.c.h.b16 %v1595
    %v4522 = vunpack.c.l.b16 %v1596
    %v4523 = vunpack.c.h.b16 %v1596
    %v4524 = vunpack.c.l.b16 %v1597
    %v4525 = vunpack.c.h.b16 %v1597
    %v4526 = vunpack.c.l.b16 %v1598
    %v4527 = vunpack.c.h.b16 %v1598
    %v4528 = vunpack.c.l.b16 %v1599
    %v4529 = vunpack.c.h.b16 %v1599
    %v4530 = vunpack.c.l.b16 %v1600
    %v4531 = vunpack.c.h.b16 %v1600
    %v4532 = vunpack.c.l.b16 %v1601
    %v4533 = vunpack.c.h.b16 %v1601
    %v4534 = vunpack.c.l.b16 %v1602
    %v4535 = vunpack.c.h.b16 %v1602
    %v4536 = vunpack.c.l.b16 %v1603
    %v4537 = vunpack.c.h.b16 %v1603
    %v4538 = vunpack.c.l.b16 %v1604
    %v4539 = vunpack.c.h.b16 %v1604
    %v4540 = vunpack.c.l.b16 %v1605
    %v4541 = vunpack.c.h.b16 %v1605
    %v4542 = vunpack.c.l.b16 %v1606
    %v4543 = vunpack.c.h.b16 %v1606
    %v4544 = vunpack.c.l.b16 %v1607
    %v4545 = vunpack.c.h.b16 %v1607
    %v4546 = vunpack.c.l.b16 %v1608
    %v4547 = vunpack.c.h.b16 %v1608
    %v4548 = vunpack.c.l.b16 %v1609
    %v4549 = vunpack.c.h.b16 %v1609
    %v4550 = vunpack.c.l.b16 %v1610
    %v4551 = vunpack.c.h.b16 %v1610
    %v4552 = vunpack.c.l.b16 %v1611
    %v4553 = vunpack.c.h.b16 %v1611
    %v4554 = vunpack.c.l.b16 %v1612
    %v4555 = vunpack.c.h.b16 %v1612
    %v4556 = vunpack.c.l.b16 %v1613
    %v4557 = vunpack.c.h.b16 %v1613
    %v4558 = vunpack.c.l.b16 %v1614
    %v4559 = vunpack.c.h.b16 %v1614
    %v4560 = vunpack.c.l.b16 %v1615
    %v4561 = vunpack.c.h.b16 %v1615
    %v4562 = vunpack.c.l.b16 %v1616
    %v4563 = vunpack.c.h.b16 %v1616
    %v4564 = vunpack.c.l.b16 %v1617
    %v4565 = vunpack.c.h.b16 %v1617
    %v4566 = vunpack.c.l.b16 %v1618
    %v4567 = vunpack.c.h.b16 %v1618
    %v4568 = vunpack.c.l.b16 %v1619
    %v4569 = vunpack.c.h.b16 %v1619
    %v4570 = vunpack.c.l.b16 %v1620
    %v4571 = vunpack.c.h.b16 %v1620
    %v4572 = vunpack.c.l.b16 %v1621
    %v4573 = vunpack.c.h.b16 %v1621
    %v4574 = vunpack.c.l.b16 %v1622
    %v4575 = vunpack.c.h.b16 %v1622
    %v4576 = vunpack.c.l.b16 %v1623
    %v4577 = vunpack.c.h.b16 %v1623
    %v4578 = vunpack.c.l.b16 %v1624
    %v4579 = vunpack.c.h.b16 %v1624
    %v4580 = vunpack.c.l.b16 %v1625
    %v4581 = vunpack.c.h.b16 %v1625
    %v4582 = vunpack.c.l.b16 %v1626
    %v4583 = vunpack.c.h.b16 %v1626
    %v4584 = vunpack.c.l.b16 %v1627
    %v4585 = vunpack.c.h.b16 %v1627
    %v4586 = vunpack.c.l.b16 %v1628
    %v4587 = vunpack.c.h.b16 %v1628
    %v4588 = vunpack.c.l.b16 %v1629
    %v4589 = vunpack.c.h.b16 %v1629
    %v4590 = vunpack.c.l.b16 %v1630
    %v4591 = vunpack.c.h.b16 %v1630
    %v4592 = vunpack.c.l.b16 %v1631
    %v4593 = vunpack.c.h.b16 %v1631
    %v4594 = vunpack.c.l.b16 %v1632
    %v4595 = vunpack.c.h.b16 %v1632
    %v4596 = vunpack.c.l.b16 %v1633
    %v4597 = vunpack.c.h.b16 %v1633
    %v4598 = vunpack.c.l.b16 %v1634
    %v4599 = vunpack.c.h.b16 %v1634
    %v4600 = vunpack.c.l.b16 %v1635
    %v4601 = vunpack.c.h.b16 %v1635
    %v4602 = vunpack.c.l.b16 %v1636
    %v4603 = vunpack.c.h.b16 %v1636
    %v4604 = vunpack.c.l.b16 %v1637
    %v4605 = vunpack.c.h.b16 %v1637
    %v4606 = vunpack.c.l.b16 %v1638
    %v4607 = vunpack.c.h.b16 %v1638
    %v4608 = vunpack.c.l.b16 %v1639
    %v4609 = vunpack.c.h.b16 %v1639
    %v4610 = vunpack.c.l.b16 %v1640
    %v4611 = vunpack.c.h.b16 %v1640
    %v4612 = vunpack.c.l.b16 %v1641
    %v4613 = vunpack.c.h.b16 %v1641
    %v4614 = vunpack.c.l.b16 %v1642
    %v4615 = vunpack.c.h.b16 %v1642
    %v4616 = vunpack.c.l.b16 %v1643
    %v4617 = vunpack.c.h.b16 %v1643
    %v4618 = vunpack.c.l.b16 %v1644
    %v4619 = vunpack.c.h.b16 %v1644
    %v4620 = vunpack.c.l.b16 %v1645
    %v4621 = vunpack.c.h.b16 %v1645
    %v4622 = vunpack.c.l.b16 %v1646
    %v4623 = vunpack.c.h.b16 %v1646
    %v4624 = vunpack.c.l.b16 %v1647
    %v4625 = vunpack.c.h.b16 %v1647
    %v4626 = vunpack.c.l.b16 %v1648
    %v4627 = vunpack.c.h.b16 %v1648
    %v4628 = vunpack.c.l.b16 %v1649
    %v4629 = vunpack.c.h.b16 %v1649
    %v4630 = vunpack.c.l.b16 %v1650
    %v4631 = vunpack.c.h.b16 %v1650
    %v4632 = vunpack.c.l.b16 %v1651
    %v4633 = vunpack.c.h.b16 %v1651
    %v4634 = vunpack.c.l.b16 %v1652
    %v4635 = vunpack.c.h.b16 %v1652
    %v4636 = vunpack.c.l.b16 %v1653
    %v4637 = vunpack.c.h.b16 %v1653
    %v4638 = vunpack.c.l.b16 %v1654
    %v4639 = vunpack.c.h.b16 %v1654
    %v4640 = vunpack.c.l.b16 %v1655
    %v4641 = vunpack.c.h.b16 %v1655
    %v4642 = vunpack.c.l.b16 %v1656
    %v4643 = vunpack.c.h.b16 %v1656
    %v4644 = vunpack.c.l.b16 %v1657
    %v4645 = vunpack.c.h.b16 %v1657
    %v4646 = vunpack.c.l.b16 %v1658
    %v4647 = vunpack.c.h.b16 %v1658
    %v4648 = vunpack.c.l.b16 %v1659
    %v4649 = vunpack.c.h.b16 %v1659
    %v4650 = vunpack.c.l.b16 %v1660
    %v4651 = vunpack.c.h.b16 %v1660
    %v4652 = vunpack.c.l.b16 %v1661
    %v4653 = vunpack.c.h.b16 %v1661
    %v4654 = vunpack.c.l.b16 %v1662
    %v4655 = vunpack.c.h.b16 %v1662
    %v4656 = vunpack.c.l.b16 %v1663
    %v4657 = vunpack.c.h.b16 %v1663
    %v4658 = vunpack.c.l.b16 %v1664
    %v4659 = vunpack.c.h.b16 %v1664
    %v4660 = vunpack.c.l.b16 %v1665
    %v4661 = vunpack.c.h.b16 %v1665
    %v4662 = vunpack.c.l.b16 %v1666
    %v4663 = vunpack.c.h.b16 %v1666
    %v4664 = vunpack.c.l.b16 %v1667
    %v4665 = vunpack.c.h.b16 %v1667
    %v4666 = vunpack.c.l.b16 %v1668
    %v4667 = vunpack.c.h.b16 %v1668
    %v4668 = vunpack.c.l.b16 %v1669
    %v4669 = vunpack.c.h.b16 %v1669
    %v4670 = vunpack.c.l.b16 %v1670
    %v4671 = vunpack.c.h.b16 %v1670
    %v4672 = vunpack.c.l.b16 %v1671
    %v4673 = vunpack.c.h.b16 %v1671
    %v4674 = vunpack.c.l.b16 %v1672
    %v4675 = vunpack.c.h.b16 %v1672
    %v4676 = vunpack.c.l.b16 %v1673
    %v4677 = vunpack.c.h.b16 %v1673
    %v4678 = vunpack.c.l.b16 %v1674
    %v4679 = vunpack.c.h.b16 %v1674
    %v4680 = vunpack.c.l.b16 %v1675
    %v4681 = vunpack.c.h.b16 %v1675
    %v4682 = vunpack.c.l.b16 %v1676
    %v4683 = vunpack.c.h.b16 %v1676
    %v4684 = vunpack.c.l.b16 %v1677
    %v4685 = vunpack.c.h.b16 %v1677
    %v4686 = vunpack.c.l.b16 %v1678
    %v4687 = vunpack.c.h.b16 %v1678
    %v4688 = vunpack.c.l.b16 %v1679
    %v4689 = vunpack.c.h.b16 %v1679
    %v4690 = vunpack.c.l.b16 %v1680
    %v4691 = vunpack.c.h.b16 %v1680
    %v4692 = vunpack.c.l.b16 %v1681
    %v4693 = vunpack.c.h.b16 %v1681
    %v4694 = vunpack.c.l.b16 %v1682
    %v4695 = vunpack.c.h.b16 %v1682
    %v4696 = vunpack.c.l.b16 %v1683
    %v4697 = vunpack.c.h.b16 %v1683
    %v4698 = vunpack.c.l.b16 %v1684
    %v4699 = vunpack.c.h.b16 %v1684
    %v4700 = vunpack.c.l.b16 %v1685
    %v4701 = vunpack.c.h.b16 %v1685
    %v4702 = vunpack.c.l.b16 %v1686
    %v4703 = vunpack.c.h.b16 %v1686
    %v4704 = vunpack.c.l.b16 %v1687
    %v4705 = vunpack.c.h.b16 %v1687
    %v4706 = vunpack.c.l.b16 %v1688
    %v4707 = vunpack.c.h.b16 %v1688
    %v4708 = vunpack.c.l.b16 %v1689
    %v4709 = vunpack.c.h.b16 %v1689
    %v4710 = vunpack.c.l.b16 %v1690
    %v4711 = vunpack.c.h.b16 %v1690
    %v4712 = vunpack.c.l.b16 %v1691
    %v4713 = vunpack.c.h.b16 %v1691
    %v4714 = vunpack.c.l.b16 %v1692
    %v4715 = vunpack.c.h.b16 %v1692
    %v4716 = vunpack.c.l.b16 %v1693
    %v4717 = vunpack.c.h.b16 %v1693
    %v4718 = vunpack.c.l.b16 %v1694
    %v4719 = vunpack.c.h.b16 %v1694
    %v4720 = vunpack.c.l.b16 %v1695
    %v4721 = vunpack.c.h.b16 %v1695
    %v4722 = vunpack.c.l.b16 %v1696
    %v4723 = vunpack.c.h.b16 %v1696
    %v4724 = vunpack.c.l.b16 %v1697
    %v4725 = vunpack.c.h.b16 %v1697
    %v4726 = vunpack.c.l.b16 %v1698
    %v4727 = vunpack.c.h.b16 %v1698
    %v4728 = vunpack.c.l.b16 %v1699
    %v4729 = vunpack.c.h.b16 %v1699
    %v4730 = vunpack.c.l.b16 %v1700
    %v4731 = vunpack.c.h.b16 %v1700
    %v4732 = vunpack.c.l.b16 %v1701
    %v4733 = vunpack.c.h.b16 %v1701
    %v4734 = vunpack.c.l.b16 %v1702
    %v4735 = vunpack.c.h.b16 %v1702
    %v4736 = vunpack.c.l.b16 %v1703
    %v4737 = vunpack.c.h.b16 %v1703
    %v4738 = vunpack.c.l.b16 %v1704
    %v4739 = vunpack.c.h.b16 %v1704
    %v4740 = vunpack.c.l.b16 %v1705
    %v4741 = vunpack.c.h.b16 %v1705
    %v4742 = vunpack.c.l.b16 %v1706
    %v4743 = vunpack.c.h.b16 %v1706
    %v4744 = vunpack.c.l.b16 %v1707
    %v4745 = vunpack.c.h.b16 %v1707
    %v4746 = vunpack.c.l.b16 %v1708
    %v4747 = vunpack.c.h.b16 %v1708
    %v4748 = vunpack.c.l.b16 %v1709
    %v4749 = vunpack.c.h.b16 %v1709
    %v4750 = vunpack.c.l.b16 %v1710
    %v4751 = vunpack.c.h.b16 %v1710
    %v4752 = vunpack.c.l.b16 %v1711
    %v4753 = vunpack.c.h.b16 %v1711
    %v4754 = vunpack.c.l.b16 %v1712
    %v4755 = vunpack.c.h.b16 %v1712
    %v4756 = vunpack.c.l.b16 %v1713
    %v4757 = vunpack.c.h.b16 %v1713
    %v4758 = vunpack.c.l.b16 %v1714
    %v4759 = vunpack.c.h.b16 %v1714
    %v4760 = vunpack.c.l.b16 %v1715
    %v4761 = vunpack.c.h.b16 %v1715
    %v4762 = vunpack.c.l.b16 %v1716
    %v4763 = vunpack.c.h.b16 %v1716
    %v4764 = vunpack.c.l.b16 %v1717
    %v4765 = vunpack.c.h.b16 %v1717
    %v4766 = vunpack.c.l.b16 %v1718
    %v4767 = vunpack.c.h.b16 %v1718
    %v4768 = vunpack.c.l.b16 %v1719
    %v4769 = vunpack.c.h.b16 %v1719
    %v4770 = vunpack.c.l.b16 %v1720
    %v4771 = vunpack.c.h.b16 %v1720
    %v4772 = vunpack.c.l.b16 %v1721
    %v4773 = vunpack.c.h.b16 %v1721
    %v4774 = vunpack.c.l.b16 %v1722
    %v4775 = vunpack.c.h.b16 %v1722
    %v4776 = vunpack.c.l.b16 %v1723
    %v4777 = vunpack.c.h.b16 %v1723
    %v4778 = vunpack.c.l.b16 %v1724
    %v4779 = vunpack.c.h.b16 %v1724
    %v4780 = vunpack.c.l.b16 %v1725
    %v4781 = vunpack.c.h.b16 %v1725
    %v4782 = vunpack.c.l.b16 %v1726
    %v4783 = vunpack.c.h.b16 %v1726
    %v4784 = vunpack.c.l.b16 %v1727
    %v4785 = vunpack.c.h.b16 %v1727
    %v4786 = vunpack.c.l.b16 %v1728
    %v4787 = vunpack.c.h.b16 %v1728
    %v4788 = vunpack.c.l.b16 %v1729
    %v4789 = vunpack.c.h.b16 %v1729
    %v4790 = vunpack.c.l.b16 %v1730
    %v4791 = vunpack.c.h.b16 %v1730
    %v4792 = vunpack.c.l.b16 %v1731
    %v4793 = vunpack.c.h.b16 %v1731
    %v4794 = vunpack.c.l.b16 %v1732
    %v4795 = vunpack.c.h.b16 %v1732
    %v4796 = vunpack.c.l.b16 %v1733
    %v4797 = vunpack.c.h.b16 %v1733
    %v4798 = vunpack.c.l.b16 %v1734
    %v4799 = vunpack.c.h.b16 %v1734
    %v4800 = vunpack.c.l.b16 %v1735
    %v4801 = vunpack.c.h.b16 %v1735
    %v4802 = vunpack.c.l.b16 %v1736
    %v4803 = vunpack.c.h.b16 %v1736
    %v4804 = vunpack.c.l.b16 %v1737
    %v4805 = vunpack.c.h.b16 %v1737
    %v4806 = vunpack.c.l.b16 %v1738
    %v4807 = vunpack.c.h.b16 %v1738
    %v4808 = vunpack.c.l.b16 %v1739
    %v4809 = vunpack.c.h.b16 %v1739
    %v4810 = vunpack.c.l.b16 %v1740
    %v4811 = vunpack.c.h.b16 %v1740
    %v4812 = vunpack.c.l.b16 %v1741
    %v4813 = vunpack.c.h.b16 %v1741
    %v4814 = vunpack.c.l.b16 %v1742
    %v4815 = vunpack.c.h.b16 %v1742
    %v4816 = vunpack.c.l.b16 %v1743
    %v4817 = vunpack.c.h.b16 %v1743
    %v4818 = vunpack.c.l.b16 %v1744
    %v4819 = vunpack.c.h.b16 %v1744
    %v4820 = vunpack.c.l.b16 %v1745
    %v4821 = vunpack.c.h.b16 %v1745
    %v4822 = vunpack.c.l.b16 %v1746
    %v4823 = vunpack.c.h.b16 %v1746
    %v4824 = vunpack.c.l.b16 %v1747
    %v4825 = vunpack.c.h.b16 %v1747
    %v4826 = vunpack.c.l.b16 %v1748
    %v4827 = vunpack.c.h.b16 %v1748
    %v4828 = vunpack.c.l.b16 %v1749
    %v4829 = vunpack.c.h.b16 %v1749
    %v4830 = vunpack.c.l.b16 %v1750
    %v4831 = vunpack.c.h.b16 %v1750
    %v4832 = vunpack.c.l.b16 %v1751
    %v4833 = vunpack.c.h.b16 %v1751
    %v4834 = vunpack.c.l.b16 %v1752
    %v4835 = vunpack.c.h.b16 %v1752
    %v4836 = vunpack.c.l.b16 %v1753
    %v4837 = vunpack.c.h.b16 %v1753
    %v4838 = vunpack.c.l.b16 %v1754
    %v4839 = vunpack.c.h.b16 %v1754
    %v4840 = vunpack.c.l.b16 %v1755
    %v4841 = vunpack.c.h.b16 %v1755
    %v4842 = vunpack.c.l.b16 %v1756
    %v4843 = vunpack.c.h.b16 %v1756
    %v4844 = vunpack.c.l.b16 %v1757
    %v4845 = vunpack.c.h.b16 %v1757
    %v4846 = vunpack.c.l.b16 %v1758
    %v4847 = vunpack.c.h.b16 %v1758
    %v4848 = vunpack.c.l.b16 %v1759
    %v4849 = vunpack.c.h.b16 %v1759
    %v4850 = vunpack.c.l.b16 %v1760
    %v4851 = vunpack.c.h.b16 %v1760
    %v4852 = vunpack.c.l.b16 %v1761
    %v4853 = vunpack.c.h.b16 %v1761
    %v4854 = vunpack.c.l.b16 %v1762
    %v4855 = vunpack.c.h.b16 %v1762
    %v4856 = vunpack.c.l.b16 %v1763
    %v4857 = vunpack.c.h.b16 %v1763
    %v4858 = vunpack.c.l.b16 %v1764
    %v4859 = vunpack.c.h.b16 %v1764
    %v4860 = vunpack.c.l.b16 %v1765
    %v4861 = vunpack.c.h.b16 %v1765
    %v4862 = vunpack.c.l.b16 %v1766
    %v4863 = vunpack.c.h.b16 %v1766
    %v4864 = vunpack.c.l.b16 %v1767
    %v4865 = vunpack.c.h.b16 %v1767
    %v4866 = vunpack.c.l.b16 %v1768
    %v4867 = vunpack.c.h.b16 %v1768
    %v4868 = vunpack.c.l.b16 %v1769
    %v4869 = vunpack.c.h.b16 %v1769
    %v4870 = vunpack.c.l.b16 %v1770
    %v4871 = vunpack.c.h.b16 %v1770
    %v4872 = vunpack.c.l.b16 %v1771
    %v4873 = vunpack.c.h.b16 %v1771
    %v4874 = vunpack.c.l.b16 %v1772
    %v4875 = vunpack.c.h.b16 %v1772
    %v4876 = vunpack.c.l.b16 %v1773
    %v4877 = vunpack.c.h.b16 %v1773
    %v4878 = vunpack.c.l.b16 %v1774
    %v4879 = vunpack.c.h.b16 %v1774
    %v4880 = vunpack.c.l.b16 %v1775
    %v4881 = vunpack.c.h.b16 %v1775
    %v4882 = vunpack.c.l.b16 %v1776
    %v4883 = vunpack.c.h.b16 %v1776
    %v4884 = vunpack.c.l.b16 %v1777
    %v4885 = vunpack.c.h.b16 %v1777
    %v4886 = vunpack.c.l.b16 %v1778
    %v4887 = vunpack.c.h.b16 %v1778
    %v4888 = vunpack.c.l.b16 %v1779
    %v4889 = vunpack.c.h.b16 %v1779
    %v4890 = vunpack.c.l.b16 %v1780
    %v4891 = vunpack.c.h.b16 %v1780
    %v4892 = vunpack.c.l.b16 %v1781
    %v4893 = vunpack.c.h.b16 %v1781
    %v4894 = vunpack.c.l.b16 %v1782
    %v4895 = vunpack.c.h.b16 %v1782
    %v4896 = vunpack.c.l.b16 %v1783
    %v4897 = vunpack.c.h.b16 %v1783
    %v4898 = vunpack.c.l.b16 %v1784
    %v4899 = vunpack.c.h.b16 %v1784
    %v4900 = vunpack.c.l.b16 %v1785
    %v4901 = vunpack.c.h.b16 %v1785
    %v4902 = vunpack.c.l.b16 %v1786
    %v4903 = vunpack.c.h.b16 %v1786
    %v4904 = vunpack.c.l.b16 %v1787
    %v4905 = vunpack.c.h.b16 %v1787
    %v4906 = vunpack.c.l.b16 %v1788
    %v4907 = vunpack.c.h.b16 %v1788
    %v4908 = vunpack.c.l.b16 %v1789
    %v4909 = vunpack.c.h.b16 %v1789
    %v4910 = vunpack.c.l.b16 %v1790
    %v4911 = vunpack.c.h.b16 %v1790
    %v4912 = vunpack.c.l.b16 %v1791
    %v4913 = vunpack.c.h.b16 %v1791
    %v4914 = vunpack.c.l.b16 %v1792
    %v4915 = vunpack.c.h.b16 %v1792
    %v4916 = vunpack.c.l.b16 %v1793
    %v4917 = vunpack.c.h.b16 %v1793
    %v4918 = vunpack.c.l.b16 %v1794
    %v4919 = vunpack.c.h.b16 %v1794
    %v4920 = vunpack.c.l.b16 %v1795
    %v4921 = vunpack.c.h.b16 %v1795
    %v4922 = vunpack.c.l.b16 %v1796
    %v4923 = vunpack.c.h.b16 %v1796
    %v4924 = vunpack.c.l.b16 %v1797
    %v4925 = vunpack.c.h.b16 %v1797
    %v4926 = vunpack.c.l.b16 %v1798
    %v4927 = vunpack.c.h.b16 %v1798
    %v4928 = vunpack.c.l.b16 %v1799
    %v4929 = vunpack.c.h.b16 %v1799
    %v4930 = vunpack.c.l.b16 %v1800
    %v4931 = vunpack.c.h.b16 %v1800
    %v4932 = vunpack.c.l.b16 %v1801
    %v4933 = vunpack.c.h.b16 %v1801
    %v4934 = vunpack.c.l.b16 %v1802
    %v4935 = vunpack.c.h.b16 %v1802
    %v4936 = vunpack.c.l.b16 %v1803
    %v4937 = vunpack.c.h.b16 %v1803
    %v4938 = vunpack.c.l.b16 %v1804
    %v4939 = vunpack.c.h.b16 %v1804
    %v4940 = vunpack.c.l.b16 %v1805
    %v4941 = vunpack.c.h.b16 %v1805
    %v4942 = vunpack.c.l.b16 %v1806
    %v4943 = vunpack.c.h.b16 %v1806
    %v4944 = vunpack.c.l.b16 %v1807
    %v4945 = vunpack.c.h.b16 %v1807
    %v4946 = vunpack.c.l.b16 %v1808
    %v4947 = vunpack.c.h.b16 %v1808
    %v4948 = vunpack.c.l.b16 %v1809
    %v4949 = vunpack.c.h.b16 %v1809
    %v4950 = vunpack.c.l.b16 %v1810
    %v4951 = vunpack.c.h.b16 %v1810
    %v4952 = vunpack.c.l.b16 %v1811
    %v4953 = vunpack.c.h.b16 %v1811
    %v4954 = vunpack.c.l.b16 %v1812
    %v4955 = vunpack.c.h.b16 %v1812
    %v4956 = vunpack.c.l.b16 %v1813
    %v4957 = vunpack.c.h.b16 %v1813
    %v4958 = vunpack.c.l.b16 %v1814
    %v4959 = vunpack.c.h.b16 %v1814
    %v4960 = vunpack.c.l.b16 %v1815
    %v4961 = vunpack.c.h.b16 %v1815
    %v4962 = vunpack.c.l.b16 %v1816
    %v4963 = vunpack.c.h.b16 %v1816
    %v4964 = vunpack.c.l.b16 %v1817
    %v4965 = vunpack.c.h.b16 %v1817
    %v4966 = vunpack.c.l.b16 %v1818
    %v4967 = vunpack.c.h.b16 %v1818
    %v4968 = vunpack.c.l.b16 %v1819
    %v4969 = vunpack.c.h.b16 %v1819
    %v4970 = vunpack.c.l.b16 %v1820
    %v4971 = vunpack.c.h.b16 %v1820
    %v4972 = vunpack.c.l.b16 %v1821
    %v4973 = vunpack.c.h.b16 %v1821
    %v4974 = vunpack.c.l.b16 %v1822
    %v4975 = vunpack.c.h.b16 %v1822
    %v4976 = vunpack.c.l.b16 %v1823
    %v4977 = vunpack.c.h.b16 %v1823
    %v4978 = vunpack.c.l.b16 %v1824
    %v4979 = vunpack.c.h.b16 %v1824
    %v4980 = vunpack.c.l.b16 %v1825
    %v4981 = vunpack.c.h.b16 %v1825
    %v4982 = vunpack.c.l.b16 %v1826
    %v4983 = vunpack.c.h.b16 %v1826
    %v4984 = vunpack.c.l.b16 %v1827
    %v4985 = vunpack.c.h.b16 %v1827
    %v4986 = vunpack.c.l.b16 %v1828
    %v4987 = vunpack.c.h.b16 %v1828
    %v4988 = vunpack.c.l.b16 %v1829
    %v4989 = vunpack.c.h.b16 %v1829
    %v4990 = vunpack.c.l.b16 %v1830
    %v4991 = vunpack.c.h.b16 %v1830
    %v4992 = vunpack.c.l.b16 %v1831
    %v4993 = vunpack.c.h.b16 %v1831
    %v4994 = vunpack.c.l.b16 %v1832
    %v4995 = vunpack.c.h.b16 %v1832
    %v4996 = vunpack.c.l.b16 %v1833
    %v4997 = vunpack.c.h.b16 %v1833
    %v4998 = vunpack.c.l.b16 %v1834
    %v4999 = vunpack.c.h.b16 %v1834
    %v5000 = vunpack.c.l.b16 %v1835
    %v5001 = vunpack.c.h.b16 %v1835
    %v5002 = vunpack.c.l.b16 %v1836
    %v5003 = vunpack.c.h.b16 %v1836
    %v5004 = vunpack.c.l.b16 %v1837
    %v5005 = vunpack.c.h.b16 %v1837
    %v5006 = vunpack.c.l.b16 %v1838
    %v5007 = vunpack.c.h.b16 %v1838
    %v5008 = vunpack.c.l.b16 %v1839
    %v5009 = vunpack.c.h.b16 %v1839
    %v5010 = vunpack.c.l.b16 %v1840
    %v5011 = vunpack.c.h.b16 %v1840
    %v5012 = vunpack.c.l.b16 %v1841
    %v5013 = vunpack.c.h.b16 %v1841
    %v5014 = vunpack.c.l.b16 %v1842
    %v5015 = vunpack.c.h.b16 %v1842
    %v5016 = vunpack.c.l.b16 %v1843
    %v5017 = vunpack.c.h.b16 %v1843
    %v5018 = vunpack.c.l.b16 %v1844
    %v5019 = vunpack.c.h.b16 %v1844
    %v5020 = vunpack.c.l.b16 %v1845
    %v5021 = vunpack.c.h.b16 %v1845
    %v5022 = vunpack.c.l.b16 %v1846
    %v5023 = vunpack.c.h.b16 %v1846
    %v5024 = vunpack.c.l.b16 %v1847
    %v5025 = vunpack.c.h.b16 %v1847
    %v5026 = vunpack.c.l.b16 %v1848
    %v5027 = vunpack.c.h.b16 %v1848
    %v5028 = vunpack.c.l.b16 %v1849
    %v5029 = vunpack.c.h.b16 %v1849
    %v5030 = vunpack.c.l.b16 %v1850
    %v5031 = vunpack.c.h.b16 %v1850
    %v5032 = vunpack.c.l.b16 %v1851
    %v5033 = vunpack.c.h.b16 %v1851
    %v5034 = vunpack.c.l.b16 %v1852
    %v5035 = vunpack.c.h.b16 %v1852
    %v5036 = vunpack.c.l.b16 %v1853
    %v5037 = vunpack.c.h.b16 %v1853
    %v5038 = vunpack.c.l.b16 %v1854
    %v5039 = vunpack.c.h.b16 %v1854
    %v5040 = vunpack.c.l.b16 %v1855
    %v5041 = vunpack.c.h.b16 %v1855
    %v5042 = vunpack.c.l.b16 %v1856
    %v5043 = vunpack.c.h.b16 %v1856
    %v5044 = vunpack.c.l.b16 %v1857
    %v5045 = vunpack.c.h.b16 %v1857
    %v5046 = vunpack.c.l.b16 %v1858
    %v5047 = vunpack.c.h.b16 %v1858
    %v5048 = vunpack.c.l.b16 %v1859
    %v5049 = vunpack.c.h.b16 %v1859
    %v5050 = vunpack.c.l.b16 %v1860
    %v5051 = vunpack.c.h.b16 %v1860
    %v5052 = vunpack.c.l.b16 %v1861
    %v5053 = vunpack.c.h.b16 %v1861
    %v5054 = vunpack.c.l.b16 %v1862
    %v5055 = vunpack.c.h.b16 %v1862
    %v5056 = vunpack.c.l.b16 %v1863
    %v5057 = vunpack.c.h.b16 %v1863
    %v5058 = vunpack.c.l.b16 %v1864
    %v5059 = vunpack.c.h.b16 %v1864
    %v5060 = vunpack.c.l.b16 %v1865
    %v5061 = vunpack.c.h.b16 %v1865
    %v5062 = vunpack.c.l.b16 %v1866
    %v5063 = vunpack.c.h.b16 %v1866
    %v5064 = vunpack.c.l.b16 %v1867
    %v5065 = vunpack.c.h.b16 %v1867
    %v5066 = vunpack.c.l.b16 %v1868
    %v5067 = vunpack.c.h.b16 %v1868
    %v5068 = vunpack.c.l.b16 %v1869
    %v5069 = vunpack.c.h.b16 %v1869
    %v5070 = vunpack.c.l.b16 %v1870
    %v5071 = vunpack.c.h.b16 %v1870
    %v5072 = vunpack.c.l.b16 %v1871
    %v5073 = vunpack.c.h.b16 %v1871
    %v5074 = vunpack.c.l.b16 %v1872
    %v5075 = vunpack.c.h.b16 %v1872
    %v5076 = vunpack.c.l.b16 %v1873
    %v5077 = vunpack.c.h.b16 %v1873
    %v5078 = vunpack.c.l.b16 %v1874
    %v5079 = vunpack.c.h.b16 %v1874
    %v5080 = vunpack.c.l.b16 %v1875
    %v5081 = vunpack.c.h.b16 %v1875
    %v5082 = vunpack.c.l.b16 %v1876
    %v5083 = vunpack.c.h.b16 %v1876
    %v5084 = vunpack.c.l.b16 %v1877
    %v5085 = vunpack.c.h.b16 %v1877
    %v5086 = vunpack.c.l.b16 %v1878
    %v5087 = vunpack.c.h.b16 %v1878
    %v5088 = vunpack.c.l.b16 %v1879
    %v5089 = vunpack.c.h.b16 %v1879
    %v5090 = vunpack.c.l.b16 %v1880
    %v5091 = vunpack.c.h.b16 %v1880
    %v5092 = vunpack.c.l.b16 %v1881
    %v5093 = vunpack.c.h.b16 %v1881
    %v5094 = vunpack.c.l.b16 %v1882
    %v5095 = vunpack.c.h.b16 %v1882
    %v5096 = vunpack.c.l.b16 %v1883
    %v5097 = vunpack.c.h.b16 %v1883
    %v5098 = vunpack.c.l.b16 %v1884
    %v5099 = vunpack.c.h.b16 %v1884
    %v5100 = vunpack.c.l.b16 %v1885
    %v5101 = vunpack.c.h.b16 %v1885
    %v5102 = vunpack.c.l.b16 %v1886
    %v5103 = vunpack.c.h.b16 %v1886
    %v5104 = vunpack.c.l.b16 %v1887
    %v5105 = vunpack.c.h.b16 %v1887
    %v5106 = vunpack.c.l.b16 %v1888
    %v5107 = vunpack.c.h.b16 %v1888
    %v5108 = vunpack.c.l.b16 %v1889
    %v5109 = vunpack.c.h.b16 %v1889
    %v5110 = vunpack.c.l.b16 %v1890
    %v5111 = vunpack.c.h.b16 %v1890
    %v5112 = vunpack.c.l.b16 %v1891
    %v5113 = vunpack.c.h.b16 %v1891
    %v5114 = vunpack.c.l.b16 %v1892
    %v5115 = vunpack.c.h.b16 %v1892
    %v5116 = vunpack.c.l.b16 %v1893
    %v5117 = vunpack.c.h.b16 %v1893
    %v5118 = vunpack.c.l.b16 %v1894
    %v5119 = vunpack.c.h.b16 %v1894
    %v5120 = vunpack.c.l.b16 %v1895
    %v5121 = vunpack.c.h.b16 %v1895
    %v5122 = vunpack.c.l.b16 %v1896
    %v5123 = vunpack.c.h.b16 %v1896
    %v5124 = vunpack.c.l.b16 %v1897
    %v5125 = vunpack.c.h.b16 %v1897
    %v5126 = vunpack.c.l.b16 %v1898
    %v5127 = vunpack.c.h.b16 %v1898
    %v5128 = vunpack.c.l.b16 %v1899
    %v5129 = vunpack.c.h.b16 %v1899
    %v5130 = vunpack.c.l.b16 %v1900
    %v5131 = vunpack.c.h.b16 %v1900
    %v5132 = vunpack.c.l.b16 %v1901
    %v5133 = vunpack.c.h.b16 %v1901
    %v5134 = vunpack.c.l.b16 %v1902
    %v5135 = vunpack.c.h.b16 %v1902
    %v5136 = vunpack.c.l.b16 %v1903
    %v5137 = vunpack.c.h.b16 %v1903
    %v5138 = vunpack.c.l.b16 %v1904
    %v5139 = vunpack.c.h.b16 %v1904
    %v5140 = vunpack.c.l.b16 %v1905
    %v5141 = vunpack.c.h.b16 %v1905
    %v5142 = vunpack.c.l.b16 %v1906
    %v5143 = vunpack.c.h.b16 %v1906
    %v5144 = vunpack.c.l.b16 %v1907
    %v5145 = vunpack.c.h.b16 %v1907
    %v5146 = vunpack.c.l.b16 %v1908
    %v5147 = vunpack.c.h.b16 %v1908
    %v5148 = vunpack.c.l.b16 %v1909
    %v5149 = vunpack.c.h.b16 %v1909
    %v5150 = vpack.c.b16 %v3134, %v3102
    %v5151 = vpack.c.b16 %v3135, %v3103
    %v5152 = vpack.c.b16 %v3136, %v3104
    %v5153 = vpack.c.b16 %v3137, %v3105
    %v5154 = vpack.c.b16 %v3138, %v3106
    %v5155 = vpack.c.b16 %v3139, %v3107
    %v5156 = vpack.c.b16 %v3140, %v3108
    %v5157 = vpack.c.b16 %v3141, %v3109
    %v5158 = vpack.c.b16 %v3142, %v3110
    %v5159 = vpack.c.b16 %v3143, %v3111
    %v5160 = vpack.c.b16 %v3144, %v3112
    %v5161 = vpack.c.b16 %v3145, %v3113
    %v5162 = vpack.c.b16 %v3146, %v3114
    %v5163 = vpack.c.b16 %v3147, %v3115
    %v5164 = vpack.c.b16 %v3148, %v3116
    %v5165 = vpack.c.b16 %v3149, %v3117
    %v5166 = vpack.c.b16 %v3150, %v3118
    %v5167 = vpack.c.b16 %v3151, %v3119
    %v5168 = vpack.c.b16 %v3152, %v3120
    %v5169 = vpack.c.b16 %v3153, %v3121
    %v5170 = vpack.c.b16 %v3154, %v3122
    %v5171 = vpack.c.b16 %v3155, %v3123
    %v5172 = vpack.c.b16 %v3156, %v3124
    %v5173 = vpack.c.b16 %v3157, %v3125
    %v5174 = vpack.c.b16 %v3158, %v3126
    %v5175 = vpack.c.b16 %v3159, %v3127
    %v5176 = vpack.c.b16 %v3160, %v3128
    %v5177 = vpack.c.b16 %v3161, %v3129
    %v5178 = vpack.c.b16 %v3162, %v3130
    %v5179 = vpack.c.b16 %v3163, %v3131
    %v5180 = vpack.c.b16 %v3164, %v3132
    %v5181 = vpack.c.b16 %v3165, %v3133
    %v5182 = vpack.c.b16 %v3198, %v3166
    %v5183 = vpack.c.b16 %v3199, %v3167
    %v5184 = vpack.c.b16 %v3200, %v3168
    %v5185 = vpack.c.b16 %v3201, %v3169
    %v5186 = vpack.c.b16 %v3202, %v3170
    %v5187 = vpack.c.b16 %v3203, %v3171
    %v5188 = vpack.c.b16 %v3204, %v3172
    %v5189 = vpack.c.b16 %v3205, %v3173
    %v5190 = vpack.c.b16 %v3206, %v3174
    %v5191 = vpack.c.b16 %v3207, %v3175
    %v5192 = vpack.c.b16 %v3208, %v3176
    %v5193 = vpack.c.b16 %v3209, %v3177
    %v5194 = vpack.c.b16 %v3210, %v3178
    %v5195 = vpack.c.b16 %v3211, %v3179
    %v5196 = vpack.c.b16 %v3212, %v3180
    %v5197 = vpack.c.b16 %v3213, %v3181
    %v5198 = vpack.c.b16 %v3214, %v3182
    %v5199 = vpack.c.b16 %v3215, %v3183
    %v5200 = vpack.c.b16 %v3216, %v3184
    %v5201 = vpack.c.b16 %v3217, %v3185
    %v5202 = vpack.c.b16 %v3218, %v3186
    %v5203 = vpack.c.b16 %v3219, %v3187
    %v5204 = vpack.c.b16 %v3220, %v3188
    %v5205 = vpack.c.b16 %v3221, %v3189
    %v5206 = vpack.c.b16 %v3222, %v3190
    %v5207 = vpack.c.b16 %v3223, %v3191
    %v5208 = vpack.c.b16 %v3224, %v3192
    %v5209 = vpack.c.b16 %v3225, %v3193
    %v5210 = vpack.c.b16 %v3226, %v3194
    %v5211 = vpack.c.b16 %v3227, %v3195
    %v5212 = vpack.c.b16 %v3228, %v3196
    %v5213 = vpack.c.b16 %v3229, %v3197
    %v5214 = vpack.c.b16 %v3262, %v3230
    %v5215 = vpack.c.b16 %v3263, %v3231
    %v5216 = vpack.c.b16 %v3264, %v3232
    %v5217 = vpack.c.b16 %v3265, %v3233
    %v5218 = vpack.c.b16 %v3266, %v3234
    %v5219 = vpack.c.b16 %v3267, %v3235
    %v5220 = vpack.c.b16 %v3268, %v3236
    %v5221 = vpack.c.b16 %v3269, %v3237
    %v5222 = vpack.c.b16 %v3270, %v3238
    %v5223 = vpack.c.b16 %v3271, %v3239
    %v5224 = vpack.c.b16 %v3272, %v3240
    %v5225 = vpack.c.b16 %v3273, %v3241
    %v5226 = vpack.c.b16 %v3274, %v3242
    %v5227 = vpack.c.b16 %v3275, %v3243
    %v5228 = vpack.c.b16 %v3276, %v3244
    %v5229 = vpack.c.b16 %v3277, %v3245
    %v5230 = vpack.c.b16 %v3278, %v3246
    %v5231 = vpack.c.b16 %v3279, %v3247
    %v5232 = vpack.c.b16 %v3280, %v3248
    %v5233 = vpack.c.b16 %v3281, %v3249
    %v5234 = vpack.c.b16 %v3282, %v3250
    %v5235 = vpack.c.b16 %v3283, %v3251
    %v5236 = vpack.c.b16 %v3284, %v3252
    %v5237 = vpack.c.b16 %v3285, %v3253
    %v5238 = vpack.c.b16 %v3286, %v3254
    %v5239 = vpack.c.b16 %v3287, %v3255
    %v5240 = vpack.c.b16 %v3288, %v3256
    %v5241 = vpack.c.b16 %v3289, %v3257
    %v5242 = vpack.c.b16 %v3290, %v3258
    %v5243 = vpack.c.b16 %v3291, %v3259
    %v5244 = vpack.c.b16 %v3292, %v3260
    %v5245 = vpack.c.b16 %v3293, %v3261
    %v5246 = vpack.c.b16 %v3326, %v3294
    %v5247 = vpack.c.b16 %v3327, %v3295
    %v5248 = vpack.c.b16 %v3328, %v3296
    %v5249 = vpack.c.b16 %v3329, %v3297
    %v5250 = vpack.c.b16 %v3330, %v3298
    %v5251 = vpack.c.b16 %v3331, %v3299
    %v5252 = vpack.c.b16 %v3332, %v3300
    %v5253 = vpack.c.b16 %v3333, %v3301
    %v5254 = vpack.c.b16 %v3334, %v3302
    %v5255 = vpack.c.b16 %v3335, %v3303
    %v5256 = vpack.c.b16 %v3336, %v3304
    %v5257 = vpack.c.b16 %v3337, %v3305
    %v5258 = vpack.c.b16 %v3338, %v3306
    %v5259 = vpack.c.b16 %v3339, %v3307
    %v5260 = vpack.c.b16 %v3340, %v3308
    %v5261 = vpack.c.b16 %v3341, %v3309
    %v5262 = vpack.c.b16 %v3342, %v3310
    %v5263 = vpack.c.b16 %v3343, %v3311
    %v5264 = vpack.c.b16 %v3344, %v3312
    %v5265 = vpack.c.b16 %v3345, %v3313
    %v5266 = vpack.c.b16 %v3346, %v3314
    %v5267 = vpack.c.b16 %v3347, %v3315
    %v5268 = vpack.c.b16 %v3348, %v3316
    %v5269 = vpack.c.b16 %v3349, %v3317
    %v5270 = vpack.c.b16 %v3350, %v3318
    %v5271 = vpack.c.b16 %v3351, %v3319
    %v5272 = vpack.c.b16 %v3352, %v3320
    %v5273 = vpack.c.b16 %v3353, %v3321
    %v5274 = vpack.c.b16 %v3354, %v3322
    %v5275 = vpack.c.b16 %v3355, %v3323
    %v5276 = vpack.c.b16 %v3356, %v3324
    %v5277 = vpack.c.b16 %v3357, %v3325
    %v5278 = vpack.c.b16 %v3390, %v3358
    %v5279 = vpack.c.b16 %v3391, %v3359
    %v5280 = vpack.c.b16 %v3392, %v3360
    %v5281 = vpack.c.b16 %v3393, %v3361
    %v5282 = vpack.c.b16 %v3394, %v3362
    %v5283 = vpack.c.b16 %v3395, %v3363
    %v5284 = vpack.c.b16 %v3396, %v3364
    %v5285 = vpack.c.b16 %v3397, %v3365
    %v5286 = vpack.c.b16 %v3398, %v3366
    %v5287 = vpack.c.b16 %v3399, %v3367
    %v5288 = vpack.c.b16 %v3400, %v3368
    %v5289 = vpack.c.b16 %v3401, %v3369
    %v5290 = vpack.c.b16 %v3402, %v3370
    %v5291 = vpack.c.b16 %v3403, %v3371
    %v5292 = vpack.c.b16 %v3404, %v3372
    %v5293 = vpack.c.b16 %v3405, %v3373
    %v5294 = vpack.c.b16 %v3406, %v3374
    %v5295 = vpack.c.b16 %v3407, %v3375
    %v5296 = vpack.c.b16 %v3408, %v3376
    %v5297 = vpack.c.b16 %v3409, %v3377
    %v5298 = vpack.c.b16 %v3410, %v3378
    %v5299 = vpack.c.b16 %v3411, %v3379
    %v5300 = vpack.c.b16 %v3412, %v3380
    %v5301 = vpack.c.b16 %v3413, %v3381
    %v5302 = vpack.c.b16 %v3414, %v3382
    %v5303 = vpack.c.b16 %v3415, %v3383
    %v5304 = vpack.c.b16 %v3416, %v3384
    %v5305 = vpack.c.b16 %v3417, %v3385
    %v5306 = vpack.c.b16 %v3418, %v3386
    %v5307 = vpack.c.b16 %v3419, %v3387
    %v5308 = vpack.c.b16 %v3420, %v3388
    %v5309 = vpack.c.b16 %v3421, %v3389
    %v5310 = vpack.c.b16 %v3454, %v3422
    %v5311 = vpack.c.b16 %v3455, %v3423
    %v5312 = vpack.c.b16 %v3456, %v3424
    %v5313 = vpack.c.b16 %v3457, %v3425
    %v5314 = vpack.c.b16 %v3458, %v3426
    %v5315 = vpack.c.b16 %v3459, %v3427
    %v5316 = vpack.c.b16 %v3460, %v3428
    %v5317 = vpack.c.b16 %v3461, %v3429
    %v5318 = vpack.c.b16 %v3462, %v3430
    %v5319 = vpack.c.b16 %v3463, %v3431
    %v5320 = vpack.c.b16 %v3464, %v3432
    %v5321 = vpack.c.b16 %v3465, %v3433
    %v5322 = vpack.c.b16 %v3466, %v3434
    %v5323 = vpack.c.b16 %v3467, %v3435
    %v5324 = vpack.c.b16 %v3468, %v3436
    %v5325 = vpack.c.b16 %v3469, %v3437
    %v5326 = vpack.c.b16 %v3470, %v3438
    %v5327 = vpack.c.b16 %v3471, %v3439
    %v5328 = vpack.c.b16 %v3472, %v3440
    %v5329 = vpack.c.b16 %v3473, %v3441
    %v5330 = vpack.c.b16 %v3474, %v3442
    %v5331 = vpack.c.b16 %v3475, %v3443
    %v5332 = vpack.c.b16 %v3476, %v3444
    %v5333 = vpack.c.b16 %v3477, %v3445
    %v5334 = vpack.c.b16 %v3478, %v3446
    %v5335 = vpack.c.b16 %v3479, %v3447
    %v5336 = vpack.c.b16 %v3480, %v3448
    %v5337 = vpack.c.b16 %v3481, %v3449
    %v5338 = vpack.c.b16 %v3482, %v3450
    %v5339 = vpack.c.b16 %v3483, %v3451
    %v5340 = vpack.c.b16 %v3484, %v3452
    %v5341 = vpack.c.b16 %v3485, %v3453
    %v5342 = vpack.c.b16 %v3518, %v3486
    %v5343 = vpack.c.b16 %v3519, %v3487
    %v5344 = vpack.c.b16 %v3520, %v3488
    %v5345 = vpack.c.b16 %v3521, %v3489
    %v5346 = vpack.c.b16 %v3522, %v3490
    %v5347 = vpack.c.b16 %v3523, %v3491
    %v5348 = vpack.c.b16 %v3524, %v3492
    %v5349 = vpack.c.b16 %v3525, %v3493
    %v5350 = vpack.c.b16 %v3526, %v3494
    %v5351 = vpack.c.b16 %v3527, %v3495
    %v5352 = vpack.c.b16 %v3528, %v3496
    %v5353 = vpack.c.b16 %v3529, %v3497
    %v5354 = vpack.c.b16 %v3530, %v3498
    %v5355 = vpack.c.b16 %v3531, %v3499
    %v5356 = vpack.c.b16 %v3532, %v3500
    %v5357 = vpack.c.b16 %v3533, %v3501
    %v5358 = vpack.c.b16 %v3534, %v3502
    %v5359 = vpack.c.b16 %v3535, %v3503
    %v5360 = vpack.c.b16 %v3536, %v3504
    %v5361 = vpack.c.b16 %v3537, %v3505
    %v5362 = vpack.c.b16 %v3538, %v3506
    %v5363 = vpack.c.b16 %v3539, %v3507
    %v5364 = vpack.c.b16 %v3540, %v3508
    %v5365 = vpack.c.b16 %v3541, %v3509
    %v5366 = vpack.c.b16 %v3542, %v3510
    %v5367 = vpack.c.b16 %v3543, %v3511
    %v5368 = vpack.c.b16 %v3544, %v3512
    %v5369 = vpack.c.b16 %v3545, %v3513
    %v5370 = vpack.c.b16 %v3546, %v3514
    %v5371 = vpack.c.b16 %v3547, %v3515
    %v5372 = vpack.c.b16 %v3548, %v3516
    %v5373 = vpack.c.b16 %v3549, %v3517
    %v5374 = vpack.c.b16 %v3582, %v3550
    %v5375 = vpack.c.b16 %v3583, %v3551
    %v5376 = vpack.c.b16 %v3584, %v3552
    %v5377 = vpack.c.b16 %v3585, %v3553
    %v5378 = vpack.c.b16 %v3586, %v3554
    %v5379 = vpack.c.b16 %v3587, %v3555
    %v5380 = vpack.c.b16 %v3588, %v3556
    %v5381 = vpack.c.b16 %v3589, %v3557
    %v5382 = vpack.c.b16 %v3590, %v3558
    %v5383 = vpack.c.b16 %v3591, %v3559
    %v5384 = vpack.c.b16 %v3592, %v3560
    %v5385 = vpack.c.b16 %v3593, %v3561
    %v5386 = vpack.c.b16 %v3594, %v3562
    %v5387 = vpack.c.b16 %v3595, %v3563
    %v5388 = vpack.c.b16 %v3596, %v3564
    %v5389 = vpack.c.b16 %v3597, %v3565
    %v5390 = vpack.c.b16 %v3598, %v3566
    %v5391 = vpack.c.b16 %v3599, %v3567
    %v5392 = vpack.c.b16 %v3600, %v3568
    %v5393 = vpack.c.b16 %v3601, %v3569
    %v5394 = vpack.c.b16 %v3602, %v3570
    %v5395 = vpack.c.b16 %v3603, %v3571
    %v5396 = vpack.c.b16 %v3604, %v3572
    %v5397 = vpack.c.b16 %v3605, %v3573
    %v5398 = vpack.c.b16 %v3606, %v3574
    %v5399 = vpack.c.b16 %v3607, %v3575
    %v5400 = vpack.c.b16 %v3608, %v3576
    %v5401 = vpack.c.b16 %v3609, %v3577
    %v5402 = vpack.c.b16 %v3610, %v3578
    %v5403 = vpack.c.b16 %v3611, %v3579
    %v5404 = vpack.c.b16 %v3612, %v3580
    %v5405 = vpack.c.b16 %v3613, %v3581
    %v5406 = vpack.c.b16 %v3646, %v3614
    %v5407 = vpack.c.b16 %v3647, %v3615
    %v5408 = vpack.c.b16 %v3648, %v3616
    %v5409 = vpack.c.b16 %v3649, %v3617
    %v5410 = vpack.c.b16 %v3650, %v3618
    %v5411 = vpack.c.b16 %v3651, %v3619
    %v5412 = vpack.c.b16 %v3652, %v3620
    %v5413 = vpack.c.b16 %v3653, %v3621
    %v5414 = vpack.c.b16 %v3654, %v3622
    %v5415 = vpack.c.b16 %v3655, %v3623
    %v5416 = vpack.c.b16 %v3656, %v3624
    %v5417 = vpack.c.b16 %v3657, %v3625
    %v5418 = vpack.c.b16 %v3658, %v3626
    %v5419 = vpack.c.b16 %v3659, %v3627
    %v5420 = vpack.c.b16 %v3660, %v3628
    %v5421 = vpack.c.b16 %v3661, %v3629
    %v5422 = vpack.c.b16 %v3662, %v3630
    %v5423 = vpack.c.b16 %v3663, %v3631
    %v5424 = vpack.c.b16 %v3664, %v3632
    %v5425 = vpack.c.b16 %v3665, %v3633
    %v5426 = vpack.c.b16 %v3666, %v3634
    %v5427 = vpack.c.b16 %v3667, %v3635
    %v5428 = vpack.c.b16 %v3668, %v3636
    %v5429 = vpack.c.b16 %v3669, %v3637
    %v5430 = vpack.c.b16 %v3670, %v3638
    %v5431 = vpack.c.b16 %v3671, %v3639
    %v5432 = vpack.c.b16 %v3672, %v3640
    %v5433 = vpack.c.b16 %v3673, %v3641
    %v5434 = vpack.c.b16 %v3674, %v3642
    %v5435 = vpack.c.b16 %v3675, %v3643
    %v5436 = vpack.c.b16 %v3676, %v3644
    %v5437 = vpack.c.b16 %v3677, %v3645
    %v5438 = vpack.c.b16 %v3710, %v3678
    %v5439 = vpack.c.b16 %v3711, %v3679
    %v5440 = vpack.c.b16 %v3712, %v3680
    %v5441 = vpack.c.b16 %v3713, %v3681
    %v5442 = vpack.c.b16 %v3714, %v3682
    %v5443 = vpack.c.b16 %v3715, %v3683
    %v5444 = vpack.c.b16 %v3716, %v3684
    %v5445 = vpack.c.b16 %v3717, %v3685
    %v5446 = vpack.c.b16 %v3718, %v3686
    %v5447 = vpack.c.b16 %v3719, %v3687
    %v5448 = vpack.c.b16 %v3720, %v3688
    %v5449 = vpack.c.b16 %v3721, %v3689
    %v5450 = vpack.c.b16 %v3722, %v3690
    %v5451 = vpack.c.b16 %v3723, %v3691
    %v5452 = vpack.c.b16 %v3724, %v3692
    %v5453 = vpack.c.b16 %v3725, %v3693
    %v5454 = vpack.c.b16 %v3726, %v3694
    %v5455 = vpack.c.b16 %v3727, %v3695
    %v5456 = vpack.c.b16 %v3728, %v3696
    %v5457 = vpack.c.b16 %v3729, %v3697
    %v5458 = vpack.c.b16 %v3730, %v3698
    %v5459 = vpack.c.b16 %v3731, %v3699
    %v5460 = vpack.c.b16 %v3732, %v3700
    %v5461 = vpack.c.b16 %v3733, %v3701
    %v5462 = vpack.c.b16 %v3734, %v3702
    %v5463 = vpack.c.b16 %v3735, %v3703
    %v5464 = vpack.c.b16 %v3736, %v3704
    %v5465 = vpack.c.b16 %v3737, %v3705
    %v5466 = vpack.c.b16 %v3738, %v3706
    %v5467 = vpack.c.b16 %v3739, %v3707
    %v5468 = vpack.c.b16 %v3740, %v3708
    %v5469 = vpack.c.b16 %v3741, %v3709
    %v5470 = vpack.c.b16 %v3774, %v3742
    %v5471 = vpack.c.b16 %v3775, %v3743
    %v5472 = vpack.c.b16 %v3776, %v3744
    %v5473 = vpack.c.b16 %v3777, %v3745
    %v5474 = vpack.c.b16 %v3778, %v3746
    %v5475 = vpack.c.b16 %v3779, %v3747
    %v5476 = vpack.c.b16 %v3780, %v3748
    %v5477 = vpack.c.b16 %v3781, %v3749
    %v5478 = vpack.c.b16 %v3782, %v3750
    %v5479 = vpack.c.b16 %v3783, %v3751
    %v5480 = vpack.c.b16 %v3784, %v3752
    %v5481 = vpack.c.b16 %v3785, %v3753
    %v5482 = vpack.c.b16 %v3786, %v3754
    %v5483 = vpack.c.b16 %v3787, %v3755
    %v5484 = vpack.c.b16 %v3788, %v3756
    %v5485 = vpack.c.b16 %v3789, %v3757
    %v5486 = vpack.c.b16 %v3790, %v3758
    %v5487 = vpack.c.b16 %v3791, %v3759
    %v5488 = vpack.c.b16 %v3792, %v3760
    %v5489 = vpack.c.b16 %v3793, %v3761
    %v5490 = vpack.c.b16 %v3794, %v3762
    %v5491 = vpack.c.b16 %v3795, %v3763
    %v5492 = vpack.c.b16 %v3796, %v3764
    %v5493 = vpack.c.b16 %v3797, %v3765
    %v5494 = vpack.c.b16 %v3798, %v3766
    %v5495 = vpack.c.b16 %v3799, %v3767
    %v5496 = vpack.c.b16 %v3800, %v3768
    %v5497 = vpack.c.b16 %v3801, %v3769
    %v5498 = vpack.c.b16 %v3802, %v3770
    %v5499 = vpack.c.b16 %v3803, %v3771
    %v5500 = vpack.c.b16 %v3804, %v3772
    %v5501 = vpack.c.b16 %v3805, %v3773
    %v5502 = vpack.c.b16 %v3838, %v3806
    %v5503 = vpack.c.b16 %v3839, %v3807
    %v5504 = vpack.c.b16 %v3840, %v3808
    %v5505 = vpack.c.b16 %v3841, %v3809
    %v5506 = vpack.c.b16 %v3842, %v3810
    %v5507 = vpack.c.b16 %v3843, %v3811
    %v5508 = vpack.c.b16 %v3844, %v3812
    %v5509 = vpack.c.b16 %v3845, %v3813
    %v5510 = vpack.c.b16 %v3846, %v3814
    %v5511 = vpack.c.b16 %v3847, %v3815
    %v5512 = vpack.c.b16 %v3848, %v3816
    %v5513 = vpack.c.b16 %v3849, %v3817
    %v5514 = vpack.c.b16 %v3850, %v3818
    %v5515 = vpack.c.b16 %v3851, %v3819
    %v5516 = vpack.c.b16 %v3852, %v3820
    %v5517 = vpack.c.b16 %v3853, %v3821
    %v5518 = vpack.c.b16 %v3854, %v3822
    %v5519 = vpack.c.b16 %v3855, %v3823
    %v5520 = vpack.c.b16 %v3856, %v3824
    %v5521 = vpack.c.b16 %v3857, %v3825
    %v5522 = vpack.c.b16 %v3858, %v3826
    %v5523 = vpack.c.b16 %v3859, %v3827
    %v5524 = vpack.c.b16 %v3860, %v3828
    %v5525 = vpack.c.b16 %v3861, %v3829
    %v5526 = vpack.c.b16 %v3862, %v3830
    %v5527 = vpack.c.b16 %v3863, %v3831
    %v5528 = vpack.c.b16 %v3864, %v3832
    %v5529 = vpack.c.b16 %v3865, %v3833
    %v5530 = vpack.c.b16 %v3866, %v3834
    %v5531 = vpack.c.b16 %v3867, %v3835
    %v5532 = vpack.c.b16 %v3868, %v3836
    %v5533 = vpack.c.b16 %v3869, %v3837
    %v5534 = vpack.c.b16 %v3902, %v3870
    %v5535 = vpack.c.b16 %v3903, %v3871
    %v5536 = vpack.c.b16 %v3904, %v3872
    %v5537 = vpack.c.b16 %v3905, %v3873
    %v5538 = vpack.c.b16 %v3906, %v3874
    %v5539 = vpack.c.b16 %v3907, %v3875
    %v5540 = vpack.c.b16 %v3908, %v3876
    %v5541 = vpack.c.b16 %v3909, %v3877
    %v5542 = vpack.c.b16 %v3910, %v3878
    %v5543 = vpack.c.b16 %v3911, %v3879
    %v5544 = vpack.c.b16 %v3912, %v3880
    %v5545 = vpack.c.b16 %v3913, %v3881
    %v5546 = vpack.c.b16 %v3914, %v3882
    %v5547 = vpack.c.b16 %v3915, %v3883
    %v5548 = vpack.c.b16 %v3916, %v3884
    %v5549 = vpack.c.b16 %v3917, %v3885
    %v5550 = vpack.c.b16 %v3918, %v3886
    %v5551 = vpack.c.b16 %v3919, %v3887
    %v5552 = vpack.c.b16 %v3920, %v3888
    %v5553 = vpack.c.b16 %v3921, %v3889
    %v5554 = vpack.c.b16 %v3922, %v3890
    %v5555 = vpack.c.b16 %v3923, %v3891
    %v5556 = vpack.c.b16 %v3924, %v3892
    %v5557 = vpack.c.b16 %v3925, %v3893
    %v5558 = vpack.c.b16 %v3926, %v3894
    %v5559 = vpack.c.b16 %v3927, %v3895
    %v5560 = vpack.c.b16 %v3928, %v3896
    %v5561 = vpack.c.b16 %v3929, %v3897
    %v5562 = vpack.c.b16 %v3930, %v3898
    %v5563 = vpack.c.b16 %v3931, %v3899
    %v5564 = vpack.c.b16 %v3932, %v3900
    %v5565 = vpack.c.b16 %v3933, %v3901
    %v5566 = vpack.c.b16 %v3966, %v3934
    %v5567 = vpack.c.b16 %v3967, %v3935
    %v5568 = vpack.c.b16 %v3968, %v3936
    %v5569 = vpack.c.b16 %v3969, %v3937
    %v5570 = vpack.c.b16 %v3970, %v3938
    %v5571 = vpack.c.b16 %v3971, %v3939
    %v5572 = vpack.c.b16 %v3972, %v3940
    %v5573 = vpack.c.b16 %v3973, %v3941
    %v5574 = vpack.c.b16 %v3974, %v3942
    %v5575 = vpack.c.b16 %v3975, %v3943
    %v5576 = vpack.c.b16 %v3976, %v3944
    %v5577 = vpack.c.b16 %v3977, %v3945
    %v5578 = vpack.c.b16 %v3978, %v3946
    %v5579 = vpack.c.b16 %v3979, %v3947
    %v5580 = vpack.c.b16 %v3980, %v3948
    %v5581 = vpack.c.b16 %v3981, %v3949
    %v5582 = vpack.c.b16 %v3982, %v3950
    %v5583 = vpack.c.b16 %v3983, %v3951
    %v5584 = vpack.c.b16 %v3984, %v3952
    %v5585 = vpack.c.b16 %v3985, %v3953
    %v5586 = vpack.c.b16 %v3986, %v3954
    %v5587 = vpack.c.b16 %v3987, %v3955
    %v5588 = vpack.c.b16 %v3988, %v3956
    %v5589 = vpack.c.b16 %v3989, %v3957
    %v5590 = vpack.c.b16 %v3990, %v3958
    %v5591 = vpack.c.b16 %v3991, %v3959
    %v5592 = vpack.c.b16 %v3992, %v3960
    %v5593 = vpack.c.b16 %v3993, %v3961
    %v5594 = vpack.c.b16 %v3994, %v3962
    %v5595 = vpack.c.b16 %v3995, %v3963
    %v5596 = vpack.c.b16 %v3996, %v3964
    %v5597 = vpack.c.b16 %v3997, %v3965
    %v5598 = vpack.c.b16 %v4030, %v3998
    %v5599 = vpack.c.b16 %v4031, %v3999
    %v5600 = vpack.c.b16 %v4032, %v4000
    %v5601 = vpack.c.b16 %v4033, %v4001
    %v5602 = vpack.c.b16 %v4034, %v4002
    %v5603 = vpack.c.b16 %v4035, %v4003
    %v5604 = vpack.c.b16 %v4036, %v4004
    %v5605 = vpack.c.b16 %v4037, %v4005
    %v5606 = vpack.c.b16 %v4038, %v4006
    %v5607 = vpack.c.b16 %v4039, %v4007
    %v5608 = vpack.c.b16 %v4040, %v4008
    %v5609 = vpack.c.b16 %v4041, %v4009
    %v5610 = vpack.c.b16 %v4042, %v4010
    %v5611 = vpack.c.b16 %v4043, %v4011
    %v5612 = vpack.c.b16 %v4044, %v4012
    %v5613 = vpack.c.b16 %v4045, %v4013
    %v5614 = vpack.c.b16 %v4046, %v4014
    %v5615 = vpack.c.b16 %v4047, %v4015
    %v5616 = vpack.c.b16 %v4048, %v4016
    %v5617 = vpack.c.b16 %v4049, %v4017
    %v5618 = vpack.c.b16 %v4050, %v4018
    %v5619 = vpack.c.b16 %v4051, %v4019
    %v5620 = vpack.c.b16 %v4052, %v4020
    %v5621 = vpack.c.b16 %v4053, %v4021
    %v5622 = vpack.c.b16 %v4054, %v4022
    %v5623 = vpack.c.b16 %v4055, %v4023
    %v5624 = vpack.c.b16 %v4056, %v4024
    %v5625 = vpack.c.b16 %v4057, %v4025
    %v5626 = vpack.c.b16 %v4058, %v4026
    %v5627 = vpack.c.b16 %v4059, %v4027
    %v5628 = vpack.c.b16 %v4060, %v4028
    %v5629 = vpack.c.b16 %v4061, %v4029
    %v5630 = vpack.c.b16 %v4094, %v4062
    %v5631 = vpack.c.b16 %v4095, %v4063
    %v5632 = vpack.c.b16 %v4096, %v4064
    %v5633 = vpack.c.b16 %v4097, %v4065
    %v5634 = vpack.c.b16 %v4098, %v4066
    %v5635 = vpack.c.b16 %v4099, %v4067
    %v5636 = vpack.c.b16 %v4100, %v4068
    %v5637 = vpack.c.b16 %v4101, %v4069
    %v5638 = vpack.c.b16 %v4102, %v4070
    %v5639 = vpack.c.b16 %v4103, %v4071
    %v5640 = vpack.c.b16 %v4104, %v4072
    %v5641 = vpack.c.b16 %v4105, %v4073
    %v5642 = vpack.c.b16 %v4106, %v4074
    %v5643 = vpack.c.b16 %v4107, %v4075
    %v5644 = vpack.c.b16 %v4108, %v4076
    %v5645 = vpack.c.b16 %v4109, %v4077
    %v5646 = vpack.c.b16 %v4110, %v4078
    %v5647 = vpack.c.b16 %v4111, %v4079
    %v5648 = vpack.c.b16 %v4112, %v4080
    %v5649 = vpack.c.b16 %v4113, %v4081
    %v5650 = vpack.c.b16 %v4114, %v4082
    %v5651 = vpack.c.b16 %v4115, %v4083
    %v5652 = vpack.c.b16 %v4116, %v4084
    %v5653 = vpack.c.b16 %v4117, %v4085
    %v5654 = vpack.c.b16 %v4118, %v4086
    %v5655 = vpack.c.b16 %v4119, %v4087
    %v5656 = vpack.c.b16 %v4120, %v4088
    %v5657 = vpack.c.b16 %v4121, %v4089
    %v5658 = vpack.c.b16 %v4122, %v4090
    %v5659 = vpack.c.b16 %v4123, %v4091
    %v5660 = vpack.c.b16 %v4124, %v4092
    %v5661 = vpack.c.b16 %v4125, %v4093
    %v5662 = vpack.c.b16 %v4158, %v4126
    %v5663 = vpack.c.b16 %v4159, %v4127
    %v5664 = vpack.c.b16 %v4160, %v4128
    %v5665 = vpack.c.b16 %v4161, %v4129
    %v5666 = vpack.c.b16 %v4162, %v4130
    %v5667 = vpack.c.b16 %v4163, %v4131
    %v5668 = vpack.c.b16 %v4164, %v4132
    %v5669 = vpack.c.b16 %v4165, %v4133
    %v5670 = vpack.c.b16 %v4166, %v4134
    %v5671 = vpack.c.b16 %v4167, %v4135
    %v5672 = vpack.c.b16 %v4168, %v4136
    %v5673 = vpack.c.b16 %v4169, %v4137
    %v5674 = vpack.c.b16 %v4170, %v4138
    %v5675 = vpack.c.b16 %v4171, %v4139
    %v5676 = vpack.c.b16 %v4172, %v4140
    %v5677 = vpack.c.b16 %v4173, %v4141
    %v5678 = vpack.c.b16 %v4174, %v4142
    %v5679 = vpack.c.b16 %v4175, %v4143
    %v5680 = vpack.c.b16 %v4176, %v4144
    %v5681 = vpack.c.b16 %v4177, %v4145
    %v5682 = vpack.c.b16 %v4178, %v4146
    %v5683 = vpack.c.b16 %v4179, %v4147
    %v5684 = vpack.c.b16 %v4180, %v4148
    %v5685 = vpack.c.b16 %v4181, %v4149
    %v5686 = vpack.c.b16 %v4182, %v4150
    %v5687 = vpack.c.b16 %v4183, %v4151
    %v5688 = vpack.c.b16 %v4184, %v4152
    %v5689 = vpack.c.b16 %v4185, %v4153
    %v5690 = vpack.c.b16 %v4186, %v4154
    %v5691 = vpack.c.b16 %v4187, %v4155
    %v5692 = vpack.c.b16 %v4188, %v4156
    %v5693 = vpack.c.b16 %v4189, %v4157
    %v5694 = vpack.c.b16 %v4222, %v4190
    %v5695 = vpack.c.b16 %v4223, %v4191
    %v5696 = vpack.c.b16 %v4224, %v4192
    %v5697 = vpack.c.b16 %v4225, %v4193
    %v5698 = vpack.c.b16 %v4226, %v4194
    %v5699 = vpack.c.b16 %v4227, %v4195
    %v5700 = vpack.c.b16 %v4228, %v4196
    %v5701 = vpack.c.b16 %v4229, %v4197
    %v5702 = vpack.c.b16 %v4230, %v4198
    %v5703 = vpack.c.b16 %v4231, %v4199
    %v5704 = vpack.c.b16 %v4232, %v4200
    %v5705 = vpack.c.b16 %v4233, %v4201
    %v5706 = vpack.c.b16 %v4234, %v4202
    %v5707 = vpack.c.b16 %v4235, %v4203
    %v5708 = vpack.c.b16 %v4236, %v4204
    %v5709 = vpack.c.b16 %v4237, %v4205
    %v5710 = vpack.c.b16 %v4238, %v4206
    %v5711 = vpack.c.b16 %v4239, %v4207
    %v5712 = vpack.c.b16 %v4240, %v4208
    %v5713 = vpack.c.b16 %v4241, %v4209
    %v5714 = vpack.c.b16 %v4242, %v4210
    %v5715 = vpack.c.b16 %v4243, %v4211
    %v5716 = vpack.c.b16 %v4244, %v4212
    %v5717 = vpack.c.b16 %v4245, %v4213
    %v5718 = vpack.c.b16 %v4246, %v4214
    %v5719 = vpack.c.b16 %v4247, %v4215
    %v5720 = vpack.c.b16 %v4248, %v4216
    %v5721 = vpack.c.b16 %v4249, %v4217
    %v5722 = vpack.c.b16 %v4250, %v4218
    %v5723 = vpack.c.b16 %v4251, %v4219
    %v5724 = vpack.c.b16 %v4252, %v4220
    %v5725 = vpack.c.b16 %v4253, %v4221
    %v5726 = vpack.c.b16 %v4286, %v4254
    %v5727 = vpack.c.b16 %v4287, %v4255
    %v5728 = vpack.c.b16 %v4288, %v4256
    %v5729 = vpack.c.b16 %v4289, %v4257
    %v5730 = vpack.c.b16 %v4290, %v4258
    %v5731 = vpack.c.b16 %v4291, %v4259
    %v5732 = vpack.c.b16 %v4292, %v4260
    %v5733 = vpack.c.b16 %v4293, %v4261
    %v5734 = vpack.c.b16 %v4294, %v4262
    %v5735 = vpack.c.b16 %v4295, %v4263
    %v5736 = vpack.c.b16 %v4296, %v4264
    %v5737 = vpack.c.b16 %v4297, %v4265
    %v5738 = vpack.c.b16 %v4298, %v4266
    %v5739 = vpack.c.b16 %v4299, %v4267
    %v5740 = vpack.c.b16 %v4300, %v4268
    %v5741 = vpack.c.b16 %v4301, %v4269
    %v5742 = vpack.c.b16 %v4302, %v4270
    %v5743 = vpack.c.b16 %v4303, %v4271
    %v5744 = vpack.c.b16 %v4304, %v4272
    %v5745 = vpack.c.b16 %v4305, %v4273
    %v5746 = vpack.c.b16 %v4306, %v4274
    %v5747 = vpack.c.b16 %v4307, %v4275
    %v5748 = vpack.c.b16 %v4308, %v4276
    %v5749 = vpack.c.b16 %v4309, %v4277
    %v5750 = vpack.c.b16 %v4310, %v4278
    %v5751 = vpack.c.b16 %v4311, %v4279
    %v5752 = vpack.c.b16 %v4312, %v4280
    %v5753 = vpack.c.b16 %v4313, %v4281
    %v5754 = vpack.c.b16 %v4314, %v4282
    %v5755 = vpack.c.b16 %v4315, %v4283
    %v5756 = vpack.c.b16 %v4316, %v4284
    %v5757 = vpack.c.b16 %v4317, %v4285
    %v5758 = vpack.c.b16 %v4350, %v4318
    %v5759 = vpack.c.b16 %v4351, %v4319
    %v5760 = vpack.c.b16 %v4352, %v4320
    %v5761 = vpack.c.b16 %v4353, %v4321
    %v5762 = vpack.c.b16 %v4354, %v4322
    %v5763 = vpack.c.b16 %v4355, %v4323
    %v5764 = vpack.c.b16 %v4356, %v4324
    %v5765 = vpack.c.b16 %v4357, %v4325
    %v5766 = vpack.c.b16 %v4358, %v4326
    %v5767 = vpack.c.b16 %v4359, %v4327
    %v5768 = vpack.c.b16 %v4360, %v4328
    %v5769 = vpack.c.b16 %v4361, %v4329
    %v5770 = vpack.c.b16 %v4362, %v4330
    %v5771 = vpack.c.b16 %v4363, %v4331
    %v5772 = vpack.c.b16 %v4364, %v4332
    %v5773 = vpack.c.b16 %v4365, %v4333
    %v5774 = vpack.c.b16 %v4366, %v4334
    %v5775 = vpack.c.b16 %v4367, %v4335
    %v5776 = vpack.c.b16 %v4368, %v4336
    %v5777 = vpack.c.b16 %v4369, %v4337
    %v5778 = vpack.c.b16 %v4370, %v4338
    %v5779 = vpack.c.b16 %v4371, %v4339
    %v5780 = vpack.c.b16 %v4372, %v4340
    %v5781 = vpack.c.b16 %v4373, %v4341
    %v5782 = vpack.c.b16 %v4374, %v4342
    %v5783 = vpack.c.b16 %v4375, %v4343
    %v5784 = vpack.c.b16 %v4376, %v4344
    %v5785 = vpack.c.b16 %v4377, %v4345
    %v5786 = vpack.c.b16 %v4378, %v4346
    %v5787 = vpack.c.b16 %v4379, %v4347
    %v5788 = vpack.c.b16 %v4380, %v4348
    %v5789 = vpack.c.b16 %v4381, %v4349
    %v5790 = vpack.c.b16 %v4414, %v4382
    %v5791 = vpack.c.b16 %v4415, %v4383
    %v5792 = vpack.c.b16 %v4416, %v4384
    %v5793 = vpack.c.b16 %v4417, %v4385
    %v5794 = vpack.c.b16 %v4418, %v4386
    %v5795 = vpack.c.b16 %v4419, %v4387
    %v5796 = vpack.c.b16 %v4420, %v4388
    %v5797 = vpack.c.b16 %v4421, %v4389
    %v5798 = vpack.c.b16 %v4422, %v4390
    %v5799 = vpack.c.b16 %v4423, %v4391
    %v5800 = vpack.c.b16 %v4424, %v4392
    %v5801 = vpack.c.b16 %v4425, %v4393
    %v5802 = vpack.c.b16 %v4426, %v4394
    %v5803 = vpack.c.b16 %v4427, %v4395
    %v5804 = vpack.c.b16 %v4428, %v4396
    %v5805 = vpack.c.b16 %v4429, %v4397
    %v5806 = vpack.c.b16 %v4430, %v4398
    %v5807 = vpack.c.b16 %v4431, %v4399
    %v5808 = vpack.c.b16 %v4432, %v4400
    %v5809 = vpack.c.b16 %v4433, %v4401
    %v5810 = vpack.c.b16 %v4434, %v4402
    %v5811 = vpack.c.b16 %v4435, %v4403
    %v5812 = vpack.c.b16 %v4436, %v4404
    %v5813 = vpack.c.b16 %v4437, %v4405
    %v5814 = vpack.c.b16 %v4438, %v4406
    %v5815 = vpack.c.b16 %v4439, %v4407
    %v5816 = vpack.c.b16 %v4440, %v4408
    %v5817 = vpack.c.b16 %v4441, %v4409
    %v5818 = vpack.c.b16 %v4442, %v4410
    %v5819 = vpack.c.b16 %v4443, %v4411
    %v5820 = vpack.c.b16 %v4444, %v4412
    %v5821 = vpack.c.b16 %v4445, %v4413
    %v5822 = vpack.c.b16 %v4478, %v4446
    %v5823 = vpack.c.b16 %v4479, %v4447
    %v5824 = vpack.c.b16 %v4480, %v4448
    %v5825 = vpack.c.b16 %v4481, %v4449
    %v5826 = vpack.c.b16 %v4482, %v4450
    %v5827 = vpack.c.b16 %v4483, %v4451
    %v5828 = vpack.c.b16 %v4484, %v4452
    %v5829 = vpack.c.b16 %v4485, %v4453
    %v5830 = vpack.c.b16 %v4486, %v4454
    %v5831 = vpack.c.b16 %v4487, %v4455
    %v5832 = vpack.c.b16 %v4488, %v4456
    %v5833 = vpack.c.b16 %v4489, %v4457
    %v5834 = vpack.c.b16 %v4490, %v4458
    %v5835 = vpack.c.b16 %v4491, %v4459
    %v5836 = vpack.c.b16 %v4492, %v4460
    %v5837 = vpack.c.b16 %v4493, %v4461
    %v5838 = vpack.c.b16 %v4494, %v4462
    %v5839 = vpack.c.b16 %v4495, %v4463
    %v5840 = vpack.c.b16 %v4496, %v4464
    %v5841 = vpack.c.b16 %v4497, %v4465
    %v5842 = vpack.c.b16 %v4498, %v4466
    %v5843 = vpack.c.b16 %v4499, %v4467
    %v5844 = vpack.c.b16 %v4500, %v4468
    %v5845 = vpack.c.b16 %v4501, %v4469
    %v5846 = vpack.c.b16 %v4502, %v4470
    %v5847 = vpack.c.b16 %v4503, %v4471
    %v5848 = vpack.c.b16 %v4504, %v4472
    %v5849 = vpack.c.b16 %v4505, %v4473
    %v5850 = vpack.c.b16 %v4506, %v4474
    %v5851 = vpack.c.b16 %v4507, %v4475
    %v5852 = vpack.c.b16 %v4508, %v4476
    %v5853 = vpack.c.b16 %v4509, %v4477
    %v5854 = vpack.c.b16 %v4542, %v4510
    %v5855 = vpack.c.b16 %v4543, %v4511
    %v5856 = vpack.c.b16 %v4544, %v4512
    %v5857 = vpack.c.b16 %v4545, %v4513
    %v5858 = vpack.c.b16 %v4546, %v4514
    %v5859 = vpack.c.b16 %v4547, %v4515
    %v5860 = vpack.c.b16 %v4548, %v4516
    %v5861 = vpack.c.b16 %v4549, %v4517
    %v5862 = vpack.c.b16 %v4550, %v4518
    %v5863 = vpack.c.b16 %v4551, %v4519
    %v5864 = vpack.c.b16 %v4552, %v4520
    %v5865 = vpack.c.b16 %v4553, %v4521
    %v5866 = vpack.c.b16 %v4554, %v4522
    %v5867 = vpack.c.b16 %v4555, %v4523
    %v5868 = vpack.c.b16 %v4556, %v4524
    %v5869 = vpack.c.b16 %v4557, %v4525
    %v5870 = vpack.c.b16 %v4558, %v4526
    %v5871 = vpack.c.b16 %v4559, %v4527
    %v5872 = vpack.c.b16 %v4560, %v4528
    %v5873 = vpack.c.b16 %v4561, %v4529
    %v5874 = vpack.c.b16 %v4562, %v4530
    %v5875 = vpack.c.b16 %v4563, %v4531
    %v5876 = vpack.c.b16 %v4564, %v4532
    %v5877 = vpack.c.b16 %v4565, %v4533
    %v5878 = vpack.c.b16 %v4566, %v4534
    %v5879 = vpack.c.b16 %v4567, %v4535
    %v5880 = vpack.c.b16 %v4568, %v4536
    %v5881 = vpack.c.b16 %v4569, %v4537
    %v5882 = vpack.c.b16 %v4570, %v4538
    %v5883 = vpack.c.b16 %v4571, %v4539
    %v5884 = vpack.c.b16 %v4572, %v4540
    %v5885 = vpack.c.b16 %v4573, %v4541
    %v5886 = vpack.c.b16 %v4606, %v4574
    %v5887 = vpack.c.b16 %v4607, %v4575
    %v5888 = vpack.c.b16 %v4608, %v4576
    %v5889 = vpack.c.b16 %v4609, %v4577
    %v5890 = vpack.c.b16 %v4610, %v4578
    %v5891 = vpack.c.b16 %v4611, %v4579
    %v5892 = vpack.c.b16 %v4612, %v4580
    %v5893 = vpack.c.b16 %v4613, %v4581
    %v5894 = vpack.c.b16 %v4614, %v4582
    %v5895 = vpack.c.b16 %v4615, %v4583
    %v5896 = vpack.c.b16 %v4616, %v4584
    %v5897 = vpack.c.b16 %v4617, %v4585
    %v5898 = vpack.c.b16 %v4618, %v4586
    %v5899 = vpack.c.b16 %v4619, %v4587
    %v5900 = vpack.c.b16 %v4620, %v4588
    %v5901 = vpack.c.b16 %v4621, %v4589
    %v5902 = vpack.c.b16 %v4622, %v4590
    %v5903 = vpack.c.b16 %v4623, %v4591
    %v5904 = vpack.c.b16 %v4624, %v4592
    %v5905 = vpack.c.b16 %v4625, %v4593
    %v5906 = vpack.c.b16 %v4626, %v4594
    %v5907 = vpack.c.b16 %v4627, %v4595
    %v5908 = vpack.c.b16 %v4628, %v4596
    %v5909 = vpack.c.b16 %v4629, %v4597
    %v5910 = vpack.c.b16 %v4630, %v4598
    %v5911 = vpack.c.b16 %v4631, %v4599
    %v5912 = vpack.c.b16 %v4632, %v4600
    %v5913 = vpack.c.b16 %v4633, %v4601
    %v5914 = vpack.c.b16 %v4634, %v4602
    %v5915 = vpack.c.b16 %v4635, %v4603
    %v5916 = vpack.c.b16 %v4636, %v4604
    %v5917 = vpack.c.b16 %v4637, %v4605
    %v5918 = vpack.c.b16 %v4670, %v4638
    %v5919 = vpack.c.b16 %v4671, %v4639
    %v5920 = vpack.c.b16 %v4672, %v4640
    %v5921 = vpack.c.b16 %v4673, %v4641
    %v5922 = vpack.c.b16 %v4674, %v4642
    %v5923 = vpack.c.b16 %v4675, %v4643
    %v5924 = vpack.c.b16 %v4676, %v4644
    %v5925 = vpack.c.b16 %v4677, %v4645
    %v5926 = vpack.c.b16 %v4678, %v4646
    %v5927 = vpack.c.b16 %v4679, %v4647
    %v5928 = vpack.c.b16 %v4680, %v4648
    %v5929 = vpack.c.b16 %v4681, %v4649
    %v5930 = vpack.c.b16 %v4682, %v4650
    %v5931 = vpack.c.b16 %v4683, %v4651
    %v5932 = vpack.c.b16 %v4684, %v4652
    %v5933 = vpack.c.b16 %v4685, %v4653
    %v5934 = vpack.c.b16 %v4686, %v4654
    %v5935 = vpack.c.b16 %v4687, %v4655
    %v5936 = vpack.c.b16 %v4688, %v4656
    %v5937 = vpack.c.b16 %v4689, %v4657
    %v5938 = vpack.c.b16 %v4690, %v4658
    %v5939 = vpack.c.b16 %v4691, %v4659
    %v5940 = vpack.c.b16 %v4692, %v4660
    %v5941 = vpack.c.b16 %v4693, %v4661
    %v5942 = vpack.c.b16 %v4694, %v4662
    %v5943 = vpack.c.b16 %v4695, %v4663
    %v5944 = vpack.c.b16 %v4696, %v4664
    %v5945 = vpack.c.b16 %v4697, %v4665
    %v5946 = vpack.c.b16 %v4698, %v4666
    %v5947 = vpack.c.b16 %v4699, %v4667
    %v5948 = vpack.c.b16 %v4700, %v4668
    %v5949 = vpack.c.b16 %v4701, %v4669
    %v5950 = vpack.c.b16 %v4734, %v4702
    %v5951 = vpack.c.b16 %v4735, %v4703
    %v5952 = vpack.c.b16 %v4736, %v4704
    %v5953 = vpack.c.b16 %v4737, %v4705
    %v5954 = vpack.c.b16 %v4738, %v4706
    %v5955 = vpack.c.b16 %v4739, %v4707
    %v5956 = vpack.c.b16 %v4740, %v4708
    %v5957 = vpack.c.b16 %v4741, %v4709
    %v5958 = vpack.c.b16 %v4742, %v4710
    %v5959 = vpack.c.b16 %v4743, %v4711
    %v5960 = vpack.c.b16 %v4744, %v4712
    %v5961 = vpack.c.b16 %v4745, %v4713
    %v5962 = vpack.c.b16 %v4746, %v4714
    %v5963 = vpack.c.b16 %v4747, %v4715
    %v5964 = vpack.c.b16 %v4748, %v4716
    %v5965 = vpack.c.b16 %v4749, %v4717
    %v5966 = vpack.c.b16 %v4750, %v4718
    %v5967 = vpack.c.b16 %v4751, %v4719
    %v5968 = vpack.c.b16 %v4752, %v4720
    %v5969 = vpack.c.b16 %v4753, %v4721
    %v5970 = vpack.c.b16 %v4754, %v4722
    %v5971 = vpack.c.b16 %v4755, %v4723
    %v5972 = vpack.c.b16 %v4756, %v4724
    %v5973 = vpack.c.b16 %v4757, %v4725
    %v5974 = vpack.c.b16 %v4758, %v4726
    %v5975 = vpack.c.b16 %v4759, %v4727
    %v5976 = vpack.c.b16 %v4760, %v4728
    %v5977 = vpack.c.b16 %v4761, %v4729
    %v5978 = vpack.c.b16 %v4762, %v4730
    %v5979 = vpack.c.b16 %v4763, %v4731
    %v5980 = vpack.c.b16 %v4764, %v4732
    %v5981 = vpack.c.b16 %v4765, %v4733
    %v5982 = vpack.c.b16 %v4798, %v4766
    %v5983 = vpack.c.b16 %v4799, %v4767
    %v5984 = vpack.c.b16 %v4800, %v4768
    %v5985 = vpack.c.b16 %v4801, %v4769
    %v5986 = vpack.c.b16 %v4802, %v4770
    %v5987 = vpack.c.b16 %v4803, %v4771
    %v5988 = vpack.c.b16 %v4804, %v4772
    %v5989 = vpack.c.b16 %v4805, %v4773
    %v5990 = vpack.c.b16 %v4806, %v4774
    %v5991 = vpack.c.b16 %v4807, %v4775
    %v5992 = vpack.c.b16 %v4808, %v4776
    %v5993 = vpack.c.b16 %v4809, %v4777
    %v5994 = vpack.c.b16 %v4810, %v4778
    %v5995 = vpack.c.b16 %v4811, %v4779
    %v5996 = vpack.c.b16 %v4812, %v4780
    %v5997 = vpack.c.b16 %v4813, %v4781
    %v5998 = vpack.c.b16 %v4814, %v4782
    %v5999 = vpack.c.b16 %v4815, %v4783
    %v6000 = vpack.c.b16 %v4816, %v4784
    %v6001 = vpack.c.b16 %v4817, %v4785
    %v6002 = vpack.c.b16 %v4818, %v4786
    %v6003 = vpack.c.b16 %v4819, %v4787
    %v6004 = vpack.c.b16 %v4820, %v4788
    %v6005 = vpack.c.b16 %v4821, %v4789
    %v6006 = vpack.c.b16 %v4822, %v4790
    %v6007 = vpack.c.b16 %v4823, %v4791
    %v6008 = vpack.c.b16 %v4824, %v4792
    %v6009 = vpack.c.b16 %v4825, %v4793
    %v6010 = vpack.c.b16 %v4826, %v4794
    %v6011 = vpack.c.b16 %v4827, %v4795
    %v6012 = vpack.c.b16 %v4828, %v4796
    %v6013 = vpack.c.b16 %v4829, %v4797
    %v6014 = vpack.c.b16 %v4862, %v4830
    %v6015 = vpack.c.b16 %v4863, %v4831
    %v6016 = vpack.c.b16 %v4864, %v4832
    %v6017 = vpack.c.b16 %v4865, %v4833
    %v6018 = vpack.c.b16 %v4866, %v4834
    %v6019 = vpack.c.b16 %v4867, %v4835
    %v6020 = vpack.c.b16 %v4868, %v4836
    %v6021 = vpack.c.b16 %v4869, %v4837
    %v6022 = vpack.c.b16 %v4870, %v4838
    %v6023 = vpack.c.b16 %v4871, %v4839
    %v6024 = vpack.c.b16 %v4872, %v4840
    %v6025 = vpack.c.b16 %v4873, %v4841
    %v6026 = vpack.c.b16 %v4874, %v4842
    %v6027 = vpack.c.b16 %v4875, %v4843
    %v6028 = vpack.c.b16 %v4876, %v4844
    %v6029 = vpack.c.b16 %v4877, %v4845
    %v6030 = vpack.c.b16 %v4878, %v4846
    %v6031 = vpack.c.b16 %v4879, %v4847
    %v6032 = vpack.c.b16 %v4880, %v4848
    %v6033 = vpack.c.b16 %v4881, %v4849
    %v6034 = vpack.c.b16 %v4882, %v4850
    %v6035 = vpack.c.b16 %v4883, %v4851
    %v6036 = vpack.c.b16 %v4884, %v4852
    %v6037 = vpack.c.b16 %v4885, %v4853
    %v6038 = vpack.c.b16 %v4886, %v4854
    %v6039 = vpack.c.b16 %v4887, %v4855
    %v6040 = vpack.c.b16 %v4888, %v4856
    %v6041 = vpack.c.b16 %v4889, %v4857
    %v6042 = vpack.c.b16 %v4890, %v4858
    %v6043 = vpack.c.b16 %v4891, %v4859
    %v6044 = vpack.c.b16 %v4892, %v4860
    %v6045 = vpack.c.b16 %v4893, %v4861
    %v6046 = vpack.c.b16 %v4926, %v4894
    %v6047 = vpack.c.b16 %v4927, %v4895
    %v6048 = vpack.c.b16 %v4928, %v4896
    %v6049 = vpack.c.b16 %v4929, %v4897
    %v6050 = vpack.c.b16 %v4930, %v4898
    %v6051 = vpack.c.b16 %v4931, %v4899
    %v6052 = vpack.c.b16 %v4932, %v4900
    %v6053 = vpack.c.b16 %v4933, %v4901
    %v6054 = vpack.c.b16 %v4934, %v4902
    %v6055 = vpack.c.b16 %v4935, %v4903
    %v6056 = vpack.c.b16 %v4936, %v4904
    %v6057 = vpack.c.b16 %v4937, %v4905
    %v6058 = vpack.c.b16 %v4938, %v4906
    %v6059 = vpack.c.b16 %v4939, %v4907
    %v6060 = vpack.c.b16 %v4940, %v4908
    %v6061 = vpack.c.b16 %v4941, %v4909
    %v6062 = vpack.c.b16 %v4942, %v4910
    %v6063 = vpack.c.b16 %v4943, %v4911
    %v6064 = vpack.c.b16 %v4944, %v4912
    %v6065 = vpack.c.b16 %v4945, %v4913
    %v6066 = vpack.c.b16 %v4946, %v4914
    %v6067 = vpack.c.b16 %v4947, %v4915
    %v6068 = vpack.c.b16 %v4948, %v4916
    %v6069 = vpack.c.b16 %v4949, %v4917
    %v6070 = vpack.c.b16 %v4950, %v4918
    %v6071 = vpack.c.b16 %v4951, %v4919
    %v6072 = vpack.c.b16 %v4952, %v4920
    %v6073 = vpack.c.b16 %v4953, %v4921
    %v6074 = vpack.c.b16 %v4954, %v4922
    %v6075 = vpack.c.b16 %v4955, %v4923
    %v6076 = vpack.c.b16 %v4956, %v4924
    %v6077 = vpack.c.b16 %v4957, %v4925
    %v6078 = vpack.c.b16 %v4990, %v4958
    %v6079 = vpack.c.b16 %v4991, %v4959
    %v6080 = vpack.c.b16 %v4992, %v4960
    %v6081 = vpack.c.b16 %v4993, %v4961
    %v6082 = vpack.c.b16 %v4994, %v4962
    %v6083 = vpack.c.b16 %v4995, %v4963
    %v6084 = vpack.c.b16 %v4996, %v4964
    %v6085 = vpack.c.b16 %v4997, %v4965
    %v6086 = vpack.c.b16 %v4998, %v4966
    %v6087 = vpack.c.b16 %v4999, %v4967
    %v6088 = vpack.c.b16 %v5000, %v4968
    %v6089 = vpack.c.b16 %v5001, %v4969
    %v6090 = vpack.c.b16 %v5002, %v4970
    %v6091 = vpack.c.b16 %v5003, %v4971
    %v6092 = vpack.c.b16 %v5004, %v4972
    %v6093 = vpack.c.b16 %v5005, %v4973
    %v6094 = vpack.c.b16 %v5006, %v4974
    %v6095 = vpack.c.b16 %v5007, %v4975
    %v6096 = vpack.c.b16 %v5008, %v4976
    %v6097 = vpack.c.b16 %v5009, %v4977
    %v6098 = vpack.c.b16 %v5010, %v4978
    %v6099 = vpack.c.b16 %v5011, %v4979
    %v6100 = vpack.c.b16 %v5012, %v4980
    %v6101 = vpack.c.b16 %v5013, %v4981
    %v6102 = vpack.c.b16 %v5014, %v4982
    %v6103 = vpack.c.b16 %v5015, %v4983
    %v6104 = vpack.c.b16 %v5016, %v4984
    %v6105 = vpack.c.b16 %v5017, %v4985
    %v6106 = vpack.c.b16 %v5018, %v4986
    %v6107 = vpack.c.b16 %v5019, %v4987
    %v6108 = vpack.c.b16 %v5020, %v4988
    %v6109 = vpack.c.b16 %v5021, %v4989
    %v6110 = vpack.c.b16 %v5054, %v5022
    %v6111 = vpack.c.b16 %v5055, %v5023
    %v6112 = vpack.c.b16 %v5056, %v5024
    %v6113 = vpack.c.b16 %v5057, %v5025
    %v6114 = vpack.c.b16 %v5058, %v5026
    %v6115 = vpack.c.b16 %v5059, %v5027
    %v6116 = vpack.c.b16 %v5060, %v5028
    %v6117 = vpack.c.b16 %v5061, %v5029
    %v6118 = vpack.c.b16 %v5062, %v5030
    %v6119 = vpack.c.b16 %v5063, %v5031
    %v6120 = vpack.c.b16 %v5064, %v5032
    %v6121 = vpack.c.b16 %v5065, %v5033
    %v6122 = vpack.c.b16 %v5066, %v5034
    %v6123 = vpack.c.b16 %v5067, %v5035
    %v6124 = vpack.c.b16 %v5068, %v5036
    %v6125 = vpack.c.b16 %v5069, %v5037
    %v6126 = vpack.c.b16 %v5070, %v5038
    %v6127 = vpack.c.b16 %v5071, %v5039
    %v6128 = vpack.c.b16 %v5072, %v5040
    %v6129 = vpack.c.b16 %v5073, %v5041
    %v6130 = vpack.c.b16 %v5074, %v5042
    %v6131 = vpack.c.b16 %v5075, %v5043
    %v6132 = vpack.c.b16 %v5076, %v5044
    %v6133 = vpack.c.b16 %v5077, %v5045
    %v6134 = vpack.c.b16 %v5078, %v5046
    %v6135 = vpack.c.b16 %v5079, %v5047
    %v6136 = vpack.c.b16 %v5080, %v5048
    %v6137 = vpack.c.b16 %v5081, %v5049
    %v6138 = vpack.c.b16 %v5082, %v5050
    %v6139 = vpack.c.b16 %v5083, %v5051
    %v6140 = vpack.c.b16 %v5084, %v5052
    %v6141 = vpack.c.b16 %v5085, %v5053
    %v6142 = vpack.c.b16 %v5118, %v5086
    %v6143 = vpack.c.b16 %v5119, %v5087
    %v6144 = vpack.c.b16 %v5120, %v5088
    %v6145 = vpack.c.b16 %v5121, %v5089
    %v6146 = vpack.c.b16 %v5122, %v5090
    %v6147 = vpack.c.b16 %v5123, %v5091
    %v6148 = vpack.c.b16 %v5124, %v5092
    %v6149 = vpack.c.b16 %v5125, %v5093
    %v6150 = vpack.c.b16 %v5126, %v5094
    %v6151 = vpack.c.b16 %v5127, %v5095
    %v6152 = vpack.c.b16 %v5128, %v5096
    %v6153 = vpack.c.b16 %v5129, %v5097
    %v6154 = vpack.c.b16 %v5130, %v5098
    %v6155 = vpack.c.b16 %v5131, %v5099
    %v6156 = vpack.c.b16 %v5132, %v5100
    %v6157 = vpack.c.b16 %v5133, %v5101
    %v6158 = vpack.c.b16 %v5134, %v5102
    %v6159 = vpack.c.b16 %v5135, %v5103
    %v6160 = vpack.c.b16 %v5136, %v5104
    %v6161 = vpack.c.b16 %v5137, %v5105
    %v6162 = vpack.c.b16 %v5138, %v5106
    %v6163 = vpack.c.b16 %v5139, %v5107
    %v6164 = vpack.c.b16 %v5140, %v5108
    %v6165 = vpack.c.b16 %v5141, %v5109
    %v6166 = vpack.c.b16 %v5142, %v5110
    %v6167 = vpack.c.b16 %v5143, %v5111
    %v6168 = vpack.c.b16 %v5144, %v5112
    %v6169 = vpack.c.b16 %v5145, %v5113
    %v6170 = vpack.c.b16 %v5146, %v5114
    %v6171 = vpack.c.b16 %v5147, %v5115
    %v6172 = vpack.c.b16 %v5148, %v5116
    %v6173 = vpack.c.b16 %v5149, %v5117
    %7198 = vmatprep.subr.bf16.mxu0 %v5151
    %7199 = vmatpush1.bf16.msra.mxu0 %v5150
    %7200 = vmatprep.subr.bf16.mxu0 %v5183
    %7201 = vmatpush1.bf16.msra.mxu0 %v5182
    %7202 = vmatprep.subr.bf16.mxu0 %v5215
    %7203 = vmatpush1.bf16.msra.mxu0 %v5214
    %7204 = vmatprep.subr.bf16.mxu0 %v5247
    %7205 = vmatpush1.bf16.msra.mxu0 %v5246
    %7206 = vmatprep.subr.bf16.mxu0 %v5279
    %7207 = vmatpush1.bf16.msra.mxu0 %v5278
    %7208 = vmatprep.subr.bf16.mxu0 %v5311
    %7209 = vmatpush1.bf16.msra.mxu0 %v5310
    %7210 = vmatprep.subr.bf16.mxu0 %v5343
    %7211 = vmatpush1.bf16.msra.mxu0 %v5342
    %7212 = vmatprep.subr.bf16.mxu0 %v5375
    %7213 = vmatpush1.bf16.msra.mxu0 %v5374
    %7214 = vmatprep.subr.bf16.mxu0 %v5407
    %7215 = vmatpush1.bf16.msra.mxu0 %v5406
    %7216 = vmatprep.subr.bf16.mxu0 %v5439
    %7217 = vmatpush1.bf16.msra.mxu0 %v5438
    %7218 = vmatprep.subr.bf16.mxu0 %v5471
    %7219 = vmatpush1.bf16.msra.mxu0 %v5470
    %7220 = vmatprep.subr.bf16.mxu0 %v5503
    %7221 = vmatpush1.bf16.msra.mxu0 %v5502
    %7222 = vmatprep.subr.bf16.mxu0 %v5535
    %7223 = vmatpush1.bf16.msra.mxu0 %v5534
    %7224 = vmatprep.subr.bf16.mxu0 %v5567
    %7225 = vmatpush1.bf16.msra.mxu0 %v5566
    %7226 = vmatprep.subr.bf16.mxu0 %v5599
    %7227 = vmatpush1.bf16.msra.mxu0 %v5598
    %7228 = vmatprep.subr.bf16.mxu0 %v5631
    %7229 = vmatpush1.bf16.msra.mxu0 %v5630
    %7230 = vmatprep.mubr.bf16.mxu0 %v883
    %7231 = vmatmul.mubr.bf16.gmra.mrb[0].mxu0 %v882
    %v7232 = vpop.f32.mrb[0].mxu0
    %v7233 = vadd.f32 %v1921, %v7232
    %v7234 = vpop.f32.mrb[0].mxu0
    %v7235 = vadd.f32 %v1925, %v7234
    %v7236 = vpop.f32.mrb[0].mxu0
    %v7237 = vpop.f32.mrb[0].mxu0
    %7238 = vdwg.mxu0
    %7239 = vmatprep.subr.bf16.mxu0 %v5663
    %7240 = vmatpush1.bf16.msra.mxu0 %v5662
    %7241 = vmatprep.subr.bf16.mxu0 %v5695
    %7242 = vmatpush1.bf16.msra.mxu0 %v5694
    %7243 = vmatprep.subr.bf16.mxu0 %v5727
    %7244 = vmatpush1.bf16.msra.mxu0 %v5726
    %7245 = vmatprep.subr.bf16.mxu0 %v5759
    %7246 = vmatpush1.bf16.msra.mxu0 %v5758
    %7247 = vmatprep.subr.bf16.mxu0 %v5791
    %7248 = vmatpush1.bf16.msra.mxu0 %v5790
    %7249 = vmatprep.subr.bf16.mxu0 %v5823
    %7250 = vmatpush1.bf16.msra.mxu0 %v5822
    %7251 = vmatprep.subr.bf16.mxu0 %v5855
    %7252 = vmatpush1.bf16.msra.mxu0 %v5854
    %7253 = vmatprep.subr.bf16.mxu0 %v5887
    %7254 = vmatpush1.bf16.msra.mxu0 %v5886
    %7255 = vmatprep.subr.bf16.mxu0 %v5919
    %7256 = vmatpush1.bf16.msra.mxu0 %v5918
    %7257 = vmatprep.subr.bf16.mxu0 %v5951
    %7258 = vmatpush1.bf16.msra.mxu0 %v5950
    %7259 = vmatprep.subr.bf16.mxu0 %v5983
    %7260 = vmatpush1.bf16.msra.mxu0 %v5982
    %7261 = vmatprep.subr.bf16.mxu0 %v6015
    %7262 = vmatpush1.bf16.msra.mxu0 %v6014
    %7263 = vmatprep.subr.bf16.mxu0 %v6047
    %7264 = vmatpush1.bf16.msra.mxu0 %v6046
    %7265 = vmatprep.subr.bf16.mxu0 %v6079
    %7266 = vmatpush1.bf16.msra.mxu0 %v6078
    %7267 = vmatprep.subr.bf16.mxu0 %v6111
    %7268 = vmatpush1.bf16.msra.mxu0 %v6110
    %7269 = vmatprep.subr.bf16.mxu0 %v6143
    %7270 = vmatpush1.bf16.msra.mxu0 %v6142
    %7271 = vmatprep.mubr.bf16.mxu0 %v885
    %7272 = vmatmul.mubr.bf16.gmra.mrb[0].mxu0 %v884
    %v7273 = vpop.f32.mrb[0].mxu0
    %v7274 = vadd.f32 %v7233, %v7273
    %v7275 = vpop.f32.mrb[0].mxu0
    %v7276 = vadd.f32 %v7235, %v7275
    %v7277 = vpop.f32.mrb[0].mxu0
    %v7278 = vpop.f32.mrb[0].mxu0
    %7279 = vdwg.mxu0
    %7280 = vmatprep.subr.bf16.mxu0 %v5153
    %7281 = vmatpush1.bf16.msra.mxu0 %v5152
    %7282 = vmatprep.subr.bf16.mxu0 %v5185
    %7283 = vmatpush1.bf16.msra.mxu0 %v5184
    %7284 = vmatprep.subr.bf16.mxu0 %v5217
    %7285 = vmatpush1.bf16.msra.mxu0 %v5216
    %7286 = vmatprep.subr.bf16.mxu0 %v5249
    %7287 = vmatpush1.bf16.msra.mxu0 %v5248
    %7288 = vmatprep.subr.bf16.mxu0 %v5281
    %7289 = vmatpush1.bf16.msra.mxu0 %v5280
    %7290 = vmatprep.subr.bf16.mxu0 %v5313
    %7291 = vmatpush1.bf16.msra.mxu0 %v5312
    %7292 = vmatprep.subr.bf16.mxu0 %v5345
    %7293 = vmatpush1.bf16.msra.mxu0 %v5344
    %7294 = vmatprep.subr.bf16.mxu0 %v5377
    %7295 = vmatpush1.bf16.msra.mxu0 %v5376
    %7296 = vmatprep.subr.bf16.mxu0 %v5409
    %7297 = vmatpush1.bf16.msra.mxu0 %v5408
    %7298 = vmatprep.subr.bf16.mxu0 %v5441
    %7299 = vmatpush1.bf16.msra.mxu0 %v5440
    %7300 = vmatprep.subr.bf16.mxu0 %v5473
    %7301 = vmatpush1.bf16.msra.mxu0 %v5472
    %7302 = vmatprep.subr.bf16.mxu0 %v5505
    %7303 = vmatpush1.bf16.msra.mxu0 %v5504
    %7304 = vmatprep.subr.bf16.mxu0 %v5537
    %7305 = vmatpush1.bf16.msra.mxu0 %v5536
    %7306 = vmatprep.subr.bf16.mxu0 %v5569
    %7307 = vmatpush1.bf16.msra.mxu0 %v5568
    %7308 = vmatprep.subr.bf16.mxu0 %v5601
    %7309 = vmatpush1.bf16.msra.mxu0 %v5600
    %7310 = vmatprep.subr.bf16.mxu0 %v5633
    %7311 = vmatpush1.bf16.msra.mxu0 %v5632
    %7312 = vmatprep.mubr.bf16.mxu0 %v883
    %7313 = vmatmul.mubr.bf16.gmra.mrb[0].mxu0 %v882
    %v7314 = vpop.f32.mrb[0].mxu0
    %v7315 = vadd.f32 %v1929, %v7314
    %v7316 = vpop.f32.mrb[0].mxu0
    %v7317 = vadd.f32 %v1933, %v7316
    %v7318 = vpop.f32.mrb[0].mxu0
    %v7319 = vpop.f32.mrb[0].mxu0
    %7320 = vdwg.mxu0
    %7321 = vmatprep.subr.bf16.mxu0 %v5665
    %7322 = vmatpush1.bf16.msra.mxu0 %v5664
    %7323 = vmatprep.subr.bf16.mxu0 %v5697
    %7324 = vmatpush1.bf16.msra.mxu0 %v5696
    %7325 = vmatprep.subr.bf16.mxu0 %v5729
    %7326 = vmatpush1.bf16.msra.mxu0 %v5728
    %7327 = vmatprep.subr.bf16.mxu0 %v5761
    %7328 = vmatpush1.bf16.msra.mxu0 %v5760
    %7329 = vmatprep.subr.bf16.mxu0 %v5793
    %7330 = vmatpush1.bf16.msra.mxu0 %v5792
    %7331 = vmatprep.subr.bf16.mxu0 %v5825
    %7332 = vmatpush1.bf16.msra.mxu0 %v5824
    %7333 = vmatprep.subr.bf16.mxu0 %v5857
    %7334 = vmatpush1.bf16.msra.mxu0 %v5856
    %7335 = vmatprep.subr.bf16.mxu0 %v5889
    %7336 = vmatpush1.bf16.msra.mxu0 %v5888
    %7337 = vmatprep.subr.bf16.mxu0 %v5921
    %7338 = vmatpush1.bf16.msra.mxu0 %v5920
    %7339 = vmatprep.subr.bf16.mxu0 %v5953
    %7340 = vmatpush1.bf16.msra.mxu0 %v5952
    %7341 = vmatprep.subr.bf16.mxu0 %v5985
    %7342 = vmatpush1.bf16.msra.mxu0 %v5984
    %7343 = vmatprep.subr.bf16.mxu0 %v6017
    %7344 = vmatpush1.bf16.msra.mxu0 %v6016
    %7345 = vmatprep.subr.bf16.mxu0 %v6049
    %7346 = vmatpush1.bf16.msra.mxu0 %v6048
    %7347 = vmatprep.subr.bf16.mxu0 %v6081
    %7348 = vmatpush1.bf16.msra.mxu0 %v6080
    %7349 = vmatprep.subr.bf16.mxu0 %v6113
    %7350 = vmatpush1.bf16.msra.mxu0 %v6112
    %7351 = vmatprep.subr.bf16.mxu0 %v6145
    %7352 = vmatpush1.bf16.msra.mxu0 %v6144
    %7353 = vmatprep.mubr.bf16.mxu0 %v885
    %7354 = vmatmul.mubr.bf16.gmra.mrb[0].mxu0 %v884
    %v7355 = vpop.f32.mrb[0].mxu0
    %v7356 = vadd.f32 %v7315, %v7355
    %v7357 = vpop.f32.mrb[0].mxu0
    %v7358 = vadd.f32 %v7317, %v7357
    %v7359 = vpop.f32.mrb[0].mxu0
    %v7360 = vpop.f32.mrb[0].mxu0
    %7361 = vdwg.mxu0
    %7362 = vmatprep.subr.bf16.mxu0 %v5155
    %7363 = vmatpush1.bf16.msra.mxu0 %v5154
    %7364 = vmatprep.subr.bf16.mxu0 %v5187
    %7365 = vmatpush1.bf16.msra.mxu0 %v5186
    %7366 = vmatprep.subr.bf16.mxu0 %v5219
    %7367 = vmatpush1.bf16.msra.mxu0 %v5218
    %7368 = vmatprep.subr.bf16.mxu0 %v5251
    %7369 = vmatpush1.bf16.msra.mxu0 %v5250
    %7370 = vmatprep.subr.bf16.mxu0 %v5283
    %7371 = vmatpush1.bf16.msra.mxu0 %v5282
    %7372 = vmatprep.subr.bf16.mxu0 %v5315
    %7373 = vmatpush1.bf16.msra.mxu0 %v5314
    %7374 = vmatprep.subr.bf16.mxu0 %v5347
    %7375 = vmatpush1.bf16.msra.mxu0 %v5346
    %7376 = vmatprep.subr.bf16.mxu0 %v5379
    %7377 = vmatpush1.bf16.msra.mxu0 %v5378
    %7378 = vmatprep.subr.bf16.mxu0 %v5411
    %7379 = vmatpush1.bf16.msra.mxu0 %v5410
    %7380 = vmatprep.subr.bf16.mxu0 %v5443
    %7381 = vmatpush1.bf16.msra.mxu0 %v5442
    %7382 = vmatprep.subr.bf16.mxu0 %v5475
    %7383 = vmatpush1.bf16.msra.mxu0 %v5474
    %7384 = vmatprep.subr.bf16.mxu0 %v5507
    %7385 = vmatpush1.bf16.msra.mxu0 %v5506
    %7386 = vmatprep.subr.bf16.mxu0 %v5539
    %7387 = vmatpush1.bf16.msra.mxu0 %v5538
    %7388 = vmatprep.subr.bf16.mxu0 %v5571
    %7389 = vmatpush1.bf16.msra.mxu0 %v5570
    %7390 = vmatprep.subr.bf16.mxu0 %v5603
    %7391 = vmatpush1.bf16.msra.mxu0 %v5602
    %7392 = vmatprep.subr.bf16.mxu0 %v5635
    %7393 = vmatpush1.bf16.msra.mxu0 %v5634
    %7394 = vmatprep.mubr.bf16.mxu0 %v883
    %7395 = vmatmul.mubr.bf16.gmra.mrb[0].mxu0 %v882
    %v7396 = vpop.f32.mrb[0].mxu0
    %v7397 = vadd.f32 %v1937, %v7396
    %v7398 = vpop.f32.mrb[0].mxu0
    %v7399 = vadd.f32 %v1941, %v7398
    %v7400 = vpop.f32.mrb[0].mxu0
    %v7401 = vpop.f32.mrb[0].mxu0
    %7402 = vdwg.mxu0
    %7403 = vmatprep.subr.bf16.mxu0 %v5667
    %7404 = vmatpush1.bf16.msra.mxu0 %v5666
    %7405 = vmatprep.subr.bf16.mxu0 %v5699
    %7406 = vmatpush1.bf16.msra.mxu0 %v5698
    %7407 = vmatprep.subr.bf16.mxu0 %v5731
    %7408 = vmatpush1.bf16.msra.mxu0 %v5730
    %7409 = vmatprep.subr.bf16.mxu0 %v5763
    %7410 = vmatpush1.bf16.msra.mxu0 %v5762
    %7411 = vmatprep.subr.bf16.mxu0 %v5795
    %7412 = vmatpush1.bf16.msra.mxu0 %v5794
    %7413 = vmatprep.subr.bf16.mxu0 %v5827
    %7414 = vmatpush1.bf16.msra.mxu0 %v5826
    %7415 = vmatprep.subr.bf16.mxu0 %v5859
    %7416 = vmatpush1.bf16.msra.mxu0 %v5858
    %7417 = vmatprep.subr.bf16.mxu0 %v5891
    %7418 = vmatpush1.bf16.msra.mxu0 %v5890
    %7419 = vmatprep.subr.bf16.mxu0 %v5923
    %7420 = vmatpush1.bf16.msra.mxu0 %v5922
    %7421 = vmatprep.subr.bf16.mxu0 %v5955
    %7422 = vmatpush1.bf16.msra.mxu0 %v5954
    %7423 = vmatprep.subr.bf16.mxu0 %v5987
    %7424 = vmatpush1.bf16.msra.mxu0 %v5986
    %7425 = vmatprep.subr.bf16.mxu0 %v6019
    %7426 = vmatpush1.bf16.msra.mxu0 %v6018
    %7427 = vmatprep.subr.bf16.mxu0 %v6051
    %7428 = vmatpush1.bf16.msra.mxu0 %v6050
    %7429 = vmatprep.subr.bf16.mxu0 %v6083
    %7430 = vmatpush1.bf16.msra.mxu0 %v6082
    %7431 = vmatprep.subr.bf16.mxu0 %v6115
    %7432 = vmatpush1.bf16.msra.mxu0 %v6114
    %7433 = vmatprep.subr.bf16.mxu0 %v6147
    %7434 = vmatpush1.bf16.msra.mxu0 %v6146
    %7435 = vmatprep.mubr.bf16.mxu0 %v885
    %7436 = vmatmul.mubr.bf16.gmra.mrb[0].mxu0 %v884
    %v7437 = vpop.f32.mrb[0].mxu0
    %v7438 = vadd.f32 %v7397, %v7437
    %v7439 = vpop.f32.mrb[0].mxu0
    %v7440 = vadd.f32 %v7399, %v7439
    %v7441 = vpop.f32.mrb[0].mxu0
    %v7442 = vpop.f32.mrb[0].mxu0
    %7443 = vdwg.mxu0
    %7444 = vmatprep.subr.bf16.mxu0 %v5157
    %7445 = vmatpush1.bf16.msra.mxu0 %v5156
    %7446 = vmatprep.subr.bf16.mxu0 %v5189
    %7447 = vmatpush1.bf16.msra.mxu0 %v5188
    %7448 = vmatprep.subr.bf16.mxu0 %v5221
    %7449 = vmatpush1.bf16.msra.mxu0 %v5220
    %7450 = vmatprep.subr.bf16.mxu0 %v5253
    %7451 = vmatpush1.bf16.msra.mxu0 %v5252
    %7452 = vmatprep.subr.bf16.mxu0 %v5285
    %7453 = vmatpush1.bf16.msra.mxu0 %v5284
    %7454 = vmatprep.subr.bf16.mxu0 %v5317
    %7455 = vmatpush1.bf16.msra.mxu0 %v5316
    %7456 = vmatprep.subr.bf16.mxu0 %v5349
    %7457 = vmatpush1.bf16.msra.mxu0 %v5348
    %7458 = vmatprep.subr.bf16.mxu0 %v5381
    %7459 = vmatpush1.bf16.msra.mxu0 %v5380
    %7460 = vmatprep.subr.bf16.mxu0 %v5413
    %7461 = vmatpush1.bf16.msra.mxu0 %v5412
    %7462 = vmatprep.subr.bf16.mxu0 %v5445
    %7463 = vmatpush1.bf16.msra.mxu0 %v5444
    %7464 = vmatprep.subr.bf16.mxu0 %v5477
    %7465 = vmatpush1.bf16.msra.mxu0 %v5476
    %7466 = vmatprep.subr.bf16.mxu0 %v5509
    %7467 = vmatpush1.bf16.msra.mxu0 %v5508
    %7468 = vmatprep.subr.bf16.mxu0 %v5541
    %7469 = vmatpush1.bf16.msra.mxu0 %v5540
    %7470 = vmatprep.subr.bf16.mxu0 %v5573
    %7471 = vmatpush1.bf16.msra.mxu0 %v5572
    %7472 = vmatprep.subr.bf16.mxu0 %v5605
    %7473 = vmatpush1.bf16.msra.mxu0 %v5604
    %7474 = vmatprep.subr.bf16.mxu0 %v5637
    %7475 = vmatpush1.bf16.msra.mxu0 %v5636
    %7476 = vmatprep.mubr.bf16.mxu0 %v883
    %7477 = vmatmul.mubr.bf16.gmra.mrb[0].mxu0 %v882
    %v7478 = vpop.f32.mrb[0].mxu0
    %v7479 = vadd.f32 %v1945, %v7478
    %v7480 = vpop.f32.mrb[0].mxu0
    %v7481 = vadd.f32 %v1949, %v7480
    %v7482 = vpop.f32.mrb[0].mxu0
    %v7483 = vpop.f32.mrb[0].mxu0
    %7484 = vdwg.mxu0
    %7485 = vmatprep.subr.bf16.mxu0 %v5669
    %7486 = vmatpush1.bf16.msra.mxu0 %v5668
    %7487 = vmatprep.subr.bf16.mxu0 %v5701
    %7488 = vmatpush1.bf16.msra.mxu0 %v5700
    %7489 = vmatprep.subr.bf16.mxu0 %v5733
    %7490 = vmatpush1.bf16.msra.mxu0 %v5732
    %7491 = vmatprep.subr.bf16.mxu0 %v5765
    %7492 = vmatpush1.bf16.msra.mxu0 %v5764
    %7493 = vmatprep.subr.bf16.mxu0 %v5797
    %7494 = vmatpush1.bf16.msra.mxu0 %v5796
    %7495 = vmatprep.subr.bf16.mxu0 %v5829
    %7496 = vmatpush1.bf16.msra.mxu0 %v5828
    %7497 = vmatprep.subr.bf16.mxu0 %v5861
    %7498 = vmatpush1.bf16.msra.mxu0 %v5860
    %7499 = vmatprep.subr.bf16.mxu0 %v5893
    %7500 = vmatpush1.bf16.msra.mxu0 %v5892
    %7501 = vmatprep.subr.bf16.mxu0 %v5925
    %7502 = vmatpush1.bf16.msra.mxu0 %v5924
    %7503 = vmatprep.subr.bf16.mxu0 %v5957
    %7504 = vmatpush1.bf16.msra.mxu0 %v5956
    %7505 = vmatprep.subr.bf16.mxu0 %v5989
    %7506 = vmatpush1.bf16.msra.mxu0 %v5988
    %7507 = vmatprep.subr.bf16.mxu0 %v6021
    %7508 = vmatpush1.bf16.msra.mxu0 %v6020
    %7509 = vmatprep.subr.bf16.mxu0 %v6053
    %7510 = vmatpush1.bf16.msra.mxu0 %v6052
    %7511 = vmatprep.subr.bf16.mxu0 %v6085
    %7512 = vmatpush1.bf16.msra.mxu0 %v6084
    %7513 = vmatprep.subr.bf16.mxu0 %v6117
    %7514 = vmatpush1.bf16.msra.mxu0 %v6116
    %7515 = vmatprep.subr.bf16.mxu0 %v6149
    %7516 = vmatpush1.bf16.msra.mxu0 %v6148
    %7517 = vmatprep.mubr.bf16.mxu0 %v885
    %7518 = vmatmul.mubr.bf16.gmra.mrb[0].mxu0 %v884
    %v7519 = vpop.f32.mrb[0].mxu0
    %v7520 = vadd.f32 %v7479, %v7519
    %v7521 = vpop.f32.mrb[0].mxu0
    %v7522 = vadd.f32 %v7481, %v7521
    %v7523 = vpop.f32.mrb[0].mxu0
    %v7524 = vpop.f32.mrb[0].mxu0
    %7525 = vdwg.mxu0
    %7526 = vmatprep.subr.bf16.mxu0 %v5159
    %7527 = vmatpush1.bf16.msra.mxu0 %v5158
    %7528 = vmatprep.subr.bf16.mxu0 %v5191
    %7529 = vmatpush1.bf16.msra.mxu0 %v5190
    %7530 = vmatprep.subr.bf16.mxu0 %v5223
    %7531 = vmatpush1.bf16.msra.mxu0 %v5222
    %7532 = vmatprep.subr.bf16.mxu0 %v5255
    %7533 = vmatpush1.bf16.msra.mxu0 %v5254
    %7534 = vmatprep.subr.bf16.mxu0 %v5287
    %7535 = vmatpush1.bf16.msra.mxu0 %v5286
    %7536 = vmatprep.subr.bf16.mxu0 %v5319
    %7537 = vmatpush1.bf16.msra.mxu0 %v5318
    %7538 = vmatprep.subr.bf16.mxu0 %v5351
    %7539 = vmatpush1.bf16.msra.mxu0 %v5350
    %7540 = vmatprep.subr.bf16.mxu0 %v5383
    %7541 = vmatpush1.bf16.msra.mxu0 %v5382
    %7542 = vmatprep.subr.bf16.mxu0 %v5415
    %7543 = vmatpush1.bf16.msra.mxu0 %v5414
    %7544 = vmatprep.subr.bf16.mxu0 %v5447
    %7545 = vmatpush1.bf16.msra.mxu0 %v5446
    %7546 = vmatprep.subr.bf16.mxu0 %v5479
    %7547 = vmatpush1.bf16.msra.mxu0 %v5478
    %7548 = vmatprep.subr.bf16.mxu0 %v5511
    %7549 = vmatpush1.bf16.msra.mxu0 %v5510
    %7550 = vmatprep.subr.bf16.mxu0 %v5543
    %7551 = vmatpush1.bf16.msra.mxu0 %v5542
    %7552 = vmatprep.subr.bf16.mxu0 %v5575
    %7553 = vmatpush1.bf16.msra.mxu0 %v5574
    %7554 = vmatprep.subr.bf16.mxu0 %v5607
    %7555 = vmatpush1.bf16.msra.mxu0 %v5606
    %7556 = vmatprep.subr.bf16.mxu0 %v5639
    %7557 = vmatpush1.bf16.msra.mxu0 %v5638
    %7558 = vmatprep.mubr.bf16.mxu0 %v883
    %7559 = vmatmul.mubr.bf16.gmra.mrb[0].mxu0 %v882
    %v7560 = vpop.f32.mrb[0].mxu0
    %v7561 = vadd.f32 %v1953, %v7560
    %v7562 = vpop.f32.mrb[0].mxu0
    %v7563 = vadd.f32 %v1957, %v7562
    %v7564 = vpop.f32.mrb[0].mxu0
    %v7565 = vpop.f32.mrb[0].mxu0
    %7566 = vdwg.mxu0
    %7567 = vmatprep.subr.bf16.mxu0 %v5671
    %7568 = vmatpush1.bf16.msra.mxu0 %v5670
    %7569 = vmatprep.subr.bf16.mxu0 %v5703
    %7570 = vmatpush1.bf16.msra.mxu0 %v5702
    %7571 = vmatprep.subr.bf16.mxu0 %v5735
    %7572 = vmatpush1.bf16.msra.mxu0 %v5734
    %7573 = vmatprep.subr.bf16.mxu0 %v5767
    %7574 = vmatpush1.bf16.msra.mxu0 %v5766
    %7575 = vmatprep.subr.bf16.mxu0 %v5799
    %7576 = vmatpush1.bf16.msra.mxu0 %v5798
    %7577 = vmatprep.subr.bf16.mxu0 %v5831
    %7578 = vmatpush1.bf16.msra.mxu0 %v5830
    %7579 = vmatprep.subr.bf16.mxu0 %v5863
    %7580 = vmatpush1.bf16.msra.mxu0 %v5862
    %7581 = vmatprep.subr.bf16.mxu0 %v5895
    %7582 = vmatpush1.bf16.msra.mxu0 %v5894
    %7583 = vmatprep.subr.bf16.mxu0 %v5927
    %7584 = vmatpush1.bf16.msra.mxu0 %v5926
    %7585 = vmatprep.subr.bf16.mxu0 %v5959
    %7586 = vmatpush1.bf16.msra.mxu0 %v5958
    %7587 = vmatprep.subr.bf16.mxu0 %v5991
    %7588 = vmatpush1.bf16.msra.mxu0 %v5990
    %7589 = vmatprep.subr.bf16.mxu0 %v6023
    %7590 = vmatpush1.bf16.msra.mxu0 %v6022
    %7591 = vmatprep.subr.bf16.mxu0 %v6055
    %7592 = vmatpush1.bf16.msra.mxu0 %v6054
    %7593 = vmatprep.subr.bf16.mxu0 %v6087
    %7594 = vmatpush1.bf16.msra.mxu0 %v6086
    %7595 = vmatprep.subr.bf16.mxu0 %v6119
    %7596 = vmatpush1.bf16.msra.mxu0 %v6118
    %7597 = vmatprep.subr.bf16.mxu0 %v6151
    %7598 = vmatpush1.bf16.msra.mxu0 %v6150
    %7599 = vmatprep.mubr.bf16.mxu0 %v885
    %7600 = vmatmul.mubr.bf16.gmra.mrb[0].mxu0 %v884
    %v7601 = vpop.f32.mrb[0].mxu0
    %v7602 = vadd.f32 %v7561, %v7601
    %v7603 = vpop.f32.mrb[0].mxu0
    %v7604 = vadd.f32 %v7563, %v7603
    %v7605 = vpop.f32.mrb[0].mxu0
    %v7606 = vpop.f32.mrb[0].mxu0
    %7607 = vdwg.mxu0
    %7608 = vmatprep.subr.bf16.mxu0 %v5161
    %7609 = vmatpush1.bf16.msra.mxu0 %v5160
    %7610 = vmatprep.subr.bf16.mxu0 %v5193
    %7611 = vmatpush1.bf16.msra.mxu0 %v5192
    %7612 = vmatprep.subr.bf16.mxu0 %v5225
    %7613 = vmatpush1.bf16.msra.mxu0 %v5224
    %7614 = vmatprep.subr.bf16.mxu0 %v5257
    %7615 = vmatpush1.bf16.msra.mxu0 %v5256
    %7616 = vmatprep.subr.bf16.mxu0 %v5289
    %7617 = vmatpush1.bf16.msra.mxu0 %v5288
    %7618 = vmatprep.subr.bf16.mxu0 %v5321
    %7619 = vmatpush1.bf16.msra.mxu0 %v5320
    %7620 = vmatprep.subr.bf16.mxu0 %v5353
    %7621 = vmatpush1.bf16.msra.mxu0 %v5352
    %7622 = vmatprep.subr.bf16.mxu0 %v5385
    %7623 = vmatpush1.bf16.msra.mxu0 %v5384
    %7624 = vmatprep.subr.bf16.mxu0 %v5417
    %7625 = vmatpush1.bf16.msra.mxu0 %v5416
    %7626 = vmatprep.subr.bf16.mxu0 %v5449
    %7627 = vmatpush1.bf16.msra.mxu0 %v5448
    %7628 = vmatprep.subr.bf16.mxu0 %v5481
    %7629 = vmatpush1.bf16.msra.mxu0 %v5480
    %7630 = vmatprep.subr.bf16.mxu0 %v5513
    %7631 = vmatpush1.bf16.msra.mxu0 %v5512
    %7632 = vmatprep.subr.bf16.mxu0 %v5545
    %7633 = vmatpush1.bf16.msra.mxu0 %v5544
    %7634 = vmatprep.subr.bf16.mxu0 %v5577
    %7635 = vmatpush1.bf16.msra.mxu0 %v5576
    %7636 = vmatprep.subr.bf16.mxu0 %v5609
    %7637 = vmatpush1.bf16.msra.mxu0 %v5608
    %7638 = vmatprep.subr.bf16.mxu0 %v5641
    %7639 = vmatpush1.bf16.msra.mxu0 %v5640
    %7640 = vmatprep.mubr.bf16.mxu0 %v883
    %7641 = vmatmul.mubr.bf16.gmra.mrb[0].mxu0 %v882
    %v7642 = vpop.f32.mrb[0].mxu0
    %v7643 = vadd.f32 %v1961, %v7642
    %v7644 = vpop.f32.mrb[0].mxu0
    %v7645 = vadd.f32 %v1965, %v7644
    %v7646 = vpop.f32.mrb[0].mxu0
    %v7647 = vpop.f32.mrb[0].mxu0
    %7648 = vdwg.mxu0
    %7649 = vmatprep.subr.bf16.mxu0 %v5673
    %7650 = vmatpush1.bf16.msra.mxu0 %v5672
    %7651 = vmatprep.subr.bf16.mxu0 %v5705
    %7652 = vmatpush1.bf16.msra.mxu0 %v5704
    %7653 = vmatprep.subr.bf16.mxu0 %v5737
    %7654 = vmatpush1.bf16.msra.mxu0 %v5736
    %7655 = vmatprep.subr.bf16.mxu0 %v5769
    %7656 = vmatpush1.bf16.msra.mxu0 %v5768
    %7657 = vmatprep.subr.bf16.mxu0 %v5801
    %7658 = vmatpush1.bf16.msra.mxu0 %v5800
    %7659 = vmatprep.subr.bf16.mxu0 %v5833
    %7660 = vmatpush1.bf16.msra.mxu0 %v5832
    %7661 = vmatprep.subr.bf16.mxu0 %v5865
    %7662 = vmatpush1.bf16.msra.mxu0 %v5864
    %7663 = vmatprep.subr.bf16.mxu0 %v5897
    %7664 = vmatpush1.bf16.msra.mxu0 %v5896
    %7665 = vmatprep.subr.bf16.mxu0 %v5929
    %7666 = vmatpush1.bf16.msra.mxu0 %v5928
    %7667 = vmatprep.subr.bf16.mxu0 %v5961
    %7668 = vmatpush1.bf16.msra.mxu0 %v5960
    %7669 = vmatprep.subr.bf16.mxu0 %v5993
    %7670 = vmatpush1.bf16.msra.mxu0 %v5992
    %7671 = vmatprep.subr.bf16.mxu0 %v6025
    %7672 = vmatpush1.bf16.msra.mxu0 %v6024
    %7673 = vmatprep.subr.bf16.mxu0 %v6057
    %7674 = vmatpush1.bf16.msra.mxu0 %v6056
    %7675 = vmatprep.subr.bf16.mxu0 %v6089
    %7676 = vmatpush1.bf16.msra.mxu0 %v6088
    %7677 = vmatprep.subr.bf16.mxu0 %v6121
    %7678 = vmatpush1.bf16.msra.mxu0 %v6120
    %7679 = vmatprep.subr.bf16.mxu0 %v6153
    %7680 = vmatpush1.bf16.msra.mxu0 %v6152
    %7681 = vmatprep.mubr.bf16.mxu0 %v885
    %7682 = vmatmul.mubr.bf16.gmra.mrb[0].mxu0 %v884
    %v7683 = vpop.f32.mrb[0].mxu0
    %v7684 = vadd.f32 %v7643, %v7683
    %v7685 = vpop.f32.mrb[0].mxu0
    %v7686 = vadd.f32 %v7645, %v7685
    %v7687 = vpop.f32.mrb[0].mxu0
    %v7688 = vpop.f32.mrb[0].mxu0
    %7689 = vdwg.mxu0
    %7690 = vmatprep.subr.bf16.mxu0 %v5163
    %7691 = vmatpush1.bf16.msra.mxu0 %v5162
    %7692 = vmatprep.subr.bf16.mxu0 %v5195
    %7693 = vmatpush1.bf16.msra.mxu0 %v5194
    %7694 = vmatprep.subr.bf16.mxu0 %v5227
    %7695 = vmatpush1.bf16.msra.mxu0 %v5226
    %7696 = vmatprep.subr.bf16.mxu0 %v5259
    %7697 = vmatpush1.bf16.msra.mxu0 %v5258
    %7698 = vmatprep.subr.bf16.mxu0 %v5291
    %7699 = vmatpush1.bf16.msra.mxu0 %v5290
    %7700 = vmatprep.subr.bf16.mxu0 %v5323
    %7701 = vmatpush1.bf16.msra.mxu0 %v5322
    %7702 = vmatprep.subr.bf16.mxu0 %v5355
    %7703 = vmatpush1.bf16.msra.mxu0 %v5354
    %7704 = vmatprep.subr.bf16.mxu0 %v5387
    %7705 = vmatpush1.bf16.msra.mxu0 %v5386
    %7706 = vmatprep.subr.bf16.mxu0 %v5419
    %7707 = vmatpush1.bf16.msra.mxu0 %v5418
    %7708 = vmatprep.subr.bf16.mxu0 %v5451
    %7709 = vmatpush1.bf16.msra.mxu0 %v5450
    %7710 = vmatprep.subr.bf16.mxu0 %v5483
    %7711 = vmatpush1.bf16.msra.mxu0 %v5482
    %7712 = vmatprep.subr.bf16.mxu0 %v5515
    %7713 = vmatpush1.bf16.msra.mxu0 %v5514
    %7714 = vmatprep.subr.bf16.mxu0 %v5547
    %7715 = vmatpush1.bf16.msra.mxu0 %v5546
    %7716 = vmatprep.subr.bf16.mxu0 %v5579
    %7717 = vmatpush1.bf16.msra.mxu0 %v5578
    %7718 = vmatprep.subr.bf16.mxu0 %v5611
    %7719 = vmatpush1.bf16.msra.mxu0 %v5610
    %7720 = vmatprep.subr.bf16.mxu0 %v5643
    %7721 = vmatpush1.bf16.msra.mxu0 %v5642
    %7722 = vmatprep.mubr.bf16.mxu0 %v883
    %7723 = vmatmul.mubr.bf16.gmra.mrb[0].mxu0 %v882
    %v7724 = vpop.f32.mrb[0].mxu0
    %v7725 = vadd.f32 %v1969, %v7724
    %v7726 = vpop.f32.mrb[0].mxu0
    %v7727 = vadd.f32 %v1973, %v7726
    %v7728 = vpop.f32.mrb[0].mxu0
    %v7729 = vpop.f32.mrb[0].mxu0
    %7730 = vdwg.mxu0
    %7731 = vmatprep.subr.bf16.mxu0 %v5675
    %7732 = vmatpush1.bf16.msra.mxu0 %v5674
    %7733 = vmatprep.subr.bf16.mxu0 %v5707
    %7734 = vmatpush1.bf16.msra.mxu0 %v5706
    %7735 = vmatprep.subr.bf16.mxu0 %v5739
    %7736 = vmatpush1.bf16.msra.mxu0 %v5738
    %7737 = vmatprep.subr.bf16.mxu0 %v5771
    %7738 = vmatpush1.bf16.msra.mxu0 %v5770
    %7739 = vmatprep.subr.bf16.mxu0 %v5803
    %7740 = vmatpush1.bf16.msra.mxu0 %v5802
    %7741 = vmatprep.subr.bf16.mxu0 %v5835
    %7742 = vmatpush1.bf16.msra.mxu0 %v5834
    %7743 = vmatprep.subr.bf16.mxu0 %v5867
    %7744 = vmatpush1.bf16.msra.mxu0 %v5866
    %7745 = vmatprep.subr.bf16.mxu0 %v5899
    %7746 = vmatpush1.bf16.msra.mxu0 %v5898
    %7747 = vmatprep.subr.bf16.mxu0 %v5931
    %7748 = vmatpush1.bf16.msra.mxu0 %v5930
    %7749 = vmatprep.subr.bf16.mxu0 %v5963
    %7750 = vmatpush1.bf16.msra.mxu0 %v5962
    %7751 = vmatprep.subr.bf16.mxu0 %v5995
    %7752 = vmatpush1.bf16.msra.mxu0 %v5994
    %7753 = vmatprep.subr.bf16.mxu0 %v6027
    %7754 = vmatpush1.bf16.msra.mxu0 %v6026
    %7755 = vmatprep.subr.bf16.mxu0 %v6059
    %7756 = vmatpush1.bf16.msra.mxu0 %v6058
    %7757 = vmatprep.subr.bf16.mxu0 %v6091
    %7758 = vmatpush1.bf16.msra.mxu0 %v6090
    %7759 = vmatprep.subr.bf16.mxu0 %v6123
    %7760 = vmatpush1.bf16.msra.mxu0 %v6122
    %7761 = vmatprep.subr.bf16.mxu0 %v6155
    %7762 = vmatpush1.bf16.msra.mxu0 %v6154
    %7763 = vmatprep.mubr.bf16.mxu0 %v885
    %7764 = vmatmul.mubr.bf16.gmra.mrb[0].mxu0 %v884
    %v7765 = vpop.f32.mrb[0].mxu0
    %v7766 = vadd.f32 %v7725, %v7765
    %v7767 = vpop.f32.mrb[0].mxu0
    %v7768 = vadd.f32 %v7727, %v7767
    %v7769 = vpop.f32.mrb[0].mxu0
    %v7770 = vpop.f32.mrb[0].mxu0
    %7771 = vdwg.mxu0
    %7772 = vmatprep.subr.bf16.mxu0 %v5165
    %7773 = vmatpush1.bf16.msra.mxu0 %v5164
    %7774 = vmatprep.subr.bf16.mxu0 %v5197
    %7775 = vmatpush1.bf16.msra.mxu0 %v5196
    %7776 = vmatprep.subr.bf16.mxu0 %v5229
    %7777 = vmatpush1.bf16.msra.mxu0 %v5228
    %7778 = vmatprep.subr.bf16.mxu0 %v5261
    %7779 = vmatpush1.bf16.msra.mxu0 %v5260
    %7780 = vmatprep.subr.bf16.mxu0 %v5293
    %7781 = vmatpush1.bf16.msra.mxu0 %v5292
    %7782 = vmatprep.subr.bf16.mxu0 %v5325
    %7783 = vmatpush1.bf16.msra.mxu0 %v5324
    %7784 = vmatprep.subr.bf16.mxu0 %v5357
    %7785 = vmatpush1.bf16.msra.mxu0 %v5356
    %7786 = vmatprep.subr.bf16.mxu0 %v5389
    %7787 = vmatpush1.bf16.msra.mxu0 %v5388
    %7788 = vmatprep.subr.bf16.mxu0 %v5421
    %7789 = vmatpush1.bf16.msra.mxu0 %v5420
    %7790 = vmatprep.subr.bf16.mxu0 %v5453
    %7791 = vmatpush1.bf16.msra.mxu0 %v5452
    %7792 = vmatprep.subr.bf16.mxu0 %v5485
    %7793 = vmatpush1.bf16.msra.mxu0 %v5484
    %7794 = vmatprep.subr.bf16.mxu0 %v5517
    %7795 = vmatpush1.bf16.msra.mxu0 %v5516
    %7796 = vmatprep.subr.bf16.mxu0 %v5549
    %7797 = vmatpush1.bf16.msra.mxu0 %v5548
    %7798 = vmatprep.subr.bf16.mxu0 %v5581
    %7799 = vmatpush1.bf16.msra.mxu0 %v5580
    %7800 = vmatprep.subr.bf16.mxu0 %v5613
    %7801 = vmatpush1.bf16.msra.mxu0 %v5612
    %7802 = vmatprep.subr.bf16.mxu0 %v5645
    %7803 = vmatpush1.bf16.msra.mxu0 %v5644
    %7804 = vmatprep.mubr.bf16.mxu0 %v883
    %7805 = vmatmul.mubr.bf16.gmra.mrb[0].mxu0 %v882
    %v7806 = vpop.f32.mrb[0].mxu0
    %v7807 = vadd.f32 %v1977, %v7806
    %v7808 = vpop.f32.mrb[0].mxu0
    %v7809 = vadd.f32 %v1981, %v7808
    %v7810 = vpop.f32.mrb[0].mxu0
    %v7811 = vpop.f32.mrb[0].mxu0
    %7812 = vdwg.mxu0
    %7813 = vmatprep.subr.bf16.mxu0 %v5677
    %7814 = vmatpush1.bf16.msra.mxu0 %v5676
    %7815 = vmatprep.subr.bf16.mxu0 %v5709
    %7816 = vmatpush1.bf16.msra.mxu0 %v5708
    %7817 = vmatprep.subr.bf16.mxu0 %v5741
    %7818 = vmatpush1.bf16.msra.mxu0 %v5740
    %7819 = vmatprep.subr.bf16.mxu0 %v5773
    %7820 = vmatpush1.bf16.msra.mxu0 %v5772
    %7821 = vmatprep.subr.bf16.mxu0 %v5805
    %7822 = vmatpush1.bf16.msra.mxu0 %v5804
    %7823 = vmatprep.subr.bf16.mxu0 %v5837
    %7824 = vmatpush1.bf16.msra.mxu0 %v5836
    %7825 = vmatprep.subr.bf16.mxu0 %v5869
    %7826 = vmatpush1.bf16.msra.mxu0 %v5868
    %7827 = vmatprep.subr.bf16.mxu0 %v5901
    %7828 = vmatpush1.bf16.msra.mxu0 %v5900
    %7829 = vmatprep.subr.bf16.mxu0 %v5933
    %7830 = vmatpush1.bf16.msra.mxu0 %v5932
    %7831 = vmatprep.subr.bf16.mxu0 %v5965
    %7832 = vmatpush1.bf16.msra.mxu0 %v5964
    %7833 = vmatprep.subr.bf16.mxu0 %v5997
    %7834 = vmatpush1.bf16.msra.mxu0 %v5996
    %7835 = vmatprep.subr.bf16.mxu0 %v6029
    %7836 = vmatpush1.bf16.msra.mxu0 %v6028
    %7837 = vmatprep.subr.bf16.mxu0 %v6061
    %7838 = vmatpush1.bf16.msra.mxu0 %v6060
    %7839 = vmatprep.subr.bf16.mxu0 %v6093
    %7840 = vmatpush1.bf16.msra.mxu0 %v6092
    %7841 = vmatprep.subr.bf16.mxu0 %v6125
    %7842 = vmatpush1.bf16.msra.mxu0 %v6124
    %7843 = vmatprep.subr.bf16.mxu0 %v6157
    %7844 = vmatpush1.bf16.msra.mxu0 %v6156
    %7845 = vmatprep.mubr.bf16.mxu0 %v885
    %7846 = vmatmul.mubr.bf16.gmra.mrb[0].mxu0 %v884
    %v7847 = vpop.f32.mrb[0].mxu0
    %v7848 = vadd.f32 %v7807, %v7847
    %v7849 = vpop.f32.mrb[0].mxu0
    %v7850 = vadd.f32 %v7809, %v7849
    %v7851 = vpop.f32.mrb[0].mxu0
    %v7852 = vpop.f32.mrb[0].mxu0
    %7853 = vdwg.mxu0
    %7854 = vmatprep.subr.bf16.mxu0 %v5167
    %7855 = vmatpush1.bf16.msra.mxu0 %v5166
    %7856 = vmatprep.subr.bf16.mxu0 %v5199
    %7857 = vmatpush1.bf16.msra.mxu0 %v5198
    %7858 = vmatprep.subr.bf16.mxu0 %v5231
    %7859 = vmatpush1.bf16.msra.mxu0 %v5230
    %7860 = vmatprep.subr.bf16.mxu0 %v5263
    %7861 = vmatpush1.bf16.msra.mxu0 %v5262
    %7862 = vmatprep.subr.bf16.mxu0 %v5295
    %7863 = vmatpush1.bf16.msra.mxu0 %v5294
    %7864 = vmatprep.subr.bf16.mxu0 %v5327
    %7865 = vmatpush1.bf16.msra.mxu0 %v5326
    %7866 = vmatprep.subr.bf16.mxu0 %v5359
    %7867 = vmatpush1.bf16.msra.mxu0 %v5358
    %7868 = vmatprep.subr.bf16.mxu0 %v5391
    %7869 = vmatpush1.bf16.msra.mxu0 %v5390
    %7870 = vmatprep.subr.bf16.mxu0 %v5423
    %7871 = vmatpush1.bf16.msra.mxu0 %v5422
    %7872 = vmatprep.subr.bf16.mxu0 %v5455
    %7873 = vmatpush1.bf16.msra.mxu0 %v5454
    %7874 = vmatprep.subr.bf16.mxu0 %v5487
    %7875 = vmatpush1.bf16.msra.mxu0 %v5486
    %7876 = vmatprep.subr.bf16.mxu0 %v5519
    %7877 = vmatpush1.bf16.msra.mxu0 %v5518
    %7878 = vmatprep.subr.bf16.mxu0 %v5551
    %7879 = vmatpush1.bf16.msra.mxu0 %v5550
    %7880 = vmatprep.subr.bf16.mxu0 %v5583
    %7881 = vmatpush1.bf16.msra.mxu0 %v5582
    %7882 = vmatprep.subr.bf16.mxu0 %v5615
    %7883 = vmatpush1.bf16.msra.mxu0 %v5614
    %7884 = vmatprep.subr.bf16.mxu0 %v5647
    %7885 = vmatpush1.bf16.msra.mxu0 %v5646
    %7886 = vmatprep.mubr.bf16.mxu0 %v883
    %7887 = vmatmul.mubr.bf16.gmra.mrb[0].mxu0 %v882
    %v7888 = vpop.f32.mrb[0].mxu0
    %v7889 = vadd.f32 %v1985, %v7888
    %v7890 = vpop.f32.mrb[0].mxu0
    %v7891 = vadd.f32 %v1989, %v7890
    %v7892 = vpop.f32.mrb[0].mxu0
    %v7893 = vpop.f32.mrb[0].mxu0
    %7894 = vdwg.mxu0
    %7895 = vmatprep.subr.bf16.mxu0 %v5679
    %7896 = vmatpush1.bf16.msra.mxu0 %v5678
    %7897 = vmatprep.subr.bf16.mxu0 %v5711
    %7898 = vmatpush1.bf16.msra.mxu0 %v5710
    %7899 = vmatprep.subr.bf16.mxu0 %v5743
    %7900 = vmatpush1.bf16.msra.mxu0 %v5742
    %7901 = vmatprep.subr.bf16.mxu0 %v5775
    %7902 = vmatpush1.bf16.msra.mxu0 %v5774
    %7903 = vmatprep.subr.bf16.mxu0 %v5807
    %7904 = vmatpush1.bf16.msra.mxu0 %v5806
    %7905 = vmatprep.subr.bf16.mxu0 %v5839
    %7906 = vmatpush1.bf16.msra.mxu0 %v5838
    %7907 = vmatprep.subr.bf16.mxu0 %v5871
    %7908 = vmatpush1.bf16.msra.mxu0 %v5870
    %7909 = vmatprep.subr.bf16.mxu0 %v5903
    %7910 = vmatpush1.bf16.msra.mxu0 %v5902
    %7911 = vmatprep.subr.bf16.mxu0 %v5935
    %7912 = vmatpush1.bf16.msra.mxu0 %v5934
    %7913 = vmatprep.subr.bf16.mxu0 %v5967
    %7914 = vmatpush1.bf16.msra.mxu0 %v5966
    %7915 = vmatprep.subr.bf16.mxu0 %v5999
    %7916 = vmatpush1.bf16.msra.mxu0 %v5998
    %7917 = vmatprep.subr.bf16.mxu0 %v6031
    %7918 = vmatpush1.bf16.msra.mxu0 %v6030
    %7919 = vmatprep.subr.bf16.mxu0 %v6063
    %7920 = vmatpush1.bf16.msra.mxu0 %v6062
    %7921 = vmatprep.subr.bf16.mxu0 %v6095
    %7922 = vmatpush1.bf16.msra.mxu0 %v6094
    %7923 = vmatprep.subr.bf16.mxu0 %v6127
    %7924 = vmatpush1.bf16.msra.mxu0 %v6126
    %7925 = vmatprep.subr.bf16.mxu0 %v6159
    %7926 = vmatpush1.bf16.msra.mxu0 %v6158
    %7927 = vmatprep.mubr.bf16.mxu0 %v885
    %7928 = vmatmul.mubr.bf16.gmra.mrb[0].mxu0 %v884
    %v7929 = vpop.f32.mrb[0].mxu0
    %v7930 = vadd.f32 %v7889, %v7929
    %v7931 = vpop.f32.mrb[0].mxu0
    %v7932 = vadd.f32 %v7891, %v7931
    %v7933 = vpop.f32.mrb[0].mxu0
    %v7934 = vpop.f32.mrb[0].mxu0
    %7935 = vdwg.mxu0
    %7936 = vmatprep.subr.bf16.mxu0 %v5169
    %7937 = vmatpush1.bf16.msra.mxu0 %v5168
    %7938 = vmatprep.subr.bf16.mxu0 %v5201
    %7939 = vmatpush1.bf16.msra.mxu0 %v5200
    %7940 = vmatprep.subr.bf16.mxu0 %v5233
    %7941 = vmatpush1.bf16.msra.mxu0 %v5232
    %7942 = vmatprep.subr.bf16.mxu0 %v5265
    %7943 = vmatpush1.bf16.msra.mxu0 %v5264
    %7944 = vmatprep.subr.bf16.mxu0 %v5297
    %7945 = vmatpush1.bf16.msra.mxu0 %v5296
    %7946 = vmatprep.subr.bf16.mxu0 %v5329
    %7947 = vmatpush1.bf16.msra.mxu0 %v5328
    %7948 = vmatprep.subr.bf16.mxu0 %v5361
    %7949 = vmatpush1.bf16.msra.mxu0 %v5360
    %7950 = vmatprep.subr.bf16.mxu0 %v5393
    %7951 = vmatpush1.bf16.msra.mxu0 %v5392
    %7952 = vmatprep.subr.bf16.mxu0 %v5425
    %7953 = vmatpush1.bf16.msra.mxu0 %v5424
    %7954 = vmatprep.subr.bf16.mxu0 %v5457
    %7955 = vmatpush1.bf16.msra.mxu0 %v5456
    %7956 = vmatprep.subr.bf16.mxu0 %v5489
    %7957 = vmatpush1.bf16.msra.mxu0 %v5488
    %7958 = vmatprep.subr.bf16.mxu0 %v5521
    %7959 = vmatpush1.bf16.msra.mxu0 %v5520
    %7960 = vmatprep.subr.bf16.mxu0 %v5553
    %7961 = vmatpush1.bf16.msra.mxu0 %v5552
    %7962 = vmatprep.subr.bf16.mxu0 %v5585
    %7963 = vmatpush1.bf16.msra.mxu0 %v5584
    %7964 = vmatprep.subr.bf16.mxu0 %v5617
    %7965 = vmatpush1.bf16.msra.mxu0 %v5616
    %7966 = vmatprep.subr.bf16.mxu0 %v5649
    %7967 = vmatpush1.bf16.msra.mxu0 %v5648
    %7968 = vmatprep.mubr.bf16.mxu0 %v883
    %7969 = vmatmul.mubr.bf16.gmra.mrb[0].mxu0 %v882
    %v7970 = vpop.f32.mrb[0].mxu0
    %v7971 = vadd.f32 %v1993, %v7970
    %v7972 = vpop.f32.mrb[0].mxu0
    %v7973 = vadd.f32 %v1997, %v7972
    %v7974 = vpop.f32.mrb[0].mxu0
    %v7975 = vpop.f32.mrb[0].mxu0
    %7976 = vdwg.mxu0
    %7977 = vmatprep.subr.bf16.mxu0 %v5681
    %7978 = vmatpush1.bf16.msra.mxu0 %v5680
    %7979 = vmatprep.subr.bf16.mxu0 %v5713
    %7980 = vmatpush1.bf16.msra.mxu0 %v5712
    %7981 = vmatprep.subr.bf16.mxu0 %v5745
    %7982 = vmatpush1.bf16.msra.mxu0 %v5744
    %7983 = vmatprep.subr.bf16.mxu0 %v5777
    %7984 = vmatpush1.bf16.msra.mxu0 %v5776
    %7985 = vmatprep.subr.bf16.mxu0 %v5809
    %7986 = vmatpush1.bf16.msra.mxu0 %v5808
    %7987 = vmatprep.subr.bf16.mxu0 %v5841
    %7988 = vmatpush1.bf16.msra.mxu0 %v5840
    %7989 = vmatprep.subr.bf16.mxu0 %v5873
    %7990 = vmatpush1.bf16.msra.mxu0 %v5872
    %7991 = vmatprep.subr.bf16.mxu0 %v5905
    %7992 = vmatpush1.bf16.msra.mxu0 %v5904
    %7993 = vmatprep.subr.bf16.mxu0 %v5937
    %7994 = vmatpush1.bf16.msra.mxu0 %v5936
    %7995 = vmatprep.subr.bf16.mxu0 %v5969
    %7996 = vmatpush1.bf16.msra.mxu0 %v5968
    %7997 = vmatprep.subr.bf16.mxu0 %v6001
    %7998 = vmatpush1.bf16.msra.mxu0 %v6000
    %7999 = vmatprep.subr.bf16.mxu0 %v6033
    %8000 = vmatpush1.bf16.msra.mxu0 %v6032
    %8001 = vmatprep.subr.bf16.mxu0 %v6065
    %8002 = vmatpush1.bf16.msra.mxu0 %v6064
    %8003 = vmatprep.subr.bf16.mxu0 %v6097
    %8004 = vmatpush1.bf16.msra.mxu0 %v6096
    %8005 = vmatprep.subr.bf16.mxu0 %v6129
    %8006 = vmatpush1.bf16.msra.mxu0 %v6128
    %8007 = vmatprep.subr.bf16.mxu0 %v6161
    %8008 = vmatpush1.bf16.msra.mxu0 %v6160
    %8009 = vmatprep.mubr.bf16.mxu0 %v885
    %8010 = vmatmul.mubr.bf16.gmra.mrb[0].mxu0 %v884
    %v8011 = vpop.f32.mrb[0].mxu0
    %v8012 = vadd.f32 %v7971, %v8011
    %v8013 = vpop.f32.mrb[0].mxu0
    %v8014 = vadd.f32 %v7973, %v8013
    %v8015 = vpop.f32.mrb[0].mxu0
    %v8016 = vpop.f32.mrb[0].mxu0
    %8017 = vdwg.mxu0
    %8018 = vmatprep.subr.bf16.mxu0 %v5171
    %8019 = vmatpush1.bf16.msra.mxu0 %v5170
    %8020 = vmatprep.subr.bf16.mxu0 %v5203
    %8021 = vmatpush1.bf16.msra.mxu0 %v5202
    %8022 = vmatprep.subr.bf16.mxu0 %v5235
    %8023 = vmatpush1.bf16.msra.mxu0 %v5234
    %8024 = vmatprep.subr.bf16.mxu0 %v5267
    %8025 = vmatpush1.bf16.msra.mxu0 %v5266
    %8026 = vmatprep.subr.bf16.mxu0 %v5299
    %8027 = vmatpush1.bf16.msra.mxu0 %v5298
    %8028 = vmatprep.subr.bf16.mxu0 %v5331
    %8029 = vmatpush1.bf16.msra.mxu0 %v5330
    %8030 = vmatprep.subr.bf16.mxu0 %v5363
    %8031 = vmatpush1.bf16.msra.mxu0 %v5362
    %8032 = vmatprep.subr.bf16.mxu0 %v5395
    %8033 = vmatpush1.bf16.msra.mxu0 %v5394
    %8034 = vmatprep.subr.bf16.mxu0 %v5427
    %8035 = vmatpush1.bf16.msra.mxu0 %v5426
    %8036 = vmatprep.subr.bf16.mxu0 %v5459
    %8037 = vmatpush1.bf16.msra.mxu0 %v5458
    %8038 = vmatprep.subr.bf16.mxu0 %v5491
    %8039 = vmatpush1.bf16.msra.mxu0 %v5490
    %8040 = vmatprep.subr.bf16.mxu0 %v5523
    %8041 = vmatpush1.bf16.msra.mxu0 %v5522
    %8042 = vmatprep.subr.bf16.mxu0 %v5555
    %8043 = vmatpush1.bf16.msra.mxu0 %v5554
    %8044 = vmatprep.subr.bf16.mxu0 %v5587
    %8045 = vmatpush1.bf16.msra.mxu0 %v5586
    %8046 = vmatprep.subr.bf16.mxu0 %v5619
    %8047 = vmatpush1.bf16.msra.mxu0 %v5618
    %8048 = vmatprep.subr.bf16.mxu0 %v5651
    %8049 = vmatpush1.bf16.msra.mxu0 %v5650
    %8050 = vmatprep.mubr.bf16.mxu0 %v883
    %8051 = vmatmul.mubr.bf16.gmra.mrb[0].mxu0 %v882
    %v8052 = vpop.f32.mrb[0].mxu0
    %v8053 = vadd.f32 %v2001, %v8052
    %v8054 = vpop.f32.mrb[0].mxu0
    %v8055 = vadd.f32 %v2005, %v8054
    %v8056 = vpop.f32.mrb[0].mxu0
    %v8057 = vpop.f32.mrb[0].mxu0
    %8058 = vdwg.mxu0
    %8059 = vmatprep.subr.bf16.mxu0 %v5683
    %8060 = vmatpush1.bf16.msra.mxu0 %v5682
    %8061 = vmatprep.subr.bf16.mxu0 %v5715
    %8062 = vmatpush1.bf16.msra.mxu0 %v5714
    %8063 = vmatprep.subr.bf16.mxu0 %v5747
    %8064 = vmatpush1.bf16.msra.mxu0 %v5746
    %8065 = vmatprep.subr.bf16.mxu0 %v5779
    %8066 = vmatpush1.bf16.msra.mxu0 %v5778
    %8067 = vmatprep.subr.bf16.mxu0 %v5811
    %8068 = vmatpush1.bf16.msra.mxu0 %v5810
    %8069 = vmatprep.subr.bf16.mxu0 %v5843
    %8070 = vmatpush1.bf16.msra.mxu0 %v5842
    %8071 = vmatprep.subr.bf16.mxu0 %v5875
    %8072 = vmatpush1.bf16.msra.mxu0 %v5874
    %8073 = vmatprep.subr.bf16.mxu0 %v5907
    %8074 = vmatpush1.bf16.msra.mxu0 %v5906
    %8075 = vmatprep.subr.bf16.mxu0 %v5939
    %8076 = vmatpush1.bf16.msra.mxu0 %v5938
    %8077 = vmatprep.subr.bf16.mxu0 %v5971
    %8078 = vmatpush1.bf16.msra.mxu0 %v5970
    %8079 = vmatprep.subr.bf16.mxu0 %v6003
    %8080 = vmatpush1.bf16.msra.mxu0 %v6002
    %8081 = vmatprep.subr.bf16.mxu0 %v6035
    %8082 = vmatpush1.bf16.msra.mxu0 %v6034
    %8083 = vmatprep.subr.bf16.mxu0 %v6067
    %8084 = vmatpush1.bf16.msra.mxu0 %v6066
    %8085 = vmatprep.subr.bf16.mxu0 %v6099
    %8086 = vmatpush1.bf16.msra.mxu0 %v6098
    %8087 = vmatprep.subr.bf16.mxu0 %v6131
    %8088 = vmatpush1.bf16.msra.mxu0 %v6130
    %8089 = vmatprep.subr.bf16.mxu0 %v6163
    %8090 = vmatpush1.bf16.msra.mxu0 %v6162
    %8091 = vmatprep.mubr.bf16.mxu0 %v885
    %8092 = vmatmul.mubr.bf16.gmra.mrb[0].mxu0 %v884
    %v8093 = vpop.f32.mrb[0].mxu0
    %v8094 = vadd.f32 %v8053, %v8093
    %v8095 = vpop.f32.mrb[0].mxu0
    %v8096 = vadd.f32 %v8055, %v8095
    %v8097 = vpop.f32.mrb[0].mxu0
    %v8098 = vpop.f32.mrb[0].mxu0
    %8099 = vdwg.mxu0
    %8100 = vmatprep.subr.bf16.mxu0 %v5173
    %8101 = vmatpush1.bf16.msra.mxu0 %v5172
    %8102 = vmatprep.subr.bf16.mxu0 %v5205
    %8103 = vmatpush1.bf16.msra.mxu0 %v5204
    %8104 = vmatprep.subr.bf16.mxu0 %v5237
    %8105 = vmatpush1.bf16.msra.mxu0 %v5236
    %8106 = vmatprep.subr.bf16.mxu0 %v5269
    %8107 = vmatpush1.bf16.msra.mxu0 %v5268
    %8108 = vmatprep.subr.bf16.mxu0 %v5301
    %8109 = vmatpush1.bf16.msra.mxu0 %v5300
    %8110 = vmatprep.subr.bf16.mxu0 %v5333
    %8111 = vmatpush1.bf16.msra.mxu0 %v5332
    %8112 = vmatprep.subr.bf16.mxu0 %v5365
    %8113 = vmatpush1.bf16.msra.mxu0 %v5364
    %8114 = vmatprep.subr.bf16.mxu0 %v5397
    %8115 = vmatpush1.bf16.msra.mxu0 %v5396
    %8116 = vmatprep.subr.bf16.mxu0 %v5429
    %8117 = vmatpush1.bf16.msra.mxu0 %v5428
    %8118 = vmatprep.subr.bf16.mxu0 %v5461
    %8119 = vmatpush1.bf16.msra.mxu0 %v5460
    %8120 = vmatprep.subr.bf16.mxu0 %v5493
    %8121 = vmatpush1.bf16.msra.mxu0 %v5492
    %8122 = vmatprep.subr.bf16.mxu0 %v5525
    %8123 = vmatpush1.bf16.msra.mxu0 %v5524
    %8124 = vmatprep.subr.bf16.mxu0 %v5557
    %8125 = vmatpush1.bf16.msra.mxu0 %v5556
    %8126 = vmatprep.subr.bf16.mxu0 %v5589
    %8127 = vmatpush1.bf16.msra.mxu0 %v5588
    %8128 = vmatprep.subr.bf16.mxu0 %v5621
    %8129 = vmatpush1.bf16.msra.mxu0 %v5620
    %8130 = vmatprep.subr.bf16.mxu0 %v5653
    %8131 = vmatpush1.bf16.msra.mxu0 %v5652
    %8132 = vmatprep.mubr.bf16.mxu0 %v883
    %8133 = vmatmul.mubr.bf16.gmra.mrb[0].mxu0 %v882
    %v8134 = vpop.f32.mrb[0].mxu0
    %v8135 = vadd.f32 %v2009, %v8134
    %v8136 = vpop.f32.mrb[0].mxu0
    %v8137 = vadd.f32 %v2013, %v8136
    %v8138 = vpop.f32.mrb[0].mxu0
    %v8139 = vpop.f32.mrb[0].mxu0
    %8140 = vdwg.mxu0
    %8141 = vmatprep.subr.bf16.mxu0 %v5685
    %8142 = vmatpush1.bf16.msra.mxu0 %v5684
    %8143 = vmatprep.subr.bf16.mxu0 %v5717
    %8144 = vmatpush1.bf16.msra.mxu0 %v5716
    %8145 = vmatprep.subr.bf16.mxu0 %v5749
    %8146 = vmatpush1.bf16.msra.mxu0 %v5748
    %8147 = vmatprep.subr.bf16.mxu0 %v5781
    %8148 = vmatpush1.bf16.msra.mxu0 %v5780
    %8149 = vmatprep.subr.bf16.mxu0 %v5813
    %8150 = vmatpush1.bf16.msra.mxu0 %v5812
    %8151 = vmatprep.subr.bf16.mxu0 %v5845
    %8152 = vmatpush1.bf16.msra.mxu0 %v5844
    %8153 = vmatprep.subr.bf16.mxu0 %v5877
    %8154 = vmatpush1.bf16.msra.mxu0 %v5876
    %8155 = vmatprep.subr.bf16.mxu0 %v5909
    %8156 = vmatpush1.bf16.msra.mxu0 %v5908
    %8157 = vmatprep.subr.bf16.mxu0 %v5941
    %8158 = vmatpush1.bf16.msra.mxu0 %v5940
    %8159 = vmatprep.subr.bf16.mxu0 %v5973
    %8160 = vmatpush1.bf16.msra.mxu0 %v5972
    %8161 = vmatprep.subr.bf16.mxu0 %v6005
    %8162 = vmatpush1.bf16.msra.mxu0 %v6004
    %8163 = vmatprep.subr.bf16.mxu0 %v6037
    %8164 = vmatpush1.bf16.msra.mxu0 %v6036
    %8165 = vmatprep.subr.bf16.mxu0 %v6069
    %8166 = vmatpush1.bf16.msra.mxu0 %v6068
    %8167 = vmatprep.subr.bf16.mxu0 %v6101
    %8168 = vmatpush1.bf16.msra.mxu0 %v6100
    %8169 = vmatprep.subr.bf16.mxu0 %v6133
    %8170 = vmatpush1.bf16.msra.mxu0 %v6132
    %8171 = vmatprep.subr.bf16.mxu0 %v6165
    %8172 = vmatpush1.bf16.msra.mxu0 %v6164
    %8173 = vmatprep.mubr.bf16.mxu0 %v885
    %8174 = vmatmul.mubr.bf16.gmra.mrb[0].mxu0 %v884
    %v8175 = vpop.f32.mrb[0].mxu0
    %v8176 = vadd.f32 %v8135, %v8175
    %v8177 = vpop.f32.mrb[0].mxu0
    %v8178 = vadd.f32 %v8137, %v8177
    %v8179 = vpop.f32.mrb[0].mxu0
    %v8180 = vpop.f32.mrb[0].mxu0
    %8181 = vdwg.mxu0
    %8182 = vmatprep.subr.bf16.mxu0 %v5175
    %8183 = vmatpush1.bf16.msra.mxu0 %v5174
    %8184 = vmatprep.subr.bf16.mxu0 %v5207
    %8185 = vmatpush1.bf16.msra.mxu0 %v5206
    %8186 = vmatprep.subr.bf16.mxu0 %v5239
    %8187 = vmatpush1.bf16.msra.mxu0 %v5238
    %8188 = vmatprep.subr.bf16.mxu0 %v5271
    %8189 = vmatpush1.bf16.msra.mxu0 %v5270
    %8190 = vmatprep.subr.bf16.mxu0 %v5303
    %8191 = vmatpush1.bf16.msra.mxu0 %v5302
    %8192 = vmatprep.subr.bf16.mxu0 %v5335
    %8193 = vmatpush1.bf16.msra.mxu0 %v5334
    %8194 = vmatprep.subr.bf16.mxu0 %v5367
    %8195 = vmatpush1.bf16.msra.mxu0 %v5366
    %8196 = vmatprep.subr.bf16.mxu0 %v5399
    %8197 = vmatpush1.bf16.msra.mxu0 %v5398
    %8198 = vmatprep.subr.bf16.mxu0 %v5431
    %8199 = vmatpush1.bf16.msra.mxu0 %v5430
    %8200 = vmatprep.subr.bf16.mxu0 %v5463
    %8201 = vmatpush1.bf16.msra.mxu0 %v5462
    %8202 = vmatprep.subr.bf16.mxu0 %v5495
    %8203 = vmatpush1.bf16.msra.mxu0 %v5494
    %8204 = vmatprep.subr.bf16.mxu0 %v5527
    %8205 = vmatpush1.bf16.msra.mxu0 %v5526
    %8206 = vmatprep.subr.bf16.mxu0 %v5559
    %8207 = vmatpush1.bf16.msra.mxu0 %v5558
    %8208 = vmatprep.subr.bf16.mxu0 %v5591
    %8209 = vmatpush1.bf16.msra.mxu0 %v5590
    %8210 = vmatprep.subr.bf16.mxu0 %v5623
    %8211 = vmatpush1.bf16.msra.mxu0 %v5622
    %8212 = vmatprep.subr.bf16.mxu0 %v5655
    %8213 = vmatpush1.bf16.msra.mxu0 %v5654
    %8214 = vmatprep.mubr.bf16.mxu0 %v883
    %8215 = vmatmul.mubr.bf16.gmra.mrb[0].mxu0 %v882
    %v8216 = vpop.f32.mrb[0].mxu0
    %v8217 = vadd.f32 %v2017, %v8216
    %v8218 = vpop.f32.mrb[0].mxu0
    %v8219 = vadd.f32 %v2021, %v8218
    %v8220 = vpop.f32.mrb[0].mxu0
    %v8221 = vpop.f32.mrb[0].mxu0
    %8222 = vdwg.mxu0
    %8223 = vmatprep.subr.bf16.mxu0 %v5687
    %8224 = vmatpush1.bf16.msra.mxu0 %v5686
    %8225 = vmatprep.subr.bf16.mxu0 %v5719
    %8226 = vmatpush1.bf16.msra.mxu0 %v5718
    %8227 = vmatprep.subr.bf16.mxu0 %v5751
    %8228 = vmatpush1.bf16.msra.mxu0 %v5750
    %8229 = vmatprep.subr.bf16.mxu0 %v5783
    %8230 = vmatpush1.bf16.msra.mxu0 %v5782
    %8231 = vmatprep.subr.bf16.mxu0 %v5815
    %8232 = vmatpush1.bf16.msra.mxu0 %v5814
    %8233 = vmatprep.subr.bf16.mxu0 %v5847
    %8234 = vmatpush1.bf16.msra.mxu0 %v5846
    %8235 = vmatprep.subr.bf16.mxu0 %v5879
    %8236 = vmatpush1.bf16.msra.mxu0 %v5878
    %8237 = vmatprep.subr.bf16.mxu0 %v5911
    %8238 = vmatpush1.bf16.msra.mxu0 %v5910
    %8239 = vmatprep.subr.bf16.mxu0 %v5943
    %8240 = vmatpush1.bf16.msra.mxu0 %v5942
    %8241 = vmatprep.subr.bf16.mxu0 %v5975
    %8242 = vmatpush1.bf16.msra.mxu0 %v5974
    %8243 = vmatprep.subr.bf16.mxu0 %v6007
    %8244 = vmatpush1.bf16.msra.mxu0 %v6006
    %8245 = vmatprep.subr.bf16.mxu0 %v6039
    %8246 = vmatpush1.bf16.msra.mxu0 %v6038
    %8247 = vmatprep.subr.bf16.mxu0 %v6071
    %8248 = vmatpush1.bf16.msra.mxu0 %v6070
    %8249 = vmatprep.subr.bf16.mxu0 %v6103
    %8250 = vmatpush1.bf16.msra.mxu0 %v6102
    %8251 = vmatprep.subr.bf16.mxu0 %v6135
    %8252 = vmatpush1.bf16.msra.mxu0 %v6134
    %8253 = vmatprep.subr.bf16.mxu0 %v6167
    %8254 = vmatpush1.bf16.msra.mxu0 %v6166
    %8255 = vmatprep.mubr.bf16.mxu0 %v885
    %8256 = vmatmul.mubr.bf16.gmra.mrb[0].mxu0 %v884
    %v8257 = vpop.f32.mrb[0].mxu0
    %v8258 = vadd.f32 %v8217, %v8257
    %v8259 = vpop.f32.mrb[0].mxu0
    %v8260 = vadd.f32 %v8219, %v8259
    %v8261 = vpop.f32.mrb[0].mxu0
    %v8262 = vpop.f32.mrb[0].mxu0
    %8263 = vdwg.mxu0
    %8264 = vmatprep.subr.bf16.mxu0 %v5177
    %8265 = vmatpush1.bf16.msra.mxu0 %v5176
    %8266 = vmatprep.subr.bf16.mxu0 %v5209
    %8267 = vmatpush1.bf16.msra.mxu0 %v5208
    %8268 = vmatprep.subr.bf16.mxu0 %v5241
    %8269 = vmatpush1.bf16.msra.mxu0 %v5240
    %8270 = vmatprep.subr.bf16.mxu0 %v5273
    %8271 = vmatpush1.bf16.msra.mxu0 %v5272
    %8272 = vmatprep.subr.bf16.mxu0 %v5305
    %8273 = vmatpush1.bf16.msra.mxu0 %v5304
    %8274 = vmatprep.subr.bf16.mxu0 %v5337
    %8275 = vmatpush1.bf16.msra.mxu0 %v5336
    %8276 = vmatprep.subr.bf16.mxu0 %v5369
    %8277 = vmatpush1.bf16.msra.mxu0 %v5368
    %8278 = vmatprep.subr.bf16.mxu0 %v5401
    %8279 = vmatpush1.bf16.msra.mxu0 %v5400
    %8280 = vmatprep.subr.bf16.mxu0 %v5433
    %8281 = vmatpush1.bf16.msra.mxu0 %v5432
    %8282 = vmatprep.subr.bf16.mxu0 %v5465
    %8283 = vmatpush1.bf16.msra.mxu0 %v5464
    %8284 = vmatprep.subr.bf16.mxu0 %v5497
    %8285 = vmatpush1.bf16.msra.mxu0 %v5496
    %8286 = vmatprep.subr.bf16.mxu0 %v5529
    %8287 = vmatpush1.bf16.msra.mxu0 %v5528
    %8288 = vmatprep.subr.bf16.mxu0 %v5561
    %8289 = vmatpush1.bf16.msra.mxu0 %v5560
    %8290 = vmatprep.subr.bf16.mxu0 %v5593
    %8291 = vmatpush1.bf16.msra.mxu0 %v5592
    %8292 = vmatprep.subr.bf16.mxu0 %v5625
    %8293 = vmatpush1.bf16.msra.mxu0 %v5624
    %8294 = vmatprep.subr.bf16.mxu0 %v5657
    %8295 = vmatpush1.bf16.msra.mxu0 %v5656
    %8296 = vmatprep.mubr.bf16.mxu0 %v883
    %8297 = vmatmul.mubr.bf16.gmra.mrb[0].mxu0 %v882
    %v8298 = vpop.f32.mrb[0].mxu0
    %v8299 = vadd.f32 %v2025, %v8298
    %v8300 = vpop.f32.mrb[0].mxu0
    %v8301 = vadd.f32 %v2029, %v8300
    %v8302 = vpop.f32.mrb[0].mxu0
    %v8303 = vpop.f32.mrb[0].mxu0
    %8304 = vdwg.mxu0
    %8305 = vmatprep.subr.bf16.mxu0 %v5689
    %8306 = vmatpush1.bf16.msra.mxu0 %v5688
    %8307 = vmatprep.subr.bf16.mxu0 %v5721
    %8308 = vmatpush1.bf16.msra.mxu0 %v5720
    %8309 = vmatprep.subr.bf16.mxu0 %v5753
    %8310 = vmatpush1.bf16.msra.mxu0 %v5752
    %8311 = vmatprep.subr.bf16.mxu0 %v5785
    %8312 = vmatpush1.bf16.msra.mxu0 %v5784
    %8313 = vmatprep.subr.bf16.mxu0 %v5817
    %8314 = vmatpush1.bf16.msra.mxu0 %v5816
    %8315 = vmatprep.subr.bf16.mxu0 %v5849
    %8316 = vmatpush1.bf16.msra.mxu0 %v5848
    %8317 = vmatprep.subr.bf16.mxu0 %v5881
    %8318 = vmatpush1.bf16.msra.mxu0 %v5880
    %8319 = vmatprep.subr.bf16.mxu0 %v5913
    %8320 = vmatpush1.bf16.msra.mxu0 %v5912
    %8321 = vmatprep.subr.bf16.mxu0 %v5945
    %8322 = vmatpush1.bf16.msra.mxu0 %v5944
    %8323 = vmatprep.subr.bf16.mxu0 %v5977
    %8324 = vmatpush1.bf16.msra.mxu0 %v5976
    %8325 = vmatprep.subr.bf16.mxu0 %v6009
    %8326 = vmatpush1.bf16.msra.mxu0 %v6008
    %8327 = vmatprep.subr.bf16.mxu0 %v6041
    %8328 = vmatpush1.bf16.msra.mxu0 %v6040
    %8329 = vmatprep.subr.bf16.mxu0 %v6073
    %8330 = vmatpush1.bf16.msra.mxu0 %v6072
    %8331 = vmatprep.subr.bf16.mxu0 %v6105
    %8332 = vmatpush1.bf16.msra.mxu0 %v6104
    %8333 = vmatprep.subr.bf16.mxu0 %v6137
    %8334 = vmatpush1.bf16.msra.mxu0 %v6136
    %8335 = vmatprep.subr.bf16.mxu0 %v6169
    %8336 = vmatpush1.bf16.msra.mxu0 %v6168
    %8337 = vmatprep.mubr.bf16.mxu0 %v885
    %8338 = vmatmul.mubr.bf16.gmra.mrb[0].mxu0 %v884
    %v8339 = vpop.f32.mrb[0].mxu0
    %v8340 = vadd.f32 %v8299, %v8339
    %v8341 = vpop.f32.mrb[0].mxu0
    %v8342 = vadd.f32 %v8301, %v8341
    %v8343 = vpop.f32.mrb[0].mxu0
    %v8344 = vpop.f32.mrb[0].mxu0
    %8345 = vdwg.mxu0
    %8346 = vmatprep.subr.bf16.mxu0 %v5179
    %8347 = vmatpush1.bf16.msra.mxu0 %v5178
    %8348 = vmatprep.subr.bf16.mxu0 %v5211
    %8349 = vmatpush1.bf16.msra.mxu0 %v5210
    %8350 = vmatprep.subr.bf16.mxu0 %v5243
    %8351 = vmatpush1.bf16.msra.mxu0 %v5242
    %8352 = vmatprep.subr.bf16.mxu0 %v5275
    %8353 = vmatpush1.bf16.msra.mxu0 %v5274
    %8354 = vmatprep.subr.bf16.mxu0 %v5307
    %8355 = vmatpush1.bf16.msra.mxu0 %v5306
    %8356 = vmatprep.subr.bf16.mxu0 %v5339
    %8357 = vmatpush1.bf16.msra.mxu0 %v5338
    %8358 = vmatprep.subr.bf16.mxu0 %v5371
    %8359 = vmatpush1.bf16.msra.mxu0 %v5370
    %8360 = vmatprep.subr.bf16.mxu0 %v5403
    %8361 = vmatpush1.bf16.msra.mxu0 %v5402
    %8362 = vmatprep.subr.bf16.mxu0 %v5435
    %8363 = vmatpush1.bf16.msra.mxu0 %v5434
    %8364 = vmatprep.subr.bf16.mxu0 %v5467
    %8365 = vmatpush1.bf16.msra.mxu0 %v5466
    %8366 = vmatprep.subr.bf16.mxu0 %v5499
    %8367 = vmatpush1.bf16.msra.mxu0 %v5498
    %8368 = vmatprep.subr.bf16.mxu0 %v5531
    %8369 = vmatpush1.bf16.msra.mxu0 %v5530
    %8370 = vmatprep.subr.bf16.mxu0 %v5563
    %8371 = vmatpush1.bf16.msra.mxu0 %v5562
    %8372 = vmatprep.subr.bf16.mxu0 %v5595
    %8373 = vmatpush1.bf16.msra.mxu0 %v5594
    %8374 = vmatprep.subr.bf16.mxu0 %v5627
    %8375 = vmatpush1.bf16.msra.mxu0 %v5626
    %8376 = vmatprep.subr.bf16.mxu0 %v5659
    %8377 = vmatpush1.bf16.msra.mxu0 %v5658
    %8378 = vmatprep.mubr.bf16.mxu0 %v883
    %8379 = vmatmul.mubr.bf16.gmra.mrb[0].mxu0 %v882
    %v8380 = vpop.f32.mrb[0].mxu0
    %v8381 = vadd.f32 %v2033, %v8380
    %v8382 = vpop.f32.mrb[0].mxu0
    %v8383 = vadd.f32 %v2037, %v8382
    %v8384 = vpop.f32.mrb[0].mxu0
    %v8385 = vpop.f32.mrb[0].mxu0
    %8386 = vdwg.mxu0
    %8387 = vmatprep.subr.bf16.mxu0 %v5691
    %8388 = vmatpush1.bf16.msra.mxu0 %v5690
    %8389 = vmatprep.subr.bf16.mxu0 %v5723
    %8390 = vmatpush1.bf16.msra.mxu0 %v5722
    %8391 = vmatprep.subr.bf16.mxu0 %v5755
    %8392 = vmatpush1.bf16.msra.mxu0 %v5754
    %8393 = vmatprep.subr.bf16.mxu0 %v5787
    %8394 = vmatpush1.bf16.msra.mxu0 %v5786
    %8395 = vmatprep.subr.bf16.mxu0 %v5819
    %8396 = vmatpush1.bf16.msra.mxu0 %v5818
    %8397 = vmatprep.subr.bf16.mxu0 %v5851
    %8398 = vmatpush1.bf16.msra.mxu0 %v5850
    %8399 = vmatprep.subr.bf16.mxu0 %v5883
    %8400 = vmatpush1.bf16.msra.mxu0 %v5882
    %8401 = vmatprep.subr.bf16.mxu0 %v5915
    %8402 = vmatpush1.bf16.msra.mxu0 %v5914
    %8403 = vmatprep.subr.bf16.mxu0 %v5947
    %8404 = vmatpush1.bf16.msra.mxu0 %v5946
    %8405 = vmatprep.subr.bf16.mxu0 %v5979
    %8406 = vmatpush1.bf16.msra.mxu0 %v5978
    %8407 = vmatprep.subr.bf16.mxu0 %v6011
    %8408 = vmatpush1.bf16.msra.mxu0 %v6010
    %8409 = vmatprep.subr.bf16.mxu0 %v6043
    %8410 = vmatpush1.bf16.msra.mxu0 %v6042
    %8411 = vmatprep.subr.bf16.mxu0 %v6075
    %8412 = vmatpush1.bf16.msra.mxu0 %v6074
    %8413 = vmatprep.subr.bf16.mxu0 %v6107
    %8414 = vmatpush1.bf16.msra.mxu0 %v6106
    %8415 = vmatprep.subr.bf16.mxu0 %v6139
    %8416 = vmatpush1.bf16.msra.mxu0 %v6138
    %8417 = vmatprep.subr.bf16.mxu0 %v6171
    %8418 = vmatpush1.bf16.msra.mxu0 %v6170
    %8419 = vmatprep.mubr.bf16.mxu0 %v885
    %8420 = vmatmul.mubr.bf16.gmra.mrb[0].mxu0 %v884
    %v8421 = vpop.f32.mrb[0].mxu0
    %v8422 = vadd.f32 %v8381, %v8421
    %v8423 = vpop.f32.mrb[0].mxu0
    %v8424 = vadd.f32 %v8383, %v8423
    %v8425 = vpop.f32.mrb[0].mxu0
    %v8426 = vpop.f32.mrb[0].mxu0
    %8427 = vdwg.mxu0
    %8428 = vmatprep.subr.bf16.mxu0 %v5181
    %8429 = vmatpush1.bf16.msra.mxu0 %v5180
    %8430 = vmatprep.subr.bf16.mxu0 %v5213
    %8431 = vmatpush1.bf16.msra.mxu0 %v5212
    %8432 = vmatprep.subr.bf16.mxu0 %v5245
    %8433 = vmatpush1.bf16.msra.mxu0 %v5244
    %8434 = vmatprep.subr.bf16.mxu0 %v5277
    %8435 = vmatpush1.bf16.msra.mxu0 %v5276
    %8436 = vmatprep.subr.bf16.mxu0 %v5309
    %8437 = vmatpush1.bf16.msra.mxu0 %v5308
    %8438 = vmatprep.subr.bf16.mxu0 %v5341
    %8439 = vmatpush1.bf16.msra.mxu0 %v5340
    %8440 = vmatprep.subr.bf16.mxu0 %v5373
    %8441 = vmatpush1.bf16.msra.mxu0 %v5372
    %8442 = vmatprep.subr.bf16.mxu0 %v5405
    %8443 = vmatpush1.bf16.msra.mxu0 %v5404
    %8444 = vmatprep.subr.bf16.mxu0 %v5437
    %8445 = vmatpush1.bf16.msra.mxu0 %v5436
    %8446 = vmatprep.subr.bf16.mxu0 %v5469
    %8447 = vmatpush1.bf16.msra.mxu0 %v5468
    %8448 = vmatprep.subr.bf16.mxu0 %v5501
    %8449 = vmatpush1.bf16.msra.mxu0 %v5500
    %8450 = vmatprep.subr.bf16.mxu0 %v5533
    %8451 = vmatpush1.bf16.msra.mxu0 %v5532
    %8452 = vmatprep.subr.bf16.mxu0 %v5565
    %8453 = vmatpush1.bf16.msra.mxu0 %v5564
    %8454 = vmatprep.subr.bf16.mxu0 %v5597
    %8455 = vmatpush1.bf16.msra.mxu0 %v5596
    %8456 = vmatprep.subr.bf16.mxu0 %v5629
    %8457 = vmatpush1.bf16.msra.mxu0 %v5628
    %8458 = vmatprep.subr.bf16.mxu0 %v5661
    %8459 = vmatpush1.bf16.msra.mxu0 %v5660
    %8460 = vmatprep.mubr.bf16.mxu0 %v883
    %8461 = vmatmul.mubr.bf16.gmra.mrb[0].mxu0 %v882
    %v8462 = vpop.f32.mrb[0].mxu0
    %v8463 = vadd.f32 %v2041, %v8462
    %v8464 = vpop.f32.mrb[0].mxu0
    %v8465 = vadd.f32 %v2045, %v8464
    %v8466 = vpop.f32.mrb[0].mxu0
    %v8467 = vpop.f32.mrb[0].mxu0
    %8468 = vdwg.mxu0
    %8469 = vmatprep.subr.bf16.mxu0 %v5693
    %8470 = vmatpush1.bf16.msra.mxu0 %v5692
    %8471 = vmatprep.subr.bf16.mxu0 %v5725
    %8472 = vmatpush1.bf16.msra.mxu0 %v5724
    %8473 = vmatprep.subr.bf16.mxu0 %v5757
    %8474 = vmatpush1.bf16.msra.mxu0 %v5756
    %8475 = vmatprep.subr.bf16.mxu0 %v5789
    %8476 = vmatpush1.bf16.msra.mxu0 %v5788
    %8477 = vmatprep.subr.bf16.mxu0 %v5821
    %8478 = vmatpush1.bf16.msra.mxu0 %v5820
    %8479 = vmatprep.subr.bf16.mxu0 %v5853
    %8480 = vmatpush1.bf16.msra.mxu0 %v5852
    %8481 = vmatprep.subr.bf16.mxu0 %v5885
    %8482 = vmatpush1.bf16.msra.mxu0 %v5884
    %8483 = vmatprep.subr.bf16.mxu0 %v5917
    %8484 = vmatpush1.bf16.msra.mxu0 %v5916
    %8485 = vmatprep.subr.bf16.mxu0 %v5949
    %8486 = vmatpush1.bf16.msra.mxu0 %v5948
    %8487 = vmatprep.subr.bf16.mxu0 %v5981
    %8488 = vmatpush1.bf16.msra.mxu0 %v5980
    %8489 = vmatprep.subr.bf16.mxu0 %v6013
    %8490 = vmatpush1.bf16.msra.mxu0 %v6012
    %8491 = vmatprep.subr.bf16.mxu0 %v6045
    %8492 = vmatpush1.bf16.msra.mxu0 %v6044
    %8493 = vmatprep.subr.bf16.mxu0 %v6077
    %8494 = vmatpush1.bf16.msra.mxu0 %v6076
    %8495 = vmatprep.subr.bf16.mxu0 %v6109
    %8496 = vmatpush1.bf16.msra.mxu0 %v6108
    %8497 = vmatprep.subr.bf16.mxu0 %v6141
    %8498 = vmatpush1.bf16.msra.mxu0 %v6140
    %8499 = vmatprep.subr.bf16.mxu0 %v6173
    %8500 = vmatpush1.bf16.msra.mxu0 %v6172
    %8501 = vmatprep.mubr.bf16.mxu0 %v885
    %8502 = vmatmul.mubr.bf16.gmra.mrb[0].mxu0 %v884
    %v8503 = vpop.f32.mrb[0].mxu0
    %v8504 = vadd.f32 %v8463, %v8503
    %v8505 = vpop.f32.mrb[0].mxu0
    %v8506 = vadd.f32 %v8465, %v8505
    %v8507 = vpop.f32.mrb[0].mxu0
    %v8508 = vpop.f32.mrb[0].mxu0
    %8509 = vdwg.mxu0
    %v8510 = vmax.f32 %v7274, 0.0
    %v8511 = vmax.f32 %v7276, 0.0
    %v8512 = vmax.f32 %v7356, 0.0
    %v8513 = vmax.f32 %v7358, 0.0
    %v8514 = vmax.f32 %v7438, 0.0
    %v8515 = vmax.f32 %v7440, 0.0
    %v8516 = vmax.f32 %v7520, 0.0
    %v8517 = vmax.f32 %v7522, 0.0
    %v8518 = vmax.f32 %v7602, 0.0
    %v8519 = vmax.f32 %v7604, 0.0
    %v8520 = vmax.f32 %v7684, 0.0
    %v8521 = vmax.f32 %v7686, 0.0
    %v8522 = vmax.f32 %v7766, 0.0
    %v8523 = vmax.f32 %v7768, 0.0
    %v8524 = vmax.f32 %v7848, 0.0
    %v8525 = vmax.f32 %v7850, 0.0
    %v8526 = vmax.f32 %v7930, 0.0
    %v8527 = vmax.f32 %v7932, 0.0
    %v8528 = vmax.f32 %v8012, 0.0
    %v8529 = vmax.f32 %v8014, 0.0
    %v8530 = vmax.f32 %v8094, 0.0
    %v8531 = vmax.f32 %v8096, 0.0
    %v8532 = vmax.f32 %v8176, 0.0
    %v8533 = vmax.f32 %v8178, 0.0
    %v8534 = vmax.f32 %v8258, 0.0
    %v8535 = vmax.f32 %v8260, 0.0
    %v8536 = vmax.f32 %v8340, 0.0
    %v8537 = vmax.f32 %v8342, 0.0
    %v8538 = vmax.f32 %v8422, 0.0
    %v8539 = vmax.f32 %v8424, 0.0
    %v8540 = vmax.f32 %v8504, 0.0
    %v8541 = vmax.f32 %v8506, 0.0
    %v8542 = vrcp.pop 0.9
    %v8543 = vmul.f32 %v7274, %v8542
    %v8544 = vmul.f32 %v7276, %v8542
    %v8545 = vmul.f32 %v7356, %v8542
    %v8546 = vmul.f32 %v7358, %v8542
    %v8547 = vmul.f32 %v7438, %v8542
    %v8548 = vmul.f32 %v7440, %v8542
    %v8549 = vmul.f32 %v7520, %v8542
    %v8550 = vmul.f32 %v7522, %v8542
    %v8551 = vmul.f32 %v7602, %v8542
    %v8552 = vmul.f32 %v7604, %v8542
    %v8553 = vmul.f32 %v7684, %v8542
    %v8554 = vmul.f32 %v7686, %v8542
    %v8555 = vmul.f32 %v7766, %v8542
    %v8556 = vmul.f32 %v7768, %v8542
    %v8557 = vmul.f32 %v7848, %v8542
    %v8558 = vmul.f32 %v7850, %v8542
    %v8559 = vmul.f32 %v7930, %v8542
    %v8560 = vmul.f32 %v7932, %v8542
    %v8561 = vmul.f32 %v8012, %v8542
    %v8562 = vmul.f32 %v8014, %v8542
    %v8563 = vmul.f32 %v8094, %v8542
    %v8564 = vmul.f32 %v8096, %v8542
    %v8565 = vmul.f32 %v8176, %v8542
    %v8566 = vmul.f32 %v8178, %v8542
    %v8567 = vmul.f32 %v8258, %v8542
    %v8568 = vmul.f32 %v8260, %v8542
    %v8569 = vmul.f32 %v8340, %v8542
    %v8570 = vmul.f32 %v8342, %v8542
    %v8571 = vmul.f32 %v8422, %v8542
    %v8572 = vmul.f32 %v8424, %v8542
    %v8573 = vmul.f32 %v8504, %v8542
    %v8574 = vmul.f32 %v8506, %v8542
    %v8575 = vmul.f32 %v8543, 1.442695
    %v8576 = vpow.pop %v8575
    %v8577 = vmul.f32 %v8544, 1.442695
    %v8578 = vpow.pop %v8577
    %v8579 = vmul.f32 %v8545, 1.442695
    %v8580 = vpow.pop %v8579
    %v8581 = vmul.f32 %v8546, 1.442695
    %v8582 = vpow.pop %v8581
    %v8583 = vmul.f32 %v8547, 1.442695
    %v8584 = vpow.pop %v8583
    %v8585 = vmul.f32 %v8548, 1.442695
    %v8586 = vpow.pop %v8585
    %v8587 = vmul.f32 %v8549, 1.442695
    %v8588 = vpow.pop %v8587
    %v8589 = vmul.f32 %v8550, 1.442695
    %v8590 = vpow.pop %v8589
    %v8591 = vmul.f32 %v8551, 1.442695
    %v8592 = vpow.pop %v8591
    %v8593 = vmul.f32 %v8552, 1.442695
    %v8594 = vpow.pop %v8593
    %v8595 = vmul.f32 %v8553, 1.442695
    %v8596 = vpow.pop %v8595
    %v8597 = vmul.f32 %v8554, 1.442695
    %v8598 = vpow.pop %v8597
    %v8599 = vmul.f32 %v8555, 1.442695
    %v8600 = vpow.pop %v8599
    %v8601 = vmul.f32 %v8556, 1.442695
    %v8602 = vpow.pop %v8601
    %v8603 = vmul.f32 %v8557, 1.442695
    %v8604 = vpow.pop %v8603
    %v8605 = vmul.f32 %v8558, 1.442695
    %v8606 = vpow.pop %v8605
    %v8607 = vmul.f32 %v8559, 1.442695
    %v8608 = vpow.pop %v8607
    %v8609 = vmul.f32 %v8560, 1.442695
    %v8610 = vpow.pop %v8609
    %v8611 = vmul.f32 %v8561, 1.442695
    %v8612 = vpow.pop %v8611
    %v8613 = vmul.f32 %v8562, 1.442695
    %v8614 = vpow.pop %v8613
    %v8615 = vmul.f32 %v8563, 1.442695
    %v8616 = vpow.pop %v8615
    %v8617 = vmul.f32 %v8564, 1.442695
    %v8618 = vpow.pop %v8617
    %v8619 = vmul.f32 %v8565, 1.442695
    %v8620 = vpow.pop %v8619
    %v8621 = vmul.f32 %v8566, 1.442695
    %v8622 = vpow.pop %v8621
    %v8623 = vmul.f32 %v8567, 1.442695
    %v8624 = vpow.pop %v8623
    %v8625 = vmul.f32 %v8568, 1.442695
    %v8626 = vpow.pop %v8625
    %v8627 = vmul.f32 %v8569, 1.442695
    %v8628 = vpow.pop %v8627
    %v8629 = vmul.f32 %v8570, 1.442695
    %v8630 = vpow.pop %v8629
    %v8631 = vmul.f32 %v8571, 1.442695
    %v8632 = vpow.pop %v8631
    %v8633 = vmul.f32 %v8572, 1.442695
    %v8634 = vpow.pop %v8633
    %v8635 = vmul.f32 %v8573, 1.442695
    %v8636 = vpow.pop %v8635
    %v8637 = vmul.f32 %v8574, 1.442695
    %v8638 = vpow.pop %v8637
    %v8639 = vsub.f32 %v8576, 1.0
    %v8640 = vsub.f32 %v8578, 1.0
    %v8641 = vsub.f32 %v8580, 1.0
    %v8642 = vsub.f32 %v8582, 1.0
    %v8643 = vsub.f32 %v8584, 1.0
    %v8644 = vsub.f32 %v8586, 1.0
    %v8645 = vsub.f32 %v8588, 1.0
    %v8646 = vsub.f32 %v8590, 1.0
    %v8647 = vsub.f32 %v8592, 1.0
    %v8648 = vsub.f32 %v8594, 1.0
    %v8649 = vsub.f32 %v8596, 1.0
    %v8650 = vsub.f32 %v8598, 1.0
    %v8651 = vsub.f32 %v8600, 1.0
    %v8652 = vsub.f32 %v8602, 1.0
    %v8653 = vsub.f32 %v8604, 1.0
    %v8654 = vsub.f32 %v8606, 1.0
    %v8655 = vsub.f32 %v8608, 1.0
    %v8656 = vsub.f32 %v8610, 1.0
    %v8657 = vsub.f32 %v8612, 1.0
    %v8658 = vsub.f32 %v8614, 1.0
    %v8659 = vsub.f32 %v8616, 1.0
    %v8660 = vsub.f32 %v8618, 1.0
    %v8661 = vsub.f32 %v8620, 1.0
    %v8662 = vsub.f32 %v8622, 1.0
    %v8663 = vsub.f32 %v8624, 1.0
    %v8664 = vsub.f32 %v8626, 1.0
    %v8665 = vsub.f32 %v8628, 1.0
    %v8666 = vsub.f32 %v8630, 1.0
    %v8667 = vsub.f32 %v8632, 1.0
    %v8668 = vsub.f32 %v8634, 1.0
    %v8669 = vsub.f32 %v8636, 1.0
    %v8670 = vsub.f32 %v8638, 1.0
    %v8671 = vmul.f32 %v8639, 0.9
    %v8672 = vmul.f32 %v8640, 0.9
    %v8673 = vmul.f32 %v8641, 0.9
    %v8674 = vmul.f32 %v8642, 0.9
    %v8675 = vmul.f32 %v8643, 0.9
    %v8676 = vmul.f32 %v8644, 0.9
    %v8677 = vmul.f32 %v8645, 0.9
    %v8678 = vmul.f32 %v8646, 0.9
    %v8679 = vmul.f32 %v8647, 0.9
    %v8680 = vmul.f32 %v8648, 0.9
    %v8681 = vmul.f32 %v8649, 0.9
    %v8682 = vmul.f32 %v8650, 0.9
    %v8683 = vmul.f32 %v8651, 0.9
    %v8684 = vmul.f32 %v8652, 0.9
    %v8685 = vmul.f32 %v8653, 0.9
    %v8686 = vmul.f32 %v8654, 0.9
    %v8687 = vmul.f32 %v8655, 0.9
    %v8688 = vmul.f32 %v8656, 0.9
    %v8689 = vmul.f32 %v8657, 0.9
    %v8690 = vmul.f32 %v8658, 0.9
    %v8691 = vmul.f32 %v8659, 0.9
    %v8692 = vmul.f32 %v8660, 0.9
    %v8693 = vmul.f32 %v8661, 0.9
    %v8694 = vmul.f32 %v8662, 0.9
    %v8695 = vmul.f32 %v8663, 0.9
    %v8696 = vmul.f32 %v8664, 0.9
    %v8697 = vmul.f32 %v8665, 0.9
    %v8698 = vmul.f32 %v8666, 0.9
    %v8699 = vmul.f32 %v8667, 0.9
    %v8700 = vmul.f32 %v8668, 0.9
    %v8701 = vmul.f32 %v8669, 0.9
    %v8702 = vmul.f32 %v8670, 0.9
    %v8703 = vmin.f32 %v8671, 0.0
    %v8704 = vmin.f32 %v8672, 0.0
    %v8705 = vmin.f32 %v8673, 0.0
    %v8706 = vmin.f32 %v8674, 0.0
    %v8707 = vmin.f32 %v8675, 0.0
    %v8708 = vmin.f32 %v8676, 0.0
    %v8709 = vmin.f32 %v8677, 0.0
    %v8710 = vmin.f32 %v8678, 0.0
    %v8711 = vmin.f32 %v8679, 0.0
    %v8712 = vmin.f32 %v8680, 0.0
    %v8713 = vmin.f32 %v8681, 0.0
    %v8714 = vmin.f32 %v8682, 0.0
    %v8715 = vmin.f32 %v8683, 0.0
    %v8716 = vmin.f32 %v8684, 0.0
    %v8717 = vmin.f32 %v8685, 0.0
    %v8718 = vmin.f32 %v8686, 0.0
    %v8719 = vmin.f32 %v8687, 0.0
    %v8720 = vmin.f32 %v8688, 0.0
    %v8721 = vmin.f32 %v8689, 0.0
    %v8722 = vmin.f32 %v8690, 0.0
    %v8723 = vmin.f32 %v8691, 0.0
    %v8724 = vmin.f32 %v8692, 0.0
    %v8725 = vmin.f32 %v8693, 0.0
    %v8726 = vmin.f32 %v8694, 0.0
    %v8727 = vmin.f32 %v8695, 0.0
    %v8728 = vmin.f32 %v8696, 0.0
    %v8729 = vmin.f32 %v8697, 0.0
    %v8730 = vmin.f32 %v8698, 0.0
    %v8731 = vmin.f32 %v8699, 0.0
    %v8732 = vmin.f32 %v8700, 0.0
    %v8733 = vmin.f32 %v8701, 0.0
    %v8734 = vmin.f32 %v8702, 0.0
    %v8735 = vadd.f32 %v8510, %v8703
    %v8736 = vadd.f32 %v8511, %v8704
    %v8737 = vadd.f32 %v8512, %v8705
    %v8738 = vadd.f32 %v8513, %v8706
    %v8739 = vadd.f32 %v8514, %v8707
    %v8740 = vadd.f32 %v8515, %v8708
    %v8741 = vadd.f32 %v8516, %v8709
    %v8742 = vadd.f32 %v8517, %v8710
    %v8743 = vadd.f32 %v8518, %v8711
    %v8744 = vadd.f32 %v8519, %v8712
    %v8745 = vadd.f32 %v8520, %v8713
    %v8746 = vadd.f32 %v8521, %v8714
    %v8747 = vadd.f32 %v8522, %v8715
    %v8748 = vadd.f32 %v8523, %v8716
    %v8749 = vadd.f32 %v8524, %v8717
    %v8750 = vadd.f32 %v8525, %v8718
    %v8751 = vadd.f32 %v8526, %v8719
    %v8752 = vadd.f32 %v8527, %v8720
    %v8753 = vadd.f32 %v8528, %v8721
    %v8754 = vadd.f32 %v8529, %v8722
    %v8755 = vadd.f32 %v8530, %v8723
    %v8756 = vadd.f32 %v8531, %v8724
    %v8757 = vadd.f32 %v8532, %v8725
    %v8758 = vadd.f32 %v8533, %v8726
    %v8759 = vadd.f32 %v8534, %v8727
    %v8760 = vadd.f32 %v8535, %v8728
    %v8761 = vadd.f32 %v8536, %v8729
    %v8762 = vadd.f32 %v8537, %v8730
    %v8763 = vadd.f32 %v8538, %v8731
    %v8764 = vadd.f32 %v8539, %v8732
    %v8765 = vadd.f32 %v8540, %v8733
    %v8766 = vadd.f32 %v8541, %v8734
    %v8767 = vpack.c.bf16 %v8735, %v8735
    %v8768 = vpack.c.bf16 %v8736, %v8736
    %v8769 = vpack.c.bf16 %v8737, %v8737
    %v8770 = vpack.c.bf16 %v8738, %v8738
    %v8771 = vpack.c.bf16 %v8739, %v8739
    %v8772 = vpack.c.bf16 %v8740, %v8740
    %v8773 = vpack.c.bf16 %v8741, %v8741
    %v8774 = vpack.c.bf16 %v8742, %v8742
    %v8775 = vpack.c.bf16 %v8743, %v8743
    %v8776 = vpack.c.bf16 %v8744, %v8744
    %v8777 = vpack.c.bf16 %v8745, %v8745
    %v8778 = vpack.c.bf16 %v8746, %v8746
    %v8779 = vpack.c.bf16 %v8747, %v8747
    %v8780 = vpack.c.bf16 %v8748, %v8748
    %v8781 = vpack.c.bf16 %v8749, %v8749
    %v8782 = vpack.c.bf16 %v8750, %v8750
    %v8783 = vpack.c.bf16 %v8751, %v8751
    %v8784 = vpack.c.bf16 %v8752, %v8752
    %v8785 = vpack.c.bf16 %v8753, %v8753
    %v8786 = vpack.c.bf16 %v8754, %v8754
    %v8787 = vpack.c.bf16 %v8755, %v8755
    %v8788 = vpack.c.bf16 %v8756, %v8756
    %v8789 = vpack.c.bf16 %v8757, %v8757
    %v8790 = vpack.c.bf16 %v8758, %v8758
    %v8791 = vpack.c.bf16 %v8759, %v8759
    %v8792 = vpack.c.bf16 %v8760, %v8760
    %v8793 = vpack.c.bf16 %v8761, %v8761
    %v8794 = vpack.c.bf16 %v8762, %v8762
    %v8795 = vpack.c.bf16 %v8763, %v8763
    %v8796 = vpack.c.bf16 %v8764, %v8764
    %v8797 = vpack.c.bf16 %v8765, %v8765
    %v8798 = vpack.c.bf16 %v8766, %v8766
    %v8799 = vld [vmem:[#allocation11] sm:$0xf]
    %v8800 = vld [vmem:[#allocation11 + $0x4] sm:$0xf]
    %v8801 = vld [vmem:[#allocation11 + $0x8] sm:$0xf]
    %v8802 = vld [vmem:[#allocation11 + $0xc] sm:$0xf]
    %v8803 = vld [vmem:[#allocation11 + $0x10] sm:$0xf]
    %v8804 = vld [vmem:[#allocation11 + $0x14] sm:$0xf]
    %v8805 = vld [vmem:[#allocation11 + $0x18] sm:$0xf]
    %v8806 = vld [vmem:[#allocation11 + $0x1c] sm:$0xf]
    %v8807 = vld [vmem:[#allocation11 + $0x20] sm:$0xf]
    %v8808 = vld [vmem:[#allocation11 + $0x24] sm:$0xf]
    %v8809 = vld [vmem:[#allocation11 + $0x28] sm:$0xf]
    %v8810 = vld [vmem:[#allocation11 + $0x2c] sm:$0xf]
    %v8811 = vld [vmem:[#allocation11 + $0x30] sm:$0xf]
    %v8812 = vld [vmem:[#allocation11 + $0x34] sm:$0xf]
    %v8813 = vld [vmem:[#allocation11 + $0x38] sm:$0xf]
    %v8814 = vld [vmem:[#allocation11 + $0x3c] sm:$0xf]
    %v8815 = vld [vmem:[#allocation11 + $0x40] sm:$0xf]
    %v8816 = vld [vmem:[#allocation11 + $0x44] sm:$0xf]
    %v8817 = vld [vmem:[#allocation11 + $0x48] sm:$0xf]
    %v8818 = vld [vmem:[#allocation11 + $0x4c] sm:$0xf]
    %v8819 = vld [vmem:[#allocation11 + $0x50] sm:$0xf]
    %v8820 = vld [vmem:[#allocation11 + $0x54] sm:$0xf]
    %v8821 = vld [vmem:[#allocation11 + $0x58] sm:$0xf]
    %v8822 = vld [vmem:[#allocation11 + $0x5c] sm:$0xf]
    %v8823 = vld [vmem:[#allocation11 + $0x60] sm:$0xf]
    %v8824 = vld [vmem:[#allocation11 + $0x64] sm:$0xf]
    %v8825 = vld [vmem:[#allocation11 + $0x68] sm:$0xf]
    %v8826 = vld [vmem:[#allocation11 + $0x6c] sm:$0xf]
    %v8827 = vld [vmem:[#allocation11 + $0x70] sm:$0xf]
    %v8828 = vld [vmem:[#allocation11 + $0x74] sm:$0xf]
    %v8829 = vld [vmem:[#allocation11 + $0x78] sm:$0xf]
    %v8830 = vld [vmem:[#allocation11 + $0x7c] sm:$0xf]
    %v8831 = vld [vmem:[#allocation11 + $0x80] sm:$0xf]
    %v8832 = vld [vmem:[#allocation11 + $0x84] sm:$0xf]
    %v8833 = vld [vmem:[#allocation11 + $0x88] sm:$0xf]
    %v8834 = vld [vmem:[#allocation11 + $0x8c] sm:$0xf]
    %v8835 = vld [vmem:[#allocation11 + $0x90] sm:$0xf]
    %v8836 = vld [vmem:[#allocation11 + $0x94] sm:$0xf]
    %v8837 = vld [vmem:[#allocation11 + $0x98] sm:$0xf]
    %v8838 = vld [vmem:[#allocation11 + $0x9c] sm:$0xf]
    %v8839 = vld [vmem:[#allocation11 + $0xa0] sm:$0xf]
    %v8840 = vld [vmem:[#allocation11 + $0xa4] sm:$0xf]
    %v8841 = vld [vmem:[#allocation11 + $0xa8] sm:$0xf]
    %v8842 = vld [vmem:[#allocation11 + $0xac] sm:$0xf]
    %v8843 = vld [vmem:[#allocation11 + $0xb0] sm:$0xf]
    %v8844 = vld [vmem:[#allocation11 + $0xb4] sm:$0xf]
    %v8845 = vld [vmem:[#allocation11 + $0xb8] sm:$0xf]
    %v8846 = vld [vmem:[#allocation11 + $0xbc] sm:$0xf]
    %v8847 = vld [vmem:[#allocation11 + $0xc0] sm:$0xf]
    %v8848 = vld [vmem:[#allocation11 + $0xc4] sm:$0xf]
    %v8849 = vld [vmem:[#allocation11 + $0xc8] sm:$0xf]
    %v8850 = vld [vmem:[#allocation11 + $0xcc] sm:$0xf]
    %v8851 = vld [vmem:[#allocation11 + $0xd0] sm:$0xf]
    %v8852 = vld [vmem:[#allocation11 + $0xd4] sm:$0xf]
    %v8853 = vld [vmem:[#allocation11 + $0xd8] sm:$0xf]
    %v8854 = vld [vmem:[#allocation11 + $0xdc] sm:$0xf]
    %v8855 = vld [vmem:[#allocation11 + $0xe0] sm:$0xf]
    %v8856 = vld [vmem:[#allocation11 + $0xe4] sm:$0xf]
    %v8857 = vld [vmem:[#allocation11 + $0xe8] sm:$0xf]
    %v8858 = vld [vmem:[#allocation11 + $0xec] sm:$0xf]
    %v8859 = vld [vmem:[#allocation11 + $0xf0] sm:$0xf]
    %v8860 = vld [vmem:[#allocation11 + $0xf4] sm:$0xf]
    %v8861 = vld [vmem:[#allocation11 + $0xf8] sm:$0xf]
    %v8862 = vld [vmem:[#allocation11 + $0xfc] sm:$0xf]
    %v8863 = vld [vmem:[#allocation11 + $0x100] sm:$0xf]
    %v8864 = vld [vmem:[#allocation11 + $0x104] sm:$0xf]
    %v8865 = vld [vmem:[#allocation11 + $0x108] sm:$0xf]
    %v8866 = vld [vmem:[#allocation11 + $0x10c] sm:$0xf]
    %v8867 = vld [vmem:[#allocation11 + $0x110] sm:$0xf]
    %v8868 = vld [vmem:[#allocation11 + $0x114] sm:$0xf]
    %v8869 = vld [vmem:[#allocation11 + $0x118] sm:$0xf]
    %v8870 = vld [vmem:[#allocation11 + $0x11c] sm:$0xf]
    %v8871 = vld [vmem:[#allocation11 + $0x120] sm:$0xf]
    %v8872 = vld [vmem:[#allocation11 + $0x124] sm:$0xf]
    %v8873 = vld [vmem:[#allocation11 + $0x128] sm:$0xf]
    %v8874 = vld [vmem:[#allocation11 + $0x12c] sm:$0xf]
    %v8875 = vld [vmem:[#allocation11 + $0x130] sm:$0xf]
    %v8876 = vld [vmem:[#allocation11 + $0x134] sm:$0xf]
    %v8877 = vld [vmem:[#allocation11 + $0x138] sm:$0xf]
    %v8878 = vld [vmem:[#allocation11 + $0x13c] sm:$0xf]
    %v8879 = vld [vmem:[#allocation11 + $0x140] sm:$0xf]
    %v8880 = vld [vmem:[#allocation11 + $0x144] sm:$0xf]
    %v8881 = vld [vmem:[#allocation11 + $0x148] sm:$0xf]
    %v8882 = vld [vmem:[#allocation11 + $0x14c] sm:$0xf]
    %v8883 = vld [vmem:[#allocation11 + $0x150] sm:$0xf]
    %v8884 = vld [vmem:[#allocation11 + $0x154] sm:$0xf]
    %v8885 = vld [vmem:[#allocation11 + $0x158] sm:$0xf]
    %v8886 = vld [vmem:[#allocation11 + $0x15c] sm:$0xf]
    %v8887 = vld [vmem:[#allocation11 + $0x160] sm:$0xf]
    %v8888 = vld [vmem:[#allocation11 + $0x164] sm:$0xf]
    %v8889 = vld [vmem:[#allocation11 + $0x168] sm:$0xf]
    %v8890 = vld [vmem:[#allocation11 + $0x16c] sm:$0xf]
    %v8891 = vld [vmem:[#allocation11 + $0x170] sm:$0xf]
    %v8892 = vld [vmem:[#allocation11 + $0x174] sm:$0xf]
    %v8893 = vld [vmem:[#allocation11 + $0x178] sm:$0xf]
    %v8894 = vld [vmem:[#allocation11 + $0x17c] sm:$0xf]
    %v8895 = vld [vmem:[#allocation11 + $0x180] sm:$0xf]
    %v8896 = vld [vmem:[#allocation11 + $0x184] sm:$0xf]
    %v8897 = vld [vmem:[#allocation11 + $0x188] sm:$0xf]
    %v8898 = vld [vmem:[#allocation11 + $0x18c] sm:$0xf]
    %v8899 = vld [vmem:[#allocation11 + $0x190] sm:$0xf]
    %v8900 = vld [vmem:[#allocation11 + $0x194] sm:$0xf]
    %v8901 = vld [vmem:[#allocation11 + $0x198] sm:$0xf]
    %v8902 = vld [vmem:[#allocation11 + $0x19c] sm:$0xf]
    %v8903 = vld [vmem:[#allocation11 + $0x1a0] sm:$0xf]
    %v8904 = vld [vmem:[#allocation11 + $0x1a4] sm:$0xf]
    %v8905 = vld [vmem:[#allocation11 + $0x1a8] sm:$0xf]
    %v8906 = vld [vmem:[#allocation11 + $0x1ac] sm:$0xf]
    %v8907 = vld [vmem:[#allocation11 + $0x1b0] sm:$0xf]
    %v8908 = vld [vmem:[#allocation11 + $0x1b4] sm:$0xf]
    %v8909 = vld [vmem:[#allocation11 + $0x1b8] sm:$0xf]
    %v8910 = vld [vmem:[#allocation11 + $0x1bc] sm:$0xf]
    %v8911 = vld [vmem:[#allocation11 + $0x1c0] sm:$0xf]
    %v8912 = vld [vmem:[#allocation11 + $0x1c4] sm:$0xf]
    %v8913 = vld [vmem:[#allocation11 + $0x1c8] sm:$0xf]
    %v8914 = vld [vmem:[#allocation11 + $0x1cc] sm:$0xf]
    %v8915 = vld [vmem:[#allocation11 + $0x1d0] sm:$0xf]
    %v8916 = vld [vmem:[#allocation11 + $0x1d4] sm:$0xf]
    %v8917 = vld [vmem:[#allocation11 + $0x1d8] sm:$0xf]
    %v8918 = vld [vmem:[#allocation11 + $0x1dc] sm:$0xf]
    %v8919 = vld [vmem:[#allocation11 + $0x1e0] sm:$0xf]
    %v8920 = vld [vmem:[#allocation11 + $0x1e4] sm:$0xf]
    %v8921 = vld [vmem:[#allocation11 + $0x1e8] sm:$0xf]
    %v8922 = vld [vmem:[#allocation11 + $0x1ec] sm:$0xf]
    %v8923 = vld [vmem:[#allocation11 + $0x1f0] sm:$0xf]
    %v8924 = vld [vmem:[#allocation11 + $0x1f4] sm:$0xf]
    %v8925 = vld [vmem:[#allocation11 + $0x1f8] sm:$0xf]
    %v8926 = vld [vmem:[#allocation11 + $0x1fc] sm:$0xf]
    %v8927 = vld [vmem:[#allocation11 + $0x200] sm:$0xf]
    %v8928 = vld [vmem:[#allocation11 + $0x204] sm:$0xf]
    %v8929 = vld [vmem:[#allocation11 + $0x208] sm:$0xf]
    %v8930 = vld [vmem:[#allocation11 + $0x20c] sm:$0xf]
    %v8931 = vld [vmem:[#allocation11 + $0x210] sm:$0xf]
    %v8932 = vld [vmem:[#allocation11 + $0x214] sm:$0xf]
    %v8933 = vld [vmem:[#allocation11 + $0x218] sm:$0xf]
    %v8934 = vld [vmem:[#allocation11 + $0x21c] sm:$0xf]
    %v8935 = vld [vmem:[#allocation11 + $0x220] sm:$0xf]
    %v8936 = vld [vmem:[#allocation11 + $0x224] sm:$0xf]
    %v8937 = vld [vmem:[#allocation11 + $0x228] sm:$0xf]
    %v8938 = vld [vmem:[#allocation11 + $0x22c] sm:$0xf]
    %v8939 = vld [vmem:[#allocation11 + $0x230] sm:$0xf]
    %v8940 = vld [vmem:[#allocation11 + $0x234] sm:$0xf]
    %v8941 = vld [vmem:[#allocation11 + $0x238] sm:$0xf]
    %v8942 = vld [vmem:[#allocation11 + $0x23c] sm:$0xf]
    %v8943 = vld [vmem:[#allocation11 + $0x240] sm:$0xf]
    %v8944 = vld [vmem:[#allocation11 + $0x244] sm:$0xf]
    %v8945 = vld [vmem:[#allocation11 + $0x248] sm:$0xf]
    %v8946 = vld [vmem:[#allocation11 + $0x24c] sm:$0xf]
    %v8947 = vld [vmem:[#allocation11 + $0x250] sm:$0xf]
    %v8948 = vld [vmem:[#allocation11 + $0x254] sm:$0xf]
    %v8949 = vld [vmem:[#allocation11 + $0x258] sm:$0xf]
    %v8950 = vld [vmem:[#allocation11 + $0x25c] sm:$0xf]
    %v8951 = vld [vmem:[#allocation11 + $0x260] sm:$0xf]
    %v8952 = vld [vmem:[#allocation11 + $0x264] sm:$0xf]
    %v8953 = vld [vmem:[#allocation11 + $0x268] sm:$0xf]
    %v8954 = vld [vmem:[#allocation11 + $0x26c] sm:$0xf]
    %v8955 = vld [vmem:[#allocation11 + $0x270] sm:$0xf]
    %v8956 = vld [vmem:[#allocation11 + $0x274] sm:$0xf]
    %v8957 = vld [vmem:[#allocation11 + $0x278] sm:$0xf]
    %v8958 = vld [vmem:[#allocation11 + $0x27c] sm:$0xf]
    %v8959 = vld [vmem:[#allocation11 + $0x280] sm:$0xf]
    %v8960 = vld [vmem:[#allocation11 + $0x284] sm:$0xf]
    %v8961 = vld [vmem:[#allocation11 + $0x288] sm:$0xf]
    %v8962 = vld [vmem:[#allocation11 + $0x28c] sm:$0xf]
    %v8963 = vld [vmem:[#allocation11 + $0x290] sm:$0xf]
    %v8964 = vld [vmem:[#allocation11 + $0x294] sm:$0xf]
    %v8965 = vld [vmem:[#allocation11 + $0x298] sm:$0xf]
    %v8966 = vld [vmem:[#allocation11 + $0x29c] sm:$0xf]
    %v8967 = vld [vmem:[#allocation11 + $0x2a0] sm:$0xf]
    %v8968 = vld [vmem:[#allocation11 + $0x2a4] sm:$0xf]
    %v8969 = vld [vmem:[#allocation11 + $0x2a8] sm:$0xf]
    %v8970 = vld [vmem:[#allocation11 + $0x2ac] sm:$0xf]
    %v8971 = vld [vmem:[#allocation11 + $0x2b0] sm:$0xf]
    %v8972 = vld [vmem:[#allocation11 + $0x2b4] sm:$0xf]
    %v8973 = vld [vmem:[#allocation11 + $0x2b8] sm:$0xf]
    %v8974 = vld [vmem:[#allocation11 + $0x2bc] sm:$0xf]
    %v8975 = vld [vmem:[#allocation11 + $0x2c0] sm:$0xf]
    %v8976 = vld [vmem:[#allocation11 + $0x2c4] sm:$0xf]
    %v8977 = vld [vmem:[#allocation11 + $0x2c8] sm:$0xf]
    %v8978 = vld [vmem:[#allocation11 + $0x2cc] sm:$0xf]
    %v8979 = vld [vmem:[#allocation11 + $0x2d0] sm:$0xf]
    %v8980 = vld [vmem:[#allocation11 + $0x2d4] sm:$0xf]
    %v8981 = vld [vmem:[#allocation11 + $0x2d8] sm:$0xf]
    %v8982 = vld [vmem:[#allocation11 + $0x2dc] sm:$0xf]
    %v8983 = vld [vmem:[#allocation11 + $0x2e0] sm:$0xf]
    %v8984 = vld [vmem:[#allocation11 + $0x2e4] sm:$0xf]
    %v8985 = vld [vmem:[#allocation11 + $0x2e8] sm:$0xf]
    %v8986 = vld [vmem:[#allocation11 + $0x2ec] sm:$0xf]
    %v8987 = vld [vmem:[#allocation11 + $0x2f0] sm:$0xf]
    %v8988 = vld [vmem:[#allocation11 + $0x2f4] sm:$0xf]
    %v8989 = vld [vmem:[#allocation11 + $0x2f8] sm:$0xf]
    %v8990 = vld [vmem:[#allocation11 + $0x2fc] sm:$0xf]
    %v8991 = vld [vmem:[#allocation11 + $0x300] sm:$0xf]
    %v8992 = vld [vmem:[#allocation11 + $0x304] sm:$0xf]
    %v8993 = vld [vmem:[#allocation11 + $0x308] sm:$0xf]
    %v8994 = vld [vmem:[#allocation11 + $0x30c] sm:$0xf]
    %v8995 = vld [vmem:[#allocation11 + $0x310] sm:$0xf]
    %v8996 = vld [vmem:[#allocation11 + $0x314] sm:$0xf]
    %v8997 = vld [vmem:[#allocation11 + $0x318] sm:$0xf]
    %v8998 = vld [vmem:[#allocation11 + $0x31c] sm:$0xf]
    %v8999 = vld [vmem:[#allocation11 + $0x320] sm:$0xf]
    %v9000 = vld [vmem:[#allocation11 + $0x324] sm:$0xf]
    %v9001 = vld [vmem:[#allocation11 + $0x328] sm:$0xf]
    %v9002 = vld [vmem:[#allocation11 + $0x32c] sm:$0xf]
    %v9003 = vld [vmem:[#allocation11 + $0x330] sm:$0xf]
    %v9004 = vld [vmem:[#allocation11 + $0x334] sm:$0xf]
    %v9005 = vld [vmem:[#allocation11 + $0x338] sm:$0xf]
    %v9006 = vld [vmem:[#allocation11 + $0x33c] sm:$0xf]
    %v9007 = vld [vmem:[#allocation11 + $0x340] sm:$0xf]
    %v9008 = vld [vmem:[#allocation11 + $0x344] sm:$0xf]
    %v9009 = vld [vmem:[#allocation11 + $0x348] sm:$0xf]
    %v9010 = vld [vmem:[#allocation11 + $0x34c] sm:$0xf]
    %v9011 = vld [vmem:[#allocation11 + $0x350] sm:$0xf]
    %v9012 = vld [vmem:[#allocation11 + $0x354] sm:$0xf]
    %v9013 = vld [vmem:[#allocation11 + $0x358] sm:$0xf]
    %v9014 = vld [vmem:[#allocation11 + $0x35c] sm:$0xf]
    %v9015 = vld [vmem:[#allocation11 + $0x360] sm:$0xf]
    %v9016 = vld [vmem:[#allocation11 + $0x364] sm:$0xf]
    %v9017 = vld [vmem:[#allocation11 + $0x368] sm:$0xf]
    %v9018 = vld [vmem:[#allocation11 + $0x36c] sm:$0xf]
    %v9019 = vld [vmem:[#allocation11 + $0x370] sm:$0xf]
    %v9020 = vld [vmem:[#allocation11 + $0x374] sm:$0xf]
    %v9021 = vld [vmem:[#allocation11 + $0x378] sm:$0xf]
    %v9022 = vld [vmem:[#allocation11 + $0x37c] sm:$0xf]
    %v9023 = vld [vmem:[#allocation11 + $0x380] sm:$0xf]
    %v9024 = vld [vmem:[#allocation11 + $0x384] sm:$0xf]
    %v9025 = vld [vmem:[#allocation11 + $0x388] sm:$0xf]
    %v9026 = vld [vmem:[#allocation11 + $0x38c] sm:$0xf]
    %v9027 = vld [vmem:[#allocation11 + $0x390] sm:$0xf]
    %v9028 = vld [vmem:[#allocation11 + $0x394] sm:$0xf]
    %v9029 = vld [vmem:[#allocation11 + $0x398] sm:$0xf]
    %v9030 = vld [vmem:[#allocation11 + $0x39c] sm:$0xf]
    %v9031 = vld [vmem:[#allocation11 + $0x3a0] sm:$0xf]
    %v9032 = vld [vmem:[#allocation11 + $0x3a4] sm:$0xf]
    %v9033 = vld [vmem:[#allocation11 + $0x3a8] sm:$0xf]
    %v9034 = vld [vmem:[#allocation11 + $0x3ac] sm:$0xf]
    %v9035 = vld [vmem:[#allocation11 + $0x3b0] sm:$0xf]
    %v9036 = vld [vmem:[#allocation11 + $0x3b4] sm:$0xf]
    %v9037 = vld [vmem:[#allocation11 + $0x3b8] sm:$0xf]
    %v9038 = vld [vmem:[#allocation11 + $0x3bc] sm:$0xf]
    %v9039 = vld [vmem:[#allocation11 + $0x3c0] sm:$0xf]
    %v9040 = vld [vmem:[#allocation11 + $0x3c4] sm:$0xf]
    %v9041 = vld [vmem:[#allocation11 + $0x3c8] sm:$0xf]
    %v9042 = vld [vmem:[#allocation11 + $0x3cc] sm:$0xf]
    %v9043 = vld [vmem:[#allocation11 + $0x3d0] sm:$0xf]
    %v9044 = vld [vmem:[#allocation11 + $0x3d4] sm:$0xf]
    %v9045 = vld [vmem:[#allocation11 + $0x3d8] sm:$0xf]
    %v9046 = vld [vmem:[#allocation11 + $0x3dc] sm:$0xf]
    %v9047 = vld [vmem:[#allocation11 + $0x3e0] sm:$0xf]
    %v9048 = vld [vmem:[#allocation11 + $0x3e4] sm:$0xf]
    %v9049 = vld [vmem:[#allocation11 + $0x3e8] sm:$0xf]
    %v9050 = vld [vmem:[#allocation11 + $0x3ec] sm:$0xf]
    %v9051 = vld [vmem:[#allocation11 + $0x3f0] sm:$0xf]
    %v9052 = vld [vmem:[#allocation11 + $0x3f4] sm:$0xf]
    %v9053 = vld [vmem:[#allocation11 + $0x3f8] sm:$0xf]
    %v9054 = vld [vmem:[#allocation11 + $0x3fc] sm:$0xf]
    %v9055 = vld [vmem:[#allocation11 + $0x400] sm:$0xf]
    %v9056 = vld [vmem:[#allocation11 + $0x404] sm:$0xf]
    %v9057 = vld [vmem:[#allocation11 + $0x408] sm:$0xf]
    %v9058 = vld [vmem:[#allocation11 + $0x40c] sm:$0xf]
    %v9059 = vld [vmem:[#allocation11 + $0x410] sm:$0xf]
    %v9060 = vld [vmem:[#allocation11 + $0x414] sm:$0xf]
    %v9061 = vld [vmem:[#allocation11 + $0x418] sm:$0xf]
    %v9062 = vld [vmem:[#allocation11 + $0x41c] sm:$0xf]
    %v9063 = vld [vmem:[#allocation11 + $0x420] sm:$0xf]
    %v9064 = vld [vmem:[#allocation11 + $0x424] sm:$0xf]
    %v9065 = vld [vmem:[#allocation11 + $0x428] sm:$0xf]
    %v9066 = vld [vmem:[#allocation11 + $0x42c] sm:$0xf]
    %v9067 = vld [vmem:[#allocation11 + $0x430] sm:$0xf]
    %v9068 = vld [vmem:[#allocation11 + $0x434] sm:$0xf]
    %v9069 = vld [vmem:[#allocation11 + $0x438] sm:$0xf]
    %v9070 = vld [vmem:[#allocation11 + $0x43c] sm:$0xf]
    %v9071 = vld [vmem:[#allocation11 + $0x440] sm:$0xf]
    %v9072 = vld [vmem:[#allocation11 + $0x444] sm:$0xf]
    %v9073 = vld [vmem:[#allocation11 + $0x448] sm:$0xf]
    %v9074 = vld [vmem:[#allocation11 + $0x44c] sm:$0xf]
    %v9075 = vld [vmem:[#allocation11 + $0x450] sm:$0xf]
    %v9076 = vld [vmem:[#allocation11 + $0x454] sm:$0xf]
    %v9077 = vld [vmem:[#allocation11 + $0x458] sm:$0xf]
    %v9078 = vld [vmem:[#allocation11 + $0x45c] sm:$0xf]
    %v9079 = vld [vmem:[#allocation11 + $0x460] sm:$0xf]
    %v9080 = vld [vmem:[#allocation11 + $0x464] sm:$0xf]
    %v9081 = vld [vmem:[#allocation11 + $0x468] sm:$0xf]
    %v9082 = vld [vmem:[#allocation11 + $0x46c] sm:$0xf]
    %v9083 = vld [vmem:[#allocation11 + $0x470] sm:$0xf]
    %v9084 = vld [vmem:[#allocation11 + $0x474] sm:$0xf]
    %v9085 = vld [vmem:[#allocation11 + $0x478] sm:$0xf]
    %v9086 = vld [vmem:[#allocation11 + $0x47c] sm:$0xf]
    %v9087 = vld [vmem:[#allocation11 + $0x480] sm:$0xf]
    %v9088 = vld [vmem:[#allocation11 + $0x484] sm:$0xf]
    %v9089 = vld [vmem:[#allocation11 + $0x488] sm:$0xf]
    %v9090 = vld [vmem:[#allocation11 + $0x48c] sm:$0xf]
    %v9091 = vld [vmem:[#allocation11 + $0x490] sm:$0xf]
    %v9092 = vld [vmem:[#allocation11 + $0x494] sm:$0xf]
    %v9093 = vld [vmem:[#allocation11 + $0x498] sm:$0xf]
    %v9094 = vld [vmem:[#allocation11 + $0x49c] sm:$0xf]
    %v9095 = vld [vmem:[#allocation11 + $0x4a0] sm:$0xf]
    %v9096 = vld [vmem:[#allocation11 + $0x4a4] sm:$0xf]
    %v9097 = vld [vmem:[#allocation11 + $0x4a8] sm:$0xf]
    %v9098 = vld [vmem:[#allocation11 + $0x4ac] sm:$0xf]
    %v9099 = vld [vmem:[#allocation11 + $0x4b0] sm:$0xf]
    %v9100 = vld [vmem:[#allocation11 + $0x4b4] sm:$0xf]
    %v9101 = vld [vmem:[#allocation11 + $0x4b8] sm:$0xf]
    %v9102 = vld [vmem:[#allocation11 + $0x4bc] sm:$0xf]
    %v9103 = vld [vmem:[#allocation11 + $0x4c0] sm:$0xf]
    %v9104 = vld [vmem:[#allocation11 + $0x4c4] sm:$0xf]
    %v9105 = vld [vmem:[#allocation11 + $0x4c8] sm:$0xf]
    %v9106 = vld [vmem:[#allocation11 + $0x4cc] sm:$0xf]
    %v9107 = vld [vmem:[#allocation11 + $0x4d0] sm:$0xf]
    %v9108 = vld [vmem:[#allocation11 + $0x4d4] sm:$0xf]
    %v9109 = vld [vmem:[#allocation11 + $0x4d8] sm:$0xf]
    %v9110 = vld [vmem:[#allocation11 + $0x4dc] sm:$0xf]
    %v9111 = vld [vmem:[#allocation11 + $0x4e0] sm:$0xf]
    %v9112 = vld [vmem:[#allocation11 + $0x4e4] sm:$0xf]
    %v9113 = vld [vmem:[#allocation11 + $0x4e8] sm:$0xf]
    %v9114 = vld [vmem:[#allocation11 + $0x4ec] sm:$0xf]
    %v9115 = vld [vmem:[#allocation11 + $0x4f0] sm:$0xf]
    %v9116 = vld [vmem:[#allocation11 + $0x4f4] sm:$0xf]
    %v9117 = vld [vmem:[#allocation11 + $0x4f8] sm:$0xf]
    %v9118 = vld [vmem:[#allocation11 + $0x4fc] sm:$0xf]
    %v9119 = vld [vmem:[#allocation11 + $0x500] sm:$0xf]
    %v9120 = vld [vmem:[#allocation11 + $0x504] sm:$0xf]
    %v9121 = vld [vmem:[#allocation11 + $0x508] sm:$0xf]
    %v9122 = vld [vmem:[#allocation11 + $0x50c] sm:$0xf]
    %v9123 = vld [vmem:[#allocation11 + $0x510] sm:$0xf]
    %v9124 = vld [vmem:[#allocation11 + $0x514] sm:$0xf]
    %v9125 = vld [vmem:[#allocation11 + $0x518] sm:$0xf]
    %v9126 = vld [vmem:[#allocation11 + $0x51c] sm:$0xf]
    %v9127 = vld [vmem:[#allocation11 + $0x520] sm:$0xf]
    %v9128 = vld [vmem:[#allocation11 + $0x524] sm:$0xf]
    %v9129 = vld [vmem:[#allocation11 + $0x528] sm:$0xf]
    %v9130 = vld [vmem:[#allocation11 + $0x52c] sm:$0xf]
    %v9131 = vld [vmem:[#allocation11 + $0x530] sm:$0xf]
    %v9132 = vld [vmem:[#allocation11 + $0x534] sm:$0xf]
    %v9133 = vld [vmem:[#allocation11 + $0x538] sm:$0xf]
    %v9134 = vld [vmem:[#allocation11 + $0x53c] sm:$0xf]
    %v9135 = vld [vmem:[#allocation11 + $0x540] sm:$0xf]
    %v9136 = vld [vmem:[#allocation11 + $0x544] sm:$0xf]
    %v9137 = vld [vmem:[#allocation11 + $0x548] sm:$0xf]
    %v9138 = vld [vmem:[#allocation11 + $0x54c] sm:$0xf]
    %v9139 = vld [vmem:[#allocation11 + $0x550] sm:$0xf]
    %v9140 = vld [vmem:[#allocation11 + $0x554] sm:$0xf]
    %v9141 = vld [vmem:[#allocation11 + $0x558] sm:$0xf]
    %v9142 = vld [vmem:[#allocation11 + $0x55c] sm:$0xf]
    %v9143 = vld [vmem:[#allocation11 + $0x560] sm:$0xf]
    %v9144 = vld [vmem:[#allocation11 + $0x564] sm:$0xf]
    %v9145 = vld [vmem:[#allocation11 + $0x568] sm:$0xf]
    %v9146 = vld [vmem:[#allocation11 + $0x56c] sm:$0xf]
    %v9147 = vld [vmem:[#allocation11 + $0x570] sm:$0xf]
    %v9148 = vld [vmem:[#allocation11 + $0x574] sm:$0xf]
    %v9149 = vld [vmem:[#allocation11 + $0x578] sm:$0xf]
    %v9150 = vld [vmem:[#allocation11 + $0x57c] sm:$0xf]
    %v9151 = vld [vmem:[#allocation11 + $0x580] sm:$0xf]
    %v9152 = vld [vmem:[#allocation11 + $0x584] sm:$0xf]
    %v9153 = vld [vmem:[#allocation11 + $0x588] sm:$0xf]
    %v9154 = vld [vmem:[#allocation11 + $0x58c] sm:$0xf]
    %v9155 = vld [vmem:[#allocation11 + $0x590] sm:$0xf]
    %v9156 = vld [vmem:[#allocation11 + $0x594] sm:$0xf]
    %v9157 = vld [vmem:[#allocation11 + $0x598] sm:$0xf]
    %v9158 = vld [vmem:[#allocation11 + $0x59c] sm:$0xf]
    %v9159 = vld [vmem:[#allocation11 + $0x5a0] sm:$0xf]
    %v9160 = vld [vmem:[#allocation11 + $0x5a4] sm:$0xf]
    %v9161 = vld [vmem:[#allocation11 + $0x5a8] sm:$0xf]
    %v9162 = vld [vmem:[#allocation11 + $0x5ac] sm:$0xf]
    %v9163 = vld [vmem:[#allocation11 + $0x5b0] sm:$0xf]
    %v9164 = vld [vmem:[#allocation11 + $0x5b4] sm:$0xf]
    %v9165 = vld [vmem:[#allocation11 + $0x5b8] sm:$0xf]
    %v9166 = vld [vmem:[#allocation11 + $0x5bc] sm:$0xf]
    %v9167 = vld [vmem:[#allocation11 + $0x5c0] sm:$0xf]
    %v9168 = vld [vmem:[#allocation11 + $0x5c4] sm:$0xf]
    %v9169 = vld [vmem:[#allocation11 + $0x5c8] sm:$0xf]
    %v9170 = vld [vmem:[#allocation11 + $0x5cc] sm:$0xf]
    %v9171 = vld [vmem:[#allocation11 + $0x5d0] sm:$0xf]
    %v9172 = vld [vmem:[#allocation11 + $0x5d4] sm:$0xf]
    %v9173 = vld [vmem:[#allocation11 + $0x5d8] sm:$0xf]
    %v9174 = vld [vmem:[#allocation11 + $0x5dc] sm:$0xf]
    %v9175 = vld [vmem:[#allocation11 + $0x5e0] sm:$0xf]
    %v9176 = vld [vmem:[#allocation11 + $0x5e4] sm:$0xf]
    %v9177 = vld [vmem:[#allocation11 + $0x5e8] sm:$0xf]
    %v9178 = vld [vmem:[#allocation11 + $0x5ec] sm:$0xf]
    %v9179 = vld [vmem:[#allocation11 + $0x5f0] sm:$0xf]
    %v9180 = vld [vmem:[#allocation11 + $0x5f4] sm:$0xf]
    %v9181 = vld [vmem:[#allocation11 + $0x5f8] sm:$0xf]
    %v9182 = vld [vmem:[#allocation11 + $0x5fc] sm:$0xf]
    %v9183 = vld [vmem:[#allocation11 + $0x600] sm:$0xf]
    %v9184 = vld [vmem:[#allocation11 + $0x604] sm:$0xf]
    %v9185 = vld [vmem:[#allocation11 + $0x608] sm:$0xf]
    %v9186 = vld [vmem:[#allocation11 + $0x60c] sm:$0xf]
    %v9187 = vld [vmem:[#allocation11 + $0x610] sm:$0xf]
    %v9188 = vld [vmem:[#allocation11 + $0x614] sm:$0xf]
    %v9189 = vld [vmem:[#allocation11 + $0x618] sm:$0xf]
    %v9190 = vld [vmem:[#allocation11 + $0x61c] sm:$0xf]
    %v9191 = vld [vmem:[#allocation11 + $0x620] sm:$0xf]
    %v9192 = vld [vmem:[#allocation11 + $0x624] sm:$0xf]
    %v9193 = vld [vmem:[#allocation11 + $0x628] sm:$0xf]
    %v9194 = vld [vmem:[#allocation11 + $0x62c] sm:$0xf]
    %v9195 = vld [vmem:[#allocation11 + $0x630] sm:$0xf]
    %v9196 = vld [vmem:[#allocation11 + $0x634] sm:$0xf]
    %v9197 = vld [vmem:[#allocation11 + $0x638] sm:$0xf]
    %v9198 = vld [vmem:[#allocation11 + $0x63c] sm:$0xf]
    %v9199 = vld [vmem:[#allocation11 + $0x640] sm:$0xf]
    %v9200 = vld [vmem:[#allocation11 + $0x644] sm:$0xf]
    %v9201 = vld [vmem:[#allocation11 + $0x648] sm:$0xf]
    %v9202 = vld [vmem:[#allocation11 + $0x64c] sm:$0xf]
    %v9203 = vld [vmem:[#allocation11 + $0x650] sm:$0xf]
    %v9204 = vld [vmem:[#allocation11 + $0x654] sm:$0xf]
    %v9205 = vld [vmem:[#allocation11 + $0x658] sm:$0xf]
    %v9206 = vld [vmem:[#allocation11 + $0x65c] sm:$0xf]
    %v9207 = vld [vmem:[#allocation11 + $0x660] sm:$0xf]
    %v9208 = vld [vmem:[#allocation11 + $0x664] sm:$0xf]
    %v9209 = vld [vmem:[#allocation11 + $0x668] sm:$0xf]
    %v9210 = vld [vmem:[#allocation11 + $0x66c] sm:$0xf]
    %v9211 = vld [vmem:[#allocation11 + $0x670] sm:$0xf]
    %v9212 = vld [vmem:[#allocation11 + $0x674] sm:$0xf]
    %v9213 = vld [vmem:[#allocation11 + $0x678] sm:$0xf]
    %v9214 = vld [vmem:[#allocation11 + $0x67c] sm:$0xf]
    %v9215 = vld [vmem:[#allocation11 + $0x680] sm:$0xf]
    %v9216 = vld [vmem:[#allocation11 + $0x684] sm:$0xf]
    %v9217 = vld [vmem:[#allocation11 + $0x688] sm:$0xf]
    %v9218 = vld [vmem:[#allocation11 + $0x68c] sm:$0xf]
    %v9219 = vld [vmem:[#allocation11 + $0x690] sm:$0xf]
    %v9220 = vld [vmem:[#allocation11 + $0x694] sm:$0xf]
    %v9221 = vld [vmem:[#allocation11 + $0x698] sm:$0xf]
    %v9222 = vld [vmem:[#allocation11 + $0x69c] sm:$0xf]
    %v9223 = vld [vmem:[#allocation11 + $0x6a0] sm:$0xf]
    %v9224 = vld [vmem:[#allocation11 + $0x6a4] sm:$0xf]
    %v9225 = vld [vmem:[#allocation11 + $0x6a8] sm:$0xf]
    %v9226 = vld [vmem:[#allocation11 + $0x6ac] sm:$0xf]
    %v9227 = vld [vmem:[#allocation11 + $0x6b0] sm:$0xf]
    %v9228 = vld [vmem:[#allocation11 + $0x6b4] sm:$0xf]
    %v9229 = vld [vmem:[#allocation11 + $0x6b8] sm:$0xf]
    %v9230 = vld [vmem:[#allocation11 + $0x6bc] sm:$0xf]
    %v9231 = vld [vmem:[#allocation11 + $0x6c0] sm:$0xf]
    %v9232 = vld [vmem:[#allocation11 + $0x6c4] sm:$0xf]
    %v9233 = vld [vmem:[#allocation11 + $0x6c8] sm:$0xf]
    %v9234 = vld [vmem:[#allocation11 + $0x6cc] sm:$0xf]
    %v9235 = vld [vmem:[#allocation11 + $0x6d0] sm:$0xf]
    %v9236 = vld [vmem:[#allocation11 + $0x6d4] sm:$0xf]
    %v9237 = vld [vmem:[#allocation11 + $0x6d8] sm:$0xf]
    %v9238 = vld [vmem:[#allocation11 + $0x6dc] sm:$0xf]
    %v9239 = vld [vmem:[#allocation11 + $0x6e0] sm:$0xf]
    %v9240 = vld [vmem:[#allocation11 + $0x6e4] sm:$0xf]
    %v9241 = vld [vmem:[#allocation11 + $0x6e8] sm:$0xf]
    %v9242 = vld [vmem:[#allocation11 + $0x6ec] sm:$0xf]
    %v9243 = vld [vmem:[#allocation11 + $0x6f0] sm:$0xf]
    %v9244 = vld [vmem:[#allocation11 + $0x6f4] sm:$0xf]
    %v9245 = vld [vmem:[#allocation11 + $0x6f8] sm:$0xf]
    %v9246 = vld [vmem:[#allocation11 + $0x6fc] sm:$0xf]
    %v9247 = vld [vmem:[#allocation11 + $0x700] sm:$0xf]
    %v9248 = vld [vmem:[#allocation11 + $0x704] sm:$0xf]
    %v9249 = vld [vmem:[#allocation11 + $0x708] sm:$0xf]
    %v9250 = vld [vmem:[#allocation11 + $0x70c] sm:$0xf]
    %v9251 = vld [vmem:[#allocation11 + $0x710] sm:$0xf]
    %v9252 = vld [vmem:[#allocation11 + $0x714] sm:$0xf]
    %v9253 = vld [vmem:[#allocation11 + $0x718] sm:$0xf]
    %v9254 = vld [vmem:[#allocation11 + $0x71c] sm:$0xf]
    %v9255 = vld [vmem:[#allocation11 + $0x720] sm:$0xf]
    %v9256 = vld [vmem:[#allocation11 + $0x724] sm:$0xf]
    %v9257 = vld [vmem:[#allocation11 + $0x728] sm:$0xf]
    %v9258 = vld [vmem:[#allocation11 + $0x72c] sm:$0xf]
    %v9259 = vld [vmem:[#allocation11 + $0x730] sm:$0xf]
    %v9260 = vld [vmem:[#allocation11 + $0x734] sm:$0xf]
    %v9261 = vld [vmem:[#allocation11 + $0x738] sm:$0xf]
    %v9262 = vld [vmem:[#allocation11 + $0x73c] sm:$0xf]
    %v9263 = vld [vmem:[#allocation11 + $0x740] sm:$0xf]
    %v9264 = vld [vmem:[#allocation11 + $0x744] sm:$0xf]
    %v9265 = vld [vmem:[#allocation11 + $0x748] sm:$0xf]
    %v9266 = vld [vmem:[#allocation11 + $0x74c] sm:$0xf]
    %v9267 = vld [vmem:[#allocation11 + $0x750] sm:$0xf]
    %v9268 = vld [vmem:[#allocation11 + $0x754] sm:$0xf]
    %v9269 = vld [vmem:[#allocation11 + $0x758] sm:$0xf]
    %v9270 = vld [vmem:[#allocation11 + $0x75c] sm:$0xf]
    %v9271 = vld [vmem:[#allocation11 + $0x760] sm:$0xf]
    %v9272 = vld [vmem:[#allocation11 + $0x764] sm:$0xf]
    %v9273 = vld [vmem:[#allocation11 + $0x768] sm:$0xf]
    %v9274 = vld [vmem:[#allocation11 + $0x76c] sm:$0xf]
    %v9275 = vld [vmem:[#allocation11 + $0x770] sm:$0xf]
    %v9276 = vld [vmem:[#allocation11 + $0x774] sm:$0xf]
    %v9277 = vld [vmem:[#allocation11 + $0x778] sm:$0xf]
    %v9278 = vld [vmem:[#allocation11 + $0x77c] sm:$0xf]
    %v9279 = vld [vmem:[#allocation11 + $0x780] sm:$0xf]
    %v9280 = vld [vmem:[#allocation11 + $0x784] sm:$0xf]
    %v9281 = vld [vmem:[#allocation11 + $0x788] sm:$0xf]
    %v9282 = vld [vmem:[#allocation11 + $0x78c] sm:$0xf]
    %v9283 = vld [vmem:[#allocation11 + $0x790] sm:$0xf]
    %v9284 = vld [vmem:[#allocation11 + $0x794] sm:$0xf]
    %v9285 = vld [vmem:[#allocation11 + $0x798] sm:$0xf]
    %v9286 = vld [vmem:[#allocation11 + $0x79c] sm:$0xf]
    %v9287 = vld [vmem:[#allocation11 + $0x7a0] sm:$0xf]
    %v9288 = vld [vmem:[#allocation11 + $0x7a4] sm:$0xf]
    %v9289 = vld [vmem:[#allocation11 + $0x7a8] sm:$0xf]
    %v9290 = vld [vmem:[#allocation11 + $0x7ac] sm:$0xf]
    %v9291 = vld [vmem:[#allocation11 + $0x7b0] sm:$0xf]
    %v9292 = vld [vmem:[#allocation11 + $0x7b4] sm:$0xf]
    %v9293 = vld [vmem:[#allocation11 + $0x7b8] sm:$0xf]
    %v9294 = vld [vmem:[#allocation11 + $0x7bc] sm:$0xf]
    %v9295 = vld [vmem:[#allocation11 + $0x7c0] sm:$0xf]
    %v9296 = vld [vmem:[#allocation11 + $0x7c4] sm:$0xf]
    %v9297 = vld [vmem:[#allocation11 + $0x7c8] sm:$0xf]
    %v9298 = vld [vmem:[#allocation11 + $0x7cc] sm:$0xf]
    %v9299 = vld [vmem:[#allocation11 + $0x7d0] sm:$0xf]
    %v9300 = vld [vmem:[#allocation11 + $0x7d4] sm:$0xf]
    %v9301 = vld [vmem:[#allocation11 + $0x7d8] sm:$0xf]
    %v9302 = vld [vmem:[#allocation11 + $0x7dc] sm:$0xf]
    %v9303 = vld [vmem:[#allocation11 + $0x7e0] sm:$0xf]
    %v9304 = vld [vmem:[#allocation11 + $0x7e4] sm:$0xf]
    %v9305 = vld [vmem:[#allocation11 + $0x7e8] sm:$0xf]
    %v9306 = vld [vmem:[#allocation11 + $0x7ec] sm:$0xf]
    %v9307 = vld [vmem:[#allocation11 + $0x7f0] sm:$0xf]
    %v9308 = vld [vmem:[#allocation11 + $0x7f4] sm:$0xf]
    %v9309 = vld [vmem:[#allocation11 + $0x7f8] sm:$0xf]
    %v9310 = vld [vmem:[#allocation11 + $0x7fc] sm:$0xf]
    %v9311 = vld [vmem:[#allocation16 + $0x27] sm:$0x1]
    %v9313 = vlaneseq
    %v9314 = vshrl.u32 %v9313, 7
    %v9315 = vsub.s32 0, %v9314
    %v9316 = vrot.slane %v9311, %v9315
    %v9830 = vunpack.c.l.b16 %v8799
    %v9831 = vunpack.c.l.b16 %v8800
    %v9832 = vunpack.c.l.b16 %v8801
    %v9833 = vunpack.c.l.b16 %v8802
    %v9834 = vunpack.c.l.b16 %v8803
    %v9835 = vunpack.c.l.b16 %v8804
    %v9836 = vunpack.c.l.b16 %v8805
    %v9837 = vunpack.c.l.b16 %v8806
    %v9838 = vunpack.c.l.b16 %v8807
    %v9839 = vunpack.c.l.b16 %v8808
    %v9840 = vunpack.c.l.b16 %v8809
    %v9841 = vunpack.c.l.b16 %v8810
    %v9842 = vunpack.c.l.b16 %v8811
    %v9843 = vunpack.c.l.b16 %v8812
    %v9844 = vunpack.c.l.b16 %v8813
    %v9845 = vunpack.c.l.b16 %v8814
    %v9846 = vunpack.c.l.b16 %v8815
    %v9847 = vunpack.c.l.b16 %v8816
    %v9848 = vunpack.c.l.b16 %v8817
    %v9849 = vunpack.c.l.b16 %v8818
    %v9850 = vunpack.c.l.b16 %v8819
    %v9851 = vunpack.c.l.b16 %v8820
    %v9852 = vunpack.c.l.b16 %v8821
    %v9853 = vunpack.c.l.b16 %v8822
    %v9854 = vunpack.c.l.b16 %v8823
    %v9855 = vunpack.c.l.b16 %v8824
    %v9856 = vunpack.c.l.b16 %v8825
    %v9857 = vunpack.c.l.b16 %v8826
    %v9858 = vunpack.c.l.b16 %v8827
    %v9859 = vunpack.c.l.b16 %v8828
    %v9860 = vunpack.c.l.b16 %v8829
    %v9861 = vunpack.c.l.b16 %v8830
    %v9862 = vunpack.c.l.b16 %v8831
    %v9863 = vunpack.c.l.b16 %v8832
    %v9864 = vunpack.c.l.b16 %v8833
    %v9865 = vunpack.c.l.b16 %v8834
    %v9866 = vunpack.c.l.b16 %v8835
    %v9867 = vunpack.c.l.b16 %v8836
    %v9868 = vunpack.c.l.b16 %v8837
    %v9869 = vunpack.c.l.b16 %v8838
    %v9870 = vunpack.c.l.b16 %v8839
    %v9871 = vunpack.c.l.b16 %v8840
    %v9872 = vunpack.c.l.b16 %v8841
    %v9873 = vunpack.c.l.b16 %v8842
    %v9874 = vunpack.c.l.b16 %v8843
    %v9875 = vunpack.c.l.b16 %v8844
    %v9876 = vunpack.c.l.b16 %v8845
    %v9877 = vunpack.c.l.b16 %v8846
    %v9878 = vunpack.c.l.b16 %v8847
    %v9879 = vunpack.c.l.b16 %v8848
    %v9880 = vunpack.c.l.b16 %v8849
    %v9881 = vunpack.c.l.b16 %v8850
    %v9882 = vunpack.c.l.b16 %v8851
    %v9883 = vunpack.c.l.b16 %v8852
    %v9884 = vunpack.c.l.b16 %v8853
    %v9885 = vunpack.c.l.b16 %v8854
    %v9886 = vunpack.c.l.b16 %v8855
    %v9887 = vunpack.c.l.b16 %v8856
    %v9888 = vunpack.c.l.b16 %v8857
    %v9889 = vunpack.c.l.b16 %v8858
    %v9890 = vunpack.c.l.b16 %v8859
    %v9891 = vunpack.c.l.b16 %v8860
    %v9892 = vunpack.c.l.b16 %v8861
    %v9893 = vunpack.c.l.b16 %v8862
    %v9894 = vunpack.c.l.b16 %v8863
    %v9895 = vunpack.c.l.b16 %v8864
    %v9896 = vunpack.c.l.b16 %v8865
    %v9897 = vunpack.c.l.b16 %v8866
    %v9898 = vunpack.c.l.b16 %v8867
    %v9899 = vunpack.c.l.b16 %v8868
    %v9900 = vunpack.c.l.b16 %v8869
    %v9901 = vunpack.c.l.b16 %v8870
    %v9902 = vunpack.c.l.b16 %v8871
    %v9903 = vunpack.c.l.b16 %v8872
    %v9904 = vunpack.c.l.b16 %v8873
    %v9905 = vunpack.c.l.b16 %v8874
    %v9906 = vunpack.c.l.b16 %v8875
    %v9907 = vunpack.c.l.b16 %v8876
    %v9908 = vunpack.c.l.b16 %v8877
    %v9909 = vunpack.c.l.b16 %v8878
    %v9910 = vunpack.c.l.b16 %v8879
    %v9911 = vunpack.c.l.b16 %v8880
    %v9912 = vunpack.c.l.b16 %v8881
    %v9913 = vunpack.c.l.b16 %v8882
    %v9914 = vunpack.c.l.b16 %v8883
    %v9915 = vunpack.c.l.b16 %v8884
    %v9916 = vunpack.c.l.b16 %v8885
    %v9917 = vunpack.c.l.b16 %v8886
    %v9918 = vunpack.c.l.b16 %v8887
    %v9919 = vunpack.c.l.b16 %v8888
    %v9920 = vunpack.c.l.b16 %v8889
    %v9921 = vunpack.c.l.b16 %v8890
    %v9922 = vunpack.c.l.b16 %v8891
    %v9923 = vunpack.c.l.b16 %v8892
    %v9924 = vunpack.c.l.b16 %v8893
    %v9925 = vunpack.c.l.b16 %v8894
    %v9926 = vunpack.c.l.b16 %v8895
    %v9927 = vunpack.c.l.b16 %v8896
    %v9928 = vunpack.c.l.b16 %v8897
    %v9929 = vunpack.c.l.b16 %v8898
    %v9930 = vunpack.c.l.b16 %v8899
    %v9931 = vunpack.c.l.b16 %v8900
    %v9932 = vunpack.c.l.b16 %v8901
    %v9933 = vunpack.c.l.b16 %v8902
    %v9934 = vunpack.c.l.b16 %v8903
    %v9935 = vunpack.c.l.b16 %v8904
    %v9936 = vunpack.c.l.b16 %v8905
    %v9937 = vunpack.c.l.b16 %v8906
    %v9938 = vunpack.c.l.b16 %v8907
    %v9939 = vunpack.c.l.b16 %v8908
    %v9940 = vunpack.c.l.b16 %v8909
    %v9941 = vunpack.c.l.b16 %v8910
    %v9942 = vunpack.c.l.b16 %v8911
    %v9943 = vunpack.c.l.b16 %v8912
    %v9944 = vunpack.c.l.b16 %v8913
    %v9945 = vunpack.c.l.b16 %v8914
    %v9946 = vunpack.c.l.b16 %v8915
    %v9947 = vunpack.c.l.b16 %v8916
    %v9948 = vunpack.c.l.b16 %v8917
    %v9949 = vunpack.c.l.b16 %v8918
    %v9950 = vunpack.c.l.b16 %v8919
    %v9951 = vunpack.c.l.b16 %v8920
    %v9952 = vunpack.c.l.b16 %v8921
    %v9953 = vunpack.c.l.b16 %v8922
    %v9954 = vunpack.c.l.b16 %v8923
    %v9955 = vunpack.c.l.b16 %v8924
    %v9956 = vunpack.c.l.b16 %v8925
    %v9957 = vunpack.c.l.b16 %v8926
    %v9958 = vunpack.c.l.b16 %v8927
    %v9959 = vunpack.c.l.b16 %v8928
    %v9960 = vunpack.c.l.b16 %v8929
    %v9961 = vunpack.c.l.b16 %v8930
    %v9962 = vunpack.c.l.b16 %v8931
    %v9963 = vunpack.c.l.b16 %v8932
    %v9964 = vunpack.c.l.b16 %v8933
    %v9965 = vunpack.c.l.b16 %v8934
    %v9966 = vunpack.c.l.b16 %v8935
    %v9967 = vunpack.c.l.b16 %v8936
    %v9968 = vunpack.c.l.b16 %v8937
    %v9969 = vunpack.c.l.b16 %v8938
    %v9970 = vunpack.c.l.b16 %v8939
    %v9971 = vunpack.c.l.b16 %v8940
    %v9972 = vunpack.c.l.b16 %v8941
    %v9973 = vunpack.c.l.b16 %v8942
    %v9974 = vunpack.c.l.b16 %v8943
    %v9975 = vunpack.c.l.b16 %v8944
    %v9976 = vunpack.c.l.b16 %v8945
    %v9977 = vunpack.c.l.b16 %v8946
    %v9978 = vunpack.c.l.b16 %v8947
    %v9979 = vunpack.c.l.b16 %v8948
    %v9980 = vunpack.c.l.b16 %v8949
    %v9981 = vunpack.c.l.b16 %v8950
    %v9982 = vunpack.c.l.b16 %v8951
    %v9983 = vunpack.c.l.b16 %v8952
    %v9984 = vunpack.c.l.b16 %v8953
    %v9985 = vunpack.c.l.b16 %v8954
    %v9986 = vunpack.c.l.b16 %v8955
    %v9987 = vunpack.c.l.b16 %v8956
    %v9988 = vunpack.c.l.b16 %v8957
    %v9989 = vunpack.c.l.b16 %v8958
    %v9990 = vunpack.c.l.b16 %v8959
    %v9991 = vunpack.c.l.b16 %v8960
    %v9992 = vunpack.c.l.b16 %v8961
    %v9993 = vunpack.c.l.b16 %v8962
    %v9994 = vunpack.c.l.b16 %v8963
    %v9995 = vunpack.c.l.b16 %v8964
    %v9996 = vunpack.c.l.b16 %v8965
    %v9997 = vunpack.c.l.b16 %v8966
    %v9998 = vunpack.c.l.b16 %v8967
    %v9999 = vunpack.c.l.b16 %v8968
    %v10000 = vunpack.c.l.b16 %v8969
    %v10001 = vunpack.c.l.b16 %v8970
    %v10002 = vunpack.c.l.b16 %v8971
    %v10003 = vunpack.c.l.b16 %v8972
    %v10004 = vunpack.c.l.b16 %v8973
    %v10005 = vunpack.c.l.b16 %v8974
    %v10006 = vunpack.c.l.b16 %v8975
    %v10007 = vunpack.c.l.b16 %v8976
    %v10008 = vunpack.c.l.b16 %v8977
    %v10009 = vunpack.c.l.b16 %v8978
    %v10010 = vunpack.c.l.b16 %v8979
    %v10011 = vunpack.c.l.b16 %v8980
    %v10012 = vunpack.c.l.b16 %v8981
    %v10013 = vunpack.c.l.b16 %v8982
    %v10014 = vunpack.c.l.b16 %v8983
    %v10015 = vunpack.c.l.b16 %v8984
    %v10016 = vunpack.c.l.b16 %v8985
    %v10017 = vunpack.c.l.b16 %v8986
    %v10018 = vunpack.c.l.b16 %v8987
    %v10019 = vunpack.c.l.b16 %v8988
    %v10020 = vunpack.c.l.b16 %v8989
    %v10021 = vunpack.c.l.b16 %v8990
    %v10022 = vunpack.c.l.b16 %v8991
    %v10023 = vunpack.c.l.b16 %v8992
    %v10024 = vunpack.c.l.b16 %v8993
    %v10025 = vunpack.c.l.b16 %v8994
    %v10026 = vunpack.c.l.b16 %v8995
    %v10027 = vunpack.c.l.b16 %v8996
    %v10028 = vunpack.c.l.b16 %v8997
    %v10029 = vunpack.c.l.b16 %v8998
    %v10030 = vunpack.c.l.b16 %v8999
    %v10031 = vunpack.c.l.b16 %v9000
    %v10032 = vunpack.c.l.b16 %v9001
    %v10033 = vunpack.c.l.b16 %v9002
    %v10034 = vunpack.c.l.b16 %v9003
    %v10035 = vunpack.c.l.b16 %v9004
    %v10036 = vunpack.c.l.b16 %v9005
    %v10037 = vunpack.c.l.b16 %v9006
    %v10038 = vunpack.c.l.b16 %v9007
    %v10039 = vunpack.c.l.b16 %v9008
    %v10040 = vunpack.c.l.b16 %v9009
    %v10041 = vunpack.c.l.b16 %v9010
    %v10042 = vunpack.c.l.b16 %v9011
    %v10043 = vunpack.c.l.b16 %v9012
    %v10044 = vunpack.c.l.b16 %v9013
    %v10045 = vunpack.c.l.b16 %v9014
    %v10046 = vunpack.c.l.b16 %v9015
    %v10047 = vunpack.c.l.b16 %v9016
    %v10048 = vunpack.c.l.b16 %v9017
    %v10049 = vunpack.c.l.b16 %v9018
    %v10050 = vunpack.c.l.b16 %v9019
    %v10051 = vunpack.c.l.b16 %v9020
    %v10052 = vunpack.c.l.b16 %v9021
    %v10053 = vunpack.c.l.b16 %v9022
    %v10054 = vunpack.c.l.b16 %v9023
    %v10055 = vunpack.c.l.b16 %v9024
    %v10056 = vunpack.c.l.b16 %v9025
    %v10057 = vunpack.c.l.b16 %v9026
    %v10058 = vunpack.c.l.b16 %v9027
    %v10059 = vunpack.c.l.b16 %v9028
    %v10060 = vunpack.c.l.b16 %v9029
    %v10061 = vunpack.c.l.b16 %v9030
    %v10062 = vunpack.c.l.b16 %v9031
    %v10063 = vunpack.c.l.b16 %v9032
    %v10064 = vunpack.c.l.b16 %v9033
    %v10065 = vunpack.c.l.b16 %v9034
    %v10066 = vunpack.c.l.b16 %v9035
    %v10067 = vunpack.c.l.b16 %v9036
    %v10068 = vunpack.c.l.b16 %v9037
    %v10069 = vunpack.c.l.b16 %v9038
    %v10070 = vunpack.c.l.b16 %v9039
    %v10071 = vunpack.c.l.b16 %v9040
    %v10072 = vunpack.c.l.b16 %v9041
    %v10073 = vunpack.c.l.b16 %v9042
    %v10074 = vunpack.c.l.b16 %v9043
    %v10075 = vunpack.c.l.b16 %v9044
    %v10076 = vunpack.c.l.b16 %v9045
    %v10077 = vunpack.c.l.b16 %v9046
    %v10078 = vunpack.c.l.b16 %v9047
    %v10079 = vunpack.c.l.b16 %v9048
    %v10080 = vunpack.c.l.b16 %v9049
    %v10081 = vunpack.c.l.b16 %v9050
    %v10082 = vunpack.c.l.b16 %v9051
    %v10083 = vunpack.c.l.b16 %v9052
    %v10084 = vunpack.c.l.b16 %v9053
    %v10085 = vunpack.c.l.b16 %v9054
    %v10086 = vunpack.c.l.b16 %v9055
    %v10087 = vunpack.c.l.b16 %v9056
    %v10088 = vunpack.c.l.b16 %v9057
    %v10089 = vunpack.c.l.b16 %v9058
    %v10090 = vunpack.c.l.b16 %v9059
    %v10091 = vunpack.c.l.b16 %v9060
    %v10092 = vunpack.c.l.b16 %v9061
    %v10093 = vunpack.c.l.b16 %v9062
    %v10094 = vunpack.c.l.b16 %v9063
    %v10095 = vunpack.c.l.b16 %v9064
    %v10096 = vunpack.c.l.b16 %v9065
    %v10097 = vunpack.c.l.b16 %v9066
    %v10098 = vunpack.c.l.b16 %v9067
    %v10099 = vunpack.c.l.b16 %v9068
    %v10100 = vunpack.c.l.b16 %v9069
    %v10101 = vunpack.c.l.b16 %v9070
    %v10102 = vunpack.c.l.b16 %v9071
    %v10103 = vunpack.c.l.b16 %v9072
    %v10104 = vunpack.c.l.b16 %v9073
    %v10105 = vunpack.c.l.b16 %v9074
    %v10106 = vunpack.c.l.b16 %v9075
    %v10107 = vunpack.c.l.b16 %v9076
    %v10108 = vunpack.c.l.b16 %v9077
    %v10109 = vunpack.c.l.b16 %v9078
    %v10110 = vunpack.c.l.b16 %v9079
    %v10111 = vunpack.c.l.b16 %v9080
    %v10112 = vunpack.c.l.b16 %v9081
    %v10113 = vunpack.c.l.b16 %v9082
    %v10114 = vunpack.c.l.b16 %v9083
    %v10115 = vunpack.c.l.b16 %v9084
    %v10116 = vunpack.c.l.b16 %v9085
    %v10117 = vunpack.c.l.b16 %v9086
    %v10118 = vunpack.c.l.b16 %v9087
    %v10119 = vunpack.c.l.b16 %v9088
    %v10120 = vunpack.c.l.b16 %v9089
    %v10121 = vunpack.c.l.b16 %v9090
    %v10122 = vunpack.c.l.b16 %v9091
    %v10123 = vunpack.c.l.b16 %v9092
    %v10124 = vunpack.c.l.b16 %v9093
    %v10125 = vunpack.c.l.b16 %v9094
    %v10126 = vunpack.c.l.b16 %v9095
    %v10127 = vunpack.c.l.b16 %v9096
    %v10128 = vunpack.c.l.b16 %v9097
    %v10129 = vunpack.c.l.b16 %v9098
    %v10130 = vunpack.c.l.b16 %v9099
    %v10131 = vunpack.c.l.b16 %v9100
    %v10132 = vunpack.c.l.b16 %v9101
    %v10133 = vunpack.c.l.b16 %v9102
    %v10134 = vunpack.c.l.b16 %v9103
    %v10135 = vunpack.c.l.b16 %v9104
    %v10136 = vunpack.c.l.b16 %v9105
    %v10137 = vunpack.c.l.b16 %v9106
    %v10138 = vunpack.c.l.b16 %v9107
    %v10139 = vunpack.c.l.b16 %v9108
    %v10140 = vunpack.c.l.b16 %v9109
    %v10141 = vunpack.c.l.b16 %v9110
    %v10142 = vunpack.c.l.b16 %v9111
    %v10143 = vunpack.c.l.b16 %v9112
    %v10144 = vunpack.c.l.b16 %v9113
    %v10145 = vunpack.c.l.b16 %v9114
    %v10146 = vunpack.c.l.b16 %v9115
    %v10147 = vunpack.c.l.b16 %v9116
    %v10148 = vunpack.c.l.b16 %v9117
    %v10149 = vunpack.c.l.b16 %v9118
    %v10150 = vunpack.c.l.b16 %v9119
    %v10151 = vunpack.c.l.b16 %v9120
    %v10152 = vunpack.c.l.b16 %v9121
    %v10153 = vunpack.c.l.b16 %v9122
    %v10154 = vunpack.c.l.b16 %v9123
    %v10155 = vunpack.c.l.b16 %v9124
    %v10156 = vunpack.c.l.b16 %v9125
    %v10157 = vunpack.c.l.b16 %v9126
    %v10158 = vunpack.c.l.b16 %v9127
    %v10159 = vunpack.c.l.b16 %v9128
    %v10160 = vunpack.c.l.b16 %v9129
    %v10161 = vunpack.c.l.b16 %v9130
    %v10162 = vunpack.c.l.b16 %v9131
    %v10163 = vunpack.c.l.b16 %v9132
    %v10164 = vunpack.c.l.b16 %v9133
    %v10165 = vunpack.c.l.b16 %v9134
    %v10166 = vunpack.c.l.b16 %v9135
    %v10167 = vunpack.c.l.b16 %v9136
    %v10168 = vunpack.c.l.b16 %v9137
    %v10169 = vunpack.c.l.b16 %v9138
    %v10170 = vunpack.c.l.b16 %v9139
    %v10171 = vunpack.c.l.b16 %v9140
    %v10172 = vunpack.c.l.b16 %v9141
    %v10173 = vunpack.c.l.b16 %v9142
    %v10174 = vunpack.c.l.b16 %v9143
    %v10175 = vunpack.c.l.b16 %v9144
    %v10176 = vunpack.c.l.b16 %v9145
    %v10177 = vunpack.c.l.b16 %v9146
    %v10178 = vunpack.c.l.b16 %v9147
    %v10179 = vunpack.c.l.b16 %v9148
    %v10180 = vunpack.c.l.b16 %v9149
    %v10181 = vunpack.c.l.b16 %v9150
    %v10182 = vunpack.c.l.b16 %v9151
    %v10183 = vunpack.c.l.b16 %v9152
    %v10184 = vunpack.c.l.b16 %v9153
    %v10185 = vunpack.c.l.b16 %v9154
    %v10186 = vunpack.c.l.b16 %v9155
    %v10187 = vunpack.c.l.b16 %v9156
    %v10188 = vunpack.c.l.b16 %v9157
    %v10189 = vunpack.c.l.b16 %v9158
    %v10190 = vunpack.c.l.b16 %v9159
    %v10191 = vunpack.c.l.b16 %v9160
    %v10192 = vunpack.c.l.b16 %v9161
    %v10193 = vunpack.c.l.b16 %v9162
    %v10194 = vunpack.c.l.b16 %v9163
    %v10195 = vunpack.c.l.b16 %v9164
    %v10196 = vunpack.c.l.b16 %v9165
    %v10197 = vunpack.c.l.b16 %v9166
    %v10198 = vunpack.c.l.b16 %v9167
    %v10199 = vunpack.c.l.b16 %v9168
    %v10200 = vunpack.c.l.b16 %v9169
    %v10201 = vunpack.c.l.b16 %v9170
    %v10202 = vunpack.c.l.b16 %v9171
    %v10203 = vunpack.c.l.b16 %v9172
    %v10204 = vunpack.c.l.b16 %v9173
    %v10205 = vunpack.c.l.b16 %v9174
    %v10206 = vunpack.c.l.b16 %v9175
    %v10207 = vunpack.c.l.b16 %v9176
    %v10208 = vunpack.c.l.b16 %v9177
    %v10209 = vunpack.c.l.b16 %v9178
    %v10210 = vunpack.c.l.b16 %v9179
    %v10211 = vunpack.c.l.b16 %v9180
    %v10212 = vunpack.c.l.b16 %v9181
    %v10213 = vunpack.c.l.b16 %v9182
    %v10214 = vunpack.c.l.b16 %v9183
    %v10215 = vunpack.c.l.b16 %v9184
    %v10216 = vunpack.c.l.b16 %v9185
    %v10217 = vunpack.c.l.b16 %v9186
    %v10218 = vunpack.c.l.b16 %v9187
    %v10219 = vunpack.c.l.b16 %v9188
    %v10220 = vunpack.c.l.b16 %v9189
    %v10221 = vunpack.c.l.b16 %v9190
    %v10222 = vunpack.c.l.b16 %v9191
    %v10223 = vunpack.c.l.b16 %v9192
    %v10224 = vunpack.c.l.b16 %v9193
    %v10225 = vunpack.c.l.b16 %v9194
    %v10226 = vunpack.c.l.b16 %v9195
    %v10227 = vunpack.c.l.b16 %v9196
    %v10228 = vunpack.c.l.b16 %v9197
    %v10229 = vunpack.c.l.b16 %v9198
    %v10230 = vunpack.c.l.b16 %v9199
    %v10231 = vunpack.c.l.b16 %v9200
    %v10232 = vunpack.c.l.b16 %v9201
    %v10233 = vunpack.c.l.b16 %v9202
    %v10234 = vunpack.c.l.b16 %v9203
    %v10235 = vunpack.c.l.b16 %v9204
    %v10236 = vunpack.c.l.b16 %v9205
    %v10237 = vunpack.c.l.b16 %v9206
    %v10238 = vunpack.c.l.b16 %v9207
    %v10239 = vunpack.c.l.b16 %v9208
    %v10240 = vunpack.c.l.b16 %v9209
    %v10241 = vunpack.c.l.b16 %v9210
    %v10242 = vunpack.c.l.b16 %v9211
    %v10243 = vunpack.c.l.b16 %v9212
    %v10244 = vunpack.c.l.b16 %v9213
    %v10245 = vunpack.c.l.b16 %v9214
    %v10246 = vunpack.c.l.b16 %v9215
    %v10247 = vunpack.c.l.b16 %v9216
    %v10248 = vunpack.c.l.b16 %v9217
    %v10249 = vunpack.c.l.b16 %v9218
    %v10250 = vunpack.c.l.b16 %v9219
    %v10251 = vunpack.c.l.b16 %v9220
    %v10252 = vunpack.c.l.b16 %v9221
    %v10253 = vunpack.c.l.b16 %v9222
    %v10254 = vunpack.c.l.b16 %v9223
    %v10255 = vunpack.c.l.b16 %v9224
    %v10256 = vunpack.c.l.b16 %v9225
    %v10257 = vunpack.c.l.b16 %v9226
    %v10258 = vunpack.c.l.b16 %v9227
    %v10259 = vunpack.c.l.b16 %v9228
    %v10260 = vunpack.c.l.b16 %v9229
    %v10261 = vunpack.c.l.b16 %v9230
    %v10262 = vunpack.c.l.b16 %v9231
    %v10263 = vunpack.c.l.b16 %v9232
    %v10264 = vunpack.c.l.b16 %v9233
    %v10265 = vunpack.c.l.b16 %v9234
    %v10266 = vunpack.c.l.b16 %v9235
    %v10267 = vunpack.c.l.b16 %v9236
    %v10268 = vunpack.c.l.b16 %v9237
    %v10269 = vunpack.c.l.b16 %v9238
    %v10270 = vunpack.c.l.b16 %v9239
    %v10271 = vunpack.c.l.b16 %v9240
    %v10272 = vunpack.c.l.b16 %v9241
    %v10273 = vunpack.c.l.b16 %v9242
    %v10274 = vunpack.c.l.b16 %v9243
    %v10275 = vunpack.c.l.b16 %v9244
    %v10276 = vunpack.c.l.b16 %v9245
    %v10277 = vunpack.c.l.b16 %v9246
    %v10278 = vunpack.c.l.b16 %v9247
    %v10279 = vunpack.c.l.b16 %v9248
    %v10280 = vunpack.c.l.b16 %v9249
    %v10281 = vunpack.c.l.b16 %v9250
    %v10282 = vunpack.c.l.b16 %v9251
    %v10283 = vunpack.c.l.b16 %v9252
    %v10284 = vunpack.c.l.b16 %v9253
    %v10285 = vunpack.c.l.b16 %v9254
    %v10286 = vunpack.c.l.b16 %v9255
    %v10287 = vunpack.c.l.b16 %v9256
    %v10288 = vunpack.c.l.b16 %v9257
    %v10289 = vunpack.c.l.b16 %v9258
    %v10290 = vunpack.c.l.b16 %v9259
    %v10291 = vunpack.c.l.b16 %v9260
    %v10292 = vunpack.c.l.b16 %v9261
    %v10293 = vunpack.c.l.b16 %v9262
    %v10294 = vunpack.c.l.b16 %v9263
    %v10295 = vunpack.c.l.b16 %v9264
    %v10296 = vunpack.c.l.b16 %v9265
    %v10297 = vunpack.c.l.b16 %v9266
    %v10298 = vunpack.c.l.b16 %v9267
    %v10299 = vunpack.c.l.b16 %v9268
    %v10300 = vunpack.c.l.b16 %v9269
    %v10301 = vunpack.c.l.b16 %v9270
    %v10302 = vunpack.c.l.b16 %v9271
    %v10303 = vunpack.c.l.b16 %v9272
    %v10304 = vunpack.c.l.b16 %v9273
    %v10305 = vunpack.c.l.b16 %v9274
    %v10306 = vunpack.c.l.b16 %v9275
    %v10307 = vunpack.c.l.b16 %v9276
    %v10308 = vunpack.c.l.b16 %v9277
    %v10309 = vunpack.c.l.b16 %v9278
    %v10310 = vunpack.c.l.b16 %v9279
    %v10311 = vunpack.c.l.b16 %v9280
    %v10312 = vunpack.c.l.b16 %v9281
    %v10313 = vunpack.c.l.b16 %v9282
    %v10314 = vunpack.c.l.b16 %v9283
    %v10315 = vunpack.c.l.b16 %v9284
    %v10316 = vunpack.c.l.b16 %v9285
    %v10317 = vunpack.c.l.b16 %v9286
    %v10318 = vunpack.c.l.b16 %v9287
    %v10319 = vunpack.c.l.b16 %v9288
    %v10320 = vunpack.c.l.b16 %v9289
    %v10321 = vunpack.c.l.b16 %v9290
    %v10322 = vunpack.c.l.b16 %v9291
    %v10323 = vunpack.c.l.b16 %v9292
    %v10324 = vunpack.c.l.b16 %v9293
    %v10325 = vunpack.c.l.b16 %v9294
    %v10326 = vunpack.c.l.b16 %v9295
    %v10327 = vunpack.c.l.b16 %v9296
    %v10328 = vunpack.c.l.b16 %v9297
    %v10329 = vunpack.c.l.b16 %v9298
    %v10330 = vunpack.c.l.b16 %v9299
    %v10331 = vunpack.c.l.b16 %v9300
    %v10332 = vunpack.c.l.b16 %v9301
    %v10333 = vunpack.c.l.b16 %v9302
    %v10334 = vunpack.c.l.b16 %v9303
    %v10335 = vunpack.c.l.b16 %v9304
    %v10336 = vunpack.c.l.b16 %v9305
    %v10337 = vunpack.c.l.b16 %v9306
    %v10338 = vunpack.c.l.b16 %v9307
    %v10339 = vunpack.c.l.b16 %v9308
    %v10340 = vunpack.c.l.b16 %v9309
    %v10341 = vunpack.c.l.b16 %v9310
    %v10342 = vpack.c.b16 %v9831, %v9830
    %v10343 = vpack.c.b16 %v9833, %v9832
    %v10344 = vpack.c.b16 %v9835, %v9834
    %v10345 = vpack.c.b16 %v9837, %v9836
    %v10346 = vpack.c.b16 %v9839, %v9838
    %v10347 = vpack.c.b16 %v9841, %v9840
    %v10348 = vpack.c.b16 %v9843, %v9842
    %v10349 = vpack.c.b16 %v9845, %v9844
    %v10350 = vpack.c.b16 %v9847, %v9846
    %v10351 = vpack.c.b16 %v9849, %v9848
    %v10352 = vpack.c.b16 %v9851, %v9850
    %v10353 = vpack.c.b16 %v9853, %v9852
    %v10354 = vpack.c.b16 %v9855, %v9854
    %v10355 = vpack.c.b16 %v9857, %v9856
    %v10356 = vpack.c.b16 %v9859, %v9858
    %v10357 = vpack.c.b16 %v9861, %v9860
    %v10358 = vpack.c.b16 %v9863, %v9862
    %v10359 = vpack.c.b16 %v9865, %v9864
    %v10360 = vpack.c.b16 %v9867, %v9866
    %v10361 = vpack.c.b16 %v9869, %v9868
    %v10362 = vpack.c.b16 %v9871, %v9870
    %v10363 = vpack.c.b16 %v9873, %v9872
    %v10364 = vpack.c.b16 %v9875, %v9874
    %v10365 = vpack.c.b16 %v9877, %v9876
    %v10366 = vpack.c.b16 %v9879, %v9878
    %v10367 = vpack.c.b16 %v9881, %v9880
    %v10368 = vpack.c.b16 %v9883, %v9882
    %v10369 = vpack.c.b16 %v9885, %v9884
    %v10370 = vpack.c.b16 %v9887, %v9886
    %v10371 = vpack.c.b16 %v9889, %v9888
    %v10372 = vpack.c.b16 %v9891, %v9890
    %v10373 = vpack.c.b16 %v9893, %v9892
    %v10374 = vpack.c.b16 %v9895, %v9894
    %v10375 = vpack.c.b16 %v9897, %v9896
    %v10376 = vpack.c.b16 %v9899, %v9898
    %v10377 = vpack.c.b16 %v9901, %v9900
    %v10378 = vpack.c.b16 %v9903, %v9902
    %v10379 = vpack.c.b16 %v9905, %v9904
    %v10380 = vpack.c.b16 %v9907, %v9906
    %v10381 = vpack.c.b16 %v9909, %v9908
    %v10382 = vpack.c.b16 %v9911, %v9910
    %v10383 = vpack.c.b16 %v9913, %v9912
    %v10384 = vpack.c.b16 %v9915, %v9914
    %v10385 = vpack.c.b16 %v9917, %v9916
    %v10386 = vpack.c.b16 %v9919, %v9918
    %v10387 = vpack.c.b16 %v9921, %v9920
    %v10388 = vpack.c.b16 %v9923, %v9922
    %v10389 = vpack.c.b16 %v9925, %v9924
    %v10390 = vpack.c.b16 %v9927, %v9926
    %v10391 = vpack.c.b16 %v9929, %v9928
    %v10392 = vpack.c.b16 %v9931, %v9930
    %v10393 = vpack.c.b16 %v9933, %v9932
    %v10394 = vpack.c.b16 %v9935, %v9934
    %v10395 = vpack.c.b16 %v9937, %v9936
    %v10396 = vpack.c.b16 %v9939, %v9938
    %v10397 = vpack.c.b16 %v9941, %v9940
    %v10398 = vpack.c.b16 %v9943, %v9942
    %v10399 = vpack.c.b16 %v9945, %v9944
    %v10400 = vpack.c.b16 %v9947, %v9946
    %v10401 = vpack.c.b16 %v9949, %v9948
    %v10402 = vpack.c.b16 %v9951, %v9950
    %v10403 = vpack.c.b16 %v9953, %v9952
    %v10404 = vpack.c.b16 %v9955, %v9954
    %v10405 = vpack.c.b16 %v9957, %v9956
    %v10406 = vpack.c.b16 %v9959, %v9958
    %v10407 = vpack.c.b16 %v9961, %v9960
    %v10408 = vpack.c.b16 %v9963, %v9962
    %v10409 = vpack.c.b16 %v9965, %v9964
    %v10410 = vpack.c.b16 %v9967, %v9966
    %v10411 = vpack.c.b16 %v9969, %v9968
    %v10412 = vpack.c.b16 %v9971, %v9970
    %v10413 = vpack.c.b16 %v9973, %v9972
    %v10414 = vpack.c.b16 %v9975, %v9974
    %v10415 = vpack.c.b16 %v9977, %v9976
    %v10416 = vpack.c.b16 %v9979, %v9978
    %v10417 = vpack.c.b16 %v9981, %v9980
    %v10418 = vpack.c.b16 %v9983, %v9982
    %v10419 = vpack.c.b16 %v9985, %v9984
    %v10420 = vpack.c.b16 %v9987, %v9986
    %v10421 = vpack.c.b16 %v9989, %v9988
    %v10422 = vpack.c.b16 %v9991, %v9990
    %v10423 = vpack.c.b16 %v9993, %v9992
    %v10424 = vpack.c.b16 %v9995, %v9994
    %v10425 = vpack.c.b16 %v9997, %v9996
    %v10426 = vpack.c.b16 %v9999, %v9998
    %v10427 = vpack.c.b16 %v10001, %v10000
    %v10428 = vpack.c.b16 %v10003, %v10002
    %v10429 = vpack.c.b16 %v10005, %v10004
    %v10430 = vpack.c.b16 %v10007, %v10006
    %v10431 = vpack.c.b16 %v10009, %v10008
    %v10432 = vpack.c.b16 %v10011, %v10010
    %v10433 = vpack.c.b16 %v10013, %v10012
    %v10434 = vpack.c.b16 %v10015, %v10014
    %v10435 = vpack.c.b16 %v10017, %v10016
    %v10436 = vpack.c.b16 %v10019, %v10018
    %v10437 = vpack.c.b16 %v10021, %v10020
    %v10438 = vpack.c.b16 %v10023, %v10022
    %v10439 = vpack.c.b16 %v10025, %v10024
    %v10440 = vpack.c.b16 %v10027, %v10026
    %v10441 = vpack.c.b16 %v10029, %v10028
    %v10442 = vpack.c.b16 %v10031, %v10030
    %v10443 = vpack.c.b16 %v10033, %v10032
    %v10444 = vpack.c.b16 %v10035, %v10034
    %v10445 = vpack.c.b16 %v10037, %v10036
    %v10446 = vpack.c.b16 %v10039, %v10038
    %v10447 = vpack.c.b16 %v10041, %v10040
    %v10448 = vpack.c.b16 %v10043, %v10042
    %v10449 = vpack.c.b16 %v10045, %v10044
    %v10450 = vpack.c.b16 %v10047, %v10046
    %v10451 = vpack.c.b16 %v10049, %v10048
    %v10452 = vpack.c.b16 %v10051, %v10050
    %v10453 = vpack.c.b16 %v10053, %v10052
    %v10454 = vpack.c.b16 %v10055, %v10054
    %v10455 = vpack.c.b16 %v10057, %v10056
    %v10456 = vpack.c.b16 %v10059, %v10058
    %v10457 = vpack.c.b16 %v10061, %v10060
    %v10458 = vpack.c.b16 %v10063, %v10062
    %v10459 = vpack.c.b16 %v10065, %v10064
    %v10460 = vpack.c.b16 %v10067, %v10066
    %v10461 = vpack.c.b16 %v10069, %v10068
    %v10462 = vpack.c.b16 %v10071, %v10070
    %v10463 = vpack.c.b16 %v10073, %v10072
    %v10464 = vpack.c.b16 %v10075, %v10074
    %v10465 = vpack.c.b16 %v10077, %v10076
    %v10466 = vpack.c.b16 %v10079, %v10078
    %v10467 = vpack.c.b16 %v10081, %v10080
    %v10468 = vpack.c.b16 %v10083, %v10082
    %v10469 = vpack.c.b16 %v10085, %v10084
    %v10470 = vpack.c.b16 %v10087, %v10086
    %v10471 = vpack.c.b16 %v10089, %v10088
    %v10472 = vpack.c.b16 %v10091, %v10090
    %v10473 = vpack.c.b16 %v10093, %v10092
    %v10474 = vpack.c.b16 %v10095, %v10094
    %v10475 = vpack.c.b16 %v10097, %v10096
    %v10476 = vpack.c.b16 %v10099, %v10098
    %v10477 = vpack.c.b16 %v10101, %v10100
    %v10478 = vpack.c.b16 %v10103, %v10102
    %v10479 = vpack.c.b16 %v10105, %v10104
    %v10480 = vpack.c.b16 %v10107, %v10106
    %v10481 = vpack.c.b16 %v10109, %v10108
    %v10482 = vpack.c.b16 %v10111, %v10110
    %v10483 = vpack.c.b16 %v10113, %v10112
    %v10484 = vpack.c.b16 %v10115, %v10114
    %v10485 = vpack.c.b16 %v10117, %v10116
    %v10486 = vpack.c.b16 %v10119, %v10118
    %v10487 = vpack.c.b16 %v10121, %v10120
    %v10488 = vpack.c.b16 %v10123, %v10122
    %v10489 = vpack.c.b16 %v10125, %v10124
    %v10490 = vpack.c.b16 %v10127, %v10126
    %v10491 = vpack.c.b16 %v10129, %v10128
    %v10492 = vpack.c.b16 %v10131, %v10130
    %v10493 = vpack.c.b16 %v10133, %v10132
    %v10494 = vpack.c.b16 %v10135, %v10134
    %v10495 = vpack.c.b16 %v10137, %v10136
    %v10496 = vpack.c.b16 %v10139, %v10138
    %v10497 = vpack.c.b16 %v10141, %v10140
    %v10498 = vpack.c.b16 %v10143, %v10142
    %v10499 = vpack.c.b16 %v10145, %v10144
    %v10500 = vpack.c.b16 %v10147, %v10146
    %v10501 = vpack.c.b16 %v10149, %v10148
    %v10502 = vpack.c.b16 %v10151, %v10150
    %v10503 = vpack.c.b16 %v10153, %v10152
    %v10504 = vpack.c.b16 %v10155, %v10154
    %v10505 = vpack.c.b16 %v10157, %v10156
    %v10506 = vpack.c.b16 %v10159, %v10158
    %v10507 = vpack.c.b16 %v10161, %v10160
    %v10508 = vpack.c.b16 %v10163, %v10162
    %v10509 = vpack.c.b16 %v10165, %v10164
    %v10510 = vpack.c.b16 %v10167, %v10166
    %v10511 = vpack.c.b16 %v10169, %v10168
    %v10512 = vpack.c.b16 %v10171, %v10170
    %v10513 = vpack.c.b16 %v10173, %v10172
    %v10514 = vpack.c.b16 %v10175, %v10174
    %v10515 = vpack.c.b16 %v10177, %v10176
    %v10516 = vpack.c.b16 %v10179, %v10178
    %v10517 = vpack.c.b16 %v10181, %v10180
    %v10518 = vpack.c.b16 %v10183, %v10182
    %v10519 = vpack.c.b16 %v10185, %v10184
    %v10520 = vpack.c.b16 %v10187, %v10186
    %v10521 = vpack.c.b16 %v10189, %v10188
    %v10522 = vpack.c.b16 %v10191, %v10190
    %v10523 = vpack.c.b16 %v10193, %v10192
    %v10524 = vpack.c.b16 %v10195, %v10194
    %v10525 = vpack.c.b16 %v10197, %v10196
    %v10526 = vpack.c.b16 %v10199, %v10198
    %v10527 = vpack.c.b16 %v10201, %v10200
    %v10528 = vpack.c.b16 %v10203, %v10202
    %v10529 = vpack.c.b16 %v10205, %v10204
    %v10530 = vpack.c.b16 %v10207, %v10206
    %v10531 = vpack.c.b16 %v10209, %v10208
    %v10532 = vpack.c.b16 %v10211, %v10210
    %v10533 = vpack.c.b16 %v10213, %v10212
    %v10534 = vpack.c.b16 %v10215, %v10214
    %v10535 = vpack.c.b16 %v10217, %v10216
    %v10536 = vpack.c.b16 %v10219, %v10218
    %v10537 = vpack.c.b16 %v10221, %v10220
    %v10538 = vpack.c.b16 %v10223, %v10222
    %v10539 = vpack.c.b16 %v10225, %v10224
    %v10540 = vpack.c.b16 %v10227, %v10226
    %v10541 = vpack.c.b16 %v10229, %v10228
    %v10542 = vpack.c.b16 %v10231, %v10230
    %v10543 = vpack.c.b16 %v10233, %v10232
    %v10544 = vpack.c.b16 %v10235, %v10234
    %v10545 = vpack.c.b16 %v10237, %v10236
    %v10546 = vpack.c.b16 %v10239, %v10238
    %v10547 = vpack.c.b16 %v10241, %v10240
    %v10548 = vpack.c.b16 %v10243, %v10242
    %v10549 = vpack.c.b16 %v10245, %v10244
    %v10550 = vpack.c.b16 %v10247, %v10246
    %v10551 = vpack.c.b16 %v10249, %v10248
    %v10552 = vpack.c.b16 %v10251, %v10250
    %v10553 = vpack.c.b16 %v10253, %v10252
    %v10554 = vpack.c.b16 %v10255, %v10254
    %v10555 = vpack.c.b16 %v10257, %v10256
    %v10556 = vpack.c.b16 %v10259, %v10258
    %v10557 = vpack.c.b16 %v10261, %v10260
    %v10558 = vpack.c.b16 %v10263, %v10262
    %v10559 = vpack.c.b16 %v10265, %v10264
    %v10560 = vpack.c.b16 %v10267, %v10266
    %v10561 = vpack.c.b16 %v10269, %v10268
    %v10562 = vpack.c.b16 %v10271, %v10270
    %v10563 = vpack.c.b16 %v10273, %v10272
    %v10564 = vpack.c.b16 %v10275, %v10274
    %v10565 = vpack.c.b16 %v10277, %v10276
    %v10566 = vpack.c.b16 %v10279, %v10278
    %v10567 = vpack.c.b16 %v10281, %v10280
    %v10568 = vpack.c.b16 %v10283, %v10282
    %v10569 = vpack.c.b16 %v10285, %v10284
    %v10570 = vpack.c.b16 %v10287, %v10286
    %v10571 = vpack.c.b16 %v10289, %v10288
    %v10572 = vpack.c.b16 %v10291, %v10290
    %v10573 = vpack.c.b16 %v10293, %v10292
    %v10574 = vpack.c.b16 %v10295, %v10294
    %v10575 = vpack.c.b16 %v10297, %v10296
    %v10576 = vpack.c.b16 %v10299, %v10298
    %v10577 = vpack.c.b16 %v10301, %v10300
    %v10578 = vpack.c.b16 %v10303, %v10302
    %v10579 = vpack.c.b16 %v10305, %v10304
    %v10580 = vpack.c.b16 %v10307, %v10306
    %v10581 = vpack.c.b16 %v10309, %v10308
    %v10582 = vpack.c.b16 %v10311, %v10310
    %v10583 = vpack.c.b16 %v10313, %v10312
    %v10584 = vpack.c.b16 %v10315, %v10314
    %v10585 = vpack.c.b16 %v10317, %v10316
    %v10586 = vpack.c.b16 %v10319, %v10318
    %v10587 = vpack.c.b16 %v10321, %v10320
    %v10588 = vpack.c.b16 %v10323, %v10322
    %v10589 = vpack.c.b16 %v10325, %v10324
    %v10590 = vpack.c.b16 %v10327, %v10326
    %v10591 = vpack.c.b16 %v10329, %v10328
    %v10592 = vpack.c.b16 %v10331, %v10330
    %v10593 = vpack.c.b16 %v10333, %v10332
    %v10594 = vpack.c.b16 %v10335, %v10334
    %v10595 = vpack.c.b16 %v10337, %v10336
    %v10596 = vpack.c.b16 %v10339, %v10338
    %v10597 = vpack.c.b16 %v10341, %v10340
    %10854 = vmatprep.subr.bf16.mxu0 0
    %10855 = vmatpush1.bf16.msra.mxu0 %v10342
    %10856 = vmatprep.subr.bf16.mxu0 0
    %10857 = vmatpush1.bf16.msra.mxu0 %v10343
    %10858 = vmatprep.subr.bf16.mxu0 0
    %10859 = vmatpush1.bf16.msra.mxu0 %v10344
    %10860 = vmatprep.subr.bf16.mxu0 0
    %10861 = vmatpush1.bf16.msra.mxu0 %v10345
    %10862 = vmatprep.subr.bf16.mxu0 0
    %10863 = vmatpush1.bf16.msra.mxu0 %v10346
    %10864 = vmatprep.subr.bf16.mxu0 0
    %10865 = vmatpush1.bf16.msra.mxu0 %v10347
    %10866 = vmatprep.subr.bf16.mxu0 0
    %10867 = vmatpush1.bf16.msra.mxu0 %v10348
    %10868 = vmatprep.subr.bf16.mxu0 0
    %10869 = vmatpush1.bf16.msra.mxu0 %v10349
    %10870 = vmatprep.subr.bf16.mxu0 0
    %10871 = vmatpush1.bf16.msra.mxu0 %v10350
    %10872 = vmatprep.subr.bf16.mxu0 0
    %10873 = vmatpush1.bf16.msra.mxu0 %v10351
    %10874 = vmatprep.subr.bf16.mxu0 0
    %10875 = vmatpush1.bf16.msra.mxu0 %v10352
    %10876 = vmatprep.subr.bf16.mxu0 0
    %10877 = vmatpush1.bf16.msra.mxu0 %v10353
    %10878 = vmatprep.subr.bf16.mxu0 0
    %10879 = vmatpush1.bf16.msra.mxu0 %v10354
    %10880 = vmatprep.subr.bf16.mxu0 0
    %10881 = vmatpush1.bf16.msra.mxu0 %v10355
    %10882 = vmatprep.subr.bf16.mxu0 0
    %10883 = vmatpush1.bf16.msra.mxu0 %v10356
    %10884 = vmatprep.subr.bf16.mxu0 0
    %10885 = vmatpush1.bf16.msra.mxu0 %v10357
    %10886 = vmatprep.mubr.bf16.mxu0 %v8768
    %10887 = vmatmul.mubr.bf16.gmra.mrb[0].mxu0 %v8767
    %v10888 = vpop.f32.mrb[0].mxu0
    %v10889 = vadd.f32 %v9316, %v10888
    %v10890 = vpop.f32.mrb[0].mxu0
    %v10891 = vpop.f32.mrb[0].mxu0
    %v10892 = vpop.f32.mrb[0].mxu0
    %10893 = vdwg.mxu0
    %10894 = vmatprep.subr.bf16.mxu0 0
    %10895 = vmatpush1.bf16.msra.mxu0 %v10358
    %10896 = vmatprep.subr.bf16.mxu0 0
    %10897 = vmatpush1.bf16.msra.mxu0 %v10359
    %10898 = vmatprep.subr.bf16.mxu0 0
    %10899 = vmatpush1.bf16.msra.mxu0 %v10360
    %10900 = vmatprep.subr.bf16.mxu0 0
    %10901 = vmatpush1.bf16.msra.mxu0 %v10361
    %10902 = vmatprep.subr.bf16.mxu0 0
    %10903 = vmatpush1.bf16.msra.mxu0 %v10362
    %10904 = vmatprep.subr.bf16.mxu0 0
    %10905 = vmatpush1.bf16.msra.mxu0 %v10363
    %10906 = vmatprep.subr.bf16.mxu0 0
    %10907 = vmatpush1.bf16.msra.mxu0 %v10364
    %10908 = vmatprep.subr.bf16.mxu0 0
    %10909 = vmatpush1.bf16.msra.mxu0 %v10365
    %10910 = vmatprep.subr.bf16.mxu0 0
    %10911 = vmatpush1.bf16.msra.mxu0 %v10366
    %10912 = vmatprep.subr.bf16.mxu0 0
    %10913 = vmatpush1.bf16.msra.mxu0 %v10367
    %10914 = vmatprep.subr.bf16.mxu0 0
    %10915 = vmatpush1.bf16.msra.mxu0 %v10368
    %10916 = vmatprep.subr.bf16.mxu0 0
    %10917 = vmatpush1.bf16.msra.mxu0 %v10369
    %10918 = vmatprep.subr.bf16.mxu0 0
    %10919 = vmatpush1.bf16.msra.mxu0 %v10370
    %10920 = vmatprep.subr.bf16.mxu0 0
    %10921 = vmatpush1.bf16.msra.mxu0 %v10371
    %10922 = vmatprep.subr.bf16.mxu0 0
    %10923 = vmatpush1.bf16.msra.mxu0 %v10372
    %10924 = vmatprep.subr.bf16.mxu0 0
    %10925 = vmatpush1.bf16.msra.mxu0 %v10373
    %10926 = vmatprep.mubr.bf16.mxu0 %v8770
    %10927 = vmatmul.mubr.bf16.gmra.mrb[0].mxu0 %v8769
    %v10928 = vpop.f32.mrb[0].mxu0
    %v10929 = vadd.f32 %v10889, %v10928
    %v10930 = vpop.f32.mrb[0].mxu0
    %v10931 = vpop.f32.mrb[0].mxu0
    %v10932 = vpop.f32.mrb[0].mxu0
    %10933 = vdwg.mxu0
    %10934 = vmatprep.subr.bf16.mxu0 0
    %10935 = vmatpush1.bf16.msra.mxu0 %v10374
    %10936 = vmatprep.subr.bf16.mxu0 0
    %10937 = vmatpush1.bf16.msra.mxu0 %v10375
    %10938 = vmatprep.subr.bf16.mxu0 0
    %10939 = vmatpush1.bf16.msra.mxu0 %v10376
    %10940 = vmatprep.subr.bf16.mxu0 0
    %10941 = vmatpush1.bf16.msra.mxu0 %v10377
    %10942 = vmatprep.subr.bf16.mxu0 0
    %10943 = vmatpush1.bf16.msra.mxu0 %v10378
    %10944 = vmatprep.subr.bf16.mxu0 0
    %10945 = vmatpush1.bf16.msra.mxu0 %v10379
    %10946 = vmatprep.subr.bf16.mxu0 0
    %10947 = vmatpush1.bf16.msra.mxu0 %v10380
    %10948 = vmatprep.subr.bf16.mxu0 0
    %10949 = vmatpush1.bf16.msra.mxu0 %v10381
    %10950 = vmatprep.subr.bf16.mxu0 0
    %10951 = vmatpush1.bf16.msra.mxu0 %v10382
    %10952 = vmatprep.subr.bf16.mxu0 0
    %10953 = vmatpush1.bf16.msra.mxu0 %v10383
    %10954 = vmatprep.subr.bf16.mxu0 0
    %10955 = vmatpush1.bf16.msra.mxu0 %v10384
    %10956 = vmatprep.subr.bf16.mxu0 0
    %10957 = vmatpush1.bf16.msra.mxu0 %v10385
    %10958 = vmatprep.subr.bf16.mxu0 0
    %10959 = vmatpush1.bf16.msra.mxu0 %v10386
    %10960 = vmatprep.subr.bf16.mxu0 0
    %10961 = vmatpush1.bf16.msra.mxu0 %v10387
    %10962 = vmatprep.subr.bf16.mxu0 0
    %10963 = vmatpush1.bf16.msra.mxu0 %v10388
    %10964 = vmatprep.subr.bf16.mxu0 0
    %10965 = vmatpush1.bf16.msra.mxu0 %v10389
    %10966 = vmatprep.mubr.bf16.mxu0 %v8772
    %10967 = vmatmul.mubr.bf16.gmra.mrb[0].mxu0 %v8771
    %v10968 = vpop.f32.mrb[0].mxu0
    %v10969 = vadd.f32 %v10929, %v10968
    %v10970 = vpop.f32.mrb[0].mxu0
    %v10971 = vpop.f32.mrb[0].mxu0
    %v10972 = vpop.f32.mrb[0].mxu0
    %10973 = vdwg.mxu0
    %10974 = vmatprep.subr.bf16.mxu0 0
    %10975 = vmatpush1.bf16.msra.mxu0 %v10390
    %10976 = vmatprep.subr.bf16.mxu0 0
    %10977 = vmatpush1.bf16.msra.mxu0 %v10391
    %10978 = vmatprep.subr.bf16.mxu0 0
    %10979 = vmatpush1.bf16.msra.mxu0 %v10392
    %10980 = vmatprep.subr.bf16.mxu0 0
    %10981 = vmatpush1.bf16.msra.mxu0 %v10393
    %10982 = vmatprep.subr.bf16.mxu0 0
    %10983 = vmatpush1.bf16.msra.mxu0 %v10394
    %10984 = vmatprep.subr.bf16.mxu0 0
    %10985 = vmatpush1.bf16.msra.mxu0 %v10395
    %10986 = vmatprep.subr.bf16.mxu0 0
    %10987 = vmatpush1.bf16.msra.mxu0 %v10396
    %10988 = vmatprep.subr.bf16.mxu0 0
    %10989 = vmatpush1.bf16.msra.mxu0 %v10397
    %10990 = vmatprep.subr.bf16.mxu0 0
    %10991 = vmatpush1.bf16.msra.mxu0 %v10398
    %10992 = vmatprep.subr.bf16.mxu0 0
    %10993 = vmatpush1.bf16.msra.mxu0 %v10399
    %10994 = vmatprep.subr.bf16.mxu0 0
    %10995 = vmatpush1.bf16.msra.mxu0 %v10400
    %10996 = vmatprep.subr.bf16.mxu0 0
    %10997 = vmatpush1.bf16.msra.mxu0 %v10401
    %10998 = vmatprep.subr.bf16.mxu0 0
    %10999 = vmatpush1.bf16.msra.mxu0 %v10402
    %11000 = vmatprep.subr.bf16.mxu0 0
    %11001 = vmatpush1.bf16.msra.mxu0 %v10403
    %11002 = vmatprep.subr.bf16.mxu0 0
    %11003 = vmatpush1.bf16.msra.mxu0 %v10404
    %11004 = vmatprep.subr.bf16.mxu0 0
    %11005 = vmatpush1.bf16.msra.mxu0 %v10405
    %11006 = vmatprep.mubr.bf16.mxu0 %v8774
    %11007 = vmatmul.mubr.bf16.gmra.mrb[0].mxu0 %v8773
    %v11008 = vpop.f32.mrb[0].mxu0
    %v11009 = vadd.f32 %v10969, %v11008
    %v11010 = vpop.f32.mrb[0].mxu0
    %v11011 = vpop.f32.mrb[0].mxu0
    %v11012 = vpop.f32.mrb[0].mxu0
    %11013 = vdwg.mxu0
    %11014 = vmatprep.subr.bf16.mxu0 0
    %11015 = vmatpush1.bf16.msra.mxu0 %v10406
    %11016 = vmatprep.subr.bf16.mxu0 0
    %11017 = vmatpush1.bf16.msra.mxu0 %v10407
    %11018 = vmatprep.subr.bf16.mxu0 0
    %11019 = vmatpush1.bf16.msra.mxu0 %v10408
    %11020 = vmatprep.subr.bf16.mxu0 0
    %11021 = vmatpush1.bf16.msra.mxu0 %v10409
    %11022 = vmatprep.subr.bf16.mxu0 0
    %11023 = vmatpush1.bf16.msra.mxu0 %v10410
    %11024 = vmatprep.subr.bf16.mxu0 0
    %11025 = vmatpush1.bf16.msra.mxu0 %v10411
    %11026 = vmatprep.subr.bf16.mxu0 0
    %11027 = vmatpush1.bf16.msra.mxu0 %v10412
    %11028 = vmatprep.subr.bf16.mxu0 0
    %11029 = vmatpush1.bf16.msra.mxu0 %v10413
    %11030 = vmatprep.subr.bf16.mxu0 0
    %11031 = vmatpush1.bf16.msra.mxu0 %v10414
    %11032 = vmatprep.subr.bf16.mxu0 0
    %11033 = vmatpush1.bf16.msra.mxu0 %v10415
    %11034 = vmatprep.subr.bf16.mxu0 0
    %11035 = vmatpush1.bf16.msra.mxu0 %v10416
    %11036 = vmatprep.subr.bf16.mxu0 0
    %11037 = vmatpush1.bf16.msra.mxu0 %v10417
    %11038 = vmatprep.subr.bf16.mxu0 0
    %11039 = vmatpush1.bf16.msra.mxu0 %v10418
    %11040 = vmatprep.subr.bf16.mxu0 0
    %11041 = vmatpush1.bf16.msra.mxu0 %v10419
    %11042 = vmatprep.subr.bf16.mxu0 0
    %11043 = vmatpush1.bf16.msra.mxu0 %v10420
    %11044 = vmatprep.subr.bf16.mxu0 0
    %11045 = vmatpush1.bf16.msra.mxu0 %v10421
    %11046 = vmatprep.mubr.bf16.mxu0 %v8776
    %11047 = vmatmul.mubr.bf16.gmra.mrb[0].mxu0 %v8775
    %v11048 = vpop.f32.mrb[0].mxu0
    %v11049 = vadd.f32 %v11009, %v11048
    %v11050 = vpop.f32.mrb[0].mxu0
    %v11051 = vpop.f32.mrb[0].mxu0
    %v11052 = vpop.f32.mrb[0].mxu0
    %11053 = vdwg.mxu0
    %11054 = vmatprep.subr.bf16.mxu0 0
    %11055 = vmatpush1.bf16.msra.mxu0 %v10422
    %11056 = vmatprep.subr.bf16.mxu0 0
    %11057 = vmatpush1.bf16.msra.mxu0 %v10423
    %11058 = vmatprep.subr.bf16.mxu0 0
    %11059 = vmatpush1.bf16.msra.mxu0 %v10424
    %11060 = vmatprep.subr.bf16.mxu0 0
    %11061 = vmatpush1.bf16.msra.mxu0 %v10425
    %11062 = vmatprep.subr.bf16.mxu0 0
    %11063 = vmatpush1.bf16.msra.mxu0 %v10426
    %11064 = vmatprep.subr.bf16.mxu0 0
    %11065 = vmatpush1.bf16.msra.mxu0 %v10427
    %11066 = vmatprep.subr.bf16.mxu0 0
    %11067 = vmatpush1.bf16.msra.mxu0 %v10428
    %11068 = vmatprep.subr.bf16.mxu0 0
    %11069 = vmatpush1.bf16.msra.mxu0 %v10429
    %11070 = vmatprep.subr.bf16.mxu0 0
    %11071 = vmatpush1.bf16.msra.mxu0 %v10430
    %11072 = vmatprep.subr.bf16.mxu0 0
    %11073 = vmatpush1.bf16.msra.mxu0 %v10431
    %11074 = vmatprep.subr.bf16.mxu0 0
    %11075 = vmatpush1.bf16.msra.mxu0 %v10432
    %11076 = vmatprep.subr.bf16.mxu0 0
    %11077 = vmatpush1.bf16.msra.mxu0 %v10433
    %11078 = vmatprep.subr.bf16.mxu0 0
    %11079 = vmatpush1.bf16.msra.mxu0 %v10434
    %11080 = vmatprep.subr.bf16.mxu0 0
    %11081 = vmatpush1.bf16.msra.mxu0 %v10435
    %11082 = vmatprep.subr.bf16.mxu0 0
    %11083 = vmatpush1.bf16.msra.mxu0 %v10436
    %11084 = vmatprep.subr.bf16.mxu0 0
    %11085 = vmatpush1.bf16.msra.mxu0 %v10437
    %11086 = vmatprep.mubr.bf16.mxu0 %v8778
    %11087 = vmatmul.mubr.bf16.gmra.mrb[0].mxu0 %v8777
    %v11088 = vpop.f32.mrb[0].mxu0
    %v11089 = vadd.f32 %v11049, %v11088
    %v11090 = vpop.f32.mrb[0].mxu0
    %v11091 = vpop.f32.mrb[0].mxu0
    %v11092 = vpop.f32.mrb[0].mxu0
    %11093 = vdwg.mxu0
    %11094 = vmatprep.subr.bf16.mxu0 0
    %11095 = vmatpush1.bf16.msra.mxu0 %v10438
    %11096 = vmatprep.subr.bf16.mxu0 0
    %11097 = vmatpush1.bf16.msra.mxu0 %v10439
    %11098 = vmatprep.subr.bf16.mxu0 0
    %11099 = vmatpush1.bf16.msra.mxu0 %v10440
    %11100 = vmatprep.subr.bf16.mxu0 0
    %11101 = vmatpush1.bf16.msra.mxu0 %v10441
    %11102 = vmatprep.subr.bf16.mxu0 0
    %11103 = vmatpush1.bf16.msra.mxu0 %v10442
    %11104 = vmatprep.subr.bf16.mxu0 0
    %11105 = vmatpush1.bf16.msra.mxu0 %v10443
    %11106 = vmatprep.subr.bf16.mxu0 0
    %11107 = vmatpush1.bf16.msra.mxu0 %v10444
    %11108 = vmatprep.subr.bf16.mxu0 0
    %11109 = vmatpush1.bf16.msra.mxu0 %v10445
    %11110 = vmatprep.subr.bf16.mxu0 0
    %11111 = vmatpush1.bf16.msra.mxu0 %v10446
    %11112 = vmatprep.subr.bf16.mxu0 0
    %11113 = vmatpush1.bf16.msra.mxu0 %v10447
    %11114 = vmatprep.subr.bf16.mxu0 0
    %11115 = vmatpush1.bf16.msra.mxu0 %v10448
    %11116 = vmatprep.subr.bf16.mxu0 0
    %11117 = vmatpush1.bf16.msra.mxu0 %v10449
    %11118 = vmatprep.subr.bf16.mxu0 0
    %11119 = vmatpush1.bf16.msra.mxu0 %v10450
    %11120 = vmatprep.subr.bf16.mxu0 0
    %11121 = vmatpush1.bf16.msra.mxu0 %v10451
    %11122 = vmatprep.subr.bf16.mxu0 0
    %11123 = vmatpush1.bf16.msra.mxu0 %v10452
    %11124 = vmatprep.subr.bf16.mxu0 0
    %11125 = vmatpush1.bf16.msra.mxu0 %v10453
    %11126 = vmatprep.mubr.bf16.mxu0 %v8780
    %11127 = vmatmul.mubr.bf16.gmra.mrb[0].mxu0 %v8779
    %v11128 = vpop.f32.mrb[0].mxu0
    %v11129 = vadd.f32 %v11089, %v11128
    %v11130 = vpop.f32.mrb[0].mxu0
    %v11131 = vpop.f32.mrb[0].mxu0
    %v11132 = vpop.f32.mrb[0].mxu0
    %11133 = vdwg.mxu0
    %11134 = vmatprep.subr.bf16.mxu0 0
    %11135 = vmatpush1.bf16.msra.mxu0 %v10454
    %11136 = vmatprep.subr.bf16.mxu0 0
    %11137 = vmatpush1.bf16.msra.mxu0 %v10455
    %11138 = vmatprep.subr.bf16.mxu0 0
    %11139 = vmatpush1.bf16.msra.mxu0 %v10456
    %11140 = vmatprep.subr.bf16.mxu0 0
    %11141 = vmatpush1.bf16.msra.mxu0 %v10457
    %11142 = vmatprep.subr.bf16.mxu0 0
    %11143 = vmatpush1.bf16.msra.mxu0 %v10458
    %11144 = vmatprep.subr.bf16.mxu0 0
    %11145 = vmatpush1.bf16.msra.mxu0 %v10459
    %11146 = vmatprep.subr.bf16.mxu0 0
    %11147 = vmatpush1.bf16.msra.mxu0 %v10460
    %11148 = vmatprep.subr.bf16.mxu0 0
    %11149 = vmatpush1.bf16.msra.mxu0 %v10461
    %11150 = vmatprep.subr.bf16.mxu0 0
    %11151 = vmatpush1.bf16.msra.mxu0 %v10462
    %11152 = vmatprep.subr.bf16.mxu0 0
    %11153 = vmatpush1.bf16.msra.mxu0 %v10463
    %11154 = vmatprep.subr.bf16.mxu0 0
    %11155 = vmatpush1.bf16.msra.mxu0 %v10464
    %11156 = vmatprep.subr.bf16.mxu0 0
    %11157 = vmatpush1.bf16.msra.mxu0 %v10465
    %11158 = vmatprep.subr.bf16.mxu0 0
    %11159 = vmatpush1.bf16.msra.mxu0 %v10466
    %11160 = vmatprep.subr.bf16.mxu0 0
    %11161 = vmatpush1.bf16.msra.mxu0 %v10467
    %11162 = vmatprep.subr.bf16.mxu0 0
    %11163 = vmatpush1.bf16.msra.mxu0 %v10468
    %11164 = vmatprep.subr.bf16.mxu0 0
    %11165 = vmatpush1.bf16.msra.mxu0 %v10469
    %11166 = vmatprep.mubr.bf16.mxu0 %v8782
    %11167 = vmatmul.mubr.bf16.gmra.mrb[0].mxu0 %v8781
    %v11168 = vpop.f32.mrb[0].mxu0
    %v11169 = vadd.f32 %v11129, %v11168
    %v11170 = vpop.f32.mrb[0].mxu0
    %v11171 = vpop.f32.mrb[0].mxu0
    %v11172 = vpop.f32.mrb[0].mxu0
    %11173 = vdwg.mxu0
    %11174 = vmatprep.subr.bf16.mxu0 0
    %11175 = vmatpush1.bf16.msra.mxu0 %v10470
    %11176 = vmatprep.subr.bf16.mxu0 0
    %11177 = vmatpush1.bf16.msra.mxu0 %v10471
    %11178 = vmatprep.subr.bf16.mxu0 0
    %11179 = vmatpush1.bf16.msra.mxu0 %v10472
    %11180 = vmatprep.subr.bf16.mxu0 0
    %11181 = vmatpush1.bf16.msra.mxu0 %v10473
    %11182 = vmatprep.subr.bf16.mxu0 0
    %11183 = vmatpush1.bf16.msra.mxu0 %v10474
    %11184 = vmatprep.subr.bf16.mxu0 0
    %11185 = vmatpush1.bf16.msra.mxu0 %v10475
    %11186 = vmatprep.subr.bf16.mxu0 0
    %11187 = vmatpush1.bf16.msra.mxu0 %v10476
    %11188 = vmatprep.subr.bf16.mxu0 0
    %11189 = vmatpush1.bf16.msra.mxu0 %v10477
    %11190 = vmatprep.subr.bf16.mxu0 0
    %11191 = vmatpush1.bf16.msra.mxu0 %v10478
    %11192 = vmatprep.subr.bf16.mxu0 0
    %11193 = vmatpush1.bf16.msra.mxu0 %v10479
    %11194 = vmatprep.subr.bf16.mxu0 0
    %11195 = vmatpush1.bf16.msra.mxu0 %v10480
    %11196 = vmatprep.subr.bf16.mxu0 0
    %11197 = vmatpush1.bf16.msra.mxu0 %v10481
    %11198 = vmatprep.subr.bf16.mxu0 0
    %11199 = vmatpush1.bf16.msra.mxu0 %v10482
    %11200 = vmatprep.subr.bf16.mxu0 0
    %11201 = vmatpush1.bf16.msra.mxu0 %v10483
    %11202 = vmatprep.subr.bf16.mxu0 0
    %11203 = vmatpush1.bf16.msra.mxu0 %v10484
    %11204 = vmatprep.subr.bf16.mxu0 0
    %11205 = vmatpush1.bf16.msra.mxu0 %v10485
    %11206 = vmatprep.mubr.bf16.mxu0 %v8784
    %11207 = vmatmul.mubr.bf16.gmra.mrb[0].mxu0 %v8783
    %v11208 = vpop.f32.mrb[0].mxu0
    %v11209 = vadd.f32 %v11169, %v11208
    %v11210 = vpop.f32.mrb[0].mxu0
    %v11211 = vpop.f32.mrb[0].mxu0
    %v11212 = vpop.f32.mrb[0].mxu0
    %11213 = vdwg.mxu0
    %11214 = vmatprep.subr.bf16.mxu0 0
    %11215 = vmatpush1.bf16.msra.mxu0 %v10486
    %11216 = vmatprep.subr.bf16.mxu0 0
    %11217 = vmatpush1.bf16.msra.mxu0 %v10487
    %11218 = vmatprep.subr.bf16.mxu0 0
    %11219 = vmatpush1.bf16.msra.mxu0 %v10488
    %11220 = vmatprep.subr.bf16.mxu0 0
    %11221 = vmatpush1.bf16.msra.mxu0 %v10489
    %11222 = vmatprep.subr.bf16.mxu0 0
    %11223 = vmatpush1.bf16.msra.mxu0 %v10490
    %11224 = vmatprep.subr.bf16.mxu0 0
    %11225 = vmatpush1.bf16.msra.mxu0 %v10491
    %11226 = vmatprep.subr.bf16.mxu0 0
    %11227 = vmatpush1.bf16.msra.mxu0 %v10492
    %11228 = vmatprep.subr.bf16.mxu0 0
    %11229 = vmatpush1.bf16.msra.mxu0 %v10493
    %11230 = vmatprep.subr.bf16.mxu0 0
    %11231 = vmatpush1.bf16.msra.mxu0 %v10494
    %11232 = vmatprep.subr.bf16.mxu0 0
    %11233 = vmatpush1.bf16.msra.mxu0 %v10495
    %11234 = vmatprep.subr.bf16.mxu0 0
    %11235 = vmatpush1.bf16.msra.mxu0 %v10496
    %11236 = vmatprep.subr.bf16.mxu0 0
    %11237 = vmatpush1.bf16.msra.mxu0 %v10497
    %11238 = vmatprep.subr.bf16.mxu0 0
    %11239 = vmatpush1.bf16.msra.mxu0 %v10498
    %11240 = vmatprep.subr.bf16.mxu0 0
    %11241 = vmatpush1.bf16.msra.mxu0 %v10499
    %11242 = vmatprep.subr.bf16.mxu0 0
    %11243 = vmatpush1.bf16.msra.mxu0 %v10500
    %11244 = vmatprep.subr.bf16.mxu0 0
    %11245 = vmatpush1.bf16.msra.mxu0 %v10501
    %11246 = vmatprep.mubr.bf16.mxu0 %v8786
    %11247 = vmatmul.mubr.bf16.gmra.mrb[0].mxu0 %v8785
    %v11248 = vpop.f32.mrb[0].mxu0
    %v11249 = vadd.f32 %v11209, %v11248
    %v11250 = vpop.f32.mrb[0].mxu0
    %v11251 = vpop.f32.mrb[0].mxu0
    %v11252 = vpop.f32.mrb[0].mxu0
    %11253 = vdwg.mxu0
    %11254 = vmatprep.subr.bf16.mxu0 0
    %11255 = vmatpush1.bf16.msra.mxu0 %v10502
    %11256 = vmatprep.subr.bf16.mxu0 0
    %11257 = vmatpush1.bf16.msra.mxu0 %v10503
    %11258 = vmatprep.subr.bf16.mxu0 0
    %11259 = vmatpush1.bf16.msra.mxu0 %v10504
    %11260 = vmatprep.subr.bf16.mxu0 0
    %11261 = vmatpush1.bf16.msra.mxu0 %v10505
    %11262 = vmatprep.subr.bf16.mxu0 0
    %11263 = vmatpush1.bf16.msra.mxu0 %v10506
    %11264 = vmatprep.subr.bf16.mxu0 0
    %11265 = vmatpush1.bf16.msra.mxu0 %v10507
    %11266 = vmatprep.subr.bf16.mxu0 0
    %11267 = vmatpush1.bf16.msra.mxu0 %v10508
    %11268 = vmatprep.subr.bf16.mxu0 0
    %11269 = vmatpush1.bf16.msra.mxu0 %v10509
    %11270 = vmatprep.subr.bf16.mxu0 0
    %11271 = vmatpush1.bf16.msra.mxu0 %v10510
    %11272 = vmatprep.subr.bf16.mxu0 0
    %11273 = vmatpush1.bf16.msra.mxu0 %v10511
    %11274 = vmatprep.subr.bf16.mxu0 0
    %11275 = vmatpush1.bf16.msra.mxu0 %v10512
    %11276 = vmatprep.subr.bf16.mxu0 0
    %11277 = vmatpush1.bf16.msra.mxu0 %v10513
    %11278 = vmatprep.subr.bf16.mxu0 0
    %11279 = vmatpush1.bf16.msra.mxu0 %v10514
    %11280 = vmatprep.subr.bf16.mxu0 0
    %11281 = vmatpush1.bf16.msra.mxu0 %v10515
    %11282 = vmatprep.subr.bf16.mxu0 0
    %11283 = vmatpush1.bf16.msra.mxu0 %v10516
    %11284 = vmatprep.subr.bf16.mxu0 0
    %11285 = vmatpush1.bf16.msra.mxu0 %v10517
    %11286 = vmatprep.mubr.bf16.mxu0 %v8788
    %11287 = vmatmul.mubr.bf16.gmra.mrb[0].mxu0 %v8787
    %v11288 = vpop.f32.mrb[0].mxu0
    %v11289 = vadd.f32 %v11249, %v11288
    %v11290 = vpop.f32.mrb[0].mxu0
    %v11291 = vpop.f32.mrb[0].mxu0
    %v11292 = vpop.f32.mrb[0].mxu0
    %11293 = vdwg.mxu0
    %11294 = vmatprep.subr.bf16.mxu0 0
    %11295 = vmatpush1.bf16.msra.mxu0 %v10518
    %11296 = vmatprep.subr.bf16.mxu0 0
    %11297 = vmatpush1.bf16.msra.mxu0 %v10519
    %11298 = vmatprep.subr.bf16.mxu0 0
    %11299 = vmatpush1.bf16.msra.mxu0 %v10520
    %11300 = vmatprep.subr.bf16.mxu0 0
    %11301 = vmatpush1.bf16.msra.mxu0 %v10521
    %11302 = vmatprep.subr.bf16.mxu0 0
    %11303 = vmatpush1.bf16.msra.mxu0 %v10522
    %11304 = vmatprep.subr.bf16.mxu0 0
    %11305 = vmatpush1.bf16.msra.mxu0 %v10523
    %11306 = vmatprep.subr.bf16.mxu0 0
    %11307 = vmatpush1.bf16.msra.mxu0 %v10524
    %11308 = vmatprep.subr.bf16.mxu0 0
    %11309 = vmatpush1.bf16.msra.mxu0 %v10525
    %11310 = vmatprep.subr.bf16.mxu0 0
    %11311 = vmatpush1.bf16.msra.mxu0 %v10526
    %11312 = vmatprep.subr.bf16.mxu0 0
    %11313 = vmatpush1.bf16.msra.mxu0 %v10527
    %11314 = vmatprep.subr.bf16.mxu0 0
    %11315 = vmatpush1.bf16.msra.mxu0 %v10528
    %11316 = vmatprep.subr.bf16.mxu0 0
    %11317 = vmatpush1.bf16.msra.mxu0 %v10529
    %11318 = vmatprep.subr.bf16.mxu0 0
    %11319 = vmatpush1.bf16.msra.mxu0 %v10530
    %11320 = vmatprep.subr.bf16.mxu0 0
    %11321 = vmatpush1.bf16.msra.mxu0 %v10531
    %11322 = vmatprep.subr.bf16.mxu0 0
    %11323 = vmatpush1.bf16.msra.mxu0 %v10532
    %11324 = vmatprep.subr.bf16.mxu0 0
    %11325 = vmatpush1.bf16.msra.mxu0 %v10533
    %11326 = vmatprep.mubr.bf16.mxu0 %v8790
    %11327 = vmatmul.mubr.bf16.gmra.mrb[0].mxu0 %v8789
    %v11328 = vpop.f32.mrb[0].mxu0
    %v11329 = vadd.f32 %v11289, %v11328
    %v11330 = vpop.f32.mrb[0].mxu0
    %v11331 = vpop.f32.mrb[0].mxu0
    %v11332 = vpop.f32.mrb[0].mxu0
    %11333 = vdwg.mxu0
    %11334 = vmatprep.subr.bf16.mxu0 0
    %11335 = vmatpush1.bf16.msra.mxu0 %v10534
    %11336 = vmatprep.subr.bf16.mxu0 0
    %11337 = vmatpush1.bf16.msra.mxu0 %v10535
    %11338 = vmatprep.subr.bf16.mxu0 0
    %11339 = vmatpush1.bf16.msra.mxu0 %v10536
    %11340 = vmatprep.subr.bf16.mxu0 0
    %11341 = vmatpush1.bf16.msra.mxu0 %v10537
    %11342 = vmatprep.subr.bf16.mxu0 0
    %11343 = vmatpush1.bf16.msra.mxu0 %v10538
    %11344 = vmatprep.subr.bf16.mxu0 0
    %11345 = vmatpush1.bf16.msra.mxu0 %v10539
    %11346 = vmatprep.subr.bf16.mxu0 0
    %11347 = vmatpush1.bf16.msra.mxu0 %v10540
    %11348 = vmatprep.subr.bf16.mxu0 0
    %11349 = vmatpush1.bf16.msra.mxu0 %v10541
    %11350 = vmatprep.subr.bf16.mxu0 0
    %11351 = vmatpush1.bf16.msra.mxu0 %v10542
    %11352 = vmatprep.subr.bf16.mxu0 0
    %11353 = vmatpush1.bf16.msra.mxu0 %v10543
    %11354 = vmatprep.subr.bf16.mxu0 0
    %11355 = vmatpush1.bf16.msra.mxu0 %v10544
    %11356 = vmatprep.subr.bf16.mxu0 0
    %11357 = vmatpush1.bf16.msra.mxu0 %v10545
    %11358 = vmatprep.subr.bf16.mxu0 0
    %11359 = vmatpush1.bf16.msra.mxu0 %v10546
    %11360 = vmatprep.subr.bf16.mxu0 0
    %11361 = vmatpush1.bf16.msra.mxu0 %v10547
    %11362 = vmatprep.subr.bf16.mxu0 0
    %11363 = vmatpush1.bf16.msra.mxu0 %v10548
    %11364 = vmatprep.subr.bf16.mxu0 0
    %11365 = vmatpush1.bf16.msra.mxu0 %v10549
    %11366 = vmatprep.mubr.bf16.mxu0 %v8792
    %11367 = vmatmul.mubr.bf16.gmra.mrb[0].mxu0 %v8791
    %v11368 = vpop.f32.mrb[0].mxu0
    %v11369 = vadd.f32 %v11329, %v11368
    %v11370 = vpop.f32.mrb[0].mxu0
    %v11371 = vpop.f32.mrb[0].mxu0
    %v11372 = vpop.f32.mrb[0].mxu0
    %11373 = vdwg.mxu0
    %11374 = vmatprep.subr.bf16.mxu0 0
    %11375 = vmatpush1.bf16.msra.mxu0 %v10550
    %11376 = vmatprep.subr.bf16.mxu0 0
    %11377 = vmatpush1.bf16.msra.mxu0 %v10551
    %11378 = vmatprep.subr.bf16.mxu0 0
    %11379 = vmatpush1.bf16.msra.mxu0 %v10552
    %11380 = vmatprep.subr.bf16.mxu0 0
    %11381 = vmatpush1.bf16.msra.mxu0 %v10553
    %11382 = vmatprep.subr.bf16.mxu0 0
    %11383 = vmatpush1.bf16.msra.mxu0 %v10554
    %11384 = vmatprep.subr.bf16.mxu0 0
    %11385 = vmatpush1.bf16.msra.mxu0 %v10555
    %11386 = vmatprep.subr.bf16.mxu0 0
    %11387 = vmatpush1.bf16.msra.mxu0 %v10556
    %11388 = vmatprep.subr.bf16.mxu0 0
    %11389 = vmatpush1.bf16.msra.mxu0 %v10557
    %11390 = vmatprep.subr.bf16.mxu0 0
    %11391 = vmatpush1.bf16.msra.mxu0 %v10558
    %11392 = vmatprep.subr.bf16.mxu0 0
    %11393 = vmatpush1.bf16.msra.mxu0 %v10559
    %11394 = vmatprep.subr.bf16.mxu0 0
    %11395 = vmatpush1.bf16.msra.mxu0 %v10560
    %11396 = vmatprep.subr.bf16.mxu0 0
    %11397 = vmatpush1.bf16.msra.mxu0 %v10561
    %11398 = vmatprep.subr.bf16.mxu0 0
    %11399 = vmatpush1.bf16.msra.mxu0 %v10562
    %11400 = vmatprep.subr.bf16.mxu0 0
    %11401 = vmatpush1.bf16.msra.mxu0 %v10563
    %11402 = vmatprep.subr.bf16.mxu0 0
    %11403 = vmatpush1.bf16.msra.mxu0 %v10564
    %11404 = vmatprep.subr.bf16.mxu0 0
    %11405 = vmatpush1.bf16.msra.mxu0 %v10565
    %11406 = vmatprep.mubr.bf16.mxu0 %v8794
    %11407 = vmatmul.mubr.bf16.gmra.mrb[0].mxu0 %v8793
    %v11408 = vpop.f32.mrb[0].mxu0
    %v11409 = vadd.f32 %v11369, %v11408
    %v11410 = vpop.f32.mrb[0].mxu0
    %v11411 = vpop.f32.mrb[0].mxu0
    %v11412 = vpop.f32.mrb[0].mxu0
    %11413 = vdwg.mxu0
    %11414 = vmatprep.subr.bf16.mxu0 0
    %11415 = vmatpush1.bf16.msra.mxu0 %v10566
    %11416 = vmatprep.subr.bf16.mxu0 0
    %11417 = vmatpush1.bf16.msra.mxu0 %v10567
    %11418 = vmatprep.subr.bf16.mxu0 0
    %11419 = vmatpush1.bf16.msra.mxu0 %v10568
    %11420 = vmatprep.subr.bf16.mxu0 0
    %11421 = vmatpush1.bf16.msra.mxu0 %v10569
    %11422 = vmatprep.subr.bf16.mxu0 0
    %11423 = vmatpush1.bf16.msra.mxu0 %v10570
    %11424 = vmatprep.subr.bf16.mxu0 0
    %11425 = vmatpush1.bf16.msra.mxu0 %v10571
    %11426 = vmatprep.subr.bf16.mxu0 0
    %11427 = vmatpush1.bf16.msra.mxu0 %v10572
    %11428 = vmatprep.subr.bf16.mxu0 0
    %11429 = vmatpush1.bf16.msra.mxu0 %v10573
    %11430 = vmatprep.subr.bf16.mxu0 0
    %11431 = vmatpush1.bf16.msra.mxu0 %v10574
    %11432 = vmatprep.subr.bf16.mxu0 0
    %11433 = vmatpush1.bf16.msra.mxu0 %v10575
    %11434 = vmatprep.subr.bf16.mxu0 0
    %11435 = vmatpush1.bf16.msra.mxu0 %v10576
    %11436 = vmatprep.subr.bf16.mxu0 0
    %11437 = vmatpush1.bf16.msra.mxu0 %v10577
    %11438 = vmatprep.subr.bf16.mxu0 0
    %11439 = vmatpush1.bf16.msra.mxu0 %v10578
    %11440 = vmatprep.subr.bf16.mxu0 0
    %11441 = vmatpush1.bf16.msra.mxu0 %v10579
    %11442 = vmatprep.subr.bf16.mxu0 0
    %11443 = vmatpush1.bf16.msra.mxu0 %v10580
    %11444 = vmatprep.subr.bf16.mxu0 0
    %11445 = vmatpush1.bf16.msra.mxu0 %v10581
    %11446 = vmatprep.mubr.bf16.mxu0 %v8796
    %11447 = vmatmul.mubr.bf16.gmra.mrb[0].mxu0 %v8795
    %v11448 = vpop.f32.mrb[0].mxu0
    %v11449 = vadd.f32 %v11409, %v11448
    %v11450 = vpop.f32.mrb[0].mxu0
    %v11451 = vpop.f32.mrb[0].mxu0
    %v11452 = vpop.f32.mrb[0].mxu0
    %11453 = vdwg.mxu0
    %11454 = vmatprep.subr.bf16.mxu0 0
    %11455 = vmatpush1.bf16.msra.mxu0 %v10582
    %11456 = vmatprep.subr.bf16.mxu0 0
    %11457 = vmatpush1.bf16.msra.mxu0 %v10583
    %11458 = vmatprep.subr.bf16.mxu0 0
    %11459 = vmatpush1.bf16.msra.mxu0 %v10584
    %11460 = vmatprep.subr.bf16.mxu0 0
    %11461 = vmatpush1.bf16.msra.mxu0 %v10585
    %11462 = vmatprep.subr.bf16.mxu0 0
    %11463 = vmatpush1.bf16.msra.mxu0 %v10586
    %11464 = vmatprep.subr.bf16.mxu0 0
    %11465 = vmatpush1.bf16.msra.mxu0 %v10587
    %11466 = vmatprep.subr.bf16.mxu0 0
    %11467 = vmatpush1.bf16.msra.mxu0 %v10588
    %11468 = vmatprep.subr.bf16.mxu0 0
    %11469 = vmatpush1.bf16.msra.mxu0 %v10589
    %11470 = vmatprep.subr.bf16.mxu0 0
    %11471 = vmatpush1.bf16.msra.mxu0 %v10590
    %11472 = vmatprep.subr.bf16.mxu0 0
    %11473 = vmatpush1.bf16.msra.mxu0 %v10591
    %11474 = vmatprep.subr.bf16.mxu0 0
    %11475 = vmatpush1.bf16.msra.mxu0 %v10592
    %11476 = vmatprep.subr.bf16.mxu0 0
    %11477 = vmatpush1.bf16.msra.mxu0 %v10593
    %11478 = vmatprep.subr.bf16.mxu0 0
    %11479 = vmatpush1.bf16.msra.mxu0 %v10594
    %11480 = vmatprep.subr.bf16.mxu0 0
    %11481 = vmatpush1.bf16.msra.mxu0 %v10595
    %11482 = vmatprep.subr.bf16.mxu0 0
    %11483 = vmatpush1.bf16.msra.mxu0 %v10596
    %11484 = vmatprep.subr.bf16.mxu0 0
    %11485 = vmatpush1.bf16.msra.mxu0 %v10597
    %11486 = vmatprep.mubr.bf16.mxu0 %v8798
    %11487 = vmatmul.mubr.bf16.gmra.mrb[0].mxu0 %v8797
    %v11488 = vpop.f32.mrb[0].mxu0
    %v11489 = vadd.f32 %v11449, %v11488
    %v11490 = vpop.f32.mrb[0].mxu0
    %v11491 = vpop.f32.mrb[0].mxu0
    %v11492 = vpop.f32.mrb[0].mxu0
    %11493 = vdwg.mxu0
    %v11494 = vmax.f32 %v11489, 0.0
    %v11495 = vmul.f32 %v11489, 1.442695
    %v11496 = vpow.pop %v11495
    %v11497 = vsub.f32 %v11496, 1.0
    %v11498 = vmin.f32 %v11497, 0.0
    %v11499 = vadd.f32 %v11494, %v11498
    %v11500 = vpack.c.bf16 %v11499, %v11499
    %v11501 = vld [vmem:[#allocation13] sm:$0xff]
    %v11502 = vld [vmem:[#allocation13 + $0x8] sm:$0xf]
    %v11503 = vld [vmem:[#allocation13 + $0xc] sm:$0xff]
    %v11504 = vld [vmem:[#allocation13 + $0x14] sm:$0xf]
    %v11505 = vld [vmem:[#allocation13 + $0x18] sm:$0xff]
    %v11506 = vld [vmem:[#allocation13 + $0x20] sm:$0xf]
    %v11507 = vld [vmem:[#allocation13 + $0x24] sm:$0xff]
    %v11508 = vld [vmem:[#allocation13 + $0x2c] sm:$0xf]
    %v11509 = vld [vmem:[#allocation13 + $0x30] sm:$0xff]
    %v11510 = vld [vmem:[#allocation13 + $0x38] sm:$0xf]
    %v11511 = vld [vmem:[#allocation13 + $0x3c] sm:$0xff]
    %v11512 = vld [vmem:[#allocation13 + $0x44] sm:$0xf]
    %v11513 = vld [vmem:[#allocation13 + $0x48] sm:$0xff]
    %v11514 = vld [vmem:[#allocation13 + $0x50] sm:$0xf]
    %v11515 = vld [vmem:[#allocation13 + $0x54] sm:$0xff]
    %v11516 = vld [vmem:[#allocation13 + $0x5c] sm:$0xf]
    %v11517 = vld [vmem:[#allocation13 + $0x60] sm:$0xff]
    %v11518 = vld [vmem:[#allocation13 + $0x68] sm:$0xf]
    %v11519 = vld [vmem:[#allocation13 + $0x6c] sm:$0xff]
    %v11520 = vld [vmem:[#allocation13 + $0x74] sm:$0xf]
    %v11521 = vld [vmem:[#allocation13 + $0x78] sm:$0xff]
    %v11522 = vld [vmem:[#allocation13 + $0x80] sm:$0xf]
    %v11523 = vld [vmem:[#allocation13 + $0x84] sm:$0xff]
    %v11524 = vld [vmem:[#allocation13 + $0x8c] sm:$0xf]
    %v11525 = vld [vmem:[#allocation13 + $0x90] sm:$0xff]
    %v11526 = vld [vmem:[#allocation13 + $0x98] sm:$0xf]
    %v11527 = vld [vmem:[#allocation13 + $0x9c] sm:$0xff]
    %v11528 = vld [vmem:[#allocation13 + $0xa4] sm:$0xf]
    %v11529 = vld [vmem:[#allocation13 + $0xa8] sm:$0xff]
    %v11530 = vld [vmem:[#allocation13 + $0xb0] sm:$0xf]
    %v11531 = vld [vmem:[#allocation13 + $0xb4] sm:$0xff]
    %v11532 = vld [vmem:[#allocation13 + $0xbc] sm:$0xf]
    %v11533 = vld [vmem:[#allocation16 + $0x28] sm:$0x7]
    %v11535 = vlaneseq
    %v11536 = vshrl.u32 %v11535, 7
    %v11537 = vsub.s32 0, %v11536
    %v11538 = vrot.slane %v11533, %v11537
    %v11539 = vlaneseq
    %v11540 = vshrl.u32 %v11539, 7
    %v11541 = vsub.s32 1, %v11540
    %v11542 = vrot.slane %v11533, %v11541
    %v11543 = vlaneseq
    %v11544 = vshrl.u32 %v11543, 7
    %v11545 = vsub.s32 2, %v11544
    %v11546 = vrot.slane %v11533, %v11545
    %v11582 = vunpack.c.l.b16 %v11501
    %v11583 = vunpack.c.h.b16 %v11501
    %v11584 = vunpack.c.l.b16 %v11502
    %v11585 = vunpack.c.l.b16 %v11503
    %v11586 = vunpack.c.h.b16 %v11503
    %v11587 = vunpack.c.l.b16 %v11504
    %v11588 = vunpack.c.l.b16 %v11505
    %v11589 = vunpack.c.h.b16 %v11505
    %v11590 = vunpack.c.l.b16 %v11506
    %v11591 = vunpack.c.l.b16 %v11507
    %v11592 = vunpack.c.h.b16 %v11507
    %v11593 = vunpack.c.l.b16 %v11508
    %v11594 = vunpack.c.l.b16 %v11509
    %v11595 = vunpack.c.h.b16 %v11509
    %v11596 = vunpack.c.l.b16 %v11510
    %v11597 = vunpack.c.l.b16 %v11511
    %v11598 = vunpack.c.h.b16 %v11511
    %v11599 = vunpack.c.l.b16 %v11512
    %v11600 = vunpack.c.l.b16 %v11513
    %v11601 = vunpack.c.h.b16 %v11513
    %v11602 = vunpack.c.l.b16 %v11514
    %v11603 = vunpack.c.l.b16 %v11515
    %v11604 = vunpack.c.h.b16 %v11515
    %v11605 = vunpack.c.l.b16 %v11516
    %v11606 = vunpack.c.l.b16 %v11517
    %v11607 = vunpack.c.h.b16 %v11517
    %v11608 = vunpack.c.l.b16 %v11518
    %v11609 = vunpack.c.l.b16 %v11519
    %v11610 = vunpack.c.h.b16 %v11519
    %v11611 = vunpack.c.l.b16 %v11520
    %v11612 = vunpack.c.l.b16 %v11521
    %v11613 = vunpack.c.h.b16 %v11521
    %v11614 = vunpack.c.l.b16 %v11522
    %v11615 = vunpack.c.l.b16 %v11523
    %v11616 = vunpack.c.h.b16 %v11523
    %v11617 = vunpack.c.l.b16 %v11524
    %v11618 = vunpack.c.l.b16 %v11525
    %v11619 = vunpack.c.h.b16 %v11525
    %v11620 = vunpack.c.l.b16 %v11526
    %v11621 = vunpack.c.l.b16 %v11527
    %v11622 = vunpack.c.h.b16 %v11527
    %v11623 = vunpack.c.l.b16 %v11528
    %v11624 = vunpack.c.l.b16 %v11529
    %v11625 = vunpack.c.h.b16 %v11529
    %v11626 = vunpack.c.l.b16 %v11530
    %v11627 = vunpack.c.l.b16 %v11531
    %v11628 = vunpack.c.h.b16 %v11531
    %v11629 = vunpack.c.l.b16 %v11532
    %v11630 = vpack.c.b16 %v11585, %v11582
    %v11631 = vpack.c.b16 %v11586, %v11583
    %v11632 = vpack.c.b16 %v11587, %v11584
    %v11633 = vpack.c.b16 %v11591, %v11588
    %v11634 = vpack.c.b16 %v11592, %v11589
    %v11635 = vpack.c.b16 %v11593, %v11590
    %v11636 = vpack.c.b16 %v11597, %v11594
    %v11637 = vpack.c.b16 %v11598, %v11595
    %v11638 = vpack.c.b16 %v11599, %v11596
    %v11639 = vpack.c.b16 %v11603, %v11600
    %v11640 = vpack.c.b16 %v11604, %v11601
    %v11641 = vpack.c.b16 %v11605, %v11602
    %v11642 = vpack.c.b16 %v11609, %v11606
    %v11643 = vpack.c.b16 %v11610, %v11607
    %v11644 = vpack.c.b16 %v11611, %v11608
    %v11645 = vpack.c.b16 %v11615, %v11612
    %v11646 = vpack.c.b16 %v11616, %v11613
    %v11647 = vpack.c.b16 %v11617, %v11614
    %v11648 = vpack.c.b16 %v11621, %v11618
    %v11649 = vpack.c.b16 %v11622, %v11619
    %v11650 = vpack.c.b16 %v11623, %v11620
    %v11651 = vpack.c.b16 %v11627, %v11624
    %v11652 = vpack.c.b16 %v11628, %v11625
    %v11653 = vpack.c.b16 %v11629, %v11626
    %11678 = vmatprep.subr.bf16.mxu0 %v11631
    %11679 = vmatpush1.bf16.msra.mxu0 %v11630
    %11680 = vmatprep.subr.bf16.mxu0 %v11634
    %11681 = vmatpush1.bf16.msra.mxu0 %v11633
    %11682 = vmatprep.subr.bf16.mxu0 %v11637
    %11683 = vmatpush1.bf16.msra.mxu0 %v11636
    %11684 = vmatprep.subr.bf16.mxu0 %v11640
    %11685 = vmatpush1.bf16.msra.mxu0 %v11639
    %11686 = vmatprep.subr.bf16.mxu0 %v11643
    %11687 = vmatpush1.bf16.msra.mxu0 %v11642
    %11688 = vmatprep.subr.bf16.mxu0 %v11646
    %11689 = vmatpush1.bf16.msra.mxu0 %v11645
    %11690 = vmatprep.subr.bf16.mxu0 %v11649
    %11691 = vmatpush1.bf16.msra.mxu0 %v11648
    %11692 = vmatprep.subr.bf16.mxu0 %v11652
    %11693 = vmatpush1.bf16.msra.mxu0 %v11651
    %11694 = vmatprep.subr.bf16.mxu0 0
    %11695 = vmatpush1.bf16.msra.mxu0 0
    %11696 = vmatprep.subr.bf16.mxu0 0
    %11697 = vmatpush1.bf16.msra.mxu0 0
    %11698 = vmatprep.subr.bf16.mxu0 0
    %11699 = vmatpush1.bf16.msra.mxu0 0
    %11700 = vmatprep.subr.bf16.mxu0 0
    %11701 = vmatpush1.bf16.msra.mxu0 0
    %11702 = vmatprep.subr.bf16.mxu0 0
    %11703 = vmatpush1.bf16.msra.mxu0 0
    %11704 = vmatprep.subr.bf16.mxu0 0
    %11705 = vmatpush1.bf16.msra.mxu0 0
    %11706 = vmatprep.subr.bf16.mxu0 0
    %11707 = vmatpush1.bf16.msra.mxu0 0
    %11708 = vmatprep.subr.bf16.mxu0 0
    %11709 = vmatpush1.bf16.msra.mxu0 0
    %11710 = vmatprep.mubr.bf16.mxu0 0
    %11711 = vmatmul.mubr.bf16.gmra.mrb[0].mxu0 %v11500
    %v11712 = vpop.f32.mrb[0].mxu0
    %v11713 = vadd.f32 %v11538, %v11712
    %v11714 = vpop.f32.mrb[0].mxu0
    %v11715 = vadd.f32 %v11542, %v11714
    %v11716 = vpop.f32.mrb[0].mxu0
    %v11717 = vpop.f32.mrb[0].mxu0
    %11718 = vdwg.mxu0
    %11719 = vmatprep.subr.bf16.mxu0 0
    %11720 = vmatpush1.bf16.msra.mxu0 %v11632
    %11721 = vmatprep.subr.bf16.mxu0 0
    %11722 = vmatpush1.bf16.msra.mxu0 %v11635
    %11723 = vmatprep.subr.bf16.mxu0 0
    %11724 = vmatpush1.bf16.msra.mxu0 %v11638
    %11725 = vmatprep.subr.bf16.mxu0 0
    %11726 = vmatpush1.bf16.msra.mxu0 %v11641
    %11727 = vmatprep.subr.bf16.mxu0 0
    %11728 = vmatpush1.bf16.msra.mxu0 %v11644
    %11729 = vmatprep.subr.bf16.mxu0 0
    %11730 = vmatpush1.bf16.msra.mxu0 %v11647
    %11731 = vmatprep.subr.bf16.mxu0 0
    %11732 = vmatpush1.bf16.msra.mxu0 %v11650
    %11733 = vmatprep.subr.bf16.mxu0 0
    %11734 = vmatpush1.bf16.msra.mxu0 %v11653
    %11735 = vmatprep.subr.bf16.mxu0 0
    %11736 = vmatpush1.bf16.msra.mxu0 0
    %11737 = vmatprep.subr.bf16.mxu0 0
    %11738 = vmatpush1.bf16.msra.mxu0 0
    %11739 = vmatprep.subr.bf16.mxu0 0
    %11740 = vmatpush1.bf16.msra.mxu0 0
    %11741 = vmatprep.subr.bf16.mxu0 0
    %11742 = vmatpush1.bf16.msra.mxu0 0
    %11743 = vmatprep.subr.bf16.mxu0 0
    %11744 = vmatpush1.bf16.msra.mxu0 0
    %11745 = vmatprep.subr.bf16.mxu0 0
    %11746 = vmatpush1.bf16.msra.mxu0 0
    %11747 = vmatprep.subr.bf16.mxu0 0
    %11748 = vmatpush1.bf16.msra.mxu0 0
    %11749 = vmatprep.subr.bf16.mxu0 0
    %11750 = vmatpush1.bf16.msra.mxu0 0
    %11751 = vmatprep.mubr.bf16.mxu0 0
    %11752 = vmatmul.mubr.bf16.gmra.mrb[0].mxu0 %v11500
    %v11753 = vpop.f32.mrb[0].mxu0
    %v11754 = vadd.f32 %v11546, %v11753
    %v11755 = vpop.f32.mrb[0].mxu0
    %v11756 = vpop.f32.mrb[0].mxu0
    %v11757 = vpop.f32.mrb[0].mxu0
    %11758 = vdwg.mxu0
    %v11759 = vpack.c.bf16 %v11713, %v11713
    %v11760 = vpack.c.bf16 %v11715, %v11715
    %v11761 = vpack.c.bf16 %v11754, %v11754
    %v11762 = vld [vmem:[#allocation14] sm:$0xff]
    %v11763 = vld [vmem:[#allocation14 + $0x8] sm:$0xff]
    %v11764 = vld [vmem:[#allocation14 + $0x10] sm:$0xff]
    %v11765 = vld [vmem:[#allocation14 + $0x18] sm:$0xff]
    %v11766 = vld [vmem:[#allocation14 + $0x20] sm:$0xff]
    %v11767 = vld [vmem:[#allocation14 + $0x28] sm:$0xff]
    %v11768 = vld [vmem:[#allocation14 + $0x30] sm:$0xff]
    %v11769 = vld [vmem:[#allocation14 + $0x38] sm:$0xff]
    %v11770 = vld [vmem:[#allocation14 + $0x40] sm:$0xff]
    %v11771 = vld [vmem:[#allocation14 + $0x48] sm:$0xff]
    %v11772 = vld [vmem:[#allocation14 + $0x50] sm:$0xff]
    %v11773 = vld [vmem:[#allocation14 + $0x58] sm:$0xff]
    %v11774 = vld [vmem:[#allocation14 + $0x60] sm:$0xff]
    %v11775 = vld [vmem:[#allocation14 + $0x68] sm:$0xff]
    %v11776 = vld [vmem:[#allocation14 + $0x70] sm:$0xff]
    %v11777 = vld [vmem:[#allocation14 + $0x78] sm:$0xff]
    %v11778 = vld [vmem:[#allocation14 + $0x80] sm:$0xff]
    %v11779 = vld [vmem:[#allocation14 + $0x88] sm:$0xff]
    %v11780 = vld [vmem:[#allocation14 + $0x90] sm:$0xff]
    %v11781 = vld [vmem:[#allocation14 + $0x98] sm:$0xff]
    %v11782 = vld [vmem:[#allocation14 + $0xa0] sm:$0xff]
    %v11783 = vld [vmem:[#allocation14 + $0xa8] sm:$0xff]
    %v11784 = vld [vmem:[#allocation14 + $0xb0] sm:$0xff]
    %v11785 = vld [vmem:[#allocation14 + $0xb8] sm:$0xff]
    %v11786 = vld [vmem:[#allocation14 + $0xc0] sm:$0xff]
    %v11787 = vld [vmem:[#allocation14 + $0xc8] sm:$0xff]
    %v11788 = vld [vmem:[#allocation14 + $0xd0] sm:$0xff]
    %v11789 = vld [vmem:[#allocation14 + $0xd8] sm:$0xff]
    %v11790 = vld [vmem:[#allocation14 + $0xe0] sm:$0xff]
    %v11791 = vld [vmem:[#allocation14 + $0xe8] sm:$0xff]
    %v11792 = vld [vmem:[#allocation14 + $0xf0] sm:$0xff]
    %v11793 = vld [vmem:[#allocation14 + $0xf8] sm:$0xff]
    %v11794 = vld [vmem:[#allocation14 + $0x100] sm:$0xff]
    %v11795 = vld [vmem:[#allocation14 + $0x108] sm:$0xff]
    %v11796 = vld [vmem:[#allocation14 + $0x110] sm:$0xff]
    %v11797 = vld [vmem:[#allocation14 + $0x118] sm:$0xff]
    %v11798 = vld [vmem:[#allocation14 + $0x120] sm:$0xff]
    %v11799 = vld [vmem:[#allocation14 + $0x128] sm:$0xff]
    %v11800 = vld [vmem:[#allocation14 + $0x130] sm:$0xff]
    %v11801 = vld [vmem:[#allocation14 + $0x138] sm:$0xff]
    %v11802 = vld [vmem:[#allocation14 + $0x140] sm:$0xff]
    %v11803 = vld [vmem:[#allocation14 + $0x148] sm:$0xff]
    %v11804 = vld [vmem:[#allocation14 + $0x150] sm:$0xff]
    %v11805 = vld [vmem:[#allocation14 + $0x158] sm:$0xff]
    %v11806 = vld [vmem:[#allocation14 + $0x160] sm:$0xff]
    %v11807 = vld [vmem:[#allocation14 + $0x168] sm:$0xff]
    %v11808 = vld [vmem:[#allocation14 + $0x170] sm:$0xff]
    %v11809 = vld [vmem:[#allocation14 + $0x178] sm:$0xff]
    %v11810 = vld [vmem:[#allocation14 + $0x180] sm:$0xff]
    %v11811 = vld [vmem:[#allocation14 + $0x188] sm:$0xff]
    %v11812 = vld [vmem:[#allocation14 + $0x190] sm:$0xff]
    %v11813 = vld [vmem:[#allocation14 + $0x198] sm:$0xff]
    %v11814 = vld [vmem:[#allocation14 + $0x1a0] sm:$0xff]
    %v11815 = vld [vmem:[#allocation14 + $0x1a8] sm:$0xff]
    %v11816 = vld [vmem:[#allocation14 + $0x1b0] sm:$0xff]
    %v11817 = vld [vmem:[#allocation14 + $0x1b8] sm:$0xff]
    %v11818 = vld [vmem:[#allocation14 + $0x1c0] sm:$0xff]
    %v11819 = vld [vmem:[#allocation14 + $0x1c8] sm:$0xff]
    %v11820 = vld [vmem:[#allocation14 + $0x1d0] sm:$0xff]
    %v11821 = vld [vmem:[#allocation14 + $0x1d8] sm:$0xff]
    %v11822 = vld [vmem:[#allocation14 + $0x1e0] sm:$0xff]
    %v11823 = vld [vmem:[#allocation14 + $0x1e8] sm:$0xff]
    %v11824 = vld [vmem:[#allocation14 + $0x1f0] sm:$0xff]
    %v11825 = vld [vmem:[#allocation14 + $0x1f8] sm:$0xff]
    %v11826 = vld [vmem:[#allocation14 + $0x200] sm:$0xff]
    %v11827 = vld [vmem:[#allocation14 + $0x208] sm:$0xff]
    %v11828 = vld [vmem:[#allocation14 + $0x210] sm:$0xff]
    %v11829 = vld [vmem:[#allocation14 + $0x218] sm:$0xff]
    %v11830 = vld [vmem:[#allocation14 + $0x220] sm:$0xff]
    %v11831 = vld [vmem:[#allocation14 + $0x228] sm:$0xff]
    %v11832 = vld [vmem:[#allocation14 + $0x230] sm:$0xff]
    %v11833 = vld [vmem:[#allocation14 + $0x238] sm:$0xff]
    %v11834 = vld [vmem:[#allocation14 + $0x240] sm:$0xff]
    %v11835 = vld [vmem:[#allocation14 + $0x248] sm:$0xff]
    %v11836 = vld [vmem:[#allocation14 + $0x250] sm:$0xff]
    %v11837 = vld [vmem:[#allocation14 + $0x258] sm:$0xff]
    %v11838 = vld [vmem:[#allocation14 + $0x260] sm:$0xff]
    %v11839 = vld [vmem:[#allocation14 + $0x268] sm:$0xff]
    %v11840 = vld [vmem:[#allocation14 + $0x270] sm:$0xff]
    %v11841 = vld [vmem:[#allocation14 + $0x278] sm:$0xff]
    %v11842 = vld [vmem:[#allocation14 + $0x280] sm:$0xff]
    %v11843 = vld [vmem:[#allocation14 + $0x288] sm:$0xff]
    %v11844 = vld [vmem:[#allocation14 + $0x290] sm:$0xff]
    %v11845 = vld [vmem:[#allocation14 + $0x298] sm:$0xff]
    %v11846 = vld [vmem:[#allocation14 + $0x2a0] sm:$0xff]
    %v11847 = vld [vmem:[#allocation14 + $0x2a8] sm:$0xff]
    %v11848 = vld [vmem:[#allocation14 + $0x2b0] sm:$0xff]
    %v11849 = vld [vmem:[#allocation14 + $0x2b8] sm:$0xff]
    %v11850 = vld [vmem:[#allocation14 + $0x2c0] sm:$0xff]
    %v11851 = vld [vmem:[#allocation14 + $0x2c8] sm:$0xff]
    %v11852 = vld [vmem:[#allocation14 + $0x2d0] sm:$0xff]
    %v11853 = vld [vmem:[#allocation14 + $0x2d8] sm:$0xff]
    %v11854 = vld [vmem:[#allocation14 + $0x2e0] sm:$0xff]
    %v11855 = vld [vmem:[#allocation14 + $0x2e8] sm:$0xff]
    %v11856 = vld [vmem:[#allocation14 + $0x2f0] sm:$0xff]
    %v11857 = vld [vmem:[#allocation14 + $0x2f8] sm:$0xff]
    %v11858 = vld [vmem:[#allocation14 + $0x300] sm:$0xff]
    %v11859 = vld [vmem:[#allocation14 + $0x308] sm:$0xff]
    %v11860 = vld [vmem:[#allocation14 + $0x310] sm:$0xff]
    %v11861 = vld [vmem:[#allocation14 + $0x318] sm:$0xff]
    %v11862 = vld [vmem:[#allocation14 + $0x320] sm:$0xff]
    %v11863 = vld [vmem:[#allocation14 + $0x328] sm:$0xff]
    %v11864 = vld [vmem:[#allocation14 + $0x330] sm:$0xff]
    %v11865 = vld [vmem:[#allocation14 + $0x338] sm:$0xff]
    %v11866 = vld [vmem:[#allocation14 + $0x340] sm:$0xff]
    %v11867 = vld [vmem:[#allocation14 + $0x348] sm:$0xff]
    %v11868 = vld [vmem:[#allocation14 + $0x350] sm:$0xff]
    %v11869 = vld [vmem:[#allocation14 + $0x358] sm:$0xff]
    %v11870 = vld [vmem:[#allocation14 + $0x360] sm:$0xff]
    %v11871 = vld [vmem:[#allocation14 + $0x368] sm:$0xff]
    %v11872 = vld [vmem:[#allocation14 + $0x370] sm:$0xff]
    %v11873 = vld [vmem:[#allocation14 + $0x378] sm:$0xff]
    %v11874 = vld [vmem:[#allocation14 + $0x380] sm:$0xff]
    %v11875 = vld [vmem:[#allocation14 + $0x388] sm:$0xff]
    %v11876 = vld [vmem:[#allocation14 + $0x390] sm:$0xff]
    %v11877 = vld [vmem:[#allocation14 + $0x398] sm:$0xff]
    %v11878 = vld [vmem:[#allocation14 + $0x3a0] sm:$0xff]
    %v11879 = vld [vmem:[#allocation14 + $0x3a8] sm:$0xff]
    %v11880 = vld [vmem:[#allocation14 + $0x3b0] sm:$0xff]
    %v11881 = vld [vmem:[#allocation14 + $0x3b8] sm:$0xff]
    %v11882 = vld [vmem:[#allocation14 + $0x3c0] sm:$0xff]
    %v11883 = vld [vmem:[#allocation14 + $0x3c8] sm:$0xff]
    %v11884 = vld [vmem:[#allocation14 + $0x3d0] sm:$0xff]
    %v11885 = vld [vmem:[#allocation14 + $0x3d8] sm:$0xff]
    %v11886 = vld [vmem:[#allocation14 + $0x3e0] sm:$0xff]
    %v11887 = vld [vmem:[#allocation14 + $0x3e8] sm:$0xff]
    %v11888 = vld [vmem:[#allocation14 + $0x3f0] sm:$0xff]
    %v11889 = vld [vmem:[#allocation14 + $0x3f8] sm:$0xff]
    %v11890 = vld [vmem:[#allocation14 + $0x400] sm:$0xff]
    %v11891 = vld [vmem:[#allocation14 + $0x408] sm:$0xff]
    %v11892 = vld [vmem:[#allocation14 + $0x410] sm:$0xff]
    %v11893 = vld [vmem:[#allocation14 + $0x418] sm:$0xff]
    %v11894 = vld [vmem:[#allocation14 + $0x420] sm:$0xff]
    %v11895 = vld [vmem:[#allocation14 + $0x428] sm:$0xff]
    %v11896 = vld [vmem:[#allocation14 + $0x430] sm:$0xff]
    %v11897 = vld [vmem:[#allocation14 + $0x438] sm:$0xff]
    %v11898 = vld [vmem:[#allocation14 + $0x440] sm:$0xff]
    %v11899 = vld [vmem:[#allocation14 + $0x448] sm:$0xff]
    %v11900 = vld [vmem:[#allocation14 + $0x450] sm:$0xff]
    %v11901 = vld [vmem:[#allocation14 + $0x458] sm:$0xff]
    %v11902 = vld [vmem:[#allocation14 + $0x460] sm:$0xff]
    %v11903 = vld [vmem:[#allocation14 + $0x468] sm:$0xff]
    %v11904 = vld [vmem:[#allocation14 + $0x470] sm:$0xff]
    %v11905 = vld [vmem:[#allocation14 + $0x478] sm:$0xff]
    %v11906 = vld [vmem:[#allocation16 + $0x2b] sm:$0x3f]
    %v11908 = vlaneseq
    %v11909 = vshrl.u32 %v11908, 7
    %v11910 = vsub.s32 0, %v11909
    %v11911 = vrot.slane %v11906, %v11910
    %v11912 = vlaneseq
    %v11913 = vshrl.u32 %v11912, 7
    %v11914 = vsub.s32 1, %v11913
    %v11915 = vrot.slane %v11906, %v11914
    %v11916 = vlaneseq
    %v11917 = vshrl.u32 %v11916, 7
    %v11918 = vsub.s32 2, %v11917
    %v11919 = vrot.slane %v11906, %v11918
    %v11920 = vlaneseq
    %v11921 = vshrl.u32 %v11920, 7
    %v11922 = vsub.s32 3, %v11921
    %v11923 = vrot.slane %v11906, %v11922
    %v11924 = vlaneseq
    %v11925 = vshrl.u32 %v11924, 7
    %v11926 = vsub.s32 4, %v11925
    %v11927 = vrot.slane %v11906, %v11926
    %v11928 = vlaneseq
    %v11929 = vshrl.u32 %v11928, 7
    %v11930 = vsub.s32 5, %v11929
    %v11931 = vrot.slane %v11906, %v11930
    %v12082 = vunpack.c.l.b16 %v11762
    %v12083 = vunpack.c.h.b16 %v11762
    %v12084 = vunpack.c.l.b16 %v11763
    %v12085 = vunpack.c.h.b16 %v11763
    %v12086 = vunpack.c.l.b16 %v11764
    %v12087 = vunpack.c.h.b16 %v11764
    %v12088 = vunpack.c.l.b16 %v11765
    %v12089 = vunpack.c.h.b16 %v11765
    %v12090 = vunpack.c.l.b16 %v11766
    %v12091 = vunpack.c.h.b16 %v11766
    %v12092 = vunpack.c.l.b16 %v11767
    %v12093 = vunpack.c.h.b16 %v11767
    %v12094 = vunpack.c.l.b16 %v11768
    %v12095 = vunpack.c.h.b16 %v11768
    %v12096 = vunpack.c.l.b16 %v11769
    %v12097 = vunpack.c.h.b16 %v11769
    %v12098 = vunpack.c.l.b16 %v11770
    %v12099 = vunpack.c.h.b16 %v11770
    %v12100 = vunpack.c.l.b16 %v11771
    %v12101 = vunpack.c.h.b16 %v11771
    %v12102 = vunpack.c.l.b16 %v11772
    %v12103 = vunpack.c.h.b16 %v11772
    %v12104 = vunpack.c.l.b16 %v11773
    %v12105 = vunpack.c.h.b16 %v11773
    %v12106 = vunpack.c.l.b16 %v11774
    %v12107 = vunpack.c.h.b16 %v11774
    %v12108 = vunpack.c.l.b16 %v11775
    %v12109 = vunpack.c.h.b16 %v11775
    %v12110 = vunpack.c.l.b16 %v11776
    %v12111 = vunpack.c.h.b16 %v11776
    %v12112 = vunpack.c.l.b16 %v11777
    %v12113 = vunpack.c.h.b16 %v11777
    %v12114 = vunpack.c.l.b16 %v11778
    %v12115 = vunpack.c.h.b16 %v11778
    %v12116 = vunpack.c.l.b16 %v11779
    %v12117 = vunpack.c.h.b16 %v11779
    %v12118 = vunpack.c.l.b16 %v11780
    %v12119 = vunpack.c.h.b16 %v11780
    %v12120 = vunpack.c.l.b16 %v11781
    %v12121 = vunpack.c.h.b16 %v11781
    %v12122 = vunpack.c.l.b16 %v11782
    %v12123 = vunpack.c.h.b16 %v11782
    %v12124 = vunpack.c.l.b16 %v11783
    %v12125 = vunpack.c.h.b16 %v11783
    %v12126 = vunpack.c.l.b16 %v11784
    %v12127 = vunpack.c.h.b16 %v11784
    %v12128 = vunpack.c.l.b16 %v11785
    %v12129 = vunpack.c.h.b16 %v11785
    %v12130 = vunpack.c.l.b16 %v11786
    %v12131 = vunpack.c.h.b16 %v11786
    %v12132 = vunpack.c.l.b16 %v11787
    %v12133 = vunpack.c.h.b16 %v11787
    %v12134 = vunpack.c.l.b16 %v11788
    %v12135 = vunpack.c.h.b16 %v11788
    %v12136 = vunpack.c.l.b16 %v11789
    %v12137 = vunpack.c.h.b16 %v11789
    %v12138 = vunpack.c.l.b16 %v11790
    %v12139 = vunpack.c.h.b16 %v11790
    %v12140 = vunpack.c.l.b16 %v11791
    %v12141 = vunpack.c.h.b16 %v11791
    %v12142 = vunpack.c.l.b16 %v11792
    %v12143 = vunpack.c.h.b16 %v11792
    %v12144 = vunpack.c.l.b16 %v11793
    %v12145 = vunpack.c.h.b16 %v11793
    %v12146 = vunpack.c.l.b16 %v11794
    %v12147 = vunpack.c.h.b16 %v11794
    %v12148 = vunpack.c.l.b16 %v11795
    %v12149 = vunpack.c.h.b16 %v11795
    %v12150 = vunpack.c.l.b16 %v11796
    %v12151 = vunpack.c.h.b16 %v11796
    %v12152 = vunpack.c.l.b16 %v11797
    %v12153 = vunpack.c.h.b16 %v11797
    %v12154 = vunpack.c.l.b16 %v11798
    %v12155 = vunpack.c.h.b16 %v11798
    %v12156 = vunpack.c.l.b16 %v11799
    %v12157 = vunpack.c.h.b16 %v11799
    %v12158 = vunpack.c.l.b16 %v11800
    %v12159 = vunpack.c.h.b16 %v11800
    %v12160 = vunpack.c.l.b16 %v11801
    %v12161 = vunpack.c.h.b16 %v11801
    %v12162 = vunpack.c.l.b16 %v11802
    %v12163 = vunpack.c.h.b16 %v11802
    %v12164 = vunpack.c.l.b16 %v11803
    %v12165 = vunpack.c.h.b16 %v11803
    %v12166 = vunpack.c.l.b16 %v11804
    %v12167 = vunpack.c.h.b16 %v11804
    %v12168 = vunpack.c.l.b16 %v11805
    %v12169 = vunpack.c.h.b16 %v11805
    %v12170 = vunpack.c.l.b16 %v11806
    %v12171 = vunpack.c.h.b16 %v11806
    %v12172 = vunpack.c.l.b16 %v11807
    %v12173 = vunpack.c.h.b16 %v11807
    %v12174 = vunpack.c.l.b16 %v11808
    %v12175 = vunpack.c.h.b16 %v11808
    %v12176 = vunpack.c.l.b16 %v11809
    %v12177 = vunpack.c.h.b16 %v11809
    %v12178 = vunpack.c.l.b16 %v11810
    %v12179 = vunpack.c.h.b16 %v11810
    %v12180 = vunpack.c.l.b16 %v11811
    %v12181 = vunpack.c.h.b16 %v11811
    %v12182 = vunpack.c.l.b16 %v11812
    %v12183 = vunpack.c.h.b16 %v11812
    %v12184 = vunpack.c.l.b16 %v11813
    %v12185 = vunpack.c.h.b16 %v11813
    %v12186 = vunpack.c.l.b16 %v11814
    %v12187 = vunpack.c.h.b16 %v11814
    %v12188 = vunpack.c.l.b16 %v11815
    %v12189 = vunpack.c.h.b16 %v11815
    %v12190 = vunpack.c.l.b16 %v11816
    %v12191 = vunpack.c.h.b16 %v11816
    %v12192 = vunpack.c.l.b16 %v11817
    %v12193 = vunpack.c.h.b16 %v11817
    %v12194 = vunpack.c.l.b16 %v11818
    %v12195 = vunpack.c.h.b16 %v11818
    %v12196 = vunpack.c.l.b16 %v11819
    %v12197 = vunpack.c.h.b16 %v11819
    %v12198 = vunpack.c.l.b16 %v11820
    %v12199 = vunpack.c.h.b16 %v11820
    %v12200 = vunpack.c.l.b16 %v11821
    %v12201 = vunpack.c.h.b16 %v11821
    %v12202 = vunpack.c.l.b16 %v11822
    %v12203 = vunpack.c.h.b16 %v11822
    %v12204 = vunpack.c.l.b16 %v11823
    %v12205 = vunpack.c.h.b16 %v11823
    %v12206 = vunpack.c.l.b16 %v11824
    %v12207 = vunpack.c.h.b16 %v11824
    %v12208 = vunpack.c.l.b16 %v11825
    %v12209 = vunpack.c.h.b16 %v11825
    %v12210 = vunpack.c.l.b16 %v11826
    %v12211 = vunpack.c.h.b16 %v11826
    %v12212 = vunpack.c.l.b16 %v11827
    %v12213 = vunpack.c.h.b16 %v11827
    %v12214 = vunpack.c.l.b16 %v11828
    %v12215 = vunpack.c.h.b16 %v11828
    %v12216 = vunpack.c.l.b16 %v11829
    %v12217 = vunpack.c.h.b16 %v11829
    %v12218 = vunpack.c.l.b16 %v11830
    %v12219 = vunpack.c.h.b16 %v11830
    %v12220 = vunpack.c.l.b16 %v11831
    %v12221 = vunpack.c.h.b16 %v11831
    %v12222 = vunpack.c.l.b16 %v11832
    %v12223 = vunpack.c.h.b16 %v11832
    %v12224 = vunpack.c.l.b16 %v11833
    %v12225 = vunpack.c.h.b16 %v11833
    %v12226 = vunpack.c.l.b16 %v11834
    %v12227 = vunpack.c.h.b16 %v11834
    %v12228 = vunpack.c.l.b16 %v11835
    %v12229 = vunpack.c.h.b16 %v11835
    %v12230 = vunpack.c.l.b16 %v11836
    %v12231 = vunpack.c.h.b16 %v11836
    %v12232 = vunpack.c.l.b16 %v11837
    %v12233 = vunpack.c.h.b16 %v11837
    %v12234 = vunpack.c.l.b16 %v11838
    %v12235 = vunpack.c.h.b16 %v11838
    %v12236 = vunpack.c.l.b16 %v11839
    %v12237 = vunpack.c.h.b16 %v11839
    %v12238 = vunpack.c.l.b16 %v11840
    %v12239 = vunpack.c.h.b16 %v11840
    %v12240 = vunpack.c.l.b16 %v11841
    %v12241 = vunpack.c.h.b16 %v11841
    %v12242 = vunpack.c.l.b16 %v11842
    %v12243 = vunpack.c.h.b16 %v11842
    %v12244 = vunpack.c.l.b16 %v11843
    %v12245 = vunpack.c.h.b16 %v11843
    %v12246 = vunpack.c.l.b16 %v11844
    %v12247 = vunpack.c.h.b16 %v11844
    %v12248 = vunpack.c.l.b16 %v11845
    %v12249 = vunpack.c.h.b16 %v11845
    %v12250 = vunpack.c.l.b16 %v11846
    %v12251 = vunpack.c.h.b16 %v11846
    %v12252 = vunpack.c.l.b16 %v11847
    %v12253 = vunpack.c.h.b16 %v11847
    %v12254 = vunpack.c.l.b16 %v11848
    %v12255 = vunpack.c.h.b16 %v11848
    %v12256 = vunpack.c.l.b16 %v11849
    %v12257 = vunpack.c.h.b16 %v11849
    %v12258 = vunpack.c.l.b16 %v11850
    %v12259 = vunpack.c.h.b16 %v11850
    %v12260 = vunpack.c.l.b16 %v11851
    %v12261 = vunpack.c.h.b16 %v11851
    %v12262 = vunpack.c.l.b16 %v11852
    %v12263 = vunpack.c.h.b16 %v11852
    %v12264 = vunpack.c.l.b16 %v11853
    %v12265 = vunpack.c.h.b16 %v11853
    %v12266 = vunpack.c.l.b16 %v11854
    %v12267 = vunpack.c.h.b16 %v11854
    %v12268 = vunpack.c.l.b16 %v11855
    %v12269 = vunpack.c.h.b16 %v11855
    %v12270 = vunpack.c.l.b16 %v11856
    %v12271 = vunpack.c.h.b16 %v11856
    %v12272 = vunpack.c.l.b16 %v11857
    %v12273 = vunpack.c.h.b16 %v11857
    %v12274 = vunpack.c.l.b16 %v11858
    %v12275 = vunpack.c.h.b16 %v11858
    %v12276 = vunpack.c.l.b16 %v11859
    %v12277 = vunpack.c.h.b16 %v11859
    %v12278 = vunpack.c.l.b16 %v11860
    %v12279 = vunpack.c.h.b16 %v11860
    %v12280 = vunpack.c.l.b16 %v11861
    %v12281 = vunpack.c.h.b16 %v11861
    %v12282 = vunpack.c.l.b16 %v11862
    %v12283 = vunpack.c.h.b16 %v11862
    %v12284 = vunpack.c.l.b16 %v11863
    %v12285 = vunpack.c.h.b16 %v11863
    %v12286 = vunpack.c.l.b16 %v11864
    %v12287 = vunpack.c.h.b16 %v11864
    %v12288 = vunpack.c.l.b16 %v11865
    %v12289 = vunpack.c.h.b16 %v11865
    %v12290 = vunpack.c.l.b16 %v11866
    %v12291 = vunpack.c.h.b16 %v11866
    %v12292 = vunpack.c.l.b16 %v11867
    %v12293 = vunpack.c.h.b16 %v11867
    %v12294 = vunpack.c.l.b16 %v11868
    %v12295 = vunpack.c.h.b16 %v11868
    %v12296 = vunpack.c.l.b16 %v11869
    %v12297 = vunpack.c.h.b16 %v11869
    %v12298 = vunpack.c.l.b16 %v11870
    %v12299 = vunpack.c.h.b16 %v11870
    %v12300 = vunpack.c.l.b16 %v11871
    %v12301 = vunpack.c.h.b16 %v11871
    %v12302 = vunpack.c.l.b16 %v11872
    %v12303 = vunpack.c.h.b16 %v11872
    %v12304 = vunpack.c.l.b16 %v11873
    %v12305 = vunpack.c.h.b16 %v11873
    %v12306 = vunpack.c.l.b16 %v11874
    %v12307 = vunpack.c.h.b16 %v11874
    %v12308 = vunpack.c.l.b16 %v11875
    %v12309 = vunpack.c.h.b16 %v11875
    %v12310 = vunpack.c.l.b16 %v11876
    %v12311 = vunpack.c.h.b16 %v11876
    %v12312 = vunpack.c.l.b16 %v11877
    %v12313 = vunpack.c.h.b16 %v11877
    %v12314 = vunpack.c.l.b16 %v11878
    %v12315 = vunpack.c.h.b16 %v11878
    %v12316 = vunpack.c.l.b16 %v11879
    %v12317 = vunpack.c.h.b16 %v11879
    %v12318 = vunpack.c.l.b16 %v11880
    %v12319 = vunpack.c.h.b16 %v11880
    %v12320 = vunpack.c.l.b16 %v11881
    %v12321 = vunpack.c.h.b16 %v11881
    %v12322 = vunpack.c.l.b16 %v11882
    %v12323 = vunpack.c.h.b16 %v11882
    %v12324 = vunpack.c.l.b16 %v11883
    %v12325 = vunpack.c.h.b16 %v11883
    %v12326 = vunpack.c.l.b16 %v11884
    %v12327 = vunpack.c.h.b16 %v11884
    %v12328 = vunpack.c.l.b16 %v11885
    %v12329 = vunpack.c.h.b16 %v11885
    %v12330 = vunpack.c.l.b16 %v11886
    %v12331 = vunpack.c.h.b16 %v11886
    %v12332 = vunpack.c.l.b16 %v11887
    %v12333 = vunpack.c.h.b16 %v11887
    %v12334 = vunpack.c.l.b16 %v11888
    %v12335 = vunpack.c.h.b16 %v11888
    %v12336 = vunpack.c.l.b16 %v11889
    %v12337 = vunpack.c.h.b16 %v11889
    %v12338 = vunpack.c.l.b16 %v11890
    %v12339 = vunpack.c.h.b16 %v11890
    %v12340 = vunpack.c.l.b16 %v11891
    %v12341 = vunpack.c.h.b16 %v11891
    %v12342 = vunpack.c.l.b16 %v11892
    %v12343 = vunpack.c.h.b16 %v11892
    %v12344 = vunpack.c.l.b16 %v11893
    %v12345 = vunpack.c.h.b16 %v11893
    %v12346 = vunpack.c.l.b16 %v11894
    %v12347 = vunpack.c.h.b16 %v11894
    %v12348 = vunpack.c.l.b16 %v11895
    %v12349 = vunpack.c.h.b16 %v11895
    %v12350 = vunpack.c.l.b16 %v11896
    %v12351 = vunpack.c.h.b16 %v11896
    %v12352 = vunpack.c.l.b16 %v11897
    %v12353 = vunpack.c.h.b16 %v11897
    %v12354 = vunpack.c.l.b16 %v11898
    %v12355 = vunpack.c.h.b16 %v11898
    %v12356 = vunpack.c.l.b16 %v11899
    %v12357 = vunpack.c.h.b16 %v11899
    %v12358 = vunpack.c.l.b16 %v11900
    %v12359 = vunpack.c.h.b16 %v11900
    %v12360 = vunpack.c.l.b16 %v11901
    %v12361 = vunpack.c.h.b16 %v11901
    %v12362 = vunpack.c.l.b16 %v11902
    %v12363 = vunpack.c.h.b16 %v11902
    %v12364 = vunpack.c.l.b16 %v11903
    %v12365 = vunpack.c.h.b16 %v11903
    %v12366 = vunpack.c.l.b16 %v11904
    %v12367 = vunpack.c.h.b16 %v11904
    %v12368 = vunpack.c.l.b16 %v11905
    %v12369 = vunpack.c.h.b16 %v11905
    %v12370 = vpack.c.b16 %v12088, %v12082
    %v12371 = vpack.c.b16 %v12089, %v12083
    %v12372 = vpack.c.b16 %v12090, %v12084
    %v12373 = vpack.c.b16 %v12091, %v12085
    %v12374 = vpack.c.b16 %v12092, %v12086
    %v12375 = vpack.c.b16 %v12093, %v12087
    %v12376 = vpack.c.b16 %v12100, %v12094
    %v12377 = vpack.c.b16 %v12101, %v12095
    %v12378 = vpack.c.b16 %v12102, %v12096
    %v12379 = vpack.c.b16 %v12103, %v12097
    %v12380 = vpack.c.b16 %v12104, %v12098
    %v12381 = vpack.c.b16 %v12105, %v12099
    %v12382 = vpack.c.b16 %v12112, %v12106
    %v12383 = vpack.c.b16 %v12113, %v12107
    %v12384 = vpack.c.b16 %v12114, %v12108
    %v12385 = vpack.c.b16 %v12115, %v12109
    %v12386 = vpack.c.b16 %v12116, %v12110
    %v12387 = vpack.c.b16 %v12117, %v12111
    %v12388 = vpack.c.b16 %v12124, %v12118
    %v12389 = vpack.c.b16 %v12125, %v12119
    %v12390 = vpack.c.b16 %v12126, %v12120
    %v12391 = vpack.c.b16 %v12127, %v12121
    %v12392 = vpack.c.b16 %v12128, %v12122
    %v12393 = vpack.c.b16 %v12129, %v12123
    %v12394 = vpack.c.b16 %v12136, %v12130
    %v12395 = vpack.c.b16 %v12137, %v12131
    %v12396 = vpack.c.b16 %v12138, %v12132
    %v12397 = vpack.c.b16 %v12139, %v12133
    %v12398 = vpack.c.b16 %v12140, %v12134
    %v12399 = vpack.c.b16 %v12141, %v12135
    %v12400 = vpack.c.b16 %v12148, %v12142
    %v12401 = vpack.c.b16 %v12149, %v12143
    %v12402 = vpack.c.b16 %v12150, %v12144
    %v12403 = vpack.c.b16 %v12151, %v12145
    %v12404 = vpack.c.b16 %v12152, %v12146
    %v12405 = vpack.c.b16 %v12153, %v12147
    %v12406 = vpack.c.b16 %v12160, %v12154
    %v12407 = vpack.c.b16 %v12161, %v12155
    %v12408 = vpack.c.b16 %v12162, %v12156
    %v12409 = vpack.c.b16 %v12163, %v12157
    %v12410 = vpack.c.b16 %v12164, %v12158
    %v12411 = vpack.c.b16 %v12165, %v12159
    %v12412 = vpack.c.b16 %v12172, %v12166
    %v12413 = vpack.c.b16 %v12173, %v12167
    %v12414 = vpack.c.b16 %v12174, %v12168
    %v12415 = vpack.c.b16 %v12175, %v12169
    %v12416 = vpack.c.b16 %v12176, %v12170
    %v12417 = vpack.c.b16 %v12177, %v12171
    %v12418 = vpack.c.b16 %v12184, %v12178
    %v12419 = vpack.c.b16 %v12185, %v12179
    %v12420 = vpack.c.b16 %v12186, %v12180
    %v12421 = vpack.c.b16 %v12187, %v12181
    %v12422 = vpack.c.b16 %v12188, %v12182
    %v12423 = vpack.c.b16 %v12189, %v12183
    %v12424 = vpack.c.b16 %v12196, %v12190
    %v12425 = vpack.c.b16 %v12197, %v12191
    %v12426 = vpack.c.b16 %v12198, %v12192
    %v12427 = vpack.c.b16 %v12199, %v12193
    %v12428 = vpack.c.b16 %v12200, %v12194
    %v12429 = vpack.c.b16 %v12201, %v12195
    %v12430 = vpack.c.b16 %v12208, %v12202
    %v12431 = vpack.c.b16 %v12209, %v12203
    %v12432 = vpack.c.b16 %v12210, %v12204
    %v12433 = vpack.c.b16 %v12211, %v12205
    %v12434 = vpack.c.b16 %v12212, %v12206
    %v12435 = vpack.c.b16 %v12213, %v12207
    %v12436 = vpack.c.b16 %v12220, %v12214
    %v12437 = vpack.c.b16 %v12221, %v12215
    %v12438 = vpack.c.b16 %v12222, %v12216
    %v12439 = vpack.c.b16 %v12223, %v12217
    %v12440 = vpack.c.b16 %v12224, %v12218
    %v12441 = vpack.c.b16 %v12225, %v12219
    %v12442 = vpack.c.b16 %v12232, %v12226
    %v12443 = vpack.c.b16 %v12233, %v12227
    %v12444 = vpack.c.b16 %v12234, %v12228
    %v12445 = vpack.c.b16 %v12235, %v12229
    %v12446 = vpack.c.b16 %v12236, %v12230
    %v12447 = vpack.c.b16 %v12237, %v12231
    %v12448 = vpack.c.b16 %v12244, %v12238
    %v12449 = vpack.c.b16 %v12245, %v12239
    %v12450 = vpack.c.b16 %v12246, %v12240
    %v12451 = vpack.c.b16 %v12247, %v12241
    %v12452 = vpack.c.b16 %v12248, %v12242
    %v12453 = vpack.c.b16 %v12249, %v12243
    %v12454 = vpack.c.b16 %v12256, %v12250
    %v12455 = vpack.c.b16 %v12257, %v12251
    %v12456 = vpack.c.b16 %v12258, %v12252
    %v12457 = vpack.c.b16 %v12259, %v12253
    %v12458 = vpack.c.b16 %v12260, %v12254
    %v12459 = vpack.c.b16 %v12261, %v12255
    %v12460 = vpack.c.b16 %v12268, %v12262
    %v12461 = vpack.c.b16 %v12269, %v12263
    %v12462 = vpack.c.b16 %v12270, %v12264
    %v12463 = vpack.c.b16 %v12271, %v12265
    %v12464 = vpack.c.b16 %v12272, %v12266
    %v12465 = vpack.c.b16 %v12273, %v12267
    %v12466 = vpack.c.b16 %v12280, %v12274
    %v12467 = vpack.c.b16 %v12281, %v12275
    %v12468 = vpack.c.b16 %v12282, %v12276
    %v12469 = vpack.c.b16 %v12283, %v12277
    %v12470 = vpack.c.b16 %v12284, %v12278
    %v12471 = vpack.c.b16 %v12285, %v12279
    %v12472 = vpack.c.b16 %v12292, %v12286
    %v12473 = vpack.c.b16 %v12293, %v12287
    %v12474 = vpack.c.b16 %v12294, %v12288
    %v12475 = vpack.c.b16 %v12295, %v12289
    %v12476 = vpack.c.b16 %v12296, %v12290
    %v12477 = vpack.c.b16 %v12297, %v12291
    %v12478 = vpack.c.b16 %v12304, %v12298
    %v12479 = vpack.c.b16 %v12305, %v12299
    %v12480 = vpack.c.b16 %v12306, %v12300
    %v12481 = vpack.c.b16 %v12307, %v12301
    %v12482 = vpack.c.b16 %v12308, %v12302
    %v12483 = vpack.c.b16 %v12309, %v12303
    %v12484 = vpack.c.b16 %v12316, %v12310
    %v12485 = vpack.c.b16 %v12317, %v12311
    %v12486 = vpack.c.b16 %v12318, %v12312
    %v12487 = vpack.c.b16 %v12319, %v12313
    %v12488 = vpack.c.b16 %v12320, %v12314
    %v12489 = vpack.c.b16 %v12321, %v12315
    %v12490 = vpack.c.b16 %v12328, %v12322
    %v12491 = vpack.c.b16 %v12329, %v12323
    %v12492 = vpack.c.b16 %v12330, %v12324
    %v12493 = vpack.c.b16 %v12331, %v12325
    %v12494 = vpack.c.b16 %v12332, %v12326
    %v12495 = vpack.c.b16 %v12333, %v12327
    %v12496 = vpack.c.b16 %v12340, %v12334
    %v12497 = vpack.c.b16 %v12341, %v12335
    %v12498 = vpack.c.b16 %v12342, %v12336
    %v12499 = vpack.c.b16 %v12343, %v12337
    %v12500 = vpack.c.b16 %v12344, %v12338
    %v12501 = vpack.c.b16 %v12345, %v12339
    %v12502 = vpack.c.b16 %v12352, %v12346
    %v12503 = vpack.c.b16 %v12353, %v12347
    %v12504 = vpack.c.b16 %v12354, %v12348
    %v12505 = vpack.c.b16 %v12355, %v12349
    %v12506 = vpack.c.b16 %v12356, %v12350
    %v12507 = vpack.c.b16 %v12357, %v12351
    %v12508 = vpack.c.b16 %v12364, %v12358
    %v12509 = vpack.c.b16 %v12365, %v12359
    %v12510 = vpack.c.b16 %v12366, %v12360
    %v12511 = vpack.c.b16 %v12367, %v12361
    %v12512 = vpack.c.b16 %v12368, %v12362
    %v12513 = vpack.c.b16 %v12369, %v12363
    %12658 = vmatprep.subr.bf16.mxu0 %v12371
    %12659 = vmatpush1.bf16.msra.mxu0 %v12370
    %12660 = vmatprep.subr.bf16.mxu0 %v12377
    %12661 = vmatpush1.bf16.msra.mxu0 %v12376
    %12662 = vmatprep.subr.bf16.mxu0 %v12383
    %12663 = vmatpush1.bf16.msra.mxu0 %v12382
    %12664 = vmatprep.subr.bf16.mxu0 %v12389
    %12665 = vmatpush1.bf16.msra.mxu0 %v12388
    %12666 = vmatprep.subr.bf16.mxu0 %v12395
    %12667 = vmatpush1.bf16.msra.mxu0 %v12394
    %12668 = vmatprep.subr.bf16.mxu0 %v12401
    %12669 = vmatpush1.bf16.msra.mxu0 %v12400
    %12670 = vmatprep.subr.bf16.mxu0 %v12407
    %12671 = vmatpush1.bf16.msra.mxu0 %v12406
    %12672 = vmatprep.subr.bf16.mxu0 %v12413
    %12673 = vmatpush1.bf16.msra.mxu0 %v12412
    %12674 = vmatprep.subr.bf16.mxu0 %v12419
    %12675 = vmatpush1.bf16.msra.mxu0 %v12418
    %12676 = vmatprep.subr.bf16.mxu0 %v12425
    %12677 = vmatpush1.bf16.msra.mxu0 %v12424
    %12678 = vmatprep.subr.bf16.mxu0 %v12431
    %12679 = vmatpush1.bf16.msra.mxu0 %v12430
    %12680 = vmatprep.subr.bf16.mxu0 %v12437
    %12681 = vmatpush1.bf16.msra.mxu0 %v12436
    %12682 = vmatprep.subr.bf16.mxu0 %v12443
    %12683 = vmatpush1.bf16.msra.mxu0 %v12442
    %12684 = vmatprep.subr.bf16.mxu0 %v12449
    %12685 = vmatpush1.bf16.msra.mxu0 %v12448
    %12686 = vmatprep.subr.bf16.mxu0 %v12455
    %12687 = vmatpush1.bf16.msra.mxu0 %v12454
    %12688 = vmatprep.subr.bf16.mxu0 %v12461
    %12689 = vmatpush1.bf16.msra.mxu0 %v12460
    %12690 = vmatprep.mubr.bf16.mxu0 %v11760
    %12691 = vmatmul.mubr.bf16.gmra.mrb[0].mxu0 %v11759
    %v12692 = vpop.f32.mrb[0].mxu0
    %v12693 = vadd.f32 %v11911, %v12692
    %v12694 = vpop.f32.mrb[0].mxu0
    %v12695 = vadd.f32 %v11915, %v12694
    %v12696 = vpop.f32.mrb[0].mxu0
    %v12697 = vpop.f32.mrb[0].mxu0
    %12698 = vdwg.mxu0
    %12699 = vmatprep.subr.bf16.mxu0 %v12467
    %12700 = vmatpush1.bf16.msra.mxu0 %v12466
    %12701 = vmatprep.subr.bf16.mxu0 %v12473
    %12702 = vmatpush1.bf16.msra.mxu0 %v12472
    %12703 = vmatprep.subr.bf16.mxu0 %v12479
    %12704 = vmatpush1.bf16.msra.mxu0 %v12478
    %12705 = vmatprep.subr.bf16.mxu0 %v12485
    %12706 = vmatpush1.bf16.msra.mxu0 %v12484
    %12707 = vmatprep.subr.bf16.mxu0 %v12491
    %12708 = vmatpush1.bf16.msra.mxu0 %v12490
    %12709 = vmatprep.subr.bf16.mxu0 %v12497
    %12710 = vmatpush1.bf16.msra.mxu0 %v12496
    %12711 = vmatprep.subr.bf16.mxu0 %v12503
    %12712 = vmatpush1.bf16.msra.mxu0 %v12502
    %12713 = vmatprep.subr.bf16.mxu0 %v12509
    %12714 = vmatpush1.bf16.msra.mxu0 %v12508
    %12715 = vmatprep.subr.bf16.mxu0 0
    %12716 = vmatpush1.bf16.msra.mxu0 0
    %12717 = vmatprep.subr.bf16.mxu0 0
    %12718 = vmatpush1.bf16.msra.mxu0 0
    %12719 = vmatprep.subr.bf16.mxu0 0
    %12720 = vmatpush1.bf16.msra.mxu0 0
    %12721 = vmatprep.subr.bf16.mxu0 0
    %12722 = vmatpush1.bf16.msra.mxu0 0
    %12723 = vmatprep.subr.bf16.mxu0 0
    %12724 = vmatpush1.bf16.msra.mxu0 0
    %12725 = vmatprep.subr.bf16.mxu0 0
    %12726 = vmatpush1.bf16.msra.mxu0 0
    %12727 = vmatprep.subr.bf16.mxu0 0
    %12728 = vmatpush1.bf16.msra.mxu0 0
    %12729 = vmatprep.subr.bf16.mxu0 0
    %12730 = vmatpush1.bf16.msra.mxu0 0
    %12731 = vmatprep.mubr.bf16.mxu0 0
    %12732 = vmatmul.mubr.bf16.gmra.mrb[0].mxu0 %v11761
    %v12733 = vpop.f32.mrb[0].mxu0
    %v12734 = vadd.f32 %v12693, %v12733
    %v12735 = vpop.f32.mrb[0].mxu0
    %v12736 = vadd.f32 %v12695, %v12735
    %v12737 = vpop.f32.mrb[0].mxu0
    %v12738 = vpop.f32.mrb[0].mxu0
    %12739 = vdwg.mxu0
    %12740 = vmatprep.subr.bf16.mxu0 %v12373
    %12741 = vmatpush1.bf16.msra.mxu0 %v12372
    %12742 = vmatprep.subr.bf16.mxu0 %v12379
    %12743 = vmatpush1.bf16.msra.mxu0 %v12378
    %12744 = vmatprep.subr.bf16.mxu0 %v12385
    %12745 = vmatpush1.bf16.msra.mxu0 %v12384
    %12746 = vmatprep.subr.bf16.mxu0 %v12391
    %12747 = vmatpush1.bf16.msra.mxu0 %v12390
    %12748 = vmatprep.subr.bf16.mxu0 %v12397
    %12749 = vmatpush1.bf16.msra.mxu0 %v12396
    %12750 = vmatprep.subr.bf16.mxu0 %v12403
    %12751 = vmatpush1.bf16.msra.mxu0 %v12402
    %12752 = vmatprep.subr.bf16.mxu0 %v12409
    %12753 = vmatpush1.bf16.msra.mxu0 %v12408
    %12754 = vmatprep.subr.bf16.mxu0 %v12415
    %12755 = vmatpush1.bf16.msra.mxu0 %v12414
    %12756 = vmatprep.subr.bf16.mxu0 %v12421
    %12757 = vmatpush1.bf16.msra.mxu0 %v12420
    %12758 = vmatprep.subr.bf16.mxu0 %v12427
    %12759 = vmatpush1.bf16.msra.mxu0 %v12426
    %12760 = vmatprep.subr.bf16.mxu0 %v12433
    %12761 = vmatpush1.bf16.msra.mxu0 %v12432
    %12762 = vmatprep.subr.bf16.mxu0 %v12439
    %12763 = vmatpush1.bf16.msra.mxu0 %v12438
    %12764 = vmatprep.subr.bf16.mxu0 %v12445
    %12765 = vmatpush1.bf16.msra.mxu0 %v12444
    %12766 = vmatprep.subr.bf16.mxu0 %v12451
    %12767 = vmatpush1.bf16.msra.mxu0 %v12450
    %12768 = vmatprep.subr.bf16.mxu0 %v12457
    %12769 = vmatpush1.bf16.msra.mxu0 %v12456
    %12770 = vmatprep.subr.bf16.mxu0 %v12463
    %12771 = vmatpush1.bf16.msra.mxu0 %v12462
    %12772 = vmatprep.mubr.bf16.mxu0 %v11760
    %12773 = vmatmul.mubr.bf16.gmra.mrb[0].mxu0 %v11759
    %v12774 = vpop.f32.mrb[0].mxu0
    %v12775 = vadd.f32 %v11919, %v12774
    %v12776 = vpop.f32.mrb[0].mxu0
    %v12777 = vadd.f32 %v11923, %v12776
    %v12778 = vpop.f32.mrb[0].mxu0
    %v12779 = vpop.f32.mrb[0].mxu0
    %12780 = vdwg.mxu0
    %12781 = vmatprep.subr.bf16.mxu0 %v12469
    %12782 = vmatpush1.bf16.msra.mxu0 %v12468
    %12783 = vmatprep.subr.bf16.mxu0 %v12475
    %12784 = vmatpush1.bf16.msra.mxu0 %v12474
    %12785 = vmatprep.subr.bf16.mxu0 %v12481
    %12786 = vmatpush1.bf16.msra.mxu0 %v12480
    %12787 = vmatprep.subr.bf16.mxu0 %v12487
    %12788 = vmatpush1.bf16.msra.mxu0 %v12486
    %12789 = vmatprep.subr.bf16.mxu0 %v12493
    %12790 = vmatpush1.bf16.msra.mxu0 %v12492
    %12791 = vmatprep.subr.bf16.mxu0 %v12499
    %12792 = vmatpush1.bf16.msra.mxu0 %v12498
    %12793 = vmatprep.subr.bf16.mxu0 %v12505
    %12794 = vmatpush1.bf16.msra.mxu0 %v12504
    %12795 = vmatprep.subr.bf16.mxu0 %v12511
    %12796 = vmatpush1.bf16.msra.mxu0 %v12510
    %12797 = vmatprep.subr.bf16.mxu0 0
    %12798 = vmatpush1.bf16.msra.mxu0 0
    %12799 = vmatprep.subr.bf16.mxu0 0
    %12800 = vmatpush1.bf16.msra.mxu0 0
    %12801 = vmatprep.subr.bf16.mxu0 0
    %12802 = vmatpush1.bf16.msra.mxu0 0
    %12803 = vmatprep.subr.bf16.mxu0 0
    %12804 = vmatpush1.bf16.msra.mxu0 0
    %12805 = vmatprep.subr.bf16.mxu0 0
    %12806 = vmatpush1.bf16.msra.mxu0 0
    %12807 = vmatprep.subr.bf16.mxu0 0
    %12808 = vmatpush1.bf16.msra.mxu0 0
    %12809 = vmatprep.subr.bf16.mxu0 0
    %12810 = vmatpush1.bf16.msra.mxu0 0
    %12811 = vmatprep.subr.bf16.mxu0 0
    %12812 = vmatpush1.bf16.msra.mxu0 0
    %12813 = vmatprep.mubr.bf16.mxu0 0
    %12814 = vmatmul.mubr.bf16.gmra.mrb[0].mxu0 %v11761
    %v12815 = vpop.f32.mrb[0].mxu0
    %v12816 = vadd.f32 %v12775, %v12815
    %v12817 = vpop.f32.mrb[0].mxu0
    %v12818 = vadd.f32 %v12777, %v12817
    %v12819 = vpop.f32.mrb[0].mxu0
    %v12820 = vpop.f32.mrb[0].mxu0
    %12821 = vdwg.mxu0
    %12822 = vmatprep.subr.bf16.mxu0 %v12375
    %12823 = vmatpush1.bf16.msra.mxu0 %v12374
    %12824 = vmatprep.subr.bf16.mxu0 %v12381
    %12825 = vmatpush1.bf16.msra.mxu0 %v12380
    %12826 = vmatprep.subr.bf16.mxu0 %v12387
    %12827 = vmatpush1.bf16.msra.mxu0 %v12386
    %12828 = vmatprep.subr.bf16.mxu0 %v12393
    %12829 = vmatpush1.bf16.msra.mxu0 %v12392
    %12830 = vmatprep.subr.bf16.mxu0 %v12399
    %12831 = vmatpush1.bf16.msra.mxu0 %v12398
    %12832 = vmatprep.subr.bf16.mxu0 %v12405
    %12833 = vmatpush1.bf16.msra.mxu0 %v12404
    %12834 = vmatprep.subr.bf16.mxu0 %v12411
    %12835 = vmatpush1.bf16.msra.mxu0 %v12410
    %12836 = vmatprep.subr.bf16.mxu0 %v12417
    %12837 = vmatpush1.bf16.msra.mxu0 %v12416
    %12838 = vmatprep.subr.bf16.mxu0 %v12423
    %12839 = vmatpush1.bf16.msra.mxu0 %v12422
    %12840 = vmatprep.subr.bf16.mxu0 %v12429
    %12841 = vmatpush1.bf16.msra.mxu0 %v12428
    %12842 = vmatprep.subr.bf16.mxu0 %v12435
    %12843 = vmatpush1.bf16.msra.mxu0 %v12434
    %12844 = vmatprep.subr.bf16.mxu0 %v12441
    %12845 = vmatpush1.bf16.msra.mxu0 %v12440
    %12846 = vmatprep.subr.bf16.mxu0 %v12447
    %12847 = vmatpush1.bf16.msra.mxu0 %v12446
    %12848 = vmatprep.subr.bf16.mxu0 %v12453
    %12849 = vmatpush1.bf16.msra.mxu0 %v12452
    %12850 = vmatprep.subr.bf16.mxu0 %v12459
    %12851 = vmatpush1.bf16.msra.mxu0 %v12458
    %12852 = vmatprep.subr.bf16.mxu0 %v12465
    %12853 = vmatpush1.bf16.msra.mxu0 %v12464
    %12854 = vmatprep.mubr.bf16.mxu0 %v11760
    %12855 = vmatmul.mubr.bf16.gmra.mrb[0].mxu0 %v11759
    %v12856 = vpop.f32.mrb[0].mxu0
    %v12857 = vadd.f32 %v11927, %v12856
    %v12858 = vpop.f32.mrb[0].mxu0
    %v12859 = vadd.f32 %v11931, %v12858
    %v12860 = vpop.f32.mrb[0].mxu0
    %v12861 = vpop.f32.mrb[0].mxu0
    %12862 = vdwg.mxu0
    %12863 = vmatprep.subr.bf16.mxu0 %v12471
    %12864 = vmatpush1.bf16.msra.mxu0 %v12470
    %12865 = vmatprep.subr.bf16.mxu0 %v12477
    %12866 = vmatpush1.bf16.msra.mxu0 %v12476
    %12867 = vmatprep.subr.bf16.mxu0 %v12483
    %12868 = vmatpush1.bf16.msra.mxu0 %v12482
    %12869 = vmatprep.subr.bf16.mxu0 %v12489
    %12870 = vmatpush1.bf16.msra.mxu0 %v12488
    %12871 = vmatprep.subr.bf16.mxu0 %v12495
    %12872 = vmatpush1.bf16.msra.mxu0 %v12494
    %12873 = vmatprep.subr.bf16.mxu0 %v12501
    %12874 = vmatpush1.bf16.msra.mxu0 %v12500
    %12875 = vmatprep.subr.bf16.mxu0 %v12507
    %12876 = vmatpush1.bf16.msra.mxu0 %v12506
    %12877 = vmatprep.subr.bf16.mxu0 %v12513
    %12878 = vmatpush1.bf16.msra.mxu0 %v12512
    %12879 = vmatprep.subr.bf16.mxu0 0
    %12880 = vmatpush1.bf16.msra.mxu0 0
    %12881 = vmatprep.subr.bf16.mxu0 0
    %12882 = vmatpush1.bf16.msra.mxu0 0
    %12883 = vmatprep.subr.bf16.mxu0 0
    %12884 = vmatpush1.bf16.msra.mxu0 0
    %12885 = vmatprep.subr.bf16.mxu0 0
    %12886 = vmatpush1.bf16.msra.mxu0 0
    %12887 = vmatprep.subr.bf16.mxu0 0
    %12888 = vmatpush1.bf16.msra.mxu0 0
    %12889 = vmatprep.subr.bf16.mxu0 0
    %12890 = vmatpush1.bf16.msra.mxu0 0
    %12891 = vmatprep.subr.bf16.mxu0 0
    %12892 = vmatpush1.bf16.msra.mxu0 0
    %12893 = vmatprep.subr.bf16.mxu0 0
    %12894 = vmatpush1.bf16.msra.mxu0 0
    %12895 = vmatprep.mubr.bf16.mxu0 0
    %12896 = vmatmul.mubr.bf16.gmra.mrb[0].mxu0 %v11761
    %v12897 = vpop.f32.mrb[0].mxu0
    %v12898 = vadd.f32 %v12857, %v12897
    %v12899 = vpop.f32.mrb[0].mxu0
    %v12900 = vadd.f32 %v12859, %v12899
    %v12901 = vpop.f32.mrb[0].mxu0
    %v12902 = vpop.f32.mrb[0].mxu0
    %12903 = vdwg.mxu0
    %v12904 = vtanh.pop %v12734
    %v12905 = vtanh.pop %v12736
    %v12906 = vtanh.pop %v12816
    %v12907 = vtanh.pop %v12818
    %v12908 = vtanh.pop %v12898
    %v12909 = vtanh.pop %v12900
    %12910 = vst [vmem:[#allocation17] sm:$0xff] %v12904
    %12911 = vst [vmem:[#allocation17 + $0x8] sm:$0xff] %v12905
    %12912 = vst [vmem:[#allocation17 + $0x10] sm:$0xff] %v12906
    %12913 = vst [vmem:[#allocation17 + $0x18] sm:$0xff] %v12907
    %12914 = vst [vmem:[#allocation17 + $0x20] sm:$0xff] %v12908
    %12915 = vst [vmem:[#allocation17 + $0x28] sm:$0xff] %v12909
    // Predicated region
    $region74: #{tpu_custom_call.1} parent=1 // pred_check
      _
    $region75: #{tpu_custom_call.1} parent=1 // pred_check_branch
      %12917 = sbr.rel (0) target = $region77
    $region76: #{tpu_custom_call.1} parent=1 // pred_region
      %s12919 = ssub.s32 768, 768
      %12920 = vsyncadd [#allocation4], %s12919
      %s12922 = sshll.u32 [#allocation17], 4
      %s12923 = int_to_ptr.vmem [resolvable:$true] %s12922
      %12925 = dma.vmem_to_hbm [thread:$0]  %s12923, 768, %s9, [#allocation4]
    $region77: #{tpu_custom_call.1} parent=1 // pred_fallthru
      _
    // Predicated region
    $region78: #{tpu_custom_call.1} parent=1 // pred_check
      _
    $region79: #{tpu_custom_call.1} parent=1 // pred_check_branch
      %12927 = sbr.rel (0) target = $region81
    $region80: #{tpu_custom_call.1} parent=1 // pred_region
      %12928 = dma.done [#allocation4], 768
    $region81: #{tpu_custom_call.1} parent=1 // pred_fallthru
      _
    %12929 = vsyncpa [#allocation3], 1
    %12930 = vsyncpa [#allocation6], 1
    %12931 = vsyncpa [#allocation9], 1
    %12932 = vsyncpa [#allocation12], 1
    %12933 = vsyncpa [#allocation15], 1
    %12934 = vsyncpa [#allocation4], 1

</llo_original>
